<compile_context>
chip_gen: v6e
topology: v6e:2x2x1
jax: 0.10.0
libtpu: 0.0.40
codegen_flags: <defaults>
</compile_context>

<pallas_src>
import functools
import math

import numpy as np
import jax
import jax.numpy as jnp
from jax import lax
from jax.experimental import pallas as pl
from jax.experimental.pallas import tpu as pltpu


# ----------------------------------------------------------------------------
# In-kernel helpers
# ----------------------------------------------------------------------------

def _ln(x, g, b, eps):
    """Custom LayerNorm of the reference repo: a_2*(x-mean)/(std+eps)+b_2,
    with unbiased std (torch .std(), ddof=1) and eps added to std (not var).
    Uses a per-row EUP reciprocal instead of a broadcast divide."""
    mean = jnp.mean(x, axis=-1, keepdims=True)
    diff = x - mean
    var = jnp.sum(diff * diff, axis=-1, keepdims=True) * (1.0 / (x.shape[-1] - 1))
    inv = pl.reciprocal(jnp.sqrt(var) + eps)          # exact; (rows, 1) only
    return (diff * inv) * g + b


# ----------------------------------------------------------------------------
# Pallas kernels
# ----------------------------------------------------------------------------

def _posenc_kernel(x_ref, add_ref, g_ref, b_ref, o_ref, *, scale, eps):
    """out = LayerNorm(x * scale + add). Whole (B, T, H) slab in one call (no grid)."""
    x = x_ref[...]
    if scale != 1.0:
        x = x * scale
    o_ref[...] = _ln(x + add_ref[...], g_ref[...], b_ref[...], eps)


def _img_posenc_kernel(x_ref, w_ref, wb_ref, add_ref, g_ref, b_ref, o_ref, *, eps):
    """img_project (Linear+Sigmoid) fused with 'img' positional encoding + LayerNorm.
    Operates on the flattened (B*T_img, E) slab -> single 2-D matmul."""
    y = jnp.dot(x_ref[...].astype(jnp.bfloat16), w_ref[...],
                preferred_element_type=jnp.float32) + wb_ref[...]
    y = jax.nn.sigmoid(y)
    o_ref[...] = _ln(y + add_ref[...], g_ref[...], b_ref[...], eps)


def _transformer_kernel(x_ref, ng_ref, nb_ref,
                        ln0g_ref, ln0b_ref, wqkv_ref, bqkv_ref, wo_ref, bo_ref,
                        ln1g_ref, ln1b_ref, w1_ref, b1_ref, w2_ref, b2_ref,
                        o_ref, attn_ref, *, n_head, eps):
    """One grid step = (batch element b, layer l).  The output block (index constant over l)
    is the VMEM-resident residual stream; it is written back to HBM only when b changes."""
    l = pl.program_id(1)

    # Transformer pre-norm, applied once per batch element (layer 0 only).
    @pl.when(l == 0)
    def _():
        o_ref[0] = _ln(x_ref[0], ng_ref[...], nb_ref[...], eps)

    x = o_ref[0]                                              # carried residual (T, H) f32
    H = x.shape[-1]
    dk = H // n_head

    # ---- sublayer 0: x + MHA(LayerNorm(x)) ----
    y = _ln(x, ln0g_ref[0], ln0b_ref[0], eps)
    # Fused QKV projection: one wide (T,H)@(H,3H) bf16 matmul, f32 accumulate.
    # 1/sqrt(dk) is already folded into the q columns of wqkv/bqkv at init.
    qkv = jnp.dot(y.astype(jnp.bfloat16), wqkv_ref[0],
                  preferred_element_type=jnp.float32) + bqkv_ref[0]

    for h in range(n_head):                                   # static unroll over heads
        qh = qkv[:, h * dk:(h + 1) * dk].astype(jnp.bfloat16)
        kh = qkv[:, H + h * dk:H + (h + 1) * dk].astype(jnp.bfloat16)
        vh = qkv[:, 2 * H + h * dk:2 * H + (h + 1) * dk].astype(jnp.bfloat16)
        s = lax.dot_general(qh, kh, (((1,), (1,)), ((), ())),
                            preferred_element_type=jnp.float32)          # (T, T)
        s = s - jnp.max(s, axis=-1, keepdims=True)
        e = jnp.exp(s)
        p = e * pl.reciprocal(jnp.sum(e, axis=-1, keepdims=True))        # exact
        # Write each head's (T, dk) output at its static lane offset (no concat relayout).
        attn_ref[:, h * dk:(h + 1) * dk] = jnp.dot(p.astype(jnp.bfloat16), vh,
                                                   preferred_element_type=jnp.float32)

    out = jnp.dot(attn_ref[...].astype(jnp.bfloat16), wo_ref[0],
                  preferred_element_type=jnp.float32) + bo_ref[0]
    x = x + out                                               # residual (in VMEM)

    # ---- sublayer 1: x + FFN(LayerNorm(x)) ----
    y = _ln(x, ln1g_ref[0], ln1b_ref[0], eps)
    h1 = jnp.dot(y.astype(jnp.bfloat16), w1_ref[0],
                 preferred_element_type=jnp.float32) + b1_ref[0]
    h1 = jnp.maximum(h1, 0.0)                                 # ReLU
    out = jnp.dot(h1.astype(jnp.bfloat16), w2_ref[0],
                  preferred_element_type=jnp.float32) + b2_ref[0]
    o_ref[0] = x + out                                        # carry to next layer


# ----------------------------------------------------------------------------
# pallas_call wrappers
# ----------------------------------------------------------------------------

_VMEM_SPEC = pl.BlockSpec(memory_space=pltpu.MemorySpace.VMEM)
_VMEM_LIMIT = 32 * 1024 * 1024   # safe on v5e/v6e (128 MiB phys) and v7x (64 MiB phys)


def posenc(x, add, g, b, *, scale, eps):
    """x: (B, T, H); add: (T, H); g/b: (1, H). Single no-grid call (B is small)."""
    return pl.pallas_call(
        functools.partial(_posenc_kernel, scale=scale, eps=eps),
        out_shape=jax.ShapeDtypeStruct(x.shape, jnp.float32),
        in_specs=[_VMEM_SPEC] * 4,
        out_specs=_VMEM_SPEC,
        compiler_params=pltpu.CompilerParams(vmem_limit_bytes=_VMEM_LIMIT),
    )(x, add, g, b)


def img_posenc(img, w, wb, add, g, b, *, eps):
    """img: (B, T_img, E) -> (B, T_img, H). Flattened to (B*T_img, E) for one 2-D matmul."""
    B, T, E = img.shape
    H = w.shape[1]
    add_full = jnp.tile(add, (B, 1))                          # (B*T, H), tiny
    out = pl.pallas_call(
        functools.partial(_img_posenc_kernel, eps=eps),
        out_shape=jax.ShapeDtypeStruct((B * T, H), jnp.float32),
        in_specs=[_VMEM_SPEC] * 6,
        out_specs=_VMEM_SPEC,
        compiler_params=pltpu.CompilerParams(vmem_limit_bytes=_VMEM_LIMIT),
    )(img.reshape(B * T, E), w, wb, add_full, g, b)
    return out.reshape(B, T, H)


def transformer(x, p, n_head):
    """Whole Transformer (pre-norm + L fused attn/FFN layers) in ONE pallas_call."""
    B, T, H = x.shape
    L = p["wqkv"].shape[0]

    def _const(arr):      # constant across the whole grid (pre-norm gamma/beta)
        n = arr.ndim
        return pl.BlockSpec(arr.shape, lambda bb, ll, _n=n: (0,) * _n)

    def _layer(arr):      # streamed per layer (prefetched while previous layer computes)
        n = arr.ndim - 1
        return pl.BlockSpec((1,) + arr.shape[1:], lambda bb, ll, _n=n: (ll,) + (0,) * _n)

    in_specs = [
        pl.BlockSpec((1, T, H), lambda bb, ll: (bb, 0, 0)),   # x (read at l==0 only)
        _const(p["norm_g"]), _const(p["norm_b"]),
        _layer(p["ln0_g"]), _layer(p["ln0_b"]),
        _layer(p["wqkv"]), _layer(p["bqkv"]),
        _layer(p["wo"]), _layer(p["bo"]),
        _layer(p["ln1_g"]), _layer(p["ln1_b"]),
        _layer(p["w1"]), _layer(p["b1"]),
        _layer(p["w2"]), _layer(p["b2"]),
    ]
    return pl.pallas_call(
        functools.partial(_transformer_kernel, n_head=n_head, eps=1e-6),
        out_shape=jax.ShapeDtypeStruct((B, T, H), jnp.float32),
        grid=(B, L),
        in_specs=in_specs,
        # Constant block index across the layer axis -> the residual stays VMEM-resident
        # for all L layers and is written to HBM once per batch element.
        out_specs=pl.BlockSpec((1, T, H), lambda bb, ll: (bb, 0, 0)),
        scratch_shapes=[pltpu.VMEM((T, H), jnp.float32)],     # per-head attention outputs
        compiler_params=pltpu.CompilerParams(
            dimension_semantics=("parallel", "arbitrary"),
            vmem_limit_bytes=_VMEM_LIMIT),
    )(x, p["norm_g"], p["norm_b"],
      p["ln0_g"], p["ln0_b"], p["wqkv"], p["bqkv"], p["wo"], p["bo"],
      p["ln1_g"], p["ln1_b"], p["w1"], p["b1"], p["w2"], p["b2"])


# ----------------------------------------------------------------------------
# Model forward (task='itm_a', compute_loss=False  ->  itm_scores (B, 2))
# ----------------------------------------------------------------------------

def model_forward_itm(params, img, cap, *, n_head, cls_id):
    B, img_toklen, _ = img.shape
    H = params["word_emb"].shape[1]
    pos = params["pos"]
    type_pe, pe = pos["type_pe"], pos["pe"]
    ln_g, ln_b = pos["ln_g"], pos["ln_b"]

    # img_project (Linear+Sigmoid) + 'img' positional encoding (pos=2), one fused kernel
    add_img = type_pe[2][None, :] + pe[:img_toklen]                    # (T_img, H)
    img_embs = img_posenc(img, params["img_proj_w"], params["img_proj_b"],
                          add_img, ln_g, ln_b, eps=1e-12)

    # CLS token embedding; the three CLS positional encodings (pos 1, 3, 5) in ONE call
    cls_tok = jnp.broadcast_to(params["word_emb"][cls_id][None, None, :], (B, 3, H))
    add_cls = type_pe[1:6:2]                                           # rows 1,3,5 -> (3, H)
    cls_all = posenc(cls_tok, add_cls, ln_g, ln_b, scale=1.0, eps=1e-12)
    CLS1, CLS2, CLS3 = cls_all[:, 0:1], cls_all[:, 1:2], cls_all[:, 2:3]

    # image branch
    image_embs1 = jnp.concatenate([CLS1, img_embs], axis=1)
    image_embs1 = transformer(image_embs1, params["single_enc"], n_head)
    image_embs = transformer(jnp.concatenate([image_embs1, CLS2], axis=1),
                             params["double_enc"], n_head)

    # text branch
    t_len = cap.shape[1]
    text_embs = params["word_emb"][cap]                                # embedding gather (glue)
    add_text = type_pe[6][None, :] + pe[:t_len]
    text_embs = posenc(text_embs, add_text, ln_g, ln_b,
                       scale=math.sqrt(H), eps=1e-12)

    input_embs = jnp.concatenate([image_embs, CLS3, text_embs], axis=1)
    output = transformer(input_embs, params["enc"], n_head)

    # itm_forward (task='itm_a', compute_loss=False): tiny pooler left to plain XLA
    # (a 2-lane-wide Pallas output would be a masked partial store + pure launch overhead).
    cls_feats = jnp.concatenate(
        [output[:, 0, :],                    # CLS1
         output[:, 1 + img_toklen, :],       # CLS2
         output[:, 2 + img_toklen, :]],      # CLS3
        axis=1)                                                         # (B, 3H)
    itm_scores = cls_feats @ params["pooler_w"] + params["pooler_b"]
    return itm_scores


# ----------------------------------------------------------------------------
# Deterministic parameter initialization (pre-fused / pre-cast / pre-stacked once)
# ----------------------------------------------------------------------------

def init_dense(key, in_dim, out_dim):
    kw, kb = jax.random.split(key)
    bound = 1.0 / math.sqrt(in_dim)
    w = jax.random.uniform(kw, (in_dim, out_dim), jnp.float32, -bound, bound)
    b = jax.random.uniform(kb, (out_dim,), jnp.float32, -bound, bound)
    return w, b


def init_attn_block(key, H, ff_dim, n_head):
    ks = jax.random.split(key, 6)
    wq, bq = init_dense(ks[0], H, H)
    wk, bk = init_dense(ks[1], H, H)
    wv, bv = init_dense(ks[2], H, H)
    wo, bo = init_dense(ks[3], H, H)
    w1, b1 = init_dense(ks[4], H, ff_dim)
    w2, b2 = init_dense(ks[5], ff_dim, H)
    scale = 1.0 / math.sqrt(H // n_head)       # fold 1/sqrt(dk) into the q projection
    return {
        "wqkv": jnp.concatenate([wq * scale, wk, wv], axis=1).astype(jnp.bfloat16),
        "bqkv": jnp.concatenate([bq * scale, bk, bv]).reshape(1, 3 * H),
        "wo": wo.astype(jnp.bfloat16), "bo": bo.reshape(1, H),
        "w1": w1.astype(jnp.bfloat16), "b1": b1.reshape(1, ff_dim),
        "w2": w2.astype(jnp.bfloat16), "b2": b2.reshape(1, H),
        "ln0_g": jnp.ones((1, H), jnp.float32), "ln0_b": jnp.zeros((1, H), jnp.float32),
        "ln1_g": jnp.ones((1, H), jnp.float32), "ln1_b": jnp.zeros((1, H), jnp.float32),
    }


def init_transformer(key, H, ff_dim, n_block, n_head):
    keys = jax.random.split(key, n_block)
    layers = [init_attn_block(k, H, ff_dim, n_head) for k in keys]

    def stk(name):
        return jnp.stack([lp[name] for lp in layers], axis=0)   # leading L axis

    return {
        "norm_g": jnp.ones((1, H), jnp.float32),
        "norm_b": jnp.zeros((1, H), jnp.float32),
        "ln0_g": stk("ln0_g"), "ln0_b": stk("ln0_b"),
        "wqkv": stk("wqkv"), "bqkv": stk("bqkv"),
        "wo": stk("wo"), "bo": stk("bo"),
        "ln1_g": stk("ln1_g"), "ln1_b": stk("ln1_b"),
        "w1": stk("w1"), "b1": stk("b1"),
        "w2": stk("w2"), "b2": stk("b2"),
    }


def make_pe(max_seq_len, d_model):
    # intentionally mirrors the reference repo's PE formula
    pe = np.zeros((max_seq_len, d_model), dtype=np.float32)
    for p in range(max_seq_len):
        for i in range(0, d_model, 2):
            pe[p, i] = math.sin(p / 10000 ** (2 * i / d_model))
            pe[p, i + 1] = math.cos(p / 10000 ** (2 * (i + 1) / d_model))
    return jnp.asarray(pe)


def init_params(key, *, img_embs, n_hidden, ff_dim, n_block, n_head, vocab_size):
    ks = jax.random.split(key, 8)
    word_emb = 0.02 * jax.random.normal(ks[0], (vocab_size, n_hidden), jnp.float32)
    img_proj_w, img_proj_b = init_dense(ks[1], img_embs, n_hidden)
    type_pe = 0.02 * jax.random.normal(ks[2], (7, n_hidden), jnp.float32)
    pooler_w, pooler_b = init_dense(ks[3], n_hidden * 3, 2)
    return {
        "word_emb": word_emb,
        "img_proj_w": img_proj_w.astype(jnp.bfloat16),
        "img_proj_b": img_proj_b.reshape(1, n_hidden),
        "pos": {
            "type_pe": type_pe,
            "pe": make_pe(200, n_hidden),
            "ln_g": jnp.ones((1, n_hidden), jnp.float32),
            "ln_b": jnp.zeros((1, n_hidden), jnp.float32),
        },
        "single_enc": init_transformer(ks[4], n_hidden, ff_dim, 1, n_head),
        "double_enc": init_transformer(ks[5], n_hidden, ff_dim, 1, n_head),
        "enc": init_transformer(ks[6], n_hidden, ff_dim, n_block, n_head),
        "pooler_w": pooler_w,                 # f32, plain XLA matmul
        "pooler_b": pooler_b.reshape(1, 2),
    }


# ----------------------------------------------------------------------------
# Main
# ----------------------------------------------------------------------------

if __name__ == "__main__":
    # Small, forward-consistent shapes
    B = 2            # batch
    IMG_TOK = 4      # image patch tokens
    IMG_EMBS = 16    # raw image feature dim
    H = 32           # n_hidden
    N_HEAD = 4
    N_BLOCK = 2
    FF_DIM = 64
    VOCAB = 50
    T_TEXT = 6
    CLS_ID = 3

    key = jax.random.PRNGKey(0)
    k_params, k_img, k_cap = jax.random.split(key, 3)

    params = init_params(k_params, img_embs=IMG_EMBS, n_hidden=H, ff_dim=FF_DIM,
                         n_block=N_BLOCK, n_head=N_HEAD, vocab_size=VOCAB)

    img = jax.random.normal(k_img, (B, IMG_TOK, IMG_EMBS), jnp.float32)   # batch['img']
    cap = jax.random.randint(k_cap, (B, T_TEXT), 0, VOCAB)                # batch['cap']

    fwd = jax.jit(functools.partial(model_forward_itm, n_head=N_HEAD, cls_id=CLS_ID))
    itm_scores = fwd(params, img, cap)
    jax.block_until_ready(itm_scores)

    assert itm_scores.shape == (B, 2)
    assert bool(jnp.all(jnp.isfinite(itm_scores)))
    # TODO(synk): mlm/mvm/fda loss paths use data-dependent boolean masking (dynamic shapes)
    # and are not expressible as static-shape Pallas outputs; only the itm_a scoring path is kernelized.
    print("KERNEL_OK")
</pallas_src>

<mosaic_0001>
module attributes {stable_mosaic.version = 11 : i64} {
  func.func @_posenc_kernel(%arg0: memref<2x3x32xf32, #tpu.memory_space<vmem>>, %arg1: memref<3x32xf32, #tpu.memory_space<vmem>>, %arg2: memref<1x32xf32, #tpu.memory_space<vmem>>, %arg3: memref<1x32xf32, #tpu.memory_space<vmem>>, %arg4: memref<2x3x32xf32, #tpu.memory_space<vmem>>) attributes {dimension_semantics = [], scalar_prefetch = 0 : i64, scratch_operands = 0 : i64, tpu.core_type = #tpu.core_type<tc>} {
    %c0 = arith.constant 0 : index
    %c0_0 = arith.constant 0 : index
    %c0_1 = arith.constant 0 : index
    %0 = vector.load %arg0[%c0, %c0_0, %c0_1] : memref<2x3x32xf32, #tpu.memory_space<vmem>>, vector<2x3x32xf32>
    %c0_2 = arith.constant 0 : index
    %c0_3 = arith.constant 0 : index
    %1 = vector.load %arg1[%c0_2, %c0_3] : memref<3x32xf32, #tpu.memory_space<vmem>>, vector<3x32xf32>
    %2 = vector.shape_cast %1 : vector<3x32xf32> to vector<1x3x32xf32>
    %3 = vector.broadcast %2 : vector<1x3x32xf32> to vector<2x3x32xf32>
    %4 = arith.addf %0, %3 : vector<2x3x32xf32>
    %c0_4 = arith.constant 0 : index
    %c0_5 = arith.constant 0 : index
    %5 = vector.load %arg2[%c0_4, %c0_5] : memref<1x32xf32, #tpu.memory_space<vmem>>, vector<1x32xf32>
    %c0_6 = arith.constant 0 : index
    %c0_7 = arith.constant 0 : index
    %6 = vector.load %arg3[%c0_6, %c0_7] : memref<1x32xf32, #tpu.memory_space<vmem>>, vector<1x32xf32>
    %cst = arith.constant dense<0.000000e+00> : vector<2x3xf32>
    %7 = vector.multi_reduction <add>, %4, %cst [2] : vector<2x3x32xf32> to vector<2x3xf32>
    %8 = vector.shape_cast %7 : vector<2x3xf32> to vector<2x3x1xf32>
    %cst_8 = arith.constant 3.200000e+01 : f32
    %9 = vector.broadcast %cst_8 : f32 to vector<2x3x1xf32>
    %10 = arith.divf %8, %9 : vector<2x3x1xf32>
    %11 = vector.broadcast %10 : vector<2x3x1xf32> to vector<2x3x32xf32>
    %12 = arith.subf %4, %11 : vector<2x3x32xf32>
    %13 = arith.mulf %12, %12 : vector<2x3x32xf32>
    %cst_9 = arith.constant dense<0.000000e+00> : vector<2x3xf32>
    %14 = vector.multi_reduction <add>, %13, %cst_9 [2] : vector<2x3x32xf32> to vector<2x3xf32>
    %15 = vector.shape_cast %14 : vector<2x3xf32> to vector<2x3x1xf32>
    %cst_10 = arith.constant 0.0322580636 : f32
    %16 = vector.broadcast %cst_10 : f32 to vector<2x3x1xf32>
    %17 = arith.mulf %15, %16 : vector<2x3x1xf32>
    %18 = math.sqrt %17 : vector<2x3x1xf32>
    %cst_11 = arith.constant 9.99999996E-13 : f32
    %19 = vector.broadcast %cst_11 : f32 to vector<2x3x1xf32>
    %20 = arith.addf %18, %19 : vector<2x3x1xf32>
    %21 = tpu.reciprocal %20 : vector<2x3x1xf32> -> vector<2x3x1xf32>
    %22 = vector.broadcast %21 : vector<2x3x1xf32> to vector<2x3x32xf32>
    %23 = arith.mulf %12, %22 : vector<2x3x32xf32>
    %24 = vector.shape_cast %5 : vector<1x32xf32> to vector<1x1x32xf32>
    %25 = vector.broadcast %24 : vector<1x1x32xf32> to vector<2x3x32xf32>
    %26 = arith.mulf %23, %25 : vector<2x3x32xf32>
    %27 = vector.shape_cast %6 : vector<1x32xf32> to vector<1x1x32xf32>
    %28 = vector.broadcast %27 : vector<1x1x32xf32> to vector<2x3x32xf32>
    %29 = arith.addf %26, %28 : vector<2x3x32xf32>
    %c0_12 = arith.constant 0 : index
    %c0_13 = arith.constant 0 : index
    %c0_14 = arith.constant 0 : index
    %30 = vector.load %arg4[%c0_12, %c0_13, %c0_14] : memref<2x3x32xf32, #tpu.memory_space<vmem>>, vector<2x3x32xf32>
    tpu.vector_store %arg4[%c0_12, %c0_13, %c0_14], %29 {strides = array<i32>} : memref<2x3x32xf32, #tpu.memory_space<vmem>>, vector<2x3x32xf32>,
    return
  }
}

module attributes {stable_mosaic.version = 11 : i64} {
  func.func @_img_posenc_kernel(%arg0: memref<8x16xf32, #tpu.memory_space<vmem>>, %arg1: memref<16x32xbf16, #tpu.memory_space<vmem>>, %arg2: memref<1x32xf32, #tpu.memory_space<vmem>>, %arg3: memref<8x32xf32, #tpu.memory_space<vmem>>, %arg4: memref<1x32xf32, #tpu.memory_space<vmem>>, %arg5: memref<1x32xf32, #tpu.memory_space<vmem>>, %arg6: memref<8x32xf32, #tpu.memory_space<vmem>>) attributes {dimension_semantics = [], scalar_prefetch = 0 : i64, scratch_operands = 0 : i64, tpu.core_type = #tpu.core_type<tc>} {
    %c0 = arith.constant 0 : index
    %c0_0 = arith.constant 0 : index
    %0 = vector.load %arg0[%c0, %c0_0] : memref<8x16xf32, #tpu.memory_space<vmem>>, vector<8x16xf32>
    %1 = arith.truncf %0 : vector<8x16xf32> to vector<8x16xbf16>
    %c0_1 = arith.constant 0 : index
    %c0_2 = arith.constant 0 : index
    %2 = vector.load %arg1[%c0_1, %c0_2] : memref<16x32xbf16, #tpu.memory_space<vmem>>, vector<16x32xbf16>
    %cst = arith.constant dense<0.000000e+00> : vector<8x32xf32>
    %3 = tpu.matmul %1, %2, %cst {dimension_numbers = #tpu.dot_dimension_numbers<[1], [0], [0], [1], [0, 0, 1, 1], [], []>} : vector<8x16xbf16>, vector<16x32xbf16>, vector<8x32xf32> -> vector<8x32xf32>
    %c0_3 = arith.constant 0 : index
    %c0_4 = arith.constant 0 : index
    %4 = vector.load %arg2[%c0_3, %c0_4] : memref<1x32xf32, #tpu.memory_space<vmem>>, vector<1x32xf32>
    %5 = vector.broadcast %4 : vector<1x32xf32> to vector<8x32xf32>
    %6 = arith.addf %3, %5 : vector<8x32xf32>
    %7 = arith.negf %6 : vector<8x32xf32>
    %8 = math.exp %7 : vector<8x32xf32>
    %cst_5 = arith.constant 1.000000e+00 : f32
    %9 = vector.broadcast %cst_5 : f32 to vector<8x32xf32>
    %10 = arith.addf %9, %8 : vector<8x32xf32>
    %11 = arith.divf %9, %10 : vector<8x32xf32>
    %c0_6 = arith.constant 0 : index
    %c0_7 = arith.constant 0 : index
    %12 = vector.load %arg3[%c0_6, %c0_7] : memref<8x32xf32, #tpu.memory_space<vmem>>, vector<8x32xf32>
    %13 = arith.addf %11, %12 : vector<8x32xf32>
    %c0_8 = arith.constant 0 : index
    %c0_9 = arith.constant 0 : index
    %14 = vector.load %arg4[%c0_8, %c0_9] : memref<1x32xf32, #tpu.memory_space<vmem>>, vector<1x32xf32>
    %c0_10 = arith.constant 0 : index
    %c0_11 = arith.constant 0 : index
    %15 = vector.load %arg5[%c0_10, %c0_11] : memref<1x32xf32, #tpu.memory_space<vmem>>, vector<1x32xf32>
    %cst_12 = arith.constant dense<0.000000e+00> : vector<8xf32>
    %16 = vector.multi_reduction <add>, %13, %cst_12 [1] : vector<8x32xf32> to vector<8xf32>
    %17 = vector.shape_cast %16 : vector<8xf32> to vector<8x1xf32>
    %cst_13 = arith.constant 3.200000e+01 : f32
    %18 = vector.broadcast %cst_13 : f32 to vector<8x1xf32>
    %19 = arith.divf %17, %18 : vector<8x1xf32>
    %20 = vector.broadcast %19 : vector<8x1xf32> to vector<8x32xf32>
    %21 = arith.subf %13, %20 : vector<8x32xf32>
    %22 = arith.mulf %21, %21 : vector<8x32xf32>
    %cst_14 = arith.constant dense<0.000000e+00> : vector<8xf32>
    %23 = vector.multi_reduction <add>, %22, %cst_14 [1] : vector<8x32xf32> to vector<8xf32>
    %24 = vector.shape_cast %23 : vector<8xf32> to vector<8x1xf32>
    %cst_15 = arith.constant 0.0322580636 : f32
    %25 = vector.broadcast %cst_15 : f32 to vector<8x1xf32>
    %26 = arith.mulf %24, %25 : vector<8x1xf32>
    %27 = math.sqrt %26 : vector<8x1xf32>
    %cst_16 = arith.constant 9.99999996E-13 : f32
    %28 = vector.broadcast %cst_16 : f32 to vector<8x1xf32>
    %29 = arith.addf %27, %28 : vector<8x1xf32>
    %30 = tpu.reciprocal %29 : vector<8x1xf32> -> vector<8x1xf32>
    %31 = vector.broadcast %30 : vector<8x1xf32> to vector<8x32xf32>
    %32 = arith.mulf %21, %31 : vector<8x32xf32>
    %33 = vector.broadcast %14 : vector<1x32xf32> to vector<8x32xf32>
    %34 = arith.mulf %32, %33 : vector<8x32xf32>
    %35 = vector.broadcast %15 : vector<1x32xf32> to vector<8x32xf32>
    %36 = arith.addf %34, %35 : vector<8x32xf32>
    %c0_17 = arith.constant 0 : index
    %c0_18 = arith.constant 0 : index
    %37 = vector.load %arg6[%c0_17, %c0_18] : memref<8x32xf32, #tpu.memory_space<vmem>>, vector<8x32xf32>
    tpu.vector_store %arg6[%c0_17, %c0_18], %36 {strides = array<i32>} : memref<8x32xf32, #tpu.memory_space<vmem>>, vector<8x32xf32>,
    return
  }
}

module attributes {stable_mosaic.version = 11 : i64} {
  func.func @_transformer_kernel(%arg0: i32, %arg1: i32, %arg2: memref<1x5x32xf32, #tpu.memory_space<vmem>>, %arg3: memref<1x32xf32, #tpu.memory_space<vmem>>, %arg4: memref<1x32xf32, #tpu.memory_space<vmem>>, %arg5: memref<1x1x32xf32, #tpu.memory_space<vmem>>, %arg6: memref<1x1x32xf32, #tpu.memory_space<vmem>>, %arg7: memref<1x32x96xbf16, #tpu.memory_space<vmem>>, %arg8: memref<1x1x96xf32, #tpu.memory_space<vmem>>, %arg9: memref<1x32x32xbf16, #tpu.memory_space<vmem>>, %arg10: memref<1x1x32xf32, #tpu.memory_space<vmem>>, %arg11: memref<1x1x32xf32, #tpu.memory_space<vmem>>, %arg12: memref<1x1x32xf32, #tpu.memory_space<vmem>>, %arg13: memref<1x32x64xbf16, #tpu.memory_space<vmem>>, %arg14: memref<1x1x64xf32, #tpu.memory_space<vmem>>, %arg15: memref<1x64x32xbf16, #tpu.memory_space<vmem>>, %arg16: memref<1x1x32xf32, #tpu.memory_space<vmem>>, %arg17: memref<1x5x32xf32, #tpu.memory_space<vmem>>, %arg18: memref<5x32xf32, #tpu.memory_space<vmem>>) attributes {dimension_semantics = [#tpu.dimension_semantics<parallel>, #tpu.dimension_semantics<arbitrary>], iteration_bounds = array<i64: 2, 1>, scalar_prefetch = 0 : i64, scratch_operands = 1 : i64, tpu.core_type = #tpu.core_type<tc>, window_params = [{transform_indices = @transform_0, window_bounds = array<i64: 1, 5, 32>}, {pipeline_mode = #tpu.pipeline_mode<synchronous>, transform_indices = @transform_1, window_bounds = array<i64: 1, 32>}, {pipeline_mode = #tpu.pipeline_mode<synchronous>, transform_indices = @transform_2, window_bounds = array<i64: 1, 32>}, {transform_indices = @transform_3, window_bounds = array<i64: 1, 1, 32>}, {transform_indices = @transform_4, window_bounds = array<i64: 1, 1, 32>}, {transform_indices = @transform_5, window_bounds = array<i64: 1, 32, 96>}, {transform_indices = @transform_6, window_bounds = array<i64: 1, 1, 96>}, {transform_indices = @transform_7, window_bounds = array<i64: 1, 32, 32>}, {transform_indices = @transform_8, window_bounds = array<i64: 1, 1, 32>}, {transform_indices = @transform_9, window_bounds = array<i64: 1, 1, 32>}, {transform_indices = @transform_10, window_bounds = array<i64: 1, 1, 32>}, {transform_indices = @transform_11, window_bounds = array<i64: 1, 32, 64>}, {transform_indices = @transform_12, window_bounds = array<i64: 1, 1, 64>}, {transform_indices = @transform_13, window_bounds = array<i64: 1, 64, 32>}, {transform_indices = @transform_14, window_bounds = array<i64: 1, 1, 32>}, {transform_indices = @transform_15, window_bounds = array<i64: 1, 5, 32>}]} {
    %c0_i32 = arith.constant 0 : i32
    %0 = arith.cmpi eq, %arg1, %c0_i32 : i32
    %1 = arith.extui %0 : i1 to i32
    %c0_i32_0 = arith.constant 0 : i32
    %2 = arith.cmpi ne, %1, %c0_i32_0 : i32
    scf.if %2 {
      %c0_79 = arith.constant 0 : index
      %c0_80 = arith.constant 0 : index
      %c0_81 = arith.constant 0 : index
      %175 = vector.load %arg2[%c0_79, %c0_80, %c0_81] : memref<1x5x32xf32, #tpu.memory_space<vmem>>, vector<1x5x32xf32>
      %176 = vector.shape_cast %175 : vector<1x5x32xf32> to vector<5x32xf32>
      %c0_82 = arith.constant 0 : index
      %c0_83 = arith.constant 0 : index
      %177 = vector.load %arg3[%c0_82, %c0_83] : memref<1x32xf32, #tpu.memory_space<vmem>>, vector<1x32xf32>
      %c0_84 = arith.constant 0 : index
      %c0_85 = arith.constant 0 : index
      %178 = vector.load %arg4[%c0_84, %c0_85] : memref<1x32xf32, #tpu.memory_space<vmem>>, vector<1x32xf32>
      %cst_86 = arith.constant dense<0.000000e+00> : vector<5xf32>
      %179 = vector.multi_reduction <add>, %176, %cst_86 [1] : vector<5x32xf32> to vector<5xf32>
      %180 = vector.shape_cast %179 : vector<5xf32> to vector<5x1xf32>
      %cst_87 = arith.constant 3.200000e+01 : f32
      %181 = vector.broadcast %cst_87 : f32 to vector<5x1xf32>
      %182 = arith.divf %180, %181 : vector<5x1xf32>
      %183 = vector.broadcast %182 : vector<5x1xf32> to vector<5x32xf32>
      %184 = arith.subf %176, %183 : vector<5x32xf32>
      %185 = arith.mulf %184, %184 : vector<5x32xf32>
      %cst_88 = arith.constant dense<0.000000e+00> : vector<5xf32>
      %186 = vector.multi_reduction <add>, %185, %cst_88 [1] : vector<5x32xf32> to vector<5xf32>
      %187 = vector.shape_cast %186 : vector<5xf32> to vector<5x1xf32>
      %cst_89 = arith.constant 0.0322580636 : f32
      %188 = vector.broadcast %cst_89 : f32 to vector<5x1xf32>
      %189 = arith.mulf %187, %188 : vector<5x1xf32>
      %190 = math.sqrt %189 : vector<5x1xf32>
      %cst_90 = arith.constant 9.99999997E-7 : f32
      %191 = vector.broadcast %cst_90 : f32 to vector<5x1xf32>
      %192 = arith.addf %190, %191 : vector<5x1xf32>
      %193 = tpu.reciprocal %192 : vector<5x1xf32> -> vector<5x1xf32>
      %194 = vector.broadcast %193 : vector<5x1xf32> to vector<5x32xf32>
      %195 = arith.mulf %184, %194 : vector<5x32xf32>
      %196 = vector.broadcast %177 : vector<1x32xf32> to vector<5x32xf32>
      %197 = arith.mulf %195, %196 : vector<5x32xf32>
      %198 = vector.broadcast %178 : vector<1x32xf32> to vector<5x32xf32>
      %199 = arith.addf %197, %198 : vector<5x32xf32>
      %c0_91 = arith.constant 0 : index
      %c0_92 = arith.constant 0 : index
      %c0_93 = arith.constant 0 : index
      %200 = vector.load %arg17[%c0_91, %c0_92, %c0_93] : memref<1x5x32xf32, #tpu.memory_space<vmem>>, vector<1x5x32xf32>
      %201 = vector.shape_cast %200 : vector<1x5x32xf32> to vector<5x32xf32>
      %202 = vector.shape_cast %199 : vector<5x32xf32> to vector<1x5x32xf32>
      tpu.vector_store %arg17[%c0_91, %c0_92, %c0_93], %202 {strides = array<i32>} : memref<1x5x32xf32, #tpu.memory_space<vmem>>, vector<1x5x32xf32>,
    } else {
    }
    %c0 = arith.constant 0 : index
    %c0_1 = arith.constant 0 : index
    %c0_2 = arith.constant 0 : index
    %3 = vector.load %arg17[%c0, %c0_1, %c0_2] : memref<1x5x32xf32, #tpu.memory_space<vmem>>, vector<1x5x32xf32>
    %4 = vector.shape_cast %3 : vector<1x5x32xf32> to vector<5x32xf32>
    %c0_3 = arith.constant 0 : index
    %c0_4 = arith.constant 0 : index
    %c0_5 = arith.constant 0 : index
    %5 = vector.load %arg5[%c0_3, %c0_4, %c0_5] : memref<1x1x32xf32, #tpu.memory_space<vmem>>, vector<1x1x32xf32>
    %6 = vector.shape_cast %5 : vector<1x1x32xf32> to vector<1x32xf32>
    %c0_6 = arith.constant 0 : index
    %c0_7 = arith.constant 0 : index
    %c0_8 = arith.constant 0 : index
    %7 = vector.load %arg6[%c0_6, %c0_7, %c0_8] : memref<1x1x32xf32, #tpu.memory_space<vmem>>, vector<1x1x32xf32>
    %8 = vector.shape_cast %7 : vector<1x1x32xf32> to vector<1x32xf32>
    %cst = arith.constant dense<0.000000e+00> : vector<5xf32>
    %9 = vector.multi_reduction <add>, %4, %cst [1] : vector<5x32xf32> to vector<5xf32>
    %10 = vector.shape_cast %9 : vector<5xf32> to vector<5x1xf32>
    %cst_9 = arith.constant 3.200000e+01 : f32
    %11 = vector.broadcast %cst_9 : f32 to vector<5x1xf32>
    %12 = arith.divf %10, %11 : vector<5x1xf32>
    %13 = vector.broadcast %12 : vector<5x1xf32> to vector<5x32xf32>
    %14 = arith.subf %4, %13 : vector<5x32xf32>
    %15 = arith.mulf %14, %14 : vector<5x32xf32>
    %cst_10 = arith.constant dense<0.000000e+00> : vector<5xf32>
    %16 = vector.multi_reduction <add>, %15, %cst_10 [1] : vector<5x32xf32> to vector<5xf32>
    %17 = vector.shape_cast %16 : vector<5xf32> to vector<5x1xf32>
    %cst_11 = arith.constant 0.0322580636 : f32
    %18 = vector.broadcast %cst_11 : f32 to vector<5x1xf32>
    %19 = arith.mulf %17, %18 : vector<5x1xf32>
    %20 = math.sqrt %19 : vector<5x1xf32>
    %cst_12 = arith.constant 9.99999997E-7 : f32
    %21 = vector.broadcast %cst_12 : f32 to vector<5x1xf32>
    %22 = arith.addf %20, %21 : vector<5x1xf32>
    %23 = tpu.reciprocal %22 : vector<5x1xf32> -> vector<5x1xf32>
    %24 = vector.broadcast %23 : vector<5x1xf32> to vector<5x32xf32>
    %25 = arith.mulf %14, %24 : vector<5x32xf32>
    %26 = vector.broadcast %6 : vector<1x32xf32> to vector<5x32xf32>
    %27 = arith.mulf %25, %26 : vector<5x32xf32>
    %28 = vector.broadcast %8 : vector<1x32xf32> to vector<5x32xf32>
    %29 = arith.addf %27, %28 : vector<5x32xf32>
    %30 = arith.truncf %29 : vector<5x32xf32> to vector<5x32xbf16>
    %c0_13 = arith.constant 0 : index
    %c0_14 = arith.constant 0 : index
    %c0_15 = arith.constant 0 : index
    %31 = vector.load %arg7[%c0_13, %c0_14, %c0_15] : memref<1x32x96xbf16, #tpu.memory_space<vmem>>, vector<1x32x96xbf16>
    %32 = vector.shape_cast %31 : vector<1x32x96xbf16> to vector<32x96xbf16>
    %cst_16 = arith.constant dense<0.000000e+00> : vector<5x96xf32>
    %33 = tpu.matmul %30, %32, %cst_16 {dimension_numbers = #tpu.dot_dimension_numbers<[1], [0], [0], [1], [0, 0, 1, 1], [], []>} : vector<5x32xbf16>, vector<32x96xbf16>, vector<5x96xf32> -> vector<5x96xf32>
    %c0_17 = arith.constant 0 : index
    %c0_18 = arith.constant 0 : index
    %c0_19 = arith.constant 0 : index
    %34 = vector.load %arg8[%c0_17, %c0_18, %c0_19] : memref<1x1x96xf32, #tpu.memory_space<vmem>>, vector<1x1x96xf32>
    %35 = vector.shape_cast %34 : vector<1x1x96xf32> to vector<1x96xf32>
    %36 = vector.broadcast %35 : vector<1x96xf32> to vector<5x96xf32>
    %37 = arith.addf %33, %36 : vector<5x96xf32>
    %38 = vector.extract_strided_slice %37 {offsets = [0, 0], sizes = [5, 8], strides = [1, 1]} : vector<5x96xf32> to vector<5x8xf32>
    %39 = arith.truncf %38 : vector<5x8xf32> to vector<5x8xbf16>
    %40 = vector.extract_strided_slice %37 {offsets = [0, 32], sizes = [5, 8], strides = [1, 1]} : vector<5x96xf32> to vector<5x8xf32>
    %41 = arith.truncf %40 : vector<5x8xf32> to vector<5x8xbf16>
    %42 = vector.extract_strided_slice %37 {offsets = [0, 64], sizes = [5, 8], strides = [1, 1]} : vector<5x96xf32> to vector<5x8xf32>
    %43 = arith.truncf %42 : vector<5x8xf32> to vector<5x8xbf16>
    %cst_20 = arith.constant dense<0.000000e+00> : vector<5x5xf32>
    %44 = tpu.matmul %39, %41, %cst_20 {dimension_numbers = #tpu.dot_dimension_numbers<[1], [1], [0], [0], [0, 0, 1, 0], [], []>} : vector<5x8xbf16>, vector<5x8xbf16>, vector<5x5xf32> -> vector<5x5xf32>
    %cst_21 = arith.constant dense<0xFF800000> : vector<5xf32>
    %45 = vector.multi_reduction <maximumf>, %44, %cst_21 [1] : vector<5x5xf32> to vector<5xf32>
    %46 = vector.shape_cast %45 : vector<5xf32> to vector<5x1xf32>
    %47 = vector.broadcast %46 : vector<5x1xf32> to vector<5x5xf32>
    %48 = arith.subf %44, %47 : vector<5x5xf32>
    %49 = math.exp %48 : vector<5x5xf32>
    %cst_22 = arith.constant dense<0.000000e+00> : vector<5xf32>
    %50 = vector.multi_reduction <add>, %49, %cst_22 [1] : vector<5x5xf32> to vector<5xf32>
    %51 = vector.shape_cast %50 : vector<5xf32> to vector<5x1xf32>
    %52 = tpu.reciprocal %51 : vector<5x1xf32> -> vector<5x1xf32>
    %53 = vector.broadcast %52 : vector<5x1xf32> to vector<5x5xf32>
    %54 = arith.mulf %49, %53 : vector<5x5xf32>
    %55 = arith.truncf %54 : vector<5x5xf32> to vector<5x5xbf16>
    %cst_23 = arith.constant dense<0.000000e+00> : vector<5x8xf32>
    %56 = tpu.matmul %55, %43, %cst_23 {dimension_numbers = #tpu.dot_dimension_numbers<[1], [0], [0], [1], [0, 0, 1, 1], [], []>} : vector<5x5xbf16>, vector<5x8xbf16>, vector<5x8xf32> -> vector<5x8xf32>
    %c0_24 = arith.constant 0 : index
    %c0_25 = arith.constant 0 : index
    %57 = vector.load %arg18[%c0_24, %c0_25] : memref<5x32xf32, #tpu.memory_space<vmem>>, vector<5x8xf32>
    tpu.vector_store %arg18[%c0_24, %c0_25], %56 {strides = array<i32>} : memref<5x32xf32, #tpu.memory_space<vmem>>, vector<5x8xf32>,
    %58 = vector.extract_strided_slice %37 {offsets = [0, 8], sizes = [5, 8], strides = [1, 1]} : vector<5x96xf32> to vector<5x8xf32>
    %59 = arith.truncf %58 : vector<5x8xf32> to vector<5x8xbf16>
    %60 = vector.extract_strided_slice %37 {offsets = [0, 40], sizes = [5, 8], strides = [1, 1]} : vector<5x96xf32> to vector<5x8xf32>
    %61 = arith.truncf %60 : vector<5x8xf32> to vector<5x8xbf16>
    %62 = vector.extract_strided_slice %37 {offsets = [0, 72], sizes = [5, 8], strides = [1, 1]} : vector<5x96xf32> to vector<5x8xf32>
    %63 = arith.truncf %62 : vector<5x8xf32> to vector<5x8xbf16>
    %cst_26 = arith.constant dense<0.000000e+00> : vector<5x5xf32>
    %64 = tpu.matmul %59, %61, %cst_26 {dimension_numbers = #tpu.dot_dimension_numbers<[1], [1], [0], [0], [0, 0, 1, 0], [], []>} : vector<5x8xbf16>, vector<5x8xbf16>, vector<5x5xf32> -> vector<5x5xf32>
    %cst_27 = arith.constant dense<0xFF800000> : vector<5xf32>
    %65 = vector.multi_reduction <maximumf>, %64, %cst_27 [1] : vector<5x5xf32> to vector<5xf32>
    %66 = vector.shape_cast %65 : vector<5xf32> to vector<5x1xf32>
    %67 = vector.broadcast %66 : vector<5x1xf32> to vector<5x5xf32>
    %68 = arith.subf %64, %67 : vector<5x5xf32>
    %69 = math.exp %68 : vector<5x5xf32>
    %cst_28 = arith.constant dense<0.000000e+00> : vector<5xf32>
    %70 = vector.multi_reduction <add>, %69, %cst_28 [1] : vector<5x5xf32> to vector<5xf32>
    %71 = vector.shape_cast %70 : vector<5xf32> to vector<5x1xf32>
    %72 = tpu.reciprocal %71 : vector<5x1xf32> -> vector<5x1xf32>
    %73 = vector.broadcast %72 : vector<5x1xf32> to vector<5x5xf32>
    %74 = arith.mulf %69, %73 : vector<5x5xf32>
    %75 = arith.truncf %74 : vector<5x5xf32> to vector<5x5xbf16>
    %cst_29 = arith.constant dense<0.000000e+00> : vector<5x8xf32>
    %76 = tpu.matmul %75, %63, %cst_29 {dimension_numbers = #tpu.dot_dimension_numbers<[1], [0], [0], [1], [0, 0, 1, 1], [], []>} : vector<5x5xbf16>, vector<5x8xbf16>, vector<5x8xf32> -> vector<5x8xf32>
    %c0_30 = arith.constant 0 : index
    %c8 = arith.constant 8 : index
    %77 = vector.load %arg18[%c0_30, %c8] : memref<5x32xf32, #tpu.memory_space<vmem>>, vector<5x8xf32>
    tpu.vector_store %arg18[%c0_30, %c8], %76 {strides = array<i32>} : memref<5x32xf32, #tpu.memory_space<vmem>>, vector<5x8xf32>,
    %78 = vector.extract_strided_slice %37 {offsets = [0, 16], sizes = [5, 8], strides = [1, 1]} : vector<5x96xf32> to vector<5x8xf32>
    %79 = arith.truncf %78 : vector<5x8xf32> to vector<5x8xbf16>
    %80 = vector.extract_strided_slice %37 {offsets = [0, 48], sizes = [5, 8], strides = [1, 1]} : vector<5x96xf32> to vector<5x8xf32>
    %81 = arith.truncf %80 : vector<5x8xf32> to vector<5x8xbf16>
    %82 = vector.extract_strided_slice %37 {offsets = [0, 80], sizes = [5, 8], strides = [1, 1]} : vector<5x96xf32> to vector<5x8xf32>
    %83 = arith.truncf %82 : vector<5x8xf32> to vector<5x8xbf16>
    %cst_31 = arith.constant dense<0.000000e+00> : vector<5x5xf32>
    %84 = tpu.matmul %79, %81, %cst_31 {dimension_numbers = #tpu.dot_dimension_numbers<[1], [1], [0], [0], [0, 0, 1, 0], [], []>} : vector<5x8xbf16>, vector<5x8xbf16>, vector<5x5xf32> -> vector<5x5xf32>
    %cst_32 = arith.constant dense<0xFF800000> : vector<5xf32>
    %85 = vector.multi_reduction <maximumf>, %84, %cst_32 [1] : vector<5x5xf32> to vector<5xf32>
    %86 = vector.shape_cast %85 : vector<5xf32> to vector<5x1xf32>
    %87 = vector.broadcast %86 : vector<5x1xf32> to vector<5x5xf32>
    %88 = arith.subf %84, %87 : vector<5x5xf32>
    %89 = math.exp %88 : vector<5x5xf32>
    %cst_33 = arith.constant dense<0.000000e+00> : vector<5xf32>
    %90 = vector.multi_reduction <add>, %89, %cst_33 [1] : vector<5x5xf32> to vector<5xf32>
    %91 = vector.shape_cast %90 : vector<5xf32> to vector<5x1xf32>
    %92 = tpu.reciprocal %91 : vector<5x1xf32> -> vector<5x1xf32>
    %93 = vector.broadcast %92 : vector<5x1xf32> to vector<5x5xf32>
    %94 = arith.mulf %89, %93 : vector<5x5xf32>
    %95 = arith.truncf %94 : vector<5x5xf32> to vector<5x5xbf16>
    %cst_34 = arith.constant dense<0.000000e+00> : vector<5x8xf32>
    %96 = tpu.matmul %95, %83, %cst_34 {dimension_numbers = #tpu.dot_dimension_numbers<[1], [0], [0], [1], [0, 0, 1, 1], [], []>} : vector<5x5xbf16>, vector<5x8xbf16>, vector<5x8xf32> -> vector<5x8xf32>
    %c0_35 = arith.constant 0 : index
    %c16 = arith.constant 16 : index
    %97 = vector.load %arg18[%c0_35, %c16] : memref<5x32xf32, #tpu.memory_space<vmem>>, vector<5x8xf32>
    tpu.vector_store %arg18[%c0_35, %c16], %96 {strides = array<i32>} : memref<5x32xf32, #tpu.memory_space<vmem>>, vector<5x8xf32>,
    %98 = vector.extract_strided_slice %37 {offsets = [0, 24], sizes = [5, 8], strides = [1, 1]} : vector<5x96xf32> to vector<5x8xf32>
    %99 = arith.truncf %98 : vector<5x8xf32> to vector<5x8xbf16>
    %100 = vector.extract_strided_slice %37 {offsets = [0, 56], sizes = [5, 8], strides = [1, 1]} : vector<5x96xf32> to vector<5x8xf32>
    %101 = arith.truncf %100 : vector<5x8xf32> to vector<5x8xbf16>
    %102 = vector.extract_strided_slice %37 {offsets = [0, 88], sizes = [5, 8], strides = [1, 1]} : vector<5x96xf32> to vector<5x8xf32>
    %103 = arith.truncf %102 : vector<5x8xf32> to vector<5x8xbf16>
    %cst_36 = arith.constant dense<0.000000e+00> : vector<5x5xf32>
    %104 = tpu.matmul %99, %101, %cst_36 {dimension_numbers = #tpu.dot_dimension_numbers<[1], [1], [0], [0], [0, 0, 1, 0], [], []>} : vector<5x8xbf16>, vector<5x8xbf16>, vector<5x5xf32> -> vector<5x5xf32>
    %cst_37 = arith.constant dense<0xFF800000> : vector<5xf32>
    %105 = vector.multi_reduction <maximumf>, %104, %cst_37 [1] : vector<5x5xf32> to vector<5xf32>
    %106 = vector.shape_cast %105 : vector<5xf32> to vector<5x1xf32>
    %107 = vector.broadcast %106 : vector<5x1xf32> to vector<5x5xf32>
    %108 = arith.subf %104, %107 : vector<5x5xf32>
    %109 = math.exp %108 : vector<5x5xf32>
    %cst_38 = arith.constant dense<0.000000e+00> : vector<5xf32>
    %110 = vector.multi_reduction <add>, %109, %cst_38 [1] : vector<5x5xf32> to vector<5xf32>
    %111 = vector.shape_cast %110 : vector<5xf32> to vector<5x1xf32>
    %112 = tpu.reciprocal %111 : vector<5x1xf32> -> vector<5x1xf32>
    %113 = vector.broadcast %112 : vector<5x1xf32> to vector<5x5xf32>
    %114 = arith.mulf %109, %113 : vector<5x5xf32>
    %115 = arith.truncf %114 : vector<5x5xf32> to vector<5x5xbf16>
    %cst_39 = arith.constant dense<0.000000e+00> : vector<5x8xf32>
    %116 = tpu.matmul %115, %103, %cst_39 {dimension_numbers = #tpu.dot_dimension_numbers<[1], [0], [0], [1], [0, 0, 1, 1], [], []>} : vector<5x5xbf16>, vector<5x8xbf16>, vector<5x8xf32> -> vector<5x8xf32>
    %c0_40 = arith.constant 0 : index
    %c24 = arith.constant 24 : index
    %117 = vector.load %arg18[%c0_40, %c24] : memref<5x32xf32, #tpu.memory_space<vmem>>, vector<5x8xf32>
    tpu.vector_store %arg18[%c0_40, %c24], %116 {strides = array<i32>} : memref<5x32xf32, #tpu.memory_space<vmem>>, vector<5x8xf32>,
    %c0_41 = arith.constant 0 : index
    %c0_42 = arith.constant 0 : index
    %118 = vector.load %arg18[%c0_41, %c0_42] : memref<5x32xf32, #tpu.memory_space<vmem>>, vector<5x32xf32>
    %119 = arith.truncf %118 : vector<5x32xf32> to vector<5x32xbf16>
    %c0_43 = arith.constant 0 : index
    %c0_44 = arith.constant 0 : index
    %c0_45 = arith.constant 0 : index
    %120 = vector.load %arg9[%c0_43, %c0_44, %c0_45] : memref<1x32x32xbf16, #tpu.memory_space<vmem>>, vector<1x32x32xbf16>
    %121 = vector.shape_cast %120 : vector<1x32x32xbf16> to vector<32x32xbf16>
    %cst_46 = arith.constant dense<0.000000e+00> : vector<5x32xf32>
    %122 = tpu.matmul %119, %121, %cst_46 {dimension_numbers = #tpu.dot_dimension_numbers<[1], [0], [0], [1], [0, 0, 1, 1], [], []>} : vector<5x32xbf16>, vector<32x32xbf16>, vector<5x32xf32> -> vector<5x32xf32>
    %c0_47 = arith.constant 0 : index
    %c0_48 = arith.constant 0 : index
    %c0_49 = arith.constant 0 : index
    %123 = vector.load %arg10[%c0_47, %c0_48, %c0_49] : memref<1x1x32xf32, #tpu.memory_space<vmem>>, vector<1x1x32xf32>
    %124 = vector.shape_cast %123 : vector<1x1x32xf32> to vector<1x32xf32>
    %125 = vector.broadcast %124 : vector<1x32xf32> to vector<5x32xf32>
    %126 = arith.addf %122, %125 : vector<5x32xf32>
    %127 = arith.addf %4, %126 : vector<5x32xf32>
    %c0_50 = arith.constant 0 : index
    %c0_51 = arith.constant 0 : index
    %c0_52 = arith.constant 0 : index
    %128 = vector.load %arg11[%c0_50, %c0_51, %c0_52] : memref<1x1x32xf32, #tpu.memory_space<vmem>>, vector<1x1x32xf32>
    %129 = vector.shape_cast %128 : vector<1x1x32xf32> to vector<1x32xf32>
    %c0_53 = arith.constant 0 : index
    %c0_54 = arith.constant 0 : index
    %c0_55 = arith.constant 0 : index
    %130 = vector.load %arg12[%c0_53, %c0_54, %c0_55] : memref<1x1x32xf32, #tpu.memory_space<vmem>>, vector<1x1x32xf32>
    %131 = vector.shape_cast %130 : vector<1x1x32xf32> to vector<1x32xf32>
    %cst_56 = arith.constant dense<0.000000e+00> : vector<5xf32>
    %132 = vector.multi_reduction <add>, %127, %cst_56 [1] : vector<5x32xf32> to vector<5xf32>
    %133 = vector.shape_cast %132 : vector<5xf32> to vector<5x1xf32>
    %cst_57 = arith.constant 3.200000e+01 : f32
    %134 = vector.broadcast %cst_57 : f32 to vector<5x1xf32>
    %135 = arith.divf %133, %134 : vector<5x1xf32>
    %136 = vector.broadcast %135 : vector<5x1xf32> to vector<5x32xf32>
    %137 = arith.subf %127, %136 : vector<5x32xf32>
    %138 = arith.mulf %137, %137 : vector<5x32xf32>
    %cst_58 = arith.constant dense<0.000000e+00> : vector<5xf32>
    %139 = vector.multi_reduction <add>, %138, %cst_58 [1] : vector<5x32xf32> to vector<5xf32>
    %140 = vector.shape_cast %139 : vector<5xf32> to vector<5x1xf32>
    %cst_59 = arith.constant 0.0322580636 : f32
    %141 = vector.broadcast %cst_59 : f32 to vector<5x1xf32>
    %142 = arith.mulf %140, %141 : vector<5x1xf32>
    %143 = math.sqrt %142 : vector<5x1xf32>
    %cst_60 = arith.constant 9.99999997E-7 : f32
    %144 = vector.broadcast %cst_60 : f32 to vector<5x1xf32>
    %145 = arith.addf %143, %144 : vector<5x1xf32>
    %146 = tpu.reciprocal %145 : vector<5x1xf32> -> vector<5x1xf32>
    %147 = vector.broadcast %146 : vector<5x1xf32> to vector<5x32xf32>
    %148 = arith.mulf %137, %147 : vector<5x32xf32>
    %149 = vector.broadcast %129 : vector<1x32xf32> to vector<5x32xf32>
    %150 = arith.mulf %148, %149 : vector<5x32xf32>
    %151 = vector.broadcast %131 : vector<1x32xf32> to vector<5x32xf32>
    %152 = arith.addf %150, %151 : vector<5x32xf32>
    %153 = arith.truncf %152 : vector<5x32xf32> to vector<5x32xbf16>
    %c0_61 = arith.constant 0 : index
    %c0_62 = arith.constant 0 : index
    %c0_63 = arith.constant 0 : index
    %154 = vector.load %arg13[%c0_61, %c0_62, %c0_63] : memref<1x32x64xbf16, #tpu.memory_space<vmem>>, vector<1x32x64xbf16>
    %155 = vector.shape_cast %154 : vector<1x32x64xbf16> to vector<32x64xbf16>
    %cst_64 = arith.constant dense<0.000000e+00> : vector<5x64xf32>
    %156 = tpu.matmul %153, %155, %cst_64 {dimension_numbers = #tpu.dot_dimension_numbers<[1], [0], [0], [1], [0, 0, 1, 1], [], []>} : vector<5x32xbf16>, vector<32x64xbf16>, vector<5x64xf32> -> vector<5x64xf32>
    %c0_65 = arith.constant 0 : index
    %c0_66 = arith.constant 0 : index
    %c0_67 = arith.constant 0 : index
    %157 = vector.load %arg14[%c0_65, %c0_66, %c0_67] : memref<1x1x64xf32, #tpu.memory_space<vmem>>, vector<1x1x64xf32>
    %158 = vector.shape_cast %157 : vector<1x1x64xf32> to vector<1x64xf32>
    %159 = vector.broadcast %158 : vector<1x64xf32> to vector<5x64xf32>
    %160 = arith.addf %156, %159 : vector<5x64xf32>
    %cst_68 = arith.constant 0.000000e+00 : f32
    %161 = vector.broadcast %cst_68 : f32 to vector<5x64xf32>
    %162 = arith.maximumf %160, %161 : vector<5x64xf32>
    %163 = arith.truncf %162 : vector<5x64xf32> to vector<5x64xbf16>
    %c0_69 = arith.constant 0 : index
    %c0_70 = arith.constant 0 : index
    %c0_71 = arith.constant 0 : index
    %164 = vector.load %arg15[%c0_69, %c0_70, %c0_71] : memref<1x64x32xbf16, #tpu.memory_space<vmem>>, vector<1x64x32xbf16>
    %165 = vector.shape_cast %164 : vector<1x64x32xbf16> to vector<64x32xbf16>
    %cst_72 = arith.constant dense<0.000000e+00> : vector<5x32xf32>
    %166 = tpu.matmul %163, %165, %cst_72 {dimension_numbers = #tpu.dot_dimension_numbers<[1], [0], [0], [1], [0, 0, 1, 1], [], []>} : vector<5x64xbf16>, vector<64x32xbf16>, vector<5x32xf32> -> vector<5x32xf32>
    %c0_73 = arith.constant 0 : index
    %c0_74 = arith.constant 0 : index
    %c0_75 = arith.constant 0 : index
    %167 = vector.load %arg16[%c0_73, %c0_74, %c0_75] : memref<1x1x32xf32, #tpu.memory_space<vmem>>, vector<1x1x32xf32>
    %168 = vector.shape_cast %167 : vector<1x1x32xf32> to vector<1x32xf32>
    %169 = vector.broadcast %168 : vector<1x32xf32> to vector<5x32xf32>
    %170 = arith.addf %166, %169 : vector<5x32xf32>
    %171 = arith.addf %127, %170 : vector<5x32xf32>
    %c0_76 = arith.constant 0 : index
    %c0_77 = arith.constant 0 : index
    %c0_78 = arith.constant 0 : index
    %172 = vector.load %arg17[%c0_76, %c0_77, %c0_78] : memref<1x5x32xf32, #tpu.memory_space<vmem>>, vector<1x5x32xf32>
    %173 = vector.shape_cast %172 : vector<1x5x32xf32> to vector<5x32xf32>
    %174 = vector.shape_cast %171 : vector<5x32xf32> to vector<1x5x32xf32>
    tpu.vector_store %arg17[%c0_76, %c0_77, %c0_78], %174 {strides = array<i32>} : memref<1x5x32xf32, #tpu.memory_space<vmem>>, vector<1x5x32xf32>,
    return
  }
  func.func @transform_0(%arg0: i32, %arg1: i32) -> (i32, i32, i32) {
    %c0_i32 = arith.constant 0 : i32
    %c0_i32_0 = arith.constant 0 : i32
    %c0_i32_1 = arith.constant 0 : i32
    return %arg0, %c0_i32, %c0_i32_0 : i32, i32, i32
  }
  func.func @transform_1(%arg0: i32, %arg1: i32) -> (i32, i32) {
    %c0_i32 = arith.constant 0 : i32
    %c0_i32_0 = arith.constant 0 : i32
    %c0_i32_1 = arith.constant 0 : i32
    return %c0_i32, %c0_i32_0 : i32, i32
  }
  func.func @transform_2(%arg0: i32, %arg1: i32) -> (i32, i32) {
    %c0_i32 = arith.constant 0 : i32
    %c0_i32_0 = arith.constant 0 : i32
    %c0_i32_1 = arith.constant 0 : i32
    return %c0_i32, %c0_i32_0 : i32, i32
  }
  func.func @transform_3(%arg0: i32, %arg1: i32) -> (i32, i32, i32) {
    %c0_i32 = arith.constant 0 : i32
    %c0_i32_0 = arith.constant 0 : i32
    %c0_i32_1 = arith.constant 0 : i32
    return %arg1, %c0_i32, %c0_i32_0 : i32, i32, i32
  }
  func.func @transform_4(%arg0: i32, %arg1: i32) -> (i32, i32, i32) {
    %c0_i32 = arith.constant 0 : i32
    %c0_i32_0 = arith.constant 0 : i32
    %c0_i32_1 = arith.constant 0 : i32
    return %arg1, %c0_i32, %c0_i32_0 : i32, i32, i32
  }
  func.func @transform_5(%arg0: i32, %arg1: i32) -> (i32, i32, i32) {
    %c0_i32 = arith.constant 0 : i32
    %c0_i32_0 = arith.constant 0 : i32
    %c0_i32_1 = arith.constant 0 : i32
    return %arg1, %c0_i32, %c0_i32_0 : i32, i32, i32
  }
  func.func @transform_6(%arg0: i32, %arg1: i32) -> (i32, i32, i32) {
    %c0_i32 = arith.constant 0 : i32
    %c0_i32_0 = arith.constant 0 : i32
    %c0_i32_1 = arith.constant 0 : i32
    return %arg1, %c0_i32, %c0_i32_0 : i32, i32, i32
  }
  func.func @transform_7(%arg0: i32, %arg1: i32) -> (i32, i32, i32) {
    %c0_i32 = arith.constant 0 : i32
    %c0_i32_0 = arith.constant 0 : i32
    %c0_i32_1 = arith.constant 0 : i32
    return %arg1, %c0_i32, %c0_i32_0 : i32, i32, i32
  }
  func.func @transform_8(%arg0: i32, %arg1: i32) -> (i32, i32, i32) {
    %c0_i32 = arith.constant 0 : i32
    %c0_i32_0 = arith.constant 0 : i32
    %c0_i32_1 = arith.constant 0 : i32
    return %arg1, %c0_i32, %c0_i32_0 : i32, i32, i32
  }
  func.func @transform_9(%arg0: i32, %arg1: i32) -> (i32, i32, i32) {
    %c0_i32 = arith.constant 0 : i32
    %c0_i32_0 = arith.constant 0 : i32
    %c0_i32_1 = arith.constant 0 : i32
    return %arg1, %c0_i32, %c0_i32_0 : i32, i32, i32
  }
  func.func @transform_10(%arg0: i32, %arg1: i32) -> (i32, i32, i32) {
    %c0_i32 = arith.constant 0 : i32
    %c0_i32_0 = arith.constant 0 : i32
    %c0_i32_1 = arith.constant 0 : i32
    return %arg1, %c0_i32, %c0_i32_0 : i32, i32, i32
  }
  func.func @transform_11(%arg0: i32, %arg1: i32) -> (i32, i32, i32) {
    %c0_i32 = arith.constant 0 : i32
    %c0_i32_0 = arith.constant 0 : i32
    %c0_i32_1 = arith.constant 0 : i32
    return %arg1, %c0_i32, %c0_i32_0 : i32, i32, i32
  }
  func.func @transform_12(%arg0: i32, %arg1: i32) -> (i32, i32, i32) {
    %c0_i32 = arith.constant 0 : i32
    %c0_i32_0 = arith.constant 0 : i32
    %c0_i32_1 = arith.constant 0 : i32
    return %arg1, %c0_i32, %c0_i32_0 : i32, i32, i32
  }
  func.func @transform_13(%arg0: i32, %arg1: i32) -> (i32, i32, i32) {
    %c0_i32 = arith.constant 0 : i32
    %c0_i32_0 = arith.constant 0 : i32
    %c0_i32_1 = arith.constant 0 : i32
    return %arg1, %c0_i32, %c0_i32_0 : i32, i32, i32
  }
  func.func @transform_14(%arg0: i32, %arg1: i32) -> (i32, i32, i32) {
    %c0_i32 = arith.constant 0 : i32
    %c0_i32_0 = arith.constant 0 : i32
    %c0_i32_1 = arith.constant 0 : i32
    return %arg1, %c0_i32, %c0_i32_0 : i32, i32, i32
  }
  func.func @transform_15(%arg0: i32, %arg1: i32) -> (i32, i32, i32) {
    %c0_i32 = arith.constant 0 : i32
    %c0_i32_0 = arith.constant 0 : i32
    %c0_i32_1 = arith.constant 0 : i32
    return %arg0, %c0_i32, %c0_i32_0 : i32, i32, i32
  }
}

module attributes {stable_mosaic.version = 11 : i64} {
  func.func @_transformer_kernel(%arg0: i32, %arg1: i32, %arg2: memref<1x6x32xf32, #tpu.memory_space<vmem>>, %arg3: memref<1x32xf32, #tpu.memory_space<vmem>>, %arg4: memref<1x32xf32, #tpu.memory_space<vmem>>, %arg5: memref<1x1x32xf32, #tpu.memory_space<vmem>>, %arg6: memref<1x1x32xf32, #tpu.memory_space<vmem>>, %arg7: memref<1x32x96xbf16, #tpu.memory_space<vmem>>, %arg8: memref<1x1x96xf32, #tpu.memory_space<vmem>>, %arg9: memref<1x32x32xbf16, #tpu.memory_space<vmem>>, %arg10: memref<1x1x32xf32, #tpu.memory_space<vmem>>, %arg11: memref<1x1x32xf32, #tpu.memory_space<vmem>>, %arg12: memref<1x1x32xf32, #tpu.memory_space<vmem>>, %arg13: memref<1x32x64xbf16, #tpu.memory_space<vmem>>, %arg14: memref<1x1x64xf32, #tpu.memory_space<vmem>>, %arg15: memref<1x64x32xbf16, #tpu.memory_space<vmem>>, %arg16: memref<1x1x32xf32, #tpu.memory_space<vmem>>, %arg17: memref<1x6x32xf32, #tpu.memory_space<vmem>>, %arg18: memref<6x32xf32, #tpu.memory_space<vmem>>) attributes {dimension_semantics = [#tpu.dimension_semantics<parallel>, #tpu.dimension_semantics<arbitrary>], iteration_bounds = array<i64: 2, 1>, scalar_prefetch = 0 : i64, scratch_operands = 1 : i64, tpu.core_type = #tpu.core_type<tc>, window_params = [{transform_indices = @transform_0, window_bounds = array<i64: 1, 6, 32>}, {pipeline_mode = #tpu.pipeline_mode<synchronous>, transform_indices = @transform_1, window_bounds = array<i64: 1, 32>}, {pipeline_mode = #tpu.pipeline_mode<synchronous>, transform_indices = @transform_2, window_bounds = array<i64: 1, 32>}, {transform_indices = @transform_3, window_bounds = array<i64: 1, 1, 32>}, {transform_indices = @transform_4, window_bounds = array<i64: 1, 1, 32>}, {transform_indices = @transform_5, window_bounds = array<i64: 1, 32, 96>}, {transform_indices = @transform_6, window_bounds = array<i64: 1, 1, 96>}, {transform_indices = @transform_7, window_bounds = array<i64: 1, 32, 32>}, {transform_indices = @transform_8, window_bounds = array<i64: 1, 1, 32>}, {transform_indices = @transform_9, window_bounds = array<i64: 1, 1, 32>}, {transform_indices = @transform_10, window_bounds = array<i64: 1, 1, 32>}, {transform_indices = @transform_11, window_bounds = array<i64: 1, 32, 64>}, {transform_indices = @transform_12, window_bounds = array<i64: 1, 1, 64>}, {transform_indices = @transform_13, window_bounds = array<i64: 1, 64, 32>}, {transform_indices = @transform_14, window_bounds = array<i64: 1, 1, 32>}, {transform_indices = @transform_15, window_bounds = array<i64: 1, 6, 32>}]} {
    %c0_i32 = arith.constant 0 : i32
    %0 = arith.cmpi eq, %arg1, %c0_i32 : i32
    %1 = arith.extui %0 : i1 to i32
    %c0_i32_0 = arith.constant 0 : i32
    %2 = arith.cmpi ne, %1, %c0_i32_0 : i32
    scf.if %2 {
      %c0_79 = arith.constant 0 : index
      %c0_80 = arith.constant 0 : index
      %c0_81 = arith.constant 0 : index
      %175 = vector.load %arg2[%c0_79, %c0_80, %c0_81] : memref<1x6x32xf32, #tpu.memory_space<vmem>>, vector<1x6x32xf32>
      %176 = vector.shape_cast %175 : vector<1x6x32xf32> to vector<6x32xf32>
      %c0_82 = arith.constant 0 : index
      %c0_83 = arith.constant 0 : index
      %177 = vector.load %arg3[%c0_82, %c0_83] : memref<1x32xf32, #tpu.memory_space<vmem>>, vector<1x32xf32>
      %c0_84 = arith.constant 0 : index
      %c0_85 = arith.constant 0 : index
      %178 = vector.load %arg4[%c0_84, %c0_85] : memref<1x32xf32, #tpu.memory_space<vmem>>, vector<1x32xf32>
      %cst_86 = arith.constant dense<0.000000e+00> : vector<6xf32>
      %179 = vector.multi_reduction <add>, %176, %cst_86 [1] : vector<6x32xf32> to vector<6xf32>
      %180 = vector.shape_cast %179 : vector<6xf32> to vector<6x1xf32>
      %cst_87 = arith.constant 3.200000e+01 : f32
      %181 = vector.broadcast %cst_87 : f32 to vector<6x1xf32>
      %182 = arith.divf %180, %181 : vector<6x1xf32>
      %183 = vector.broadcast %182 : vector<6x1xf32> to vector<6x32xf32>
      %184 = arith.subf %176, %183 : vector<6x32xf32>
      %185 = arith.mulf %184, %184 : vector<6x32xf32>
      %cst_88 = arith.constant dense<0.000000e+00> : vector<6xf32>
      %186 = vector.multi_reduction <add>, %185, %cst_88 [1] : vector<6x32xf32> to vector<6xf32>
      %187 = vector.shape_cast %186 : vector<6xf32> to vector<6x1xf32>
      %cst_89 = arith.constant 0.0322580636 : f32
      %188 = vector.broadcast %cst_89 : f32 to vector<6x1xf32>
      %189 = arith.mulf %187, %188 : vector<6x1xf32>
      %190 = math.sqrt %189 : vector<6x1xf32>
      %cst_90 = arith.constant 9.99999997E-7 : f32
      %191 = vector.broadcast %cst_90 : f32 to vector<6x1xf32>
      %192 = arith.addf %190, %191 : vector<6x1xf32>
      %193 = tpu.reciprocal %192 : vector<6x1xf32> -> vector<6x1xf32>
      %194 = vector.broadcast %193 : vector<6x1xf32> to vector<6x32xf32>
      %195 = arith.mulf %184, %194 : vector<6x32xf32>
      %196 = vector.broadcast %177 : vector<1x32xf32> to vector<6x32xf32>
      %197 = arith.mulf %195, %196 : vector<6x32xf32>
      %198 = vector.broadcast %178 : vector<1x32xf32> to vector<6x32xf32>
      %199 = arith.addf %197, %198 : vector<6x32xf32>
      %c0_91 = arith.constant 0 : index
      %c0_92 = arith.constant 0 : index
      %c0_93 = arith.constant 0 : index
      %200 = vector.load %arg17[%c0_91, %c0_92, %c0_93] : memref<1x6x32xf32, #tpu.memory_space<vmem>>, vector<1x6x32xf32>
      %201 = vector.shape_cast %200 : vector<1x6x32xf32> to vector<6x32xf32>
      %202 = vector.shape_cast %199 : vector<6x32xf32> to vector<1x6x32xf32>
      tpu.vector_store %arg17[%c0_91, %c0_92, %c0_93], %202 {strides = array<i32>} : memref<1x6x32xf32, #tpu.memory_space<vmem>>, vector<1x6x32xf32>,
    } else {
    }
    %c0 = arith.constant 0 : index
    %c0_1 = arith.constant 0 : index
    %c0_2 = arith.constant 0 : index
    %3 = vector.load %arg17[%c0, %c0_1, %c0_2] : memref<1x6x32xf32, #tpu.memory_space<vmem>>, vector<1x6x32xf32>
    %4 = vector.shape_cast %3 : vector<1x6x32xf32> to vector<6x32xf32>
    %c0_3 = arith.constant 0 : index
    %c0_4 = arith.constant 0 : index
    %c0_5 = arith.constant 0 : index
    %5 = vector.load %arg5[%c0_3, %c0_4, %c0_5] : memref<1x1x32xf32, #tpu.memory_space<vmem>>, vector<1x1x32xf32>
    %6 = vector.shape_cast %5 : vector<1x1x32xf32> to vector<1x32xf32>
    %c0_6 = arith.constant 0 : index
    %c0_7 = arith.constant 0 : index
    %c0_8 = arith.constant 0 : index
    %7 = vector.load %arg6[%c0_6, %c0_7, %c0_8] : memref<1x1x32xf32, #tpu.memory_space<vmem>>, vector<1x1x32xf32>
    %8 = vector.shape_cast %7 : vector<1x1x32xf32> to vector<1x32xf32>
    %cst = arith.constant dense<0.000000e+00> : vector<6xf32>
    %9 = vector.multi_reduction <add>, %4, %cst [1] : vector<6x32xf32> to vector<6xf32>
    %10 = vector.shape_cast %9 : vector<6xf32> to vector<6x1xf32>
    %cst_9 = arith.constant 3.200000e+01 : f32
    %11 = vector.broadcast %cst_9 : f32 to vector<6x1xf32>
    %12 = arith.divf %10, %11 : vector<6x1xf32>
    %13 = vector.broadcast %12 : vector<6x1xf32> to vector<6x32xf32>
    %14 = arith.subf %4, %13 : vector<6x32xf32>
    %15 = arith.mulf %14, %14 : vector<6x32xf32>
    %cst_10 = arith.constant dense<0.000000e+00> : vector<6xf32>
    %16 = vector.multi_reduction <add>, %15, %cst_10 [1] : vector<6x32xf32> to vector<6xf32>
    %17 = vector.shape_cast %16 : vector<6xf32> to vector<6x1xf32>
    %cst_11 = arith.constant 0.0322580636 : f32
    %18 = vector.broadcast %cst_11 : f32 to vector<6x1xf32>
    %19 = arith.mulf %17, %18 : vector<6x1xf32>
    %20 = math.sqrt %19 : vector<6x1xf32>
    %cst_12 = arith.constant 9.99999997E-7 : f32
    %21 = vector.broadcast %cst_12 : f32 to vector<6x1xf32>
    %22 = arith.addf %20, %21 : vector<6x1xf32>
    %23 = tpu.reciprocal %22 : vector<6x1xf32> -> vector<6x1xf32>
    %24 = vector.broadcast %23 : vector<6x1xf32> to vector<6x32xf32>
    %25 = arith.mulf %14, %24 : vector<6x32xf32>
    %26 = vector.broadcast %6 : vector<1x32xf32> to vector<6x32xf32>
    %27 = arith.mulf %25, %26 : vector<6x32xf32>
    %28 = vector.broadcast %8 : vector<1x32xf32> to vector<6x32xf32>
    %29 = arith.addf %27, %28 : vector<6x32xf32>
    %30 = arith.truncf %29 : vector<6x32xf32> to vector<6x32xbf16>
    %c0_13 = arith.constant 0 : index
    %c0_14 = arith.constant 0 : index
    %c0_15 = arith.constant 0 : index
    %31 = vector.load %arg7[%c0_13, %c0_14, %c0_15] : memref<1x32x96xbf16, #tpu.memory_space<vmem>>, vector<1x32x96xbf16>
    %32 = vector.shape_cast %31 : vector<1x32x96xbf16> to vector<32x96xbf16>
    %cst_16 = arith.constant dense<0.000000e+00> : vector<6x96xf32>
    %33 = tpu.matmul %30, %32, %cst_16 {dimension_numbers = #tpu.dot_dimension_numbers<[1], [0], [0], [1], [0, 0, 1, 1], [], []>} : vector<6x32xbf16>, vector<32x96xbf16>, vector<6x96xf32> -> vector<6x96xf32>
    %c0_17 = arith.constant 0 : index
    %c0_18 = arith.constant 0 : index
    %c0_19 = arith.constant 0 : index
    %34 = vector.load %arg8[%c0_17, %c0_18, %c0_19] : memref<1x1x96xf32, #tpu.memory_space<vmem>>, vector<1x1x96xf32>
    %35 = vector.shape_cast %34 : vector<1x1x96xf32> to vector<1x96xf32>
    %36 = vector.broadcast %35 : vector<1x96xf32> to vector<6x96xf32>
    %37 = arith.addf %33, %36 : vector<6x96xf32>
    %38 = vector.extract_strided_slice %37 {offsets = [0, 0], sizes = [6, 8], strides = [1, 1]} : vector<6x96xf32> to vector<6x8xf32>
    %39 = arith.truncf %38 : vector<6x8xf32> to vector<6x8xbf16>
    %40 = vector.extract_strided_slice %37 {offsets = [0, 32], sizes = [6, 8], strides = [1, 1]} : vector<6x96xf32> to vector<6x8xf32>
    %41 = arith.truncf %40 : vector<6x8xf32> to vector<6x8xbf16>
    %42 = vector.extract_strided_slice %37 {offsets = [0, 64], sizes = [6, 8], strides = [1, 1]} : vector<6x96xf32> to vector<6x8xf32>
    %43 = arith.truncf %42 : vector<6x8xf32> to vector<6x8xbf16>
    %cst_20 = arith.constant dense<0.000000e+00> : vector<6x6xf32>
    %44 = tpu.matmul %39, %41, %cst_20 {dimension_numbers = #tpu.dot_dimension_numbers<[1], [1], [0], [0], [0, 0, 1, 0], [], []>} : vector<6x8xbf16>, vector<6x8xbf16>, vector<6x6xf32> -> vector<6x6xf32>
    %cst_21 = arith.constant dense<0xFF800000> : vector<6xf32>
    %45 = vector.multi_reduction <maximumf>, %44, %cst_21 [1] : vector<6x6xf32> to vector<6xf32>
    %46 = vector.shape_cast %45 : vector<6xf32> to vector<6x1xf32>
    %47 = vector.broadcast %46 : vector<6x1xf32> to vector<6x6xf32>
    %48 = arith.subf %44, %47 : vector<6x6xf32>
    %49 = math.exp %48 : vector<6x6xf32>
    %cst_22 = arith.constant dense<0.000000e+00> : vector<6xf32>
    %50 = vector.multi_reduction <add>, %49, %cst_22 [1] : vector<6x6xf32> to vector<6xf32>
    %51 = vector.shape_cast %50 : vector<6xf32> to vector<6x1xf32>
    %52 = tpu.reciprocal %51 : vector<6x1xf32> -> vector<6x1xf32>
    %53 = vector.broadcast %52 : vector<6x1xf32> to vector<6x6xf32>
    %54 = arith.mulf %49, %53 : vector<6x6xf32>
    %55 = arith.truncf %54 : vector<6x6xf32> to vector<6x6xbf16>
    %cst_23 = arith.constant dense<0.000000e+00> : vector<6x8xf32>
    %56 = tpu.matmul %55, %43, %cst_23 {dimension_numbers = #tpu.dot_dimension_numbers<[1], [0], [0], [1], [0, 0, 1, 1], [], []>} : vector<6x6xbf16>, vector<6x8xbf16>, vector<6x8xf32> -> vector<6x8xf32>
    %c0_24 = arith.constant 0 : index
    %c0_25 = arith.constant 0 : index
    %57 = vector.load %arg18[%c0_24, %c0_25] : memref<6x32xf32, #tpu.memory_space<vmem>>, vector<6x8xf32>
    tpu.vector_store %arg18[%c0_24, %c0_25], %56 {strides = array<i32>} : memref<6x32xf32, #tpu.memory_space<vmem>>, vector<6x8xf32>,
    %58 = vector.extract_strided_slice %37 {offsets = [0, 8], sizes = [6, 8], strides = [1, 1]} : vector<6x96xf32> to vector<6x8xf32>
    %59 = arith.truncf %58 : vector<6x8xf32> to vector<6x8xbf16>
    %60 = vector.extract_strided_slice %37 {offsets = [0, 40], sizes = [6, 8], strides = [1, 1]} : vector<6x96xf32> to vector<6x8xf32>
    %61 = arith.truncf %60 : vector<6x8xf32> to vector<6x8xbf16>
    %62 = vector.extract_strided_slice %37 {offsets = [0, 72], sizes = [6, 8], strides = [1, 1]} : vector<6x96xf32> to vector<6x8xf32>
    %63 = arith.truncf %62 : vector<6x8xf32> to vector<6x8xbf16>
    %cst_26 = arith.constant dense<0.000000e+00> : vector<6x6xf32>
    %64 = tpu.matmul %59, %61, %cst_26 {dimension_numbers = #tpu.dot_dimension_numbers<[1], [1], [0], [0], [0, 0, 1, 0], [], []>} : vector<6x8xbf16>, vector<6x8xbf16>, vector<6x6xf32> -> vector<6x6xf32>
    %cst_27 = arith.constant dense<0xFF800000> : vector<6xf32>
    %65 = vector.multi_reduction <maximumf>, %64, %cst_27 [1] : vector<6x6xf32> to vector<6xf32>
    %66 = vector.shape_cast %65 : vector<6xf32> to vector<6x1xf32>
    %67 = vector.broadcast %66 : vector<6x1xf32> to vector<6x6xf32>
    %68 = arith.subf %64, %67 : vector<6x6xf32>
    %69 = math.exp %68 : vector<6x6xf32>
    %cst_28 = arith.constant dense<0.000000e+00> : vector<6xf32>
    %70 = vector.multi_reduction <add>, %69, %cst_28 [1] : vector<6x6xf32> to vector<6xf32>
    %71 = vector.shape_cast %70 : vector<6xf32> to vector<6x1xf32>
    %72 = tpu.reciprocal %71 : vector<6x1xf32> -> vector<6x1xf32>
    %73 = vector.broadcast %72 : vector<6x1xf32> to vector<6x6xf32>
    %74 = arith.mulf %69, %73 : vector<6x6xf32>
    %75 = arith.truncf %74 : vector<6x6xf32> to vector<6x6xbf16>
    %cst_29 = arith.constant dense<0.000000e+00> : vector<6x8xf32>
    %76 = tpu.matmul %75, %63, %cst_29 {dimension_numbers = #tpu.dot_dimension_numbers<[1], [0], [0], [1], [0, 0, 1, 1], [], []>} : vector<6x6xbf16>, vector<6x8xbf16>, vector<6x8xf32> -> vector<6x8xf32>
    %c0_30 = arith.constant 0 : index
    %c8 = arith.constant 8 : index
    %77 = vector.load %arg18[%c0_30, %c8] : memref<6x32xf32, #tpu.memory_space<vmem>>, vector<6x8xf32>
    tpu.vector_store %arg18[%c0_30, %c8], %76 {strides = array<i32>} : memref<6x32xf32, #tpu.memory_space<vmem>>, vector<6x8xf32>,
    %78 = vector.extract_strided_slice %37 {offsets = [0, 16], sizes = [6, 8], strides = [1, 1]} : vector<6x96xf32> to vector<6x8xf32>
    %79 = arith.truncf %78 : vector<6x8xf32> to vector<6x8xbf16>
    %80 = vector.extract_strided_slice %37 {offsets = [0, 48], sizes = [6, 8], strides = [1, 1]} : vector<6x96xf32> to vector<6x8xf32>
    %81 = arith.truncf %80 : vector<6x8xf32> to vector<6x8xbf16>
    %82 = vector.extract_strided_slice %37 {offsets = [0, 80], sizes = [6, 8], strides = [1, 1]} : vector<6x96xf32> to vector<6x8xf32>
    %83 = arith.truncf %82 : vector<6x8xf32> to vector<6x8xbf16>
    %cst_31 = arith.constant dense<0.000000e+00> : vector<6x6xf32>
    %84 = tpu.matmul %79, %81, %cst_31 {dimension_numbers = #tpu.dot_dimension_numbers<[1], [1], [0], [0], [0, 0, 1, 0], [], []>} : vector<6x8xbf16>, vector<6x8xbf16>, vector<6x6xf32> -> vector<6x6xf32>
    %cst_32 = arith.constant dense<0xFF800000> : vector<6xf32>
    %85 = vector.multi_reduction <maximumf>, %84, %cst_32 [1] : vector<6x6xf32> to vector<6xf32>
    %86 = vector.shape_cast %85 : vector<6xf32> to vector<6x1xf32>
    %87 = vector.broadcast %86 : vector<6x1xf32> to vector<6x6xf32>
    %88 = arith.subf %84, %87 : vector<6x6xf32>
    %89 = math.exp %88 : vector<6x6xf32>
    %cst_33 = arith.constant dense<0.000000e+00> : vector<6xf32>
    %90 = vector.multi_reduction <add>, %89, %cst_33 [1] : vector<6x6xf32> to vector<6xf32>
    %91 = vector.shape_cast %90 : vector<6xf32> to vector<6x1xf32>
    %92 = tpu.reciprocal %91 : vector<6x1xf32> -> vector<6x1xf32>
    %93 = vector.broadcast %92 : vector<6x1xf32> to vector<6x6xf32>
    %94 = arith.mulf %89, %93 : vector<6x6xf32>
    %95 = arith.truncf %94 : vector<6x6xf32> to vector<6x6xbf16>
    %cst_34 = arith.constant dense<0.000000e+00> : vector<6x8xf32>
    %96 = tpu.matmul %95, %83, %cst_34 {dimension_numbers = #tpu.dot_dimension_numbers<[1], [0], [0], [1], [0, 0, 1, 1], [], []>} : vector<6x6xbf16>, vector<6x8xbf16>, vector<6x8xf32> -> vector<6x8xf32>
    %c0_35 = arith.constant 0 : index
    %c16 = arith.constant 16 : index
    %97 = vector.load %arg18[%c0_35, %c16] : memref<6x32xf32, #tpu.memory_space<vmem>>, vector<6x8xf32>
    tpu.vector_store %arg18[%c0_35, %c16], %96 {strides = array<i32>} : memref<6x32xf32, #tpu.memory_space<vmem>>, vector<6x8xf32>,
    %98 = vector.extract_strided_slice %37 {offsets = [0, 24], sizes = [6, 8], strides = [1, 1]} : vector<6x96xf32> to vector<6x8xf32>
    %99 = arith.truncf %98 : vector<6x8xf32> to vector<6x8xbf16>
    %100 = vector.extract_strided_slice %37 {offsets = [0, 56], sizes = [6, 8], strides = [1, 1]} : vector<6x96xf32> to vector<6x8xf32>
    %101 = arith.truncf %100 : vector<6x8xf32> to vector<6x8xbf16>
    %102 = vector.extract_strided_slice %37 {offsets = [0, 88], sizes = [6, 8], strides = [1, 1]} : vector<6x96xf32> to vector<6x8xf32>
    %103 = arith.truncf %102 : vector<6x8xf32> to vector<6x8xbf16>
    %cst_36 = arith.constant dense<0.000000e+00> : vector<6x6xf32>
    %104 = tpu.matmul %99, %101, %cst_36 {dimension_numbers = #tpu.dot_dimension_numbers<[1], [1], [0], [0], [0, 0, 1, 0], [], []>} : vector<6x8xbf16>, vector<6x8xbf16>, vector<6x6xf32> -> vector<6x6xf32>
    %cst_37 = arith.constant dense<0xFF800000> : vector<6xf32>
    %105 = vector.multi_reduction <maximumf>, %104, %cst_37 [1] : vector<6x6xf32> to vector<6xf32>
    %106 = vector.shape_cast %105 : vector<6xf32> to vector<6x1xf32>
    %107 = vector.broadcast %106 : vector<6x1xf32> to vector<6x6xf32>
    %108 = arith.subf %104, %107 : vector<6x6xf32>
    %109 = math.exp %108 : vector<6x6xf32>
    %cst_38 = arith.constant dense<0.000000e+00> : vector<6xf32>
    %110 = vector.multi_reduction <add>, %109, %cst_38 [1] : vector<6x6xf32> to vector<6xf32>
    %111 = vector.shape_cast %110 : vector<6xf32> to vector<6x1xf32>
    %112 = tpu.reciprocal %111 : vector<6x1xf32> -> vector<6x1xf32>
    %113 = vector.broadcast %112 : vector<6x1xf32> to vector<6x6xf32>
    %114 = arith.mulf %109, %113 : vector<6x6xf32>
    %115 = arith.truncf %114 : vector<6x6xf32> to vector<6x6xbf16>
    %cst_39 = arith.constant dense<0.000000e+00> : vector<6x8xf32>
    %116 = tpu.matmul %115, %103, %cst_39 {dimension_numbers = #tpu.dot_dimension_numbers<[1], [0], [0], [1], [0, 0, 1, 1], [], []>} : vector<6x6xbf16>, vector<6x8xbf16>, vector<6x8xf32> -> vector<6x8xf32>
    %c0_40 = arith.constant 0 : index
    %c24 = arith.constant 24 : index
    %117 = vector.load %arg18[%c0_40, %c24] : memref<6x32xf32, #tpu.memory_space<vmem>>, vector<6x8xf32>
    tpu.vector_store %arg18[%c0_40, %c24], %116 {strides = array<i32>} : memref<6x32xf32, #tpu.memory_space<vmem>>, vector<6x8xf32>,
    %c0_41 = arith.constant 0 : index
    %c0_42 = arith.constant 0 : index
    %118 = vector.load %arg18[%c0_41, %c0_42] : memref<6x32xf32, #tpu.memory_space<vmem>>, vector<6x32xf32>
    %119 = arith.truncf %118 : vector<6x32xf32> to vector<6x32xbf16>
    %c0_43 = arith.constant 0 : index
    %c0_44 = arith.constant 0 : index
    %c0_45 = arith.constant 0 : index
    %120 = vector.load %arg9[%c0_43, %c0_44, %c0_45] : memref<1x32x32xbf16, #tpu.memory_space<vmem>>, vector<1x32x32xbf16>
    %121 = vector.shape_cast %120 : vector<1x32x32xbf16> to vector<32x32xbf16>
    %cst_46 = arith.constant dense<0.000000e+00> : vector<6x32xf32>
    %122 = tpu.matmul %119, %121, %cst_46 {dimension_numbers = #tpu.dot_dimension_numbers<[1], [0], [0], [1], [0, 0, 1, 1], [], []>} : vector<6x32xbf16>, vector<32x32xbf16>, vector<6x32xf32> -> vector<6x32xf32>
    %c0_47 = arith.constant 0 : index
    %c0_48 = arith.constant 0 : index
    %c0_49 = arith.constant 0 : index
    %123 = vector.load %arg10[%c0_47, %c0_48, %c0_49] : memref<1x1x32xf32, #tpu.memory_space<vmem>>, vector<1x1x32xf32>
    %124 = vector.shape_cast %123 : vector<1x1x32xf32> to vector<1x32xf32>
    %125 = vector.broadcast %124 : vector<1x32xf32> to vector<6x32xf32>
    %126 = arith.addf %122, %125 : vector<6x32xf32>
    %127 = arith.addf %4, %126 : vector<6x32xf32>
    %c0_50 = arith.constant 0 : index
    %c0_51 = arith.constant 0 : index
    %c0_52 = arith.constant 0 : index
    %128 = vector.load %arg11[%c0_50, %c0_51, %c0_52] : memref<1x1x32xf32, #tpu.memory_space<vmem>>, vector<1x1x32xf32>
    %129 = vector.shape_cast %128 : vector<1x1x32xf32> to vector<1x32xf32>
    %c0_53 = arith.constant 0 : index
    %c0_54 = arith.constant 0 : index
    %c0_55 = arith.constant 0 : index
    %130 = vector.load %arg12[%c0_53, %c0_54, %c0_55] : memref<1x1x32xf32, #tpu.memory_space<vmem>>, vector<1x1x32xf32>
    %131 = vector.shape_cast %130 : vector<1x1x32xf32> to vector<1x32xf32>
    %cst_56 = arith.constant dense<0.000000e+00> : vector<6xf32>
    %132 = vector.multi_reduction <add>, %127, %cst_56 [1] : vector<6x32xf32> to vector<6xf32>
    %133 = vector.shape_cast %132 : vector<6xf32> to vector<6x1xf32>
    %cst_57 = arith.constant 3.200000e+01 : f32
    %134 = vector.broadcast %cst_57 : f32 to vector<6x1xf32>
    %135 = arith.divf %133, %134 : vector<6x1xf32>
    %136 = vector.broadcast %135 : vector<6x1xf32> to vector<6x32xf32>
    %137 = arith.subf %127, %136 : vector<6x32xf32>
    %138 = arith.mulf %137, %137 : vector<6x32xf32>
    %cst_58 = arith.constant dense<0.000000e+00> : vector<6xf32>
    %139 = vector.multi_reduction <add>, %138, %cst_58 [1] : vector<6x32xf32> to vector<6xf32>
    %140 = vector.shape_cast %139 : vector<6xf32> to vector<6x1xf32>
    %cst_59 = arith.constant 0.0322580636 : f32
    %141 = vector.broadcast %cst_59 : f32 to vector<6x1xf32>
    %142 = arith.mulf %140, %141 : vector<6x1xf32>
    %143 = math.sqrt %142 : vector<6x1xf32>
    %cst_60 = arith.constant 9.99999997E-7 : f32
    %144 = vector.broadcast %cst_60 : f32 to vector<6x1xf32>
    %145 = arith.addf %143, %144 : vector<6x1xf32>
    %146 = tpu.reciprocal %145 : vector<6x1xf32> -> vector<6x1xf32>
    %147 = vector.broadcast %146 : vector<6x1xf32> to vector<6x32xf32>
    %148 = arith.mulf %137, %147 : vector<6x32xf32>
    %149 = vector.broadcast %129 : vector<1x32xf32> to vector<6x32xf32>
    %150 = arith.mulf %148, %149 : vector<6x32xf32>
    %151 = vector.broadcast %131 : vector<1x32xf32> to vector<6x32xf32>
    %152 = arith.addf %150, %151 : vector<6x32xf32>
    %153 = arith.truncf %152 : vector<6x32xf32> to vector<6x32xbf16>
    %c0_61 = arith.constant 0 : index
    %c0_62 = arith.constant 0 : index
    %c0_63 = arith.constant 0 : index
    %154 = vector.load %arg13[%c0_61, %c0_62, %c0_63] : memref<1x32x64xbf16, #tpu.memory_space<vmem>>, vector<1x32x64xbf16>
    %155 = vector.shape_cast %154 : vector<1x32x64xbf16> to vector<32x64xbf16>
    %cst_64 = arith.constant dense<0.000000e+00> : vector<6x64xf32>
    %156 = tpu.matmul %153, %155, %cst_64 {dimension_numbers = #tpu.dot_dimension_numbers<[1], [0], [0], [1], [0, 0, 1, 1], [], []>} : vector<6x32xbf16>, vector<32x64xbf16>, vector<6x64xf32> -> vector<6x64xf32>
    %c0_65 = arith.constant 0 : index
    %c0_66 = arith.constant 0 : index
    %c0_67 = arith.constant 0 : index
    %157 = vector.load %arg14[%c0_65, %c0_66, %c0_67] : memref<1x1x64xf32, #tpu.memory_space<vmem>>, vector<1x1x64xf32>
    %158 = vector.shape_cast %157 : vector<1x1x64xf32> to vector<1x64xf32>
    %159 = vector.broadcast %158 : vector<1x64xf32> to vector<6x64xf32>
    %160 = arith.addf %156, %159 : vector<6x64xf32>
    %cst_68 = arith.constant 0.000000e+00 : f32
    %161 = vector.broadcast %cst_68 : f32 to vector<6x64xf32>
    %162 = arith.maximumf %160, %161 : vector<6x64xf32>
    %163 = arith.truncf %162 : vector<6x64xf32> to vector<6x64xbf16>
    %c0_69 = arith.constant 0 : index
    %c0_70 = arith.constant 0 : index
    %c0_71 = arith.constant 0 : index
    %164 = vector.load %arg15[%c0_69, %c0_70, %c0_71] : memref<1x64x32xbf16, #tpu.memory_space<vmem>>, vector<1x64x32xbf16>
    %165 = vector.shape_cast %164 : vector<1x64x32xbf16> to vector<64x32xbf16>
    %cst_72 = arith.constant dense<0.000000e+00> : vector<6x32xf32>
    %166 = tpu.matmul %163, %165, %cst_72 {dimension_numbers = #tpu.dot_dimension_numbers<[1], [0], [0], [1], [0, 0, 1, 1], [], []>} : vector<6x64xbf16>, vector<64x32xbf16>, vector<6x32xf32> -> vector<6x32xf32>
    %c0_73 = arith.constant 0 : index
    %c0_74 = arith.constant 0 : index
    %c0_75 = arith.constant 0 : index
    %167 = vector.load %arg16[%c0_73, %c0_74, %c0_75] : memref<1x1x32xf32, #tpu.memory_space<vmem>>, vector<1x1x32xf32>
    %168 = vector.shape_cast %167 : vector<1x1x32xf32> to vector<1x32xf32>
    %169 = vector.broadcast %168 : vector<1x32xf32> to vector<6x32xf32>
    %170 = arith.addf %166, %169 : vector<6x32xf32>
    %171 = arith.addf %127, %170 : vector<6x32xf32>
    %c0_76 = arith.constant 0 : index
    %c0_77 = arith.constant 0 : index
    %c0_78 = arith.constant 0 : index
    %172 = vector.load %arg17[%c0_76, %c0_77, %c0_78] : memref<1x6x32xf32, #tpu.memory_space<vmem>>, vector<1x6x32xf32>
    %173 = vector.shape_cast %172 : vector<1x6x32xf32> to vector<6x32xf32>
    %174 = vector.shape_cast %171 : vector<6x32xf32> to vector<1x6x32xf32>
    tpu.vector_store %arg17[%c0_76, %c0_77, %c0_78], %174 {strides = array<i32>} : memref<1x6x32xf32, #tpu.memory_space<vmem>>, vector<1x6x32xf32>,
    return
  }
  func.func @transform_0(%arg0: i32, %arg1: i32) -> (i32, i32, i32) {
    %c0_i32 = arith.constant 0 : i32
    %c0_i32_0 = arith.constant 0 : i32
    %c0_i32_1 = arith.constant 0 : i32
    return %arg0, %c0_i32, %c0_i32_0 : i32, i32, i32
  }
  func.func @transform_1(%arg0: i32, %arg1: i32) -> (i32, i32) {
    %c0_i32 = arith.constant 0 : i32
    %c0_i32_0 = arith.constant 0 : i32
    %c0_i32_1 = arith.constant 0 : i32
    return %c0_i32, %c0_i32_0 : i32, i32
  }
  func.func @transform_2(%arg0: i32, %arg1: i32) -> (i32, i32) {
    %c0_i32 = arith.constant 0 : i32
    %c0_i32_0 = arith.constant 0 : i32
    %c0_i32_1 = arith.constant 0 : i32
    return %c0_i32, %c0_i32_0 : i32, i32
  }
  func.func @transform_3(%arg0: i32, %arg1: i32) -> (i32, i32, i32) {
    %c0_i32 = arith.constant 0 : i32
    %c0_i32_0 = arith.constant 0 : i32
    %c0_i32_1 = arith.constant 0 : i32
    return %arg1, %c0_i32, %c0_i32_0 : i32, i32, i32
  }
  func.func @transform_4(%arg0: i32, %arg1: i32) -> (i32, i32, i32) {
    %c0_i32 = arith.constant 0 : i32
    %c0_i32_0 = arith.constant 0 : i32
    %c0_i32_1 = arith.constant 0 : i32
    return %arg1, %c0_i32, %c0_i32_0 : i32, i32, i32
  }
  func.func @transform_5(%arg0: i32, %arg1: i32) -> (i32, i32, i32) {
    %c0_i32 = arith.constant 0 : i32
    %c0_i32_0 = arith.constant 0 : i32
    %c0_i32_1 = arith.constant 0 : i32
    return %arg1, %c0_i32, %c0_i32_0 : i32, i32, i32
  }
  func.func @transform_6(%arg0: i32, %arg1: i32) -> (i32, i32, i32) {
    %c0_i32 = arith.constant 0 : i32
    %c0_i32_0 = arith.constant 0 : i32
    %c0_i32_1 = arith.constant 0 : i32
    return %arg1, %c0_i32, %c0_i32_0 : i32, i32, i32
  }
  func.func @transform_7(%arg0: i32, %arg1: i32) -> (i32, i32, i32) {
    %c0_i32 = arith.constant 0 : i32
    %c0_i32_0 = arith.constant 0 : i32
    %c0_i32_1 = arith.constant 0 : i32
    return %arg1, %c0_i32, %c0_i32_0 : i32, i32, i32
  }
  func.func @transform_8(%arg0: i32, %arg1: i32) -> (i32, i32, i32) {
    %c0_i32 = arith.constant 0 : i32
    %c0_i32_0 = arith.constant 0 : i32
    %c0_i32_1 = arith.constant 0 : i32
    return %arg1, %c0_i32, %c0_i32_0 : i32, i32, i32
  }
  func.func @transform_9(%arg0: i32, %arg1: i32) -> (i32, i32, i32) {
    %c0_i32 = arith.constant 0 : i32
    %c0_i32_0 = arith.constant 0 : i32
    %c0_i32_1 = arith.constant 0 : i32
    return %arg1, %c0_i32, %c0_i32_0 : i32, i32, i32
  }
  func.func @transform_10(%arg0: i32, %arg1: i32) -> (i32, i32, i32) {
    %c0_i32 = arith.constant 0 : i32
    %c0_i32_0 = arith.constant 0 : i32
    %c0_i32_1 = arith.constant 0 : i32
    return %arg1, %c0_i32, %c0_i32_0 : i32, i32, i32
  }
  func.func @transform_11(%arg0: i32, %arg1: i32) -> (i32, i32, i32) {
    %c0_i32 = arith.constant 0 : i32
    %c0_i32_0 = arith.constant 0 : i32
    %c0_i32_1 = arith.constant 0 : i32
    return %arg1, %c0_i32, %c0_i32_0 : i32, i32, i32
  }
  func.func @transform_12(%arg0: i32, %arg1: i32) -> (i32, i32, i32) {
    %c0_i32 = arith.constant 0 : i32
    %c0_i32_0 = arith.constant 0 : i32
    %c0_i32_1 = arith.constant 0 : i32
    return %arg1, %c0_i32, %c0_i32_0 : i32, i32, i32
  }
  func.func @transform_13(%arg0: i32, %arg1: i32) -> (i32, i32, i32) {
    %c0_i32 = arith.constant 0 : i32
    %c0_i32_0 = arith.constant 0 : i32
    %c0_i32_1 = arith.constant 0 : i32
    return %arg1, %c0_i32, %c0_i32_0 : i32, i32, i32
  }
  func.func @transform_14(%arg0: i32, %arg1: i32) -> (i32, i32, i32) {
    %c0_i32 = arith.constant 0 : i32
    %c0_i32_0 = arith.constant 0 : i32
    %c0_i32_1 = arith.constant 0 : i32
    return %arg1, %c0_i32, %c0_i32_0 : i32, i32, i32
  }
  func.func @transform_15(%arg0: i32, %arg1: i32) -> (i32, i32, i32) {
    %c0_i32 = arith.constant 0 : i32
    %c0_i32_0 = arith.constant 0 : i32
    %c0_i32_1 = arith.constant 0 : i32
    return %arg0, %c0_i32, %c0_i32_0 : i32, i32, i32
  }
}

module attributes {stable_mosaic.version = 11 : i64} {
  func.func @_posenc_kernel(%arg0: memref<2x6x32xf32, #tpu.memory_space<vmem>>, %arg1: memref<6x32xf32, #tpu.memory_space<vmem>>, %arg2: memref<1x32xf32, #tpu.memory_space<vmem>>, %arg3: memref<1x32xf32, #tpu.memory_space<vmem>>, %arg4: memref<2x6x32xf32, #tpu.memory_space<vmem>>) attributes {dimension_semantics = [], scalar_prefetch = 0 : i64, scratch_operands = 0 : i64, tpu.core_type = #tpu.core_type<tc>} {
    %c0 = arith.constant 0 : index
    %c0_0 = arith.constant 0 : index
    %c0_1 = arith.constant 0 : index
    %0 = vector.load %arg0[%c0, %c0_0, %c0_1] : memref<2x6x32xf32, #tpu.memory_space<vmem>>, vector<2x6x32xf32>
    %cst = arith.constant 5.65685415 : f32
    %1 = vector.broadcast %cst : f32 to vector<2x6x32xf32>
    %2 = arith.mulf %0, %1 : vector<2x6x32xf32>
    %c0_2 = arith.constant 0 : index
    %c0_3 = arith.constant 0 : index
    %3 = vector.load %arg1[%c0_2, %c0_3] : memref<6x32xf32, #tpu.memory_space<vmem>>, vector<6x32xf32>
    %4 = vector.shape_cast %3 : vector<6x32xf32> to vector<1x6x32xf32>
    %5 = vector.broadcast %4 : vector<1x6x32xf32> to vector<2x6x32xf32>
    %6 = arith.addf %2, %5 : vector<2x6x32xf32>
    %c0_4 = arith.constant 0 : index
    %c0_5 = arith.constant 0 : index
    %7 = vector.load %arg2[%c0_4, %c0_5] : memref<1x32xf32, #tpu.memory_space<vmem>>, vector<1x32xf32>
    %c0_6 = arith.constant 0 : index
    %c0_7 = arith.constant 0 : index
    %8 = vector.load %arg3[%c0_6, %c0_7] : memref<1x32xf32, #tpu.memory_space<vmem>>, vector<1x32xf32>
    %cst_8 = arith.constant dense<0.000000e+00> : vector<2x6xf32>
    %9 = vector.multi_reduction <add>, %6, %cst_8 [2] : vector<2x6x32xf32> to vector<2x6xf32>
    %10 = vector.shape_cast %9 : vector<2x6xf32> to vector<2x6x1xf32>
    %cst_9 = arith.constant 3.200000e+01 : f32
    %11 = vector.broadcast %cst_9 : f32 to vector<2x6x1xf32>
    %12 = arith.divf %10, %11 : vector<2x6x1xf32>
    %13 = vector.broadcast %12 : vector<2x6x1xf32> to vector<2x6x32xf32>
    %14 = arith.subf %6, %13 : vector<2x6x32xf32>
    %15 = arith.mulf %14, %14 : vector<2x6x32xf32>
    %cst_10 = arith.constant dense<0.000000e+00> : vector<2x6xf32>
    %16 = vector.multi_reduction <add>, %15, %cst_10 [2] : vector<2x6x32xf32> to vector<2x6xf32>
    %17 = vector.shape_cast %16 : vector<2x6xf32> to vector<2x6x1xf32>
    %cst_11 = arith.constant 0.0322580636 : f32
    %18 = vector.broadcast %cst_11 : f32 to vector<2x6x1xf32>
    %19 = arith.mulf %17, %18 : vector<2x6x1xf32>
    %20 = math.sqrt %19 : vector<2x6x1xf32>
    %cst_12 = arith.constant 9.99999996E-13 : f32
    %21 = vector.broadcast %cst_12 : f32 to vector<2x6x1xf32>
    %22 = arith.addf %20, %21 : vector<2x6x1xf32>
    %23 = tpu.reciprocal %22 : vector<2x6x1xf32> -> vector<2x6x1xf32>
    %24 = vector.broadcast %23 : vector<2x6x1xf32> to vector<2x6x32xf32>
    %25 = arith.mulf %14, %24 : vector<2x6x32xf32>
    %26 = vector.shape_cast %7 : vector<1x32xf32> to vector<1x1x32xf32>
    %27 = vector.broadcast %26 : vector<1x1x32xf32> to vector<2x6x32xf32>
    %28 = arith.mulf %25, %27 : vector<2x6x32xf32>
    %29 = vector.shape_cast %8 : vector<1x32xf32> to vector<1x1x32xf32>
    %30 = vector.broadcast %29 : vector<1x1x32xf32> to vector<2x6x32xf32>
    %31 = arith.addf %28, %30 : vector<2x6x32xf32>
    %c0_13 = arith.constant 0 : index
    %c0_14 = arith.constant 0 : index
    %c0_15 = arith.constant 0 : index
    %32 = vector.load %arg4[%c0_13, %c0_14, %c0_15] : memref<2x6x32xf32, #tpu.memory_space<vmem>>, vector<2x6x32xf32>
    tpu.vector_store %arg4[%c0_13, %c0_14, %c0_15], %31 {strides = array<i32>} : memref<2x6x32xf32, #tpu.memory_space<vmem>>, vector<2x6x32xf32>,
    return
  }
}

module attributes {stable_mosaic.version = 11 : i64} {
  func.func @_transformer_kernel(%arg0: i32, %arg1: i32, %arg2: memref<1x13x32xf32, #tpu.memory_space<vmem>>, %arg3: memref<1x32xf32, #tpu.memory_space<vmem>>, %arg4: memref<1x32xf32, #tpu.memory_space<vmem>>, %arg5: memref<1x1x32xf32, #tpu.memory_space<vmem>>, %arg6: memref<1x1x32xf32, #tpu.memory_space<vmem>>, %arg7: memref<1x32x96xbf16, #tpu.memory_space<vmem>>, %arg8: memref<1x1x96xf32, #tpu.memory_space<vmem>>, %arg9: memref<1x32x32xbf16, #tpu.memory_space<vmem>>, %arg10: memref<1x1x32xf32, #tpu.memory_space<vmem>>, %arg11: memref<1x1x32xf32, #tpu.memory_space<vmem>>, %arg12: memref<1x1x32xf32, #tpu.memory_space<vmem>>, %arg13: memref<1x32x64xbf16, #tpu.memory_space<vmem>>, %arg14: memref<1x1x64xf32, #tpu.memory_space<vmem>>, %arg15: memref<1x64x32xbf16, #tpu.memory_space<vmem>>, %arg16: memref<1x1x32xf32, #tpu.memory_space<vmem>>, %arg17: memref<1x13x32xf32, #tpu.memory_space<vmem>>, %arg18: memref<13x32xf32, #tpu.memory_space<vmem>>) attributes {dimension_semantics = [#tpu.dimension_semantics<parallel>, #tpu.dimension_semantics<arbitrary>], iteration_bounds = array<i64: 2, 2>, scalar_prefetch = 0 : i64, scratch_operands = 1 : i64, tpu.core_type = #tpu.core_type<tc>, window_params = [{transform_indices = @transform_0, window_bounds = array<i64: 1, 13, 32>}, {pipeline_mode = #tpu.pipeline_mode<synchronous>, transform_indices = @transform_1, window_bounds = array<i64: 1, 32>}, {pipeline_mode = #tpu.pipeline_mode<synchronous>, transform_indices = @transform_2, window_bounds = array<i64: 1, 32>}, {transform_indices = @transform_3, window_bounds = array<i64: 1, 1, 32>}, {transform_indices = @transform_4, window_bounds = array<i64: 1, 1, 32>}, {transform_indices = @transform_5, window_bounds = array<i64: 1, 32, 96>}, {transform_indices = @transform_6, window_bounds = array<i64: 1, 1, 96>}, {transform_indices = @transform_7, window_bounds = array<i64: 1, 32, 32>}, {transform_indices = @transform_8, window_bounds = array<i64: 1, 1, 32>}, {transform_indices = @transform_9, window_bounds = array<i64: 1, 1, 32>}, {transform_indices = @transform_10, window_bounds = array<i64: 1, 1, 32>}, {transform_indices = @transform_11, window_bounds = array<i64: 1, 32, 64>}, {transform_indices = @transform_12, window_bounds = array<i64: 1, 1, 64>}, {transform_indices = @transform_13, window_bounds = array<i64: 1, 64, 32>}, {transform_indices = @transform_14, window_bounds = array<i64: 1, 1, 32>}, {transform_indices = @transform_15, window_bounds = array<i64: 1, 13, 32>}]} {
    %c0_i32 = arith.constant 0 : i32
    %0 = arith.cmpi eq, %arg1, %c0_i32 : i32
    %1 = arith.extui %0 : i1 to i32
    %c0_i32_0 = arith.constant 0 : i32
    %2 = arith.cmpi ne, %1, %c0_i32_0 : i32
    scf.if %2 {
      %c0_79 = arith.constant 0 : index
      %c0_80 = arith.constant 0 : index
      %c0_81 = arith.constant 0 : index
      %175 = vector.load %arg2[%c0_79, %c0_80, %c0_81] : memref<1x13x32xf32, #tpu.memory_space<vmem>>, vector<1x13x32xf32>
      %176 = vector.shape_cast %175 : vector<1x13x32xf32> to vector<13x32xf32>
      %c0_82 = arith.constant 0 : index
      %c0_83 = arith.constant 0 : index
      %177 = vector.load %arg3[%c0_82, %c0_83] : memref<1x32xf32, #tpu.memory_space<vmem>>, vector<1x32xf32>
      %c0_84 = arith.constant 0 : index
      %c0_85 = arith.constant 0 : index
      %178 = vector.load %arg4[%c0_84, %c0_85] : memref<1x32xf32, #tpu.memory_space<vmem>>, vector<1x32xf32>
      %cst_86 = arith.constant dense<0.000000e+00> : vector<13xf32>
      %179 = vector.multi_reduction <add>, %176, %cst_86 [1] : vector<13x32xf32> to vector<13xf32>
      %180 = vector.shape_cast %179 : vector<13xf32> to vector<13x1xf32>
      %cst_87 = arith.constant 3.200000e+01 : f32
      %181 = vector.broadcast %cst_87 : f32 to vector<13x1xf32>
      %182 = arith.divf %180, %181 : vector<13x1xf32>
      %183 = vector.broadcast %182 : vector<13x1xf32> to vector<13x32xf32>
      %184 = arith.subf %176, %183 : vector<13x32xf32>
      %185 = arith.mulf %184, %184 : vector<13x32xf32>
      %cst_88 = arith.constant dense<0.000000e+00> : vector<13xf32>
      %186 = vector.multi_reduction <add>, %185, %cst_88 [1] : vector<13x32xf32> to vector<13xf32>
      %187 = vector.shape_cast %186 : vector<13xf32> to vector<13x1xf32>
      %cst_89 = arith.constant 0.0322580636 : f32
      %188 = vector.broadcast %cst_89 : f32 to vector<13x1xf32>
      %189 = arith.mulf %187, %188 : vector<13x1xf32>
      %190 = math.sqrt %189 : vector<13x1xf32>
      %cst_90 = arith.constant 9.99999997E-7 : f32
      %191 = vector.broadcast %cst_90 : f32 to vector<13x1xf32>
      %192 = arith.addf %190, %191 : vector<13x1xf32>
      %193 = tpu.reciprocal %192 : vector<13x1xf32> -> vector<13x1xf32>
      %194 = vector.broadcast %193 : vector<13x1xf32> to vector<13x32xf32>
      %195 = arith.mulf %184, %194 : vector<13x32xf32>
      %196 = vector.broadcast %177 : vector<1x32xf32> to vector<13x32xf32>
      %197 = arith.mulf %195, %196 : vector<13x32xf32>
      %198 = vector.broadcast %178 : vector<1x32xf32> to vector<13x32xf32>
      %199 = arith.addf %197, %198 : vector<13x32xf32>
      %c0_91 = arith.constant 0 : index
      %c0_92 = arith.constant 0 : index
      %c0_93 = arith.constant 0 : index
      %200 = vector.load %arg17[%c0_91, %c0_92, %c0_93] : memref<1x13x32xf32, #tpu.memory_space<vmem>>, vector<1x13x32xf32>
      %201 = vector.shape_cast %200 : vector<1x13x32xf32> to vector<13x32xf32>
      %202 = vector.shape_cast %199 : vector<13x32xf32> to vector<1x13x32xf32>
      tpu.vector_store %arg17[%c0_91, %c0_92, %c0_93], %202 {strides = array<i32>} : memref<1x13x32xf32, #tpu.memory_space<vmem>>, vector<1x13x32xf32>,
    } else {
    }
    %c0 = arith.constant 0 : index
    %c0_1 = arith.constant 0 : index
    %c0_2 = arith.constant 0 : index
    %3 = vector.load %arg17[%c0, %c0_1, %c0_2] : memref<1x13x32xf32, #tpu.memory_space<vmem>>, vector<1x13x32xf32>
    %4 = vector.shape_cast %3 : vector<1x13x32xf32> to vector<13x32xf32>
    %c0_3 = arith.constant 0 : index
    %c0_4 = arith.constant 0 : index
    %c0_5 = arith.constant 0 : index
    %5 = vector.load %arg5[%c0_3, %c0_4, %c0_5] : memref<1x1x32xf32, #tpu.memory_space<vmem>>, vector<1x1x32xf32>
    %6 = vector.shape_cast %5 : vector<1x1x32xf32> to vector<1x32xf32>
    %c0_6 = arith.constant 0 : index
    %c0_7 = arith.constant 0 : index
    %c0_8 = arith.constant 0 : index
    %7 = vector.load %arg6[%c0_6, %c0_7, %c0_8] : memref<1x1x32xf32, #tpu.memory_space<vmem>>, vector<1x1x32xf32>
    %8 = vector.shape_cast %7 : vector<1x1x32xf32> to vector<1x32xf32>
    %cst = arith.constant dense<0.000000e+00> : vector<13xf32>
    %9 = vector.multi_reduction <add>, %4, %cst [1] : vector<13x32xf32> to vector<13xf32>
    %10 = vector.shape_cast %9 : vector<13xf32> to vector<13x1xf32>
    %cst_9 = arith.constant 3.200000e+01 : f32
    %11 = vector.broadcast %cst_9 : f32 to vector<13x1xf32>
    %12 = arith.divf %10, %11 : vector<13x1xf32>
    %13 = vector.broadcast %12 : vector<13x1xf32> to vector<13x32xf32>
    %14 = arith.subf %4, %13 : vector<13x32xf32>
    %15 = arith.mulf %14, %14 : vector<13x32xf32>
    %cst_10 = arith.constant dense<0.000000e+00> : vector<13xf32>
    %16 = vector.multi_reduction <add>, %15, %cst_10 [1] : vector<13x32xf32> to vector<13xf32>
    %17 = vector.shape_cast %16 : vector<13xf32> to vector<13x1xf32>
    %cst_11 = arith.constant 0.0322580636 : f32
    %18 = vector.broadcast %cst_11 : f32 to vector<13x1xf32>
    %19 = arith.mulf %17, %18 : vector<13x1xf32>
    %20 = math.sqrt %19 : vector<13x1xf32>
    %cst_12 = arith.constant 9.99999997E-7 : f32
    %21 = vector.broadcast %cst_12 : f32 to vector<13x1xf32>
    %22 = arith.addf %20, %21 : vector<13x1xf32>
    %23 = tpu.reciprocal %22 : vector<13x1xf32> -> vector<13x1xf32>
    %24 = vector.broadcast %23 : vector<13x1xf32> to vector<13x32xf32>
    %25 = arith.mulf %14, %24 : vector<13x32xf32>
    %26 = vector.broadcast %6 : vector<1x32xf32> to vector<13x32xf32>
    %27 = arith.mulf %25, %26 : vector<13x32xf32>
    %28 = vector.broadcast %8 : vector<1x32xf32> to vector<13x32xf32>
    %29 = arith.addf %27, %28 : vector<13x32xf32>
    %30 = arith.truncf %29 : vector<13x32xf32> to vector<13x32xbf16>
    %c0_13 = arith.constant 0 : index
    %c0_14 = arith.constant 0 : index
    %c0_15 = arith.constant 0 : index
    %31 = vector.load %arg7[%c0_13, %c0_14, %c0_15] : memref<1x32x96xbf16, #tpu.memory_space<vmem>>, vector<1x32x96xbf16>
    %32 = vector.shape_cast %31 : vector<1x32x96xbf16> to vector<32x96xbf16>
    %cst_16 = arith.constant dense<0.000000e+00> : vector<13x96xf32>
    %33 = tpu.matmul %30, %32, %cst_16 {dimension_numbers = #tpu.dot_dimension_numbers<[1], [0], [0], [1], [0, 0, 1, 1], [], []>} : vector<13x32xbf16>, vector<32x96xbf16>, vector<13x96xf32> -> vector<13x96xf32>
    %c0_17 = arith.constant 0 : index
    %c0_18 = arith.constant 0 : index
    %c0_19 = arith.constant 0 : index
    %34 = vector.load %arg8[%c0_17, %c0_18, %c0_19] : memref<1x1x96xf32, #tpu.memory_space<vmem>>, vector<1x1x96xf32>
    %35 = vector.shape_cast %34 : vector<1x1x96xf32> to vector<1x96xf32>
    %36 = vector.broadcast %35 : vector<1x96xf32> to vector<13x96xf32>
    %37 = arith.addf %33, %36 : vector<13x96xf32>
    %38 = vector.extract_strided_slice %37 {offsets = [0, 0], sizes = [13, 8], strides = [1, 1]} : vector<13x96xf32> to vector<13x8xf32>
    %39 = arith.truncf %38 : vector<13x8xf32> to vector<13x8xbf16>
    %40 = vector.extract_strided_slice %37 {offsets = [0, 32], sizes = [13, 8], strides = [1, 1]} : vector<13x96xf32> to vector<13x8xf32>
    %41 = arith.truncf %40 : vector<13x8xf32> to vector<13x8xbf16>
    %42 = vector.extract_strided_slice %37 {offsets = [0, 64], sizes = [13, 8], strides = [1, 1]} : vector<13x96xf32> to vector<13x8xf32>
    %43 = arith.truncf %42 : vector<13x8xf32> to vector<13x8xbf16>
    %cst_20 = arith.constant dense<0.000000e+00> : vector<13x13xf32>
    %44 = tpu.matmul %39, %41, %cst_20 {dimension_numbers = #tpu.dot_dimension_numbers<[1], [1], [0], [0], [0, 0, 1, 0], [], []>} : vector<13x8xbf16>, vector<13x8xbf16>, vector<13x13xf32> -> vector<13x13xf32>
    %cst_21 = arith.constant dense<0xFF800000> : vector<13xf32>
    %45 = vector.multi_reduction <maximumf>, %44, %cst_21 [1] : vector<13x13xf32> to vector<13xf32>
    %46 = vector.shape_cast %45 : vector<13xf32> to vector<13x1xf32>
    %47 = vector.broadcast %46 : vector<13x1xf32> to vector<13x13xf32>
    %48 = arith.subf %44, %47 : vector<13x13xf32>
    %49 = math.exp %48 : vector<13x13xf32>
    %cst_22 = arith.constant dense<0.000000e+00> : vector<13xf32>
    %50 = vector.multi_reduction <add>, %49, %cst_22 [1] : vector<13x13xf32> to vector<13xf32>
    %51 = vector.shape_cast %50 : vector<13xf32> to vector<13x1xf32>
    %52 = tpu.reciprocal %51 : vector<13x1xf32> -> vector<13x1xf32>
    %53 = vector.broadcast %52 : vector<13x1xf32> to vector<13x13xf32>
    %54 = arith.mulf %49, %53 : vector<13x13xf32>
    %55 = arith.truncf %54 : vector<13x13xf32> to vector<13x13xbf16>
    %cst_23 = arith.constant dense<0.000000e+00> : vector<13x8xf32>
    %56 = tpu.matmul %55, %43, %cst_23 {dimension_numbers = #tpu.dot_dimension_numbers<[1], [0], [0], [1], [0, 0, 1, 1], [], []>} : vector<13x13xbf16>, vector<13x8xbf16>, vector<13x8xf32> -> vector<13x8xf32>
    %c0_24 = arith.constant 0 : index
    %c0_25 = arith.constant 0 : index
    %57 = vector.load %arg18[%c0_24, %c0_25] : memref<13x32xf32, #tpu.memory_space<vmem>>, vector<13x8xf32>
    tpu.vector_store %arg18[%c0_24, %c0_25], %56 {strides = array<i32>} : memref<13x32xf32, #tpu.memory_space<vmem>>, vector<13x8xf32>,
    %58 = vector.extract_strided_slice %37 {offsets = [0, 8], sizes = [13, 8], strides = [1, 1]} : vector<13x96xf32> to vector<13x8xf32>
    %59 = arith.truncf %58 : vector<13x8xf32> to vector<13x8xbf16>
    %60 = vector.extract_strided_slice %37 {offsets = [0, 40], sizes = [13, 8], strides = [1, 1]} : vector<13x96xf32> to vector<13x8xf32>
    %61 = arith.truncf %60 : vector<13x8xf32> to vector<13x8xbf16>
    %62 = vector.extract_strided_slice %37 {offsets = [0, 72], sizes = [13, 8], strides = [1, 1]} : vector<13x96xf32> to vector<13x8xf32>
    %63 = arith.truncf %62 : vector<13x8xf32> to vector<13x8xbf16>
    %cst_26 = arith.constant dense<0.000000e+00> : vector<13x13xf32>
    %64 = tpu.matmul %59, %61, %cst_26 {dimension_numbers = #tpu.dot_dimension_numbers<[1], [1], [0], [0], [0, 0, 1, 0], [], []>} : vector<13x8xbf16>, vector<13x8xbf16>, vector<13x13xf32> -> vector<13x13xf32>
    %cst_27 = arith.constant dense<0xFF800000> : vector<13xf32>
    %65 = vector.multi_reduction <maximumf>, %64, %cst_27 [1] : vector<13x13xf32> to vector<13xf32>
    %66 = vector.shape_cast %65 : vector<13xf32> to vector<13x1xf32>
    %67 = vector.broadcast %66 : vector<13x1xf32> to vector<13x13xf32>
    %68 = arith.subf %64, %67 : vector<13x13xf32>
    %69 = math.exp %68 : vector<13x13xf32>
    %cst_28 = arith.constant dense<0.000000e+00> : vector<13xf32>
    %70 = vector.multi_reduction <add>, %69, %cst_28 [1] : vector<13x13xf32> to vector<13xf32>
    %71 = vector.shape_cast %70 : vector<13xf32> to vector<13x1xf32>
    %72 = tpu.reciprocal %71 : vector<13x1xf32> -> vector<13x1xf32>
    %73 = vector.broadcast %72 : vector<13x1xf32> to vector<13x13xf32>
    %74 = arith.mulf %69, %73 : vector<13x13xf32>
    %75 = arith.truncf %74 : vector<13x13xf32> to vector<13x13xbf16>
    %cst_29 = arith.constant dense<0.000000e+00> : vector<13x8xf32>
    %76 = tpu.matmul %75, %63, %cst_29 {dimension_numbers = #tpu.dot_dimension_numbers<[1], [0], [0], [1], [0, 0, 1, 1], [], []>} : vector<13x13xbf16>, vector<13x8xbf16>, vector<13x8xf32> -> vector<13x8xf32>
    %c0_30 = arith.constant 0 : index
    %c8 = arith.constant 8 : index
    %77 = vector.load %arg18[%c0_30, %c8] : memref<13x32xf32, #tpu.memory_space<vmem>>, vector<13x8xf32>
    tpu.vector_store %arg18[%c0_30, %c8], %76 {strides = array<i32>} : memref<13x32xf32, #tpu.memory_space<vmem>>, vector<13x8xf32>,
    %78 = vector.extract_strided_slice %37 {offsets = [0, 16], sizes = [13, 8], strides = [1, 1]} : vector<13x96xf32> to vector<13x8xf32>
    %79 = arith.truncf %78 : vector<13x8xf32> to vector<13x8xbf16>
    %80 = vector.extract_strided_slice %37 {offsets = [0, 48], sizes = [13, 8], strides = [1, 1]} : vector<13x96xf32> to vector<13x8xf32>
    %81 = arith.truncf %80 : vector<13x8xf32> to vector<13x8xbf16>
    %82 = vector.extract_strided_slice %37 {offsets = [0, 80], sizes = [13, 8], strides = [1, 1]} : vector<13x96xf32> to vector<13x8xf32>
    %83 = arith.truncf %82 : vector<13x8xf32> to vector<13x8xbf16>
    %cst_31 = arith.constant dense<0.000000e+00> : vector<13x13xf32>
    %84 = tpu.matmul %79, %81, %cst_31 {dimension_numbers = #tpu.dot_dimension_numbers<[1], [1], [0], [0], [0, 0, 1, 0], [], []>} : vector<13x8xbf16>, vector<13x8xbf16>, vector<13x13xf32> -> vector<13x13xf32>
    %cst_32 = arith.constant dense<0xFF800000> : vector<13xf32>
    %85 = vector.multi_reduction <maximumf>, %84, %cst_32 [1] : vector<13x13xf32> to vector<13xf32>
    %86 = vector.shape_cast %85 : vector<13xf32> to vector<13x1xf32>
    %87 = vector.broadcast %86 : vector<13x1xf32> to vector<13x13xf32>
    %88 = arith.subf %84, %87 : vector<13x13xf32>
    %89 = math.exp %88 : vector<13x13xf32>
    %cst_33 = arith.constant dense<0.000000e+00> : vector<13xf32>
    %90 = vector.multi_reduction <add>, %89, %cst_33 [1] : vector<13x13xf32> to vector<13xf32>
    %91 = vector.shape_cast %90 : vector<13xf32> to vector<13x1xf32>
    %92 = tpu.reciprocal %91 : vector<13x1xf32> -> vector<13x1xf32>
    %93 = vector.broadcast %92 : vector<13x1xf32> to vector<13x13xf32>
    %94 = arith.mulf %89, %93 : vector<13x13xf32>
    %95 = arith.truncf %94 : vector<13x13xf32> to vector<13x13xbf16>
    %cst_34 = arith.constant dense<0.000000e+00> : vector<13x8xf32>
    %96 = tpu.matmul %95, %83, %cst_34 {dimension_numbers = #tpu.dot_dimension_numbers<[1], [0], [0], [1], [0, 0, 1, 1], [], []>} : vector<13x13xbf16>, vector<13x8xbf16>, vector<13x8xf32> -> vector<13x8xf32>
    %c0_35 = arith.constant 0 : index
    %c16 = arith.constant 16 : index
    %97 = vector.load %arg18[%c0_35, %c16] : memref<13x32xf32, #tpu.memory_space<vmem>>, vector<13x8xf32>
    tpu.vector_store %arg18[%c0_35, %c16], %96 {strides = array<i32>} : memref<13x32xf32, #tpu.memory_space<vmem>>, vector<13x8xf32>,
    %98 = vector.extract_strided_slice %37 {offsets = [0, 24], sizes = [13, 8], strides = [1, 1]} : vector<13x96xf32> to vector<13x8xf32>
    %99 = arith.truncf %98 : vector<13x8xf32> to vector<13x8xbf16>
    %100 = vector.extract_strided_slice %37 {offsets = [0, 56], sizes = [13, 8], strides = [1, 1]} : vector<13x96xf32> to vector<13x8xf32>
    %101 = arith.truncf %100 : vector<13x8xf32> to vector<13x8xbf16>
    %102 = vector.extract_strided_slice %37 {offsets = [0, 88], sizes = [13, 8], strides = [1, 1]} : vector<13x96xf32> to vector<13x8xf32>
    %103 = arith.truncf %102 : vector<13x8xf32> to vector<13x8xbf16>
    %cst_36 = arith.constant dense<0.000000e+00> : vector<13x13xf32>
    %104 = tpu.matmul %99, %101, %cst_36 {dimension_numbers = #tpu.dot_dimension_numbers<[1], [1], [0], [0], [0, 0, 1, 0], [], []>} : vector<13x8xbf16>, vector<13x8xbf16>, vector<13x13xf32> -> vector<13x13xf32>
    %cst_37 = arith.constant dense<0xFF800000> : vector<13xf32>
    %105 = vector.multi_reduction <maximumf>, %104, %cst_37 [1] : vector<13x13xf32> to vector<13xf32>
    %106 = vector.shape_cast %105 : vector<13xf32> to vector<13x1xf32>
    %107 = vector.broadcast %106 : vector<13x1xf32> to vector<13x13xf32>
    %108 = arith.subf %104, %107 : vector<13x13xf32>
    %109 = math.exp %108 : vector<13x13xf32>
    %cst_38 = arith.constant dense<0.000000e+00> : vector<13xf32>
    %110 = vector.multi_reduction <add>, %109, %cst_38 [1] : vector<13x13xf32> to vector<13xf32>
    %111 = vector.shape_cast %110 : vector<13xf32> to vector<13x1xf32>
    %112 = tpu.reciprocal %111 : vector<13x1xf32> -> vector<13x1xf32>
    %113 = vector.broadcast %112 : vector<13x1xf32> to vector<13x13xf32>
    %114 = arith.mulf %109, %113 : vector<13x13xf32>
    %115 = arith.truncf %114 : vector<13x13xf32> to vector<13x13xbf16>
    %cst_39 = arith.constant dense<0.000000e+00> : vector<13x8xf32>
    %116 = tpu.matmul %115, %103, %cst_39 {dimension_numbers = #tpu.dot_dimension_numbers<[1], [0], [0], [1], [0, 0, 1, 1], [], []>} : vector<13x13xbf16>, vector<13x8xbf16>, vector<13x8xf32> -> vector<13x8xf32>
    %c0_40 = arith.constant 0 : index
    %c24 = arith.constant 24 : index
    %117 = vector.load %arg18[%c0_40, %c24] : memref<13x32xf32, #tpu.memory_space<vmem>>, vector<13x8xf32>
    tpu.vector_store %arg18[%c0_40, %c24], %116 {strides = array<i32>} : memref<13x32xf32, #tpu.memory_space<vmem>>, vector<13x8xf32>,
    %c0_41 = arith.constant 0 : index
    %c0_42 = arith.constant 0 : index
    %118 = vector.load %arg18[%c0_41, %c0_42] : memref<13x32xf32, #tpu.memory_space<vmem>>, vector<13x32xf32>
    %119 = arith.truncf %118 : vector<13x32xf32> to vector<13x32xbf16>
    %c0_43 = arith.constant 0 : index
    %c0_44 = arith.constant 0 : index
    %c0_45 = arith.constant 0 : index
    %120 = vector.load %arg9[%c0_43, %c0_44, %c0_45] : memref<1x32x32xbf16, #tpu.memory_space<vmem>>, vector<1x32x32xbf16>
    %121 = vector.shape_cast %120 : vector<1x32x32xbf16> to vector<32x32xbf16>
    %cst_46 = arith.constant dense<0.000000e+00> : vector<13x32xf32>
    %122 = tpu.matmul %119, %121, %cst_46 {dimension_numbers = #tpu.dot_dimension_numbers<[1], [0], [0], [1], [0, 0, 1, 1], [], []>} : vector<13x32xbf16>, vector<32x32xbf16>, vector<13x32xf32> -> vector<13x32xf32>
    %c0_47 = arith.constant 0 : index
    %c0_48 = arith.constant 0 : index
    %c0_49 = arith.constant 0 : index
    %123 = vector.load %arg10[%c0_47, %c0_48, %c0_49] : memref<1x1x32xf32, #tpu.memory_space<vmem>>, vector<1x1x32xf32>
    %124 = vector.shape_cast %123 : vector<1x1x32xf32> to vector<1x32xf32>
    %125 = vector.broadcast %124 : vector<1x32xf32> to vector<13x32xf32>
    %126 = arith.addf %122, %125 : vector<13x32xf32>
    %127 = arith.addf %4, %126 : vector<13x32xf32>
    %c0_50 = arith.constant 0 : index
    %c0_51 = arith.constant 0 : index
    %c0_52 = arith.constant 0 : index
    %128 = vector.load %arg11[%c0_50, %c0_51, %c0_52] : memref<1x1x32xf32, #tpu.memory_space<vmem>>, vector<1x1x32xf32>
    %129 = vector.shape_cast %128 : vector<1x1x32xf32> to vector<1x32xf32>
    %c0_53 = arith.constant 0 : index
    %c0_54 = arith.constant 0 : index
    %c0_55 = arith.constant 0 : index
    %130 = vector.load %arg12[%c0_53, %c0_54, %c0_55] : memref<1x1x32xf32, #tpu.memory_space<vmem>>, vector<1x1x32xf32>
    %131 = vector.shape_cast %130 : vector<1x1x32xf32> to vector<1x32xf32>
    %cst_56 = arith.constant dense<0.000000e+00> : vector<13xf32>
    %132 = vector.multi_reduction <add>, %127, %cst_56 [1] : vector<13x32xf32> to vector<13xf32>
    %133 = vector.shape_cast %132 : vector<13xf32> to vector<13x1xf32>
    %cst_57 = arith.constant 3.200000e+01 : f32
    %134 = vector.broadcast %cst_57 : f32 to vector<13x1xf32>
    %135 = arith.divf %133, %134 : vector<13x1xf32>
    %136 = vector.broadcast %135 : vector<13x1xf32> to vector<13x32xf32>
    %137 = arith.subf %127, %136 : vector<13x32xf32>
    %138 = arith.mulf %137, %137 : vector<13x32xf32>
    %cst_58 = arith.constant dense<0.000000e+00> : vector<13xf32>
    %139 = vector.multi_reduction <add>, %138, %cst_58 [1] : vector<13x32xf32> to vector<13xf32>
    %140 = vector.shape_cast %139 : vector<13xf32> to vector<13x1xf32>
    %cst_59 = arith.constant 0.0322580636 : f32
    %141 = vector.broadcast %cst_59 : f32 to vector<13x1xf32>
    %142 = arith.mulf %140, %141 : vector<13x1xf32>
    %143 = math.sqrt %142 : vector<13x1xf32>
    %cst_60 = arith.constant 9.99999997E-7 : f32
    %144 = vector.broadcast %cst_60 : f32 to vector<13x1xf32>
    %145 = arith.addf %143, %144 : vector<13x1xf32>
    %146 = tpu.reciprocal %145 : vector<13x1xf32> -> vector<13x1xf32>
    %147 = vector.broadcast %146 : vector<13x1xf32> to vector<13x32xf32>
    %148 = arith.mulf %137, %147 : vector<13x32xf32>
    %149 = vector.broadcast %129 : vector<1x32xf32> to vector<13x32xf32>
    %150 = arith.mulf %148, %149 : vector<13x32xf32>
    %151 = vector.broadcast %131 : vector<1x32xf32> to vector<13x32xf32>
    %152 = arith.addf %150, %151 : vector<13x32xf32>
    %153 = arith.truncf %152 : vector<13x32xf32> to vector<13x32xbf16>
    %c0_61 = arith.constant 0 : index
    %c0_62 = arith.constant 0 : index
    %c0_63 = arith.constant 0 : index
    %154 = vector.load %arg13[%c0_61, %c0_62, %c0_63] : memref<1x32x64xbf16, #tpu.memory_space<vmem>>, vector<1x32x64xbf16>
    %155 = vector.shape_cast %154 : vector<1x32x64xbf16> to vector<32x64xbf16>
    %cst_64 = arith.constant dense<0.000000e+00> : vector<13x64xf32>
    %156 = tpu.matmul %153, %155, %cst_64 {dimension_numbers = #tpu.dot_dimension_numbers<[1], [0], [0], [1], [0, 0, 1, 1], [], []>} : vector<13x32xbf16>, vector<32x64xbf16>, vector<13x64xf32> -> vector<13x64xf32>
    %c0_65 = arith.constant 0 : index
    %c0_66 = arith.constant 0 : index
    %c0_67 = arith.constant 0 : index
    %157 = vector.load %arg14[%c0_65, %c0_66, %c0_67] : memref<1x1x64xf32, #tpu.memory_space<vmem>>, vector<1x1x64xf32>
    %158 = vector.shape_cast %157 : vector<1x1x64xf32> to vector<1x64xf32>
    %159 = vector.broadcast %158 : vector<1x64xf32> to vector<13x64xf32>
    %160 = arith.addf %156, %159 : vector<13x64xf32>
    %cst_68 = arith.constant 0.000000e+00 : f32
    %161 = vector.broadcast %cst_68 : f32 to vector<13x64xf32>
    %162 = arith.maximumf %160, %161 : vector<13x64xf32>
    %163 = arith.truncf %162 : vector<13x64xf32> to vector<13x64xbf16>
    %c0_69 = arith.constant 0 : index
    %c0_70 = arith.constant 0 : index
    %c0_71 = arith.constant 0 : index
    %164 = vector.load %arg15[%c0_69, %c0_70, %c0_71] : memref<1x64x32xbf16, #tpu.memory_space<vmem>>, vector<1x64x32xbf16>
    %165 = vector.shape_cast %164 : vector<1x64x32xbf16> to vector<64x32xbf16>
    %cst_72 = arith.constant dense<0.000000e+00> : vector<13x32xf32>
    %166 = tpu.matmul %163, %165, %cst_72 {dimension_numbers = #tpu.dot_dimension_numbers<[1], [0], [0], [1], [0, 0, 1, 1], [], []>} : vector<13x64xbf16>, vector<64x32xbf16>, vector<13x32xf32> -> vector<13x32xf32>
    %c0_73 = arith.constant 0 : index
    %c0_74 = arith.constant 0 : index
    %c0_75 = arith.constant 0 : index
    %167 = vector.load %arg16[%c0_73, %c0_74, %c0_75] : memref<1x1x32xf32, #tpu.memory_space<vmem>>, vector<1x1x32xf32>
    %168 = vector.shape_cast %167 : vector<1x1x32xf32> to vector<1x32xf32>
    %169 = vector.broadcast %168 : vector<1x32xf32> to vector<13x32xf32>
    %170 = arith.addf %166, %169 : vector<13x32xf32>
    %171 = arith.addf %127, %170 : vector<13x32xf32>
    %c0_76 = arith.constant 0 : index
    %c0_77 = arith.constant 0 : index
    %c0_78 = arith.constant 0 : index
    %172 = vector.load %arg17[%c0_76, %c0_77, %c0_78] : memref<1x13x32xf32, #tpu.memory_space<vmem>>, vector<1x13x32xf32>
    %173 = vector.shape_cast %172 : vector<1x13x32xf32> to vector<13x32xf32>
    %174 = vector.shape_cast %171 : vector<13x32xf32> to vector<1x13x32xf32>
    tpu.vector_store %arg17[%c0_76, %c0_77, %c0_78], %174 {strides = array<i32>} : memref<1x13x32xf32, #tpu.memory_space<vmem>>, vector<1x13x32xf32>,
    return
  }
  func.func @transform_0(%arg0: i32, %arg1: i32) -> (i32, i32, i32) {
    %c0_i32 = arith.constant 0 : i32
    %c0_i32_0 = arith.constant 0 : i32
    %c0_i32_1 = arith.constant 0 : i32
    return %arg0, %c0_i32, %c0_i32_0 : i32, i32, i32
  }
  func.func @transform_1(%arg0: i32, %arg1: i32) -> (i32, i32) {
    %c0_i32 = arith.constant 0 : i32
    %c0_i32_0 = arith.constant 0 : i32
    %c0_i32_1 = arith.constant 0 : i32
    return %c0_i32, %c0_i32_0 : i32, i32
  }
  func.func @transform_2(%arg0: i32, %arg1: i32) -> (i32, i32) {
    %c0_i32 = arith.constant 0 : i32
    %c0_i32_0 = arith.constant 0 : i32
    %c0_i32_1 = arith.constant 0 : i32
    return %c0_i32, %c0_i32_0 : i32, i32
  }
  func.func @transform_3(%arg0: i32, %arg1: i32) -> (i32, i32, i32) {
    %c0_i32 = arith.constant 0 : i32
    %c0_i32_0 = arith.constant 0 : i32
    %c0_i32_1 = arith.constant 0 : i32
    return %arg1, %c0_i32, %c0_i32_0 : i32, i32, i32
  }
  func.func @transform_4(%arg0: i32, %arg1: i32) -> (i32, i32, i32) {
    %c0_i32 = arith.constant 0 : i32
    %c0_i32_0 = arith.constant 0 : i32
    %c0_i32_1 = arith.constant 0 : i32
    return %arg1, %c0_i32, %c0_i32_0 : i32, i32, i32
  }
  func.func @transform_5(%arg0: i32, %arg1: i32) -> (i32, i32, i32) {
    %c0_i32 = arith.constant 0 : i32
    %c0_i32_0 = arith.constant 0 : i32
    %c0_i32_1 = arith.constant 0 : i32
    return %arg1, %c0_i32, %c0_i32_0 : i32, i32, i32
  }
  func.func @transform_6(%arg0: i32, %arg1: i32) -> (i32, i32, i32) {
    %c0_i32 = arith.constant 0 : i32
    %c0_i32_0 = arith.constant 0 : i32
    %c0_i32_1 = arith.constant 0 : i32
    return %arg1, %c0_i32, %c0_i32_0 : i32, i32, i32
  }
  func.func @transform_7(%arg0: i32, %arg1: i32) -> (i32, i32, i32) {
    %c0_i32 = arith.constant 0 : i32
    %c0_i32_0 = arith.constant 0 : i32
    %c0_i32_1 = arith.constant 0 : i32
    return %arg1, %c0_i32, %c0_i32_0 : i32, i32, i32
  }
  func.func @transform_8(%arg0: i32, %arg1: i32) -> (i32, i32, i32) {
    %c0_i32 = arith.constant 0 : i32
    %c0_i32_0 = arith.constant 0 : i32
    %c0_i32_1 = arith.constant 0 : i32
    return %arg1, %c0_i32, %c0_i32_0 : i32, i32, i32
  }
  func.func @transform_9(%arg0: i32, %arg1: i32) -> (i32, i32, i32) {
    %c0_i32 = arith.constant 0 : i32
    %c0_i32_0 = arith.constant 0 : i32
    %c0_i32_1 = arith.constant 0 : i32
    return %arg1, %c0_i32, %c0_i32_0 : i32, i32, i32
  }
  func.func @transform_10(%arg0: i32, %arg1: i32) -> (i32, i32, i32) {
    %c0_i32 = arith.constant 0 : i32
    %c0_i32_0 = arith.constant 0 : i32
    %c0_i32_1 = arith.constant 0 : i32
    return %arg1, %c0_i32, %c0_i32_0 : i32, i32, i32
  }
  func.func @transform_11(%arg0: i32, %arg1: i32) -> (i32, i32, i32) {
    %c0_i32 = arith.constant 0 : i32
    %c0_i32_0 = arith.constant 0 : i32
    %c0_i32_1 = arith.constant 0 : i32
    return %arg1, %c0_i32, %c0_i32_0 : i32, i32, i32
  }
  func.func @transform_12(%arg0: i32, %arg1: i32) -> (i32, i32, i32) {
    %c0_i32 = arith.constant 0 : i32
    %c0_i32_0 = arith.constant 0 : i32
    %c0_i32_1 = arith.constant 0 : i32
    return %arg1, %c0_i32, %c0_i32_0 : i32, i32, i32
  }
  func.func @transform_13(%arg0: i32, %arg1: i32) -> (i32, i32, i32) {
    %c0_i32 = arith.constant 0 : i32
    %c0_i32_0 = arith.constant 0 : i32
    %c0_i32_1 = arith.constant 0 : i32
    return %arg1, %c0_i32, %c0_i32_0 : i32, i32, i32
  }
  func.func @transform_14(%arg0: i32, %arg1: i32) -> (i32, i32, i32) {
    %c0_i32 = arith.constant 0 : i32
    %c0_i32_0 = arith.constant 0 : i32
    %c0_i32_1 = arith.constant 0 : i32
    return %arg1, %c0_i32, %c0_i32_0 : i32, i32, i32
  }
  func.func @transform_15(%arg0: i32, %arg1: i32) -> (i32, i32, i32) {
    %c0_i32 = arith.constant 0 : i32
    %c0_i32_0 = arith.constant 0 : i32
    %c0_i32_1 = arith.constant 0 : i32
    return %arg0, %c0_i32, %c0_i32_0 : i32, i32, i32
  }
}

</mosaic_0001>

<llo_original>
// kernel: model_forward_itm.6
$region0: #{model_forward_itm.6}
  #allocation0 [shape = 'u32[]', space=smem, size = 0x4, offset = 0x4, fixed_abs, tag = 'smem constant byte address 0x4 - core index']
  #allocation1 [shape = 'u32[144,128]{1,0:T(1,128)}', space=vmem, size = 0x12000, scoped, tag = 'internal scratch']
  %s0 = inlined_call_operand.vmem [shape: f32[8,16], index: 0, kind: input, shape index: {}]
  %s1 = inlined_call_operand.vmem [shape: bf16[16,32], index: 1, kind: input, shape index: {}]
  %s2 = inlined_call_operand.vmem [shape: f32[1,32], index: 2, kind: input, shape index: {}]
  %s3 = inlined_call_operand.vmem [shape: f32[8,32], index: 3, kind: input, shape index: {}]
  %s4 = inlined_call_operand.vmem [shape: f32[1,32], index: 4, kind: input, shape index: {}]
  %s5 = inlined_call_operand.vmem [shape: f32[1,32], index: 5, kind: input, shape index: {}]
  %s6 = inlined_call_operand.vmem [shape: f32[8,32], index: 6, kind: output, shape index: {}]
  %s7 = sld [smem:[#allocation0]]
  $region34: #{model_forward_itm.6} parent=0
    _
  %s9 = ssub.s32 1, %s7
  %s10 = scalar_select 0, %s9, %s7
  // Predicated region
  $region2: #{model_forward_itm.6} parent=0 // pred_check
    _
  $region3: #{model_forward_itm.6} parent=0 // pred_check_branch
    %12 = sbr.rel (0) target = $region5
  $region4: #{model_forward_itm.6} parent=0 // pred_region
    _
  $region5: #{model_forward_itm.6} parent=0 // pred_fallthru
    _
  // Predicated region
  $region6: #{model_forward_itm.6} parent=0 // pred_check
    _
  $region7: #{model_forward_itm.6} parent=0 // pred_check_branch
    %14 = sbr.rel (0) target = $region9
  $region8: #{model_forward_itm.6} parent=0 // pred_region
    _
  $region9: #{model_forward_itm.6} parent=0 // pred_fallthru
    _
  // Predicated region
  $region10: #{model_forward_itm.6} parent=0 // pred_check
    _
  $region11: #{model_forward_itm.6} parent=0 // pred_check_branch
    %16 = sbr.rel (0) target = $region13
  $region12: #{model_forward_itm.6} parent=0 // pred_region
    _
  $region13: #{model_forward_itm.6} parent=0 // pred_fallthru
    _
  // Predicated region
  $region14: #{model_forward_itm.6} parent=0 // pred_check
    _
  $region15: #{model_forward_itm.6} parent=0 // pred_check_branch
    %18 = sbr.rel (0) target = $region17
  $region16: #{model_forward_itm.6} parent=0 // pred_region
    _
  $region17: #{model_forward_itm.6} parent=0 // pred_fallthru
    _
  // Predicated region
  $region18: #{model_forward_itm.6} parent=0 // pred_check
    _
  $region19: #{model_forward_itm.6} parent=0 // pred_check_branch
    %20 = sbr.rel (0) target = $region21
  $region20: #{model_forward_itm.6} parent=0 // pred_region
    _
  $region21: #{model_forward_itm.6} parent=0 // pred_fallthru
    _
  // Predicated region
  $region22: #{model_forward_itm.6} parent=0 // pred_check
    _
  $region23: #{model_forward_itm.6} parent=0 // pred_check_branch
    %22 = sbr.rel (0) target = $region25
  $region24: #{model_forward_itm.6} parent=0 // pred_region
    _
  $region25: #{model_forward_itm.6} parent=0 // pred_fallthru
    _
  %v24 = vld [vmem:[%s0] sm:$0xff]
  %v25 = vpack.c.bf16 %v24, %v24
  %v26 = vld [vmem:[%s1] sm:$0xf]
  %v27 = vld [vmem:[%s1 + $0x4] sm:$0xf]
  %v28 = vld [vmem:[%s2] sm:$0x1]
  %v30 = vlaneseq
  %v31 = vshrl.u32 %v30, 7
  %v32 = vsub.s32 0, %v31
  %v33 = vrot.slane %v28, %v32
  %v37 = vunpack.c.l.b16 %v26
  %v38 = vunpack.c.l.b16 %v27
  %v39 = vpack.c.b16 %v38, %v37
  %vm41 = vcmask 130048
  %v43 = vsel %vm41, %v25, 0
  %45 = vmatprep.subr.bf16.mxu0 0
  %46 = vmatpush1.bf16.msra.mxu0 0
  %47 = vmatprep.subr.bf16.mxu0 0
  %48 = vmatpush1.bf16.msra.mxu0 0
  %49 = vmatprep.subr.bf16.mxu0 0
  %50 = vmatpush1.bf16.msra.mxu0 0
  %51 = vmatprep.subr.bf16.mxu0 0
  %52 = vmatpush1.bf16.msra.mxu0 0
  %53 = vmatprep.subr.bf16.mxu0 0
  %54 = vmatpush1.bf16.msra.mxu0 0
  %55 = vmatprep.subr.bf16.mxu0 0
  %56 = vmatpush1.bf16.msra.mxu0 0
  %57 = vmatprep.subr.bf16.mxu0 0
  %58 = vmatpush1.bf16.msra.mxu0 0
  %59 = vmatprep.subr.bf16.mxu0 0
  %60 = vmatpush1.bf16.msra.mxu0 %v39
  %61 = vmatprep.subr.bf16.mxu0 0
  %62 = vmatpush2.bf16.msra.mxu0 0
  %63 = vmatprep.subr.bf16.mxu0 0
  %64 = vmatpush2.bf16.msra.mxu0 0
  %65 = vmatprep.subr.bf16.mxu0 0
  %66 = vmatpush2.bf16.msra.mxu0 0
  %67 = vmatprep.subr.bf16.mxu0 0
  %68 = vmatpush2.bf16.msra.mxu0 0
  %69 = vmatprep.subr.bf16.mxu0 0
  %70 = vmatpush2.bf16.msra.mxu0 0
  %71 = vmatprep.subr.bf16.mxu0 0
  %72 = vmatpush2.bf16.msra.mxu0 0
  %73 = vmatprep.subr.bf16.mxu0 0
  %74 = vmatpush2.bf16.msra.mxu0 0
  %75 = vmatprep.subr.bf16.mxu0 0
  %76 = vmatpush2.bf16.msra.mxu0 0
  %77 = vmatprep.mubr.bf16.mxu0 0
  %78 = vmatmul.mubr.bf16.gmra.mxu0 %v43
  %v79 = vpop.f32.mrf.mxu0
  %v80 = vadd.f32 %v33, %v79
  %v81 = vpop.f32.mrf.mxu0
  %v82 = vpop.f32.mrf.mxu0
  %v83 = vpop.f32.mrf.mxu0
  %84 = vdwg.mxu0
  %v85 = vxor.u32 %v80, 2147483648
  %v86 = vmul.f32 %v85, 1.442695
  %v87 = vpow.pop %v86
  %v88 = vadd.f32 %v87, 1.0
  %v89 = vrcp.pop %v88
  %v90 = vmul.f32 1.0, %v89
  %v91 = vld [vmem:[%s3] sm:$0xff]
  %v92 = vadd.f32 %v90, %v91
  %v93 = vld [vmem:[%s4] sm:$0x1]
  %v94 = vld [vmem:[%s5] sm:$0x1]
  %vm95 = vcmask 261120
  %v96 = vsel %vm95, %v92, 0.0
  %97 = vadd.xlane.f32.xlu0 %v96
  %v98 = vpop.xlane.xlu0 %97
  %v99 = vrcp.pop 32.0
  %v100 = vmul.f32 %v98, %v99
  %v101 = vsub.f32 %v92, %v100
  %v102 = vmul.f32 %v101, %v101
  %v103 = vsel %vm95, %v102, 0.0
  %104 = vadd.xlane.f32.xlu0 %v103
  %v105 = vpop.xlane.xlu0 %104
  %v106 = vmul.f32 %v105, 0.032258064
  %v107 = vrsqrt.pop %v106
  %v108 = vmul.f32 %v106, %v107
  %vm109 = vcmp.eq.f32.partialorder %v106, inf
  %v110 = vsel %vm109, %v106, %v108
  %vm111 = vcmp.eq.f32.partialorder %v106, 0.0
  %v112 = vand.u32 %v106, 2147483648
  %v113 = vsel %vm111, %v112, %v110
  %v114 = vadd.f32 %v113, 1e-12
  %v115 = vrcp.pop %v114
  %v116 = vmul.f32 %v101, %v115
  %v118 = vlaneseq
  %v119 = vshrl.u32 %v118, 7
  %v120 = vsub.s32 0, %v119
  %v121 = vrot.slane %v93, %v120
  %v123 = vmul.f32 %v116, %v121
  %v125 = vlaneseq
  %v126 = vshrl.u32 %v125, 7
  %v127 = vsub.s32 0, %v126
  %v128 = vrot.slane %v94, %v127
  %v130 = vadd.f32 %v123, %v128
  %131 = vst.msk [vmem:[%s6] sm:$0xff] %vm95, %v130
  // Predicated region
  $region26: #{model_forward_itm.6} parent=0 // pred_check
    _
  $region27: #{model_forward_itm.6} parent=0 // pred_check_branch
    %133 = sbr.rel (0) target = $region29
  $region28: #{model_forward_itm.6} parent=0 // pred_region
    _
  $region29: #{model_forward_itm.6} parent=0 // pred_fallthru
    _
  // Predicated region
  $region30: #{model_forward_itm.6} parent=0 // pred_check
    _
  $region31: #{model_forward_itm.6} parent=0 // pred_check_branch
    %135 = sbr.rel (0) target = $region33
  $region32: #{model_forward_itm.6} parent=0 // pred_region
    _
  $region33: #{model_forward_itm.6} parent=0 // pred_fallthru
    _

// kernel: model_forward_itm.7
$region0: #{model_forward_itm.7}
  #allocation0 [shape = 'u32[]', space=smem, size = 0x4, offset = 0x4, fixed_abs, tag = 'smem constant byte address 0x4 - core index']
  #allocation1 [shape = 'u32[144,128]{1,0:T(1,128)}', space=vmem, size = 0x12000, scoped, tag = 'internal scratch']
  %s0 = inlined_call_operand.vmem [shape: f32[2,3,32], index: 0, kind: input, shape index: {}]
  %s1 = inlined_call_operand.vmem [shape: f32[3,32], index: 1, kind: input, shape index: {}]
  %s2 = inlined_call_operand.vmem [shape: f32[1,32], index: 2, kind: input, shape index: {}]
  %s3 = inlined_call_operand.vmem [shape: f32[1,32], index: 3, kind: input, shape index: {}]
  %s4 = inlined_call_operand.vmem [shape: f32[2,3,32], index: 4, kind: output, shape index: {}]
  %s5 = sld [smem:[#allocation0]]
  $region26: #{model_forward_itm.7} parent=0
    _
  %s7 = ssub.s32 1, %s5
  %s8 = scalar_select 0, %s7, %s5
  // Predicated region
  $region2: #{model_forward_itm.7} parent=0 // pred_check
    _
  $region3: #{model_forward_itm.7} parent=0 // pred_check_branch
    %10 = sbr.rel (0) target = $region5
  $region4: #{model_forward_itm.7} parent=0 // pred_region
    _
  $region5: #{model_forward_itm.7} parent=0 // pred_fallthru
    _
  // Predicated region
  $region6: #{model_forward_itm.7} parent=0 // pred_check
    _
  $region7: #{model_forward_itm.7} parent=0 // pred_check_branch
    %12 = sbr.rel (0) target = $region9
  $region8: #{model_forward_itm.7} parent=0 // pred_region
    _
  $region9: #{model_forward_itm.7} parent=0 // pred_fallthru
    _
  // Predicated region
  $region10: #{model_forward_itm.7} parent=0 // pred_check
    _
  $region11: #{model_forward_itm.7} parent=0 // pred_check_branch
    %14 = sbr.rel (0) target = $region13
  $region12: #{model_forward_itm.7} parent=0 // pred_region
    _
  $region13: #{model_forward_itm.7} parent=0 // pred_fallthru
    _
  // Predicated region
  $region14: #{model_forward_itm.7} parent=0 // pred_check
    _
  $region15: #{model_forward_itm.7} parent=0 // pred_check_branch
    %16 = sbr.rel (0) target = $region17
  $region16: #{model_forward_itm.7} parent=0 // pred_region
    _
  $region17: #{model_forward_itm.7} parent=0 // pred_fallthru
    _
  %v17 = vld [vmem:[%s0] sm:$0x7]
  %v18 = vld [vmem:[%s0 + $0x4] sm:$0x7]
  %v19 = vld [vmem:[%s1] sm:$0x7]
  %v20 = vadd.f32 %v17, %v19
  %v21 = vadd.f32 %v18, %v19
  %v22 = vld [vmem:[%s2] sm:$0x1]
  %v23 = vld [vmem:[%s3] sm:$0x1]
  %vm24 = vcmask 256000
  %v25 = vsel %vm24, %v20, 0.0
  %26 = vadd.xlane.f32.xlu0 %v25
  %v27 = vpop.xlane.xlu0 %26
  %v28 = vsel %vm24, %v21, 0.0
  %29 = vadd.xlane.f32.xlu0 %v28
  %v30 = vpop.xlane.xlu0 %29
  %v31 = vrcp.pop 32.0
  %v32 = vmul.f32 %v27, %v31
  %v33 = vmul.f32 %v30, %v31
  %v34 = vsub.f32 %v20, %v32
  %v35 = vsub.f32 %v21, %v33
  %v36 = vmul.f32 %v34, %v34
  %v37 = vmul.f32 %v35, %v35
  %v38 = vsel %vm24, %v36, 0.0
  %39 = vadd.xlane.f32.xlu0 %v38
  %v40 = vpop.xlane.xlu0 %39
  %v41 = vsel %vm24, %v37, 0.0
  %42 = vadd.xlane.f32.xlu0 %v41
  %v43 = vpop.xlane.xlu0 %42
  %v44 = vmul.f32 %v40, 0.032258064
  %v45 = vmul.f32 %v43, 0.032258064
  %v46 = vrsqrt.pop %v44
  %v47 = vmul.f32 %v44, %v46
  %vm48 = vcmp.eq.f32.partialorder %v44, inf
  %v49 = vsel %vm48, %v44, %v47
  %vm50 = vcmp.eq.f32.partialorder %v44, 0.0
  %v51 = vand.u32 %v44, 2147483648
  %v52 = vsel %vm50, %v51, %v49
  %v53 = vrsqrt.pop %v45
  %v54 = vmul.f32 %v45, %v53
  %vm55 = vcmp.eq.f32.partialorder %v45, inf
  %v56 = vsel %vm55, %v45, %v54
  %vm57 = vcmp.eq.f32.partialorder %v45, 0.0
  %v58 = vand.u32 %v45, 2147483648
  %v59 = vsel %vm57, %v58, %v56
  %v60 = vadd.f32 %v52, 1e-12
  %v61 = vadd.f32 %v59, 1e-12
  %v62 = vrcp.pop %v60
  %v63 = vrcp.pop %v61
  %v64 = vmul.f32 %v34, %v62
  %v65 = vmul.f32 %v35, %v63
  %v67 = vlaneseq
  %v68 = vshrl.u32 %v67, 7
  %v69 = vsub.s32 0, %v68
  %v70 = vrot.slane %v22, %v69
  %v72 = vmul.f32 %v64, %v70
  %v73 = vmul.f32 %v65, %v70
  %v75 = vlaneseq
  %v76 = vshrl.u32 %v75, 7
  %v77 = vsub.s32 0, %v76
  %v78 = vrot.slane %v23, %v77
  %v80 = vadd.f32 %v72, %v78
  %v81 = vadd.f32 %v73, %v78
  %82 = vst.msk [vmem:[%s4] sm:$0x7] %vm24, %v80
  %83 = vst.msk [vmem:[%s4 + $0x4] sm:$0x7] %vm24, %v81
  // Predicated region
  $region18: #{model_forward_itm.7} parent=0 // pred_check
    _
  $region19: #{model_forward_itm.7} parent=0 // pred_check_branch
    %85 = sbr.rel (0) target = $region21
  $region20: #{model_forward_itm.7} parent=0 // pred_region
    _
  $region21: #{model_forward_itm.7} parent=0 // pred_fallthru
    _
  // Predicated region
  $region22: #{model_forward_itm.7} parent=0 // pred_check
    _
  $region23: #{model_forward_itm.7} parent=0 // pred_check_branch
    %87 = sbr.rel (0) target = $region25
  $region24: #{model_forward_itm.7} parent=0 // pred_region
    _
  $region25: #{model_forward_itm.7} parent=0 // pred_fallthru
    _

// kernel: model_forward_itm.8
$region0: #{model_forward_itm.8}
  #allocation0 [shape = 'u32[]', space=smem, size = 0x4, offset = 0x4, fixed_abs, tag = 'smem constant byte address 0x4 - core index']
  #allocation1 [shape = 'u32[144,128]{1,0:T(1,128)}', space=vmem, size = 0x12000, scoped, tag = 'internal scratch']
  #allocation2 [shape = 'f32[5,32]{1,0:T(8,128)}', space=vmem, size = 0x1000, scoped, tag = 'scratch operand']
  %s0 = inlined_call_operand.vmem [shape: f32[2,5,32], index: 0, kind: input, shape index: {}]
  %s1 = inlined_call_operand.vmem [shape: f32[1,32], index: 1, kind: input, shape index: {}]
  %s2 = inlined_call_operand.vmem [shape: f32[1,32], index: 2, kind: input, shape index: {}]
  %s3 = inlined_call_operand.vmem [shape: f32[1,1,32], index: 3, kind: input, shape index: {}]
  %s4 = inlined_call_operand.vmem [shape: f32[1,1,32], index: 4, kind: input, shape index: {}]
  %s5 = inlined_call_operand.vmem [shape: bf16[1,32,96], index: 5, kind: input, shape index: {}]
  %s6 = inlined_call_operand.vmem [shape: f32[1,1,96], index: 6, kind: input, shape index: {}]
  %s7 = inlined_call_operand.vmem [shape: bf16[1,32,32], index: 7, kind: input, shape index: {}]
  %s8 = inlined_call_operand.vmem [shape: f32[1,1,32], index: 8, kind: input, shape index: {}]
  %s9 = inlined_call_operand.vmem [shape: f32[1,1,32], index: 9, kind: input, shape index: {}]
  %s10 = inlined_call_operand.vmem [shape: f32[1,1,32], index: 10, kind: input, shape index: {}]
  %s11 = inlined_call_operand.vmem [shape: bf16[1,32,64], index: 11, kind: input, shape index: {}]
  %s12 = inlined_call_operand.vmem [shape: f32[1,1,64], index: 12, kind: input, shape index: {}]
  %s13 = inlined_call_operand.vmem [shape: bf16[1,64,32], index: 13, kind: input, shape index: {}]
  %s14 = inlined_call_operand.vmem [shape: f32[1,1,32], index: 14, kind: input, shape index: {}]
  %s15 = inlined_call_operand.vmem [shape: f32[2,5,32], index: 15, kind: output, shape index: {}]
  %s16 = sld [smem:[#allocation0]]
  $region97: #{model_forward_itm.8} parent=0
    _
  %s18 = ssub.s32 1, %s16
  %s19 = scalar_select 0, %s18, %s16
  loop: start=0, step=1, limit=4
  $region2: #{model_forward_itm.8} parent=0 // loop_pre_header
    _
  $region3: #{model_forward_itm.8} parent=0 // loop_header
    %s21 = sphi 0, %s25
    %p22 = scmp.ge.s32.totalorder %s21, 4
    %s28 = sphi 0, %s40
    %s29 = sphi 0, %s36
    %s30 = sphi 0, %s28
    %s31 = sphi 0, %s29
    %s32 = sphi 0, %s30
    %s33 = sphi 0, %s31
    %s43 = sphi 0, %s45
    %s46 = sphi 0, %s43
    %s47 = sphi 0, %s46
    %s63 = sphi 0, %s47
    %s67 = sphi 0, %s67
    %s69 = sphi 0, %s67
    %s70 = sphi 0, %s69
    %s84 = sphi 0, %s70
    %s88 = sphi 0, %s88
    %s90 = sphi 0, %s88
    %s91 = sphi 0, %s90
    %s105 = sphi 0, %s91
    %s111 = sphi 0, %s113
    %s114 = sphi 0, %s111
    %s115 = sphi 0, %s114
    %s131 = sphi 0, %s115
    %s137 = sphi 0, %s139
    %s140 = sphi 0, %s137
    %s141 = sphi 0, %s140
    %s157 = sphi 0, %s141
    %s163 = sphi 0, %s165
    %s166 = sphi 0, %s163
    %s167 = sphi 0, %s166
    %s183 = sphi 0, %s167
    %s189 = sphi 0, %s191
    %s192 = sphi 0, %s189
    %s193 = sphi 0, %s192
    %s209 = sphi 0, %s193
    %s215 = sphi 0, %s217
    %s218 = sphi 0, %s215
    %s219 = sphi 0, %s218
    %s235 = sphi 0, %s219
    %s241 = sphi 0, %s243
    %s244 = sphi 0, %s241
    %s245 = sphi 0, %s244
    %s261 = sphi 0, %s245
    %s267 = sphi 0, %s269
    %s270 = sphi 0, %s267
    %s271 = sphi 0, %s270
    %s287 = sphi 0, %s271
    %s293 = sphi 0, %s295
    %s296 = sphi 0, %s293
    %s297 = sphi 0, %s296
    %s313 = sphi 0, %s297
    %s319 = sphi 0, %s321
    %s322 = sphi 0, %s319
    %s323 = sphi 0, %s322
    %s339 = sphi 0, %s323
    %s345 = sphi 0, %s347
    %s348 = sphi 0, %s345
    %s349 = sphi 0, %s348
    %s365 = sphi 0, %s349
    %s371 = sphi 0, %s373
    %s374 = sphi 0, %s371
    %s375 = sphi 0, %s374
    %s391 = sphi 0, %s375
    %s397 = sphi 0, %s399
    %s400 = sphi 0, %s397
    %s401 = sphi 0, %s400
    %s417 = sphi 0, %s401
    %s423 = sphi 0, %s425
    %s426 = sphi 0, %s423
    %s427 = sphi 0, %s426
    %s443 = sphi 0, %s427
  $region4: #{model_forward_itm.8} parent=0 // loop_header_branch
    %24 = sbr.rel (%p22) target = $region8
  $region5: #{model_forward_itm.8} parent=0 // loop_body
    %s26 = ssub.s32 %s21, 1
    %s27 = ssub.s32 %s21, 2
    %s34 = sadd.s32 1, %s29
    %p35 = scmp.ge.s32.totalorder %s34, 1
    %s36 = scalar_select %p35, 0, %s34
    %s37 = sadd.s32 1, %s28
    %s38 = scalar_select %p35, %s37, %s28
    %p39 = scmp.ge.s32.totalorder %s38, 2
    %s40 = scalar_select %p39, 0, %s38
    %s41 = ssub.s32 %s28, %s40
    %p42 = scmp.eq.s32.totalorder %s41, 0
    %s44 = sadd.s32 %s43, 1
    %s45 = scalar_select %p42, %s43, %s44
    %p48 = pneg %p42
    %p49 = scmp.eq.s32.totalorder %s21, 1
    %p50 = por %p48, %p49
    %p51 = scmp.ne.s32.totalorder %s43, %s46
    %p52 = scmp.eq.s32.totalorder %s21, 0
    %p53 = por %p51, %p52
    %p54 = scmp.ne.s32.totalorder %s43, %s46
    %p55 = scmp.eq.s32.totalorder %s26, 1
    %p56 = por %p54, %p55
    %p57 = scmp.ne.s32.totalorder %s46, %s47
    %p58 = scmp.eq.s32.totalorder %s26, 0
    %p59 = por %p57, %p58
    %p60 = scmp.ne.s32.totalorder %s46, %s47
    %p61 = scmp.eq.s32.totalorder %s27, 1
    %p62 = por %p60, %p61
    %p64 = scmp.ne.s32.totalorder %s47, %s63
    %p65 = scmp.eq.s32.totalorder %s27, 0
    %p66 = por %p64, %p65
    %s68 = sadd.s32 %s67, 1
    %p71 = scmp.eq.s32.totalorder %s21, 1
    %p72 = scmp.ne.s32.totalorder %s67, %s69
    %p73 = scmp.eq.s32.totalorder %s21, 0
    %p74 = por %p72, %p73
    %p75 = scmp.ne.s32.totalorder %s67, %s69
    %p76 = scmp.eq.s32.totalorder %s26, 1
    %p77 = por %p75, %p76
    %p78 = scmp.ne.s32.totalorder %s69, %s70
    %p79 = scmp.eq.s32.totalorder %s26, 0
    %p80 = por %p78, %p79
    %p81 = scmp.ne.s32.totalorder %s69, %s70
    %p82 = scmp.eq.s32.totalorder %s27, 1
    %p83 = por %p81, %p82
    %p85 = scmp.ne.s32.totalorder %s70, %s84
    %p86 = scmp.eq.s32.totalorder %s27, 0
    %p87 = por %p85, %p86
    %s89 = sadd.s32 %s88, 1
    %p92 = scmp.eq.s32.totalorder %s21, 1
    %p93 = scmp.ne.s32.totalorder %s88, %s90
    %p94 = scmp.eq.s32.totalorder %s21, 0
    %p95 = por %p93, %p94
    %p96 = scmp.ne.s32.totalorder %s88, %s90
    %p97 = scmp.eq.s32.totalorder %s26, 1
    %p98 = por %p96, %p97
    %p99 = scmp.ne.s32.totalorder %s90, %s91
    %p100 = scmp.eq.s32.totalorder %s26, 0
    %p101 = por %p99, %p100
    %p102 = scmp.ne.s32.totalorder %s90, %s91
    %p103 = scmp.eq.s32.totalorder %s27, 1
    %p104 = por %p102, %p103
    %p106 = scmp.ne.s32.totalorder %s91, %s105
    %p107 = scmp.eq.s32.totalorder %s27, 0
    %p108 = por %p106, %p107
    %s109 = ssub.s32 %s29, %s36
    %p110 = scmp.eq.s32.totalorder %s109, 0
    %s112 = sadd.s32 %s111, 1
    %s113 = scalar_select %p110, %s111, %s112
    %p116 = pneg %p110
    %p117 = scmp.eq.s32.totalorder %s21, 1
    %p118 = por %p116, %p117
    %p119 = scmp.ne.s32.totalorder %s111, %s114
    %p120 = scmp.eq.s32.totalorder %s21, 0
    %p121 = por %p119, %p120
    %p122 = scmp.ne.s32.totalorder %s111, %s114
    %p123 = scmp.eq.s32.totalorder %s26, 1
    %p124 = por %p122, %p123
    %p125 = scmp.ne.s32.totalorder %s114, %s115
    %p126 = scmp.eq.s32.totalorder %s26, 0
    %p127 = por %p125, %p126
    %p128 = scmp.ne.s32.totalorder %s114, %s115
    %p129 = scmp.eq.s32.totalorder %s27, 1
    %p130 = por %p128, %p129
    %p132 = scmp.ne.s32.totalorder %s115, %s131
    %p133 = scmp.eq.s32.totalorder %s27, 0
    %p134 = por %p132, %p133
    %s135 = ssub.s32 %s29, %s36
    %p136 = scmp.eq.s32.totalorder %s135, 0
    %s138 = sadd.s32 %s137, 1
    %s139 = scalar_select %p136, %s137, %s138
    %p142 = pneg %p136
    %p143 = scmp.eq.s32.totalorder %s21, 1
    %p144 = por %p142, %p143
    %p145 = scmp.ne.s32.totalorder %s137, %s140
    %p146 = scmp.eq.s32.totalorder %s21, 0
    %p147 = por %p145, %p146
    %p148 = scmp.ne.s32.totalorder %s137, %s140
    %p149 = scmp.eq.s32.totalorder %s26, 1
    %p150 = por %p148, %p149
    %p151 = scmp.ne.s32.totalorder %s140, %s141
    %p152 = scmp.eq.s32.totalorder %s26, 0
    %p153 = por %p151, %p152
    %p154 = scmp.ne.s32.totalorder %s140, %s141
    %p155 = scmp.eq.s32.totalorder %s27, 1
    %p156 = por %p154, %p155
    %p158 = scmp.ne.s32.totalorder %s141, %s157
    %p159 = scmp.eq.s32.totalorder %s27, 0
    %p160 = por %p158, %p159
    %s161 = ssub.s32 %s29, %s36
    %p162 = scmp.eq.s32.totalorder %s161, 0
    %s164 = sadd.s32 %s163, 1
    %s165 = scalar_select %p162, %s163, %s164
    %p168 = pneg %p162
    %p169 = scmp.eq.s32.totalorder %s21, 1
    %p170 = por %p168, %p169
    %p171 = scmp.ne.s32.totalorder %s163, %s166
    %p172 = scmp.eq.s32.totalorder %s21, 0
    %p173 = por %p171, %p172
    %p174 = scmp.ne.s32.totalorder %s163, %s166
    %p175 = scmp.eq.s32.totalorder %s26, 1
    %p176 = por %p174, %p175
    %p177 = scmp.ne.s32.totalorder %s166, %s167
    %p178 = scmp.eq.s32.totalorder %s26, 0
    %p179 = por %p177, %p178
    %p180 = scmp.ne.s32.totalorder %s166, %s167
    %p181 = scmp.eq.s32.totalorder %s27, 1
    %p182 = por %p180, %p181
    %p184 = scmp.ne.s32.totalorder %s167, %s183
    %p185 = scmp.eq.s32.totalorder %s27, 0
    %p186 = por %p184, %p185
    %s187 = ssub.s32 %s29, %s36
    %p188 = scmp.eq.s32.totalorder %s187, 0
    %s190 = sadd.s32 %s189, 1
    %s191 = scalar_select %p188, %s189, %s190
    %p194 = pneg %p188
    %p195 = scmp.eq.s32.totalorder %s21, 1
    %p196 = por %p194, %p195
    %p197 = scmp.ne.s32.totalorder %s189, %s192
    %p198 = scmp.eq.s32.totalorder %s21, 0
    %p199 = por %p197, %p198
    %p200 = scmp.ne.s32.totalorder %s189, %s192
    %p201 = scmp.eq.s32.totalorder %s26, 1
    %p202 = por %p200, %p201
    %p203 = scmp.ne.s32.totalorder %s192, %s193
    %p204 = scmp.eq.s32.totalorder %s26, 0
    %p205 = por %p203, %p204
    %p206 = scmp.ne.s32.totalorder %s192, %s193
    %p207 = scmp.eq.s32.totalorder %s27, 1
    %p208 = por %p206, %p207
    %p210 = scmp.ne.s32.totalorder %s193, %s209
    %p211 = scmp.eq.s32.totalorder %s27, 0
    %p212 = por %p210, %p211
    %s213 = ssub.s32 %s29, %s36
    %p214 = scmp.eq.s32.totalorder %s213, 0
    %s216 = sadd.s32 %s215, 1
    %s217 = scalar_select %p214, %s215, %s216
    %p220 = pneg %p214
    %p221 = scmp.eq.s32.totalorder %s21, 1
    %p222 = por %p220, %p221
    %p223 = scmp.ne.s32.totalorder %s215, %s218
    %p224 = scmp.eq.s32.totalorder %s21, 0
    %p225 = por %p223, %p224
    %p226 = scmp.ne.s32.totalorder %s215, %s218
    %p227 = scmp.eq.s32.totalorder %s26, 1
    %p228 = por %p226, %p227
    %p229 = scmp.ne.s32.totalorder %s218, %s219
    %p230 = scmp.eq.s32.totalorder %s26, 0
    %p231 = por %p229, %p230
    %p232 = scmp.ne.s32.totalorder %s218, %s219
    %p233 = scmp.eq.s32.totalorder %s27, 1
    %p234 = por %p232, %p233
    %p236 = scmp.ne.s32.totalorder %s219, %s235
    %p237 = scmp.eq.s32.totalorder %s27, 0
    %p238 = por %p236, %p237
    %s239 = ssub.s32 %s29, %s36
    %p240 = scmp.eq.s32.totalorder %s239, 0
    %s242 = sadd.s32 %s241, 1
    %s243 = scalar_select %p240, %s241, %s242
    %p246 = pneg %p240
    %p247 = scmp.eq.s32.totalorder %s21, 1
    %p248 = por %p246, %p247
    %p249 = scmp.ne.s32.totalorder %s241, %s244
    %p250 = scmp.eq.s32.totalorder %s21, 0
    %p251 = por %p249, %p250
    %p252 = scmp.ne.s32.totalorder %s241, %s244
    %p253 = scmp.eq.s32.totalorder %s26, 1
    %p254 = por %p252, %p253
    %p255 = scmp.ne.s32.totalorder %s244, %s245
    %p256 = scmp.eq.s32.totalorder %s26, 0
    %p257 = por %p255, %p256
    %p258 = scmp.ne.s32.totalorder %s244, %s245
    %p259 = scmp.eq.s32.totalorder %s27, 1
    %p260 = por %p258, %p259
    %p262 = scmp.ne.s32.totalorder %s245, %s261
    %p263 = scmp.eq.s32.totalorder %s27, 0
    %p264 = por %p262, %p263
    %s265 = ssub.s32 %s29, %s36
    %p266 = scmp.eq.s32.totalorder %s265, 0
    %s268 = sadd.s32 %s267, 1
    %s269 = scalar_select %p266, %s267, %s268
    %p272 = pneg %p266
    %p273 = scmp.eq.s32.totalorder %s21, 1
    %p274 = por %p272, %p273
    %p275 = scmp.ne.s32.totalorder %s267, %s270
    %p276 = scmp.eq.s32.totalorder %s21, 0
    %p277 = por %p275, %p276
    %p278 = scmp.ne.s32.totalorder %s267, %s270
    %p279 = scmp.eq.s32.totalorder %s26, 1
    %p280 = por %p278, %p279
    %p281 = scmp.ne.s32.totalorder %s270, %s271
    %p282 = scmp.eq.s32.totalorder %s26, 0
    %p283 = por %p281, %p282
    %p284 = scmp.ne.s32.totalorder %s270, %s271
    %p285 = scmp.eq.s32.totalorder %s27, 1
    %p286 = por %p284, %p285
    %p288 = scmp.ne.s32.totalorder %s271, %s287
    %p289 = scmp.eq.s32.totalorder %s27, 0
    %p290 = por %p288, %p289
    %s291 = ssub.s32 %s29, %s36
    %p292 = scmp.eq.s32.totalorder %s291, 0
    %s294 = sadd.s32 %s293, 1
    %s295 = scalar_select %p292, %s293, %s294
    %p298 = pneg %p292
    %p299 = scmp.eq.s32.totalorder %s21, 1
    %p300 = por %p298, %p299
    %p301 = scmp.ne.s32.totalorder %s293, %s296
    %p302 = scmp.eq.s32.totalorder %s21, 0
    %p303 = por %p301, %p302
    %p304 = scmp.ne.s32.totalorder %s293, %s296
    %p305 = scmp.eq.s32.totalorder %s26, 1
    %p306 = por %p304, %p305
    %p307 = scmp.ne.s32.totalorder %s296, %s297
    %p308 = scmp.eq.s32.totalorder %s26, 0
    %p309 = por %p307, %p308
    %p310 = scmp.ne.s32.totalorder %s296, %s297
    %p311 = scmp.eq.s32.totalorder %s27, 1
    %p312 = por %p310, %p311
    %p314 = scmp.ne.s32.totalorder %s297, %s313
    %p315 = scmp.eq.s32.totalorder %s27, 0
    %p316 = por %p314, %p315
    %s317 = ssub.s32 %s29, %s36
    %p318 = scmp.eq.s32.totalorder %s317, 0
    %s320 = sadd.s32 %s319, 1
    %s321 = scalar_select %p318, %s319, %s320
    %p324 = pneg %p318
    %p325 = scmp.eq.s32.totalorder %s21, 1
    %p326 = por %p324, %p325
    %p327 = scmp.ne.s32.totalorder %s319, %s322
    %p328 = scmp.eq.s32.totalorder %s21, 0
    %p329 = por %p327, %p328
    %p330 = scmp.ne.s32.totalorder %s319, %s322
    %p331 = scmp.eq.s32.totalorder %s26, 1
    %p332 = por %p330, %p331
    %p333 = scmp.ne.s32.totalorder %s322, %s323
    %p334 = scmp.eq.s32.totalorder %s26, 0
    %p335 = por %p333, %p334
    %p336 = scmp.ne.s32.totalorder %s322, %s323
    %p337 = scmp.eq.s32.totalorder %s27, 1
    %p338 = por %p336, %p337
    %p340 = scmp.ne.s32.totalorder %s323, %s339
    %p341 = scmp.eq.s32.totalorder %s27, 0
    %p342 = por %p340, %p341
    %s343 = ssub.s32 %s29, %s36
    %p344 = scmp.eq.s32.totalorder %s343, 0
    %s346 = sadd.s32 %s345, 1
    %s347 = scalar_select %p344, %s345, %s346
    %p350 = pneg %p344
    %p351 = scmp.eq.s32.totalorder %s21, 1
    %p352 = por %p350, %p351
    %p353 = scmp.ne.s32.totalorder %s345, %s348
    %p354 = scmp.eq.s32.totalorder %s21, 0
    %p355 = por %p353, %p354
    %p356 = scmp.ne.s32.totalorder %s345, %s348
    %p357 = scmp.eq.s32.totalorder %s26, 1
    %p358 = por %p356, %p357
    %p359 = scmp.ne.s32.totalorder %s348, %s349
    %p360 = scmp.eq.s32.totalorder %s26, 0
    %p361 = por %p359, %p360
    %p362 = scmp.ne.s32.totalorder %s348, %s349
    %p363 = scmp.eq.s32.totalorder %s27, 1
    %p364 = por %p362, %p363
    %p366 = scmp.ne.s32.totalorder %s349, %s365
    %p367 = scmp.eq.s32.totalorder %s27, 0
    %p368 = por %p366, %p367
    %s369 = ssub.s32 %s29, %s36
    %p370 = scmp.eq.s32.totalorder %s369, 0
    %s372 = sadd.s32 %s371, 1
    %s373 = scalar_select %p370, %s371, %s372
    %p376 = pneg %p370
    %p377 = scmp.eq.s32.totalorder %s21, 1
    %p378 = por %p376, %p377
    %p379 = scmp.ne.s32.totalorder %s371, %s374
    %p380 = scmp.eq.s32.totalorder %s21, 0
    %p381 = por %p379, %p380
    %p382 = scmp.ne.s32.totalorder %s371, %s374
    %p383 = scmp.eq.s32.totalorder %s26, 1
    %p384 = por %p382, %p383
    %p385 = scmp.ne.s32.totalorder %s374, %s375
    %p386 = scmp.eq.s32.totalorder %s26, 0
    %p387 = por %p385, %p386
    %p388 = scmp.ne.s32.totalorder %s374, %s375
    %p389 = scmp.eq.s32.totalorder %s27, 1
    %p390 = por %p388, %p389
    %p392 = scmp.ne.s32.totalorder %s375, %s391
    %p393 = scmp.eq.s32.totalorder %s27, 0
    %p394 = por %p392, %p393
    %s395 = ssub.s32 %s29, %s36
    %p396 = scmp.eq.s32.totalorder %s395, 0
    %s398 = sadd.s32 %s397, 1
    %s399 = scalar_select %p396, %s397, %s398
    %p402 = pneg %p396
    %p403 = scmp.eq.s32.totalorder %s21, 1
    %p404 = por %p402, %p403
    %p405 = scmp.ne.s32.totalorder %s397, %s400
    %p406 = scmp.eq.s32.totalorder %s21, 0
    %p407 = por %p405, %p406
    %p408 = scmp.ne.s32.totalorder %s397, %s400
    %p409 = scmp.eq.s32.totalorder %s26, 1
    %p410 = por %p408, %p409
    %p411 = scmp.ne.s32.totalorder %s400, %s401
    %p412 = scmp.eq.s32.totalorder %s26, 0
    %p413 = por %p411, %p412
    %p414 = scmp.ne.s32.totalorder %s400, %s401
    %p415 = scmp.eq.s32.totalorder %s27, 1
    %p416 = por %p414, %p415
    %p418 = scmp.ne.s32.totalorder %s401, %s417
    %p419 = scmp.eq.s32.totalorder %s27, 0
    %p420 = por %p418, %p419
    %s421 = ssub.s32 %s28, %s40
    %p422 = scmp.eq.s32.totalorder %s421, 0
    %s424 = sadd.s32 %s423, 1
    %s425 = scalar_select %p422, %s423, %s424
    %p428 = pneg %p422
    %p429 = scmp.eq.s32.totalorder %s21, 1
    %p430 = por %p428, %p429
    %p431 = scmp.ne.s32.totalorder %s423, %s426
    %p432 = scmp.eq.s32.totalorder %s21, 0
    %p433 = por %p431, %p432
    %p434 = scmp.ne.s32.totalorder %s423, %s426
    %p435 = scmp.eq.s32.totalorder %s26, 1
    %p436 = por %p434, %p435
    %p437 = scmp.ne.s32.totalorder %s426, %s427
    %p438 = scmp.eq.s32.totalorder %s26, 0
    %p439 = por %p437, %p438
    %p440 = scmp.ne.s32.totalorder %s426, %s427
    %p441 = scmp.eq.s32.totalorder %s27, 1
    %p442 = por %p440, %p441
    %p444 = scmp.ne.s32.totalorder %s427, %s443
    %p445 = scmp.eq.s32.totalorder %s27, 0
    %p446 = por %p444, %p445
    %p447 = scmp.le.s32.totalorder 1, %s21
    %p448 = scmp.lt.s32.totalorder %s21, 3
    %p449 = pnand %p447, %p448
    %p450 = pneg %p449
    // Predicated region
    $region9: #{model_forward_itm.8} parent=5 // pred_check
      _
    $region10: #{model_forward_itm.8} parent=5 // pred_check_branch
      %452 = sbr.rel (%p449) target = $region12
    $region11: #{model_forward_itm.8} parent=5 // pred_region
      %s453 = ssub.s32 %s21, 1
      // Predicated region
      $region13: #{model_forward_itm.8} parent=11 // pred_check
        %p454 = pneg %p80
      $region14: #{model_forward_itm.8} parent=11 // pred_check_branch
        %456 = sbr.rel (%p454) target = $region16
      $region15: #{model_forward_itm.8} parent=11 // pred_region
        _
      $region16: #{model_forward_itm.8} parent=11 // pred_fallthru
        _
      // Predicated region
      $region17: #{model_forward_itm.8} parent=11 // pred_check
        %p457 = pneg %p101
      $region18: #{model_forward_itm.8} parent=11 // pred_check_branch
        %459 = sbr.rel (%p457) target = $region20
      $region19: #{model_forward_itm.8} parent=11 // pred_region
        _
      $region20: #{model_forward_itm.8} parent=11 // pred_fallthru
        _
      // Predicated region
      $region21: #{model_forward_itm.8} parent=11 // pred_check
        %p460 = pneg %p127
      $region22: #{model_forward_itm.8} parent=11 // pred_check_branch
        %462 = sbr.rel (%p460) target = $region24
      $region23: #{model_forward_itm.8} parent=11 // pred_region
        %p463 = scmp.lt.s32.totalorder %s31, 0
        %s464 = scalar_select %p463, %s31, 0
        %s465 = scalar_lea.vmem %s3, %s464
      $region24: #{model_forward_itm.8} parent=11 // pred_fallthru
        _
      // Predicated region
      $region25: #{model_forward_itm.8} parent=11 // pred_check
        %p466 = pneg %p153
      $region26: #{model_forward_itm.8} parent=11 // pred_check_branch
        %468 = sbr.rel (%p466) target = $region28
      $region27: #{model_forward_itm.8} parent=11 // pred_region
        %p469 = scmp.lt.s32.totalorder %s31, 0
        %s470 = scalar_select %p469, %s31, 0
        %s471 = scalar_lea.vmem %s4, %s470
      $region28: #{model_forward_itm.8} parent=11 // pred_fallthru
        _
      // Predicated region
      $region29: #{model_forward_itm.8} parent=11 // pred_check
        %p472 = pneg %p179
      $region30: #{model_forward_itm.8} parent=11 // pred_check_branch
        %474 = sbr.rel (%p472) target = $region32
      $region31: #{model_forward_itm.8} parent=11 // pred_region
        %p475 = scmp.lt.s32.totalorder %s31, 0
        %s476 = scalar_select %p475, %s31, 0
        %s477 = smul.addr %s476, 4
        %s478 = smul.addr %s477, 4
        %s479 = scalar_lea.vmem %s5, %s478
      $region32: #{model_forward_itm.8} parent=11 // pred_fallthru
        _
      // Predicated region
      $region33: #{model_forward_itm.8} parent=11 // pred_check
        %p480 = pneg %p205
      $region34: #{model_forward_itm.8} parent=11 // pred_check_branch
        %482 = sbr.rel (%p480) target = $region36
      $region35: #{model_forward_itm.8} parent=11 // pred_region
        %p483 = scmp.lt.s32.totalorder %s31, 0
        %s484 = scalar_select %p483, %s31, 0
        %s485 = scalar_lea.vmem %s6, %s484
      $region36: #{model_forward_itm.8} parent=11 // pred_fallthru
        _
      // Predicated region
      $region37: #{model_forward_itm.8} parent=11 // pred_check
        %p486 = pneg %p231
      $region38: #{model_forward_itm.8} parent=11 // pred_check_branch
        %488 = sbr.rel (%p486) target = $region40
      $region39: #{model_forward_itm.8} parent=11 // pred_region
        %p489 = scmp.lt.s32.totalorder %s31, 0
        %s490 = scalar_select %p489, %s31, 0
        %s491 = smul.addr %s490, 4
        %s492 = smul.addr %s491, 4
        %s493 = scalar_lea.vmem %s7, %s492
      $region40: #{model_forward_itm.8} parent=11 // pred_fallthru
        _
      // Predicated region
      $region41: #{model_forward_itm.8} parent=11 // pred_check
        %p494 = pneg %p257
      $region42: #{model_forward_itm.8} parent=11 // pred_check_branch
        %496 = sbr.rel (%p494) target = $region44
      $region43: #{model_forward_itm.8} parent=11 // pred_region
        %p497 = scmp.lt.s32.totalorder %s31, 0
        %s498 = scalar_select %p497, %s31, 0
        %s499 = scalar_lea.vmem %s8, %s498
      $region44: #{model_forward_itm.8} parent=11 // pred_fallthru
        _
      // Predicated region
      $region45: #{model_forward_itm.8} parent=11 // pred_check
        %p500 = pneg %p283
      $region46: #{model_forward_itm.8} parent=11 // pred_check_branch
        %502 = sbr.rel (%p500) target = $region48
      $region47: #{model_forward_itm.8} parent=11 // pred_region
        %p503 = scmp.lt.s32.totalorder %s31, 0
        %s504 = scalar_select %p503, %s31, 0
        %s505 = scalar_lea.vmem %s9, %s504
      $region48: #{model_forward_itm.8} parent=11 // pred_fallthru
        _
      // Predicated region
      $region49: #{model_forward_itm.8} parent=11 // pred_check
        %p506 = pneg %p309
      $region50: #{model_forward_itm.8} parent=11 // pred_check_branch
        %508 = sbr.rel (%p506) target = $region52
      $region51: #{model_forward_itm.8} parent=11 // pred_region
        %p509 = scmp.lt.s32.totalorder %s31, 0
        %s510 = scalar_select %p509, %s31, 0
        %s511 = scalar_lea.vmem %s10, %s510
      $region52: #{model_forward_itm.8} parent=11 // pred_fallthru
        _
      // Predicated region
      $region53: #{model_forward_itm.8} parent=11 // pred_check
        %p512 = pneg %p335
      $region54: #{model_forward_itm.8} parent=11 // pred_check_branch
        %514 = sbr.rel (%p512) target = $region56
      $region55: #{model_forward_itm.8} parent=11 // pred_region
        %p515 = scmp.lt.s32.totalorder %s31, 0
        %s516 = scalar_select %p515, %s31, 0
        %s517 = smul.addr %s516, 4
        %s518 = smul.addr %s517, 4
        %s519 = scalar_lea.vmem %s11, %s518
      $region56: #{model_forward_itm.8} parent=11 // pred_fallthru
        _
      // Predicated region
      $region57: #{model_forward_itm.8} parent=11 // pred_check
        %p520 = pneg %p361
      $region58: #{model_forward_itm.8} parent=11 // pred_check_branch
        %522 = sbr.rel (%p520) target = $region60
      $region59: #{model_forward_itm.8} parent=11 // pred_region
        %p523 = scmp.lt.s32.totalorder %s31, 0
        %s524 = scalar_select %p523, %s31, 0
        %s525 = scalar_lea.vmem %s12, %s524
      $region60: #{model_forward_itm.8} parent=11 // pred_fallthru
        _
      // Predicated region
      $region61: #{model_forward_itm.8} parent=11 // pred_check
        %p526 = pneg %p387
      $region62: #{model_forward_itm.8} parent=11 // pred_check_branch
        %528 = sbr.rel (%p526) target = $region64
      $region63: #{model_forward_itm.8} parent=11 // pred_region
        %p529 = scmp.lt.s32.totalorder %s31, 0
        %s530 = scalar_select %p529, %s31, 0
        %s531 = smul.addr %s530, 8
        %s532 = smul.addr %s531, 4
        %s533 = scalar_lea.vmem %s13, %s532
      $region64: #{model_forward_itm.8} parent=11 // pred_fallthru
        _
      // Predicated region
      $region65: #{model_forward_itm.8} parent=11 // pred_check
        %p534 = pneg %p413
      $region66: #{model_forward_itm.8} parent=11 // pred_check_branch
        %536 = sbr.rel (%p534) target = $region68
      $region67: #{model_forward_itm.8} parent=11 // pred_region
        %p537 = scmp.lt.s32.totalorder %s31, 0
        %s538 = scalar_select %p537, %s31, 0
        %s539 = scalar_lea.vmem %s14, %s538
      $region68: #{model_forward_itm.8} parent=11 // pred_fallthru
        _
    $region12: #{model_forward_itm.8} parent=5 // pred_fallthru
      _
    %p540 = scmp.lt.s32.totalorder %s21, 2
    // Predicated region
    $region69: #{model_forward_itm.8} parent=5 // pred_check
      %p541 = pneg %p540
    $region70: #{model_forward_itm.8} parent=5 // pred_check_branch
      %543 = sbr.rel (%p541) target = $region72
    $region71: #{model_forward_itm.8} parent=5 // pred_region
      // Predicated region
      $region73: #{model_forward_itm.8} parent=71 // pred_check
        %p544 = pneg %p53
      $region74: #{model_forward_itm.8} parent=71 // pred_check_branch
        %546 = sbr.rel (%p544) target = $region76
      $region75: #{model_forward_itm.8} parent=71 // pred_region
        %p547 = scmp.lt.s32.totalorder %s28, 1
        %s548 = scalar_select %p547, %s28, 1
        %s549 = smul.addr %s548, 8
        %s550 = scalar_lea.vmem %s0, %s549
      $region76: #{model_forward_itm.8} parent=71 // pred_fallthru
        _
    $region72: #{model_forward_itm.8} parent=5 // pred_fallthru
      _
    %p551 = scmp.le.s32.totalorder 1, %s21
    %p552 = scmp.lt.s32.totalorder %s21, 3
    %p553 = pnand %p551, %p552
    %p554 = pneg %p553
    // Predicated region
    $region77: #{model_forward_itm.8} parent=5 // pred_check
      _
    $region78: #{model_forward_itm.8} parent=5 // pred_check_branch
      %556 = sbr.rel (%p553) target = $region80
    $region79: #{model_forward_itm.8} parent=5 // pred_region
      %s557 = ssub.s32 %s21, 1
      %p558 = scmp.lt.s32.totalorder %s30, 1
      %s559 = scalar_select %p558, %s30, 1
      %s560 = smul.addr %s559, 8
      %s561 = scalar_lea.vmem %s0, %s560
      %p562 = pneg %p59
      %p563 = pneg %p56
      %p564 = pneg %p80
      %p565 = pneg %p77
      %p566 = pneg %p101
      %p567 = pneg %p98
      %p568 = scmp.lt.s32.totalorder %s31, 0
      %s569 = scalar_select %p568, %s31, 0
      %s570 = scalar_lea.vmem %s3, %s569
      %p571 = pneg %p127
      %p572 = pneg %p124
      %p573 = scmp.lt.s32.totalorder %s31, 0
      %s574 = scalar_select %p573, %s31, 0
      %s575 = scalar_lea.vmem %s4, %s574
      %p576 = pneg %p153
      %p577 = pneg %p150
      %p578 = scmp.lt.s32.totalorder %s31, 0
      %s579 = scalar_select %p578, %s31, 0
      %s580 = smul.addr %s579, 4
      %s581 = smul.addr %s580, 4
      %s582 = scalar_lea.vmem %s5, %s581
      %p583 = pneg %p179
      %p584 = pneg %p176
      %p585 = scmp.lt.s32.totalorder %s31, 0
      %s586 = scalar_select %p585, %s31, 0
      %s587 = scalar_lea.vmem %s6, %s586
      %p588 = pneg %p205
      %p589 = pneg %p202
      %p590 = scmp.lt.s32.totalorder %s31, 0
      %s591 = scalar_select %p590, %s31, 0
      %s592 = smul.addr %s591, 4
      %s593 = smul.addr %s592, 4
      %s594 = scalar_lea.vmem %s7, %s593
      %p595 = pneg %p231
      %p596 = pneg %p228
      %p597 = scmp.lt.s32.totalorder %s31, 0
      %s598 = scalar_select %p597, %s31, 0
      %s599 = scalar_lea.vmem %s8, %s598
      %p600 = pneg %p257
      %p601 = pneg %p254
      %p602 = scmp.lt.s32.totalorder %s31, 0
      %s603 = scalar_select %p602, %s31, 0
      %s604 = scalar_lea.vmem %s9, %s603
      %p605 = pneg %p283
      %p606 = pneg %p280
      %p607 = scmp.lt.s32.totalorder %s31, 0
      %s608 = scalar_select %p607, %s31, 0
      %s609 = scalar_lea.vmem %s10, %s608
      %p610 = pneg %p309
      %p611 = pneg %p306
      %p612 = scmp.lt.s32.totalorder %s31, 0
      %s613 = scalar_select %p612, %s31, 0
      %s614 = smul.addr %s613, 4
      %s615 = smul.addr %s614, 4
      %s616 = scalar_lea.vmem %s11, %s615
      %p617 = pneg %p335
      %p618 = pneg %p332
      %p619 = scmp.lt.s32.totalorder %s31, 0
      %s620 = scalar_select %p619, %s31, 0
      %s621 = scalar_lea.vmem %s12, %s620
      %p622 = pneg %p361
      %p623 = pneg %p358
      %p624 = scmp.lt.s32.totalorder %s31, 0
      %s625 = scalar_select %p624, %s31, 0
      %s626 = smul.addr %s625, 8
      %s627 = smul.addr %s626, 4
      %s628 = scalar_lea.vmem %s13, %s627
      %p629 = pneg %p387
      %p630 = pneg %p384
      %p631 = scmp.lt.s32.totalorder %s31, 0
      %s632 = scalar_select %p631, %s31, 0
      %s633 = scalar_lea.vmem %s14, %s632
      %p634 = pneg %p413
      %p635 = pneg %p410
      %p636 = pneg %p439
      %p637 = pneg %p436
      %p638 = scmp.lt.s32.totalorder %s30, 1
      %s639 = scalar_select %p638, %s30, 1
      %s640 = smul.addr %s639, 8
      %s641 = scalar_lea.vmem %s15, %s640
      %p642 = scmp.lt.s32.totalorder %s30, 1
      %s643 = scalar_select %p642, %s30, 1
      %s644 = smul.addr %s643, 8
      %s645 = scalar_lea.vmem %s0, %s644
      %p646 = scmp.lt.s32.totalorder %s31, 0
      %s647 = scalar_select %p646, %s31, 0
      %s648 = scalar_lea.vmem %s3, %s647
      %p649 = scmp.lt.s32.totalorder %s31, 0
      %s650 = scalar_select %p649, %s31, 0
      %s651 = scalar_lea.vmem %s4, %s650
      %p652 = scmp.lt.s32.totalorder %s31, 0
      %s653 = scalar_select %p652, %s31, 0
      %s654 = smul.addr %s653, 4
      %s655 = smul.addr %s654, 4
      %s656 = scalar_lea.vmem %s5, %s655
      %p657 = scmp.lt.s32.totalorder %s31, 0
      %s658 = scalar_select %p657, %s31, 0
      %s659 = scalar_lea.vmem %s6, %s658
      %p660 = scmp.lt.s32.totalorder %s31, 0
      %s661 = scalar_select %p660, %s31, 0
      %s662 = smul.addr %s661, 4
      %s663 = smul.addr %s662, 4
      %s664 = scalar_lea.vmem %s7, %s663
      %p665 = scmp.lt.s32.totalorder %s31, 0
      %s666 = scalar_select %p665, %s31, 0
      %s667 = scalar_lea.vmem %s8, %s666
      %p668 = scmp.lt.s32.totalorder %s31, 0
      %s669 = scalar_select %p668, %s31, 0
      %s670 = scalar_lea.vmem %s9, %s669
      %p671 = scmp.lt.s32.totalorder %s31, 0
      %s672 = scalar_select %p671, %s31, 0
      %s673 = scalar_lea.vmem %s10, %s672
      %p674 = scmp.lt.s32.totalorder %s31, 0
      %s675 = scalar_select %p674, %s31, 0
      %s676 = smul.addr %s675, 4
      %s677 = smul.addr %s676, 4
      %s678 = scalar_lea.vmem %s11, %s677
      %p679 = scmp.lt.s32.totalorder %s31, 0
      %s680 = scalar_select %p679, %s31, 0
      %s681 = scalar_lea.vmem %s12, %s680
      %p682 = scmp.lt.s32.totalorder %s31, 0
      %s683 = scalar_select %p682, %s31, 0
      %s684 = smul.addr %s683, 8
      %s685 = smul.addr %s684, 4
      %s686 = scalar_lea.vmem %s13, %s685
      %p687 = scmp.lt.s32.totalorder %s31, 0
      %s688 = scalar_select %p687, %s31, 0
      %s689 = scalar_lea.vmem %s14, %s688
      %p690 = scmp.lt.s32.totalorder %s30, 1
      %s691 = scalar_select %p690, %s30, 1
      %s692 = smul.addr %s691, 8
      %s693 = scalar_lea.vmem %s15, %s692
      %p695 = scmp.eq.s32.totalorder %s31, 0
      // Predicated region
      $region81: #{model_forward_itm.8} parent=79 // pred_check
        %p696 = pneg %p695
      $region82: #{model_forward_itm.8} parent=79 // pred_check_branch
        %698 = sbr.rel (%p696) target = $region84
      $region83: #{model_forward_itm.8} parent=79 // pred_region
        %v699 = vld [vmem:[%s645] sm:$0x1f]
        %v700 = vld [vmem:[%s1] sm:$0x1]
        %v701 = vld [vmem:[%s2] sm:$0x1]
        %vm702 = vcmask 258048
        %v703 = vsel %vm702, %v699, 0.0
        %704 = vadd.xlane.f32.xlu0 %v703
        %v705 = vpop.xlane.xlu0 %704
        %v706 = vrcp.pop 32.0
        %v707 = vmul.f32 %v705, %v706
        %v708 = vsub.f32 %v699, %v707
        %v709 = vmul.f32 %v708, %v708
        %v710 = vsel %vm702, %v709, 0.0
        %711 = vadd.xlane.f32.xlu0 %v710
        %v712 = vpop.xlane.xlu0 %711
        %v713 = vmul.f32 %v712, 0.032258064
        %v714 = vrsqrt.pop %v713
        %v715 = vmul.f32 %v713, %v714
        %vm716 = vcmp.eq.f32.partialorder %v713, inf
        %v717 = vsel %vm716, %v713, %v715
        %vm718 = vcmp.eq.f32.partialorder %v713, 0.0
        %v719 = vand.u32 %v713, 2147483648
        %v720 = vsel %vm718, %v719, %v717
        %v721 = vadd.f32 %v720, 1e-06
        %v722 = vrcp.pop %v721
        %v723 = vmul.f32 %v708, %v722
        %v725 = vlaneseq
        %v726 = vshrl.u32 %v725, 7
        %v727 = vsub.s32 0, %v726
        %v728 = vrot.slane %v700, %v727
        %v730 = vmul.f32 %v723, %v728
        %v732 = vlaneseq
        %v733 = vshrl.u32 %v732, 7
        %v734 = vsub.s32 0, %v733
        %v735 = vrot.slane %v701, %v734
        %v737 = vadd.f32 %v730, %v735
        %738 = vst.msk [vmem:[%s693] sm:$0x1f] %vm702, %v737
      $region84: #{model_forward_itm.8} parent=79 // pred_fallthru
        _
      %v739 = vld [vmem:[%s693] sm:$0x1f]
      %v740 = vld [vmem:[%s648] sm:$0x1]
      %v741 = vld [vmem:[%s651] sm:$0x1]
      %vm742 = vcmask 258048
      %v743 = vsel %vm742, %v739, 0.0
      %744 = vadd.xlane.f32.xlu0 %v743
      %v745 = vpop.xlane.xlu0 %744
      %v746 = vrcp.pop 32.0
      %v747 = vmul.f32 %v745, %v746
      %v748 = vsub.f32 %v739, %v747
      %v749 = vmul.f32 %v748, %v748
      %v750 = vsel %vm742, %v749, 0.0
      %751 = vadd.xlane.f32.xlu0 %v750
      %v752 = vpop.xlane.xlu0 %751
      %v753 = vmul.f32 %v752, 0.032258064
      %v754 = vrsqrt.pop %v753
      %v755 = vmul.f32 %v753, %v754
      %vm756 = vcmp.eq.f32.partialorder %v753, inf
      %v757 = vsel %vm756, %v753, %v755
      %vm758 = vcmp.eq.f32.partialorder %v753, 0.0
      %v759 = vand.u32 %v753, 2147483648
      %v760 = vsel %vm758, %v759, %v757
      %v761 = vadd.f32 %v760, 1e-06
      %v762 = vrcp.pop %v761
      %v763 = vmul.f32 %v748, %v762
      %v765 = vlaneseq
      %v766 = vshrl.u32 %v765, 7
      %v767 = vsub.s32 0, %v766
      %v768 = vrot.slane %v740, %v767
      %v770 = vmul.f32 %v763, %v768
      %v772 = vlaneseq
      %v773 = vshrl.u32 %v772, 7
      %v774 = vsub.s32 0, %v773
      %v775 = vrot.slane %v741, %v774
      %v777 = vadd.f32 %v770, %v775
      %v778 = vpack.c.bf16 %v777, %v777
      %v779 = vld [vmem:[%s656] sm:$0xf]
      %v780 = vld [vmem:[%s656 + $0x4] sm:$0xf]
      %v781 = vld [vmem:[%s656 + $0x8] sm:$0xf]
      %v782 = vld [vmem:[%s656 + $0xc] sm:$0xf]
      %v783 = vld [vmem:[%s659] sm:$0x1]
      %v785 = vlaneseq
      %v786 = vshrl.u32 %v785, 7
      %v787 = vsub.s32 0, %v786
      %v788 = vrot.slane %v783, %v787
      %v794 = vunpack.c.l.b16 %v779
      %v795 = vunpack.c.l.b16 %v780
      %v796 = vunpack.c.l.b16 %v781
      %v797 = vunpack.c.l.b16 %v782
      %v798 = vpack.c.b16 %v795, %v794
      %v799 = vpack.c.b16 %v797, %v796
      %vm802 = vcmask 261120
      %v804 = vsel %vm802, %v778, 0
      %806 = vmatprep.subr.bf16.mxu0 0
      %807 = vmatpush1.bf16.msra.mxu0 0
      %808 = vmatprep.subr.bf16.mxu0 0
      %809 = vmatpush1.bf16.msra.mxu0 0
      %810 = vmatprep.subr.bf16.mxu0 0
      %811 = vmatpush1.bf16.msra.mxu0 0
      %812 = vmatprep.subr.bf16.mxu0 0
      %813 = vmatpush1.bf16.msra.mxu0 0
      %814 = vmatprep.subr.bf16.mxu0 0
      %815 = vmatpush1.bf16.msra.mxu0 0
      %816 = vmatprep.subr.bf16.mxu0 0
      %817 = vmatpush1.bf16.msra.mxu0 0
      %818 = vmatprep.subr.bf16.mxu0 0
      %819 = vmatpush1.bf16.msra.mxu0 %v799
      %820 = vmatprep.subr.bf16.mxu0 0
      %821 = vmatpush1.bf16.msra.mxu0 %v798
      %822 = vmatprep.subr.bf16.mxu0 0
      %823 = vmatpush2.bf16.msra.mxu0 0
      %824 = vmatprep.subr.bf16.mxu0 0
      %825 = vmatpush2.bf16.msra.mxu0 0
      %826 = vmatprep.subr.bf16.mxu0 0
      %827 = vmatpush2.bf16.msra.mxu0 0
      %828 = vmatprep.subr.bf16.mxu0 0
      %829 = vmatpush2.bf16.msra.mxu0 0
      %830 = vmatprep.subr.bf16.mxu0 0
      %831 = vmatpush2.bf16.msra.mxu0 0
      %832 = vmatprep.subr.bf16.mxu0 0
      %833 = vmatpush2.bf16.msra.mxu0 0
      %834 = vmatprep.subr.bf16.mxu0 0
      %835 = vmatpush2.bf16.msra.mxu0 0
      %836 = vmatprep.subr.bf16.mxu0 0
      %837 = vmatpush2.bf16.msra.mxu0 0
      %838 = vmatprep.mubr.bf16.mxu0 0
      %839 = vmatmul.mubr.bf16.gmra.mxu0 %v804
      %v840 = vpop.f32.mrf.mxu0
      %v841 = vadd.f32 %v788, %v840
      %v842 = vpop.f32.mrf.mxu0
      %v843 = vpop.f32.mrf.mxu0
      %v844 = vpop.f32.mrf.mxu0
      %845 = vdwg.mxu0
      %v846 = vpack.c.bf16 %v841, %v841
      %848 = vrot.lane.b32.xlu0 %v846, 96
      %v849 = vpop.permute.xlu0 %848
      %vm850 = vcmask 64512
      %v852 = vsel %vm850, %v846, 0
      %v855 = vsel %vm850, %v849, 0
      %857 = vmatprep.subr.bf16.mxu0 0
      %858 = vmatpush1.bf16.xpose.msra.mxu0 0
      %859 = vmatprep.subr.bf16.mxu0 0
      %860 = vmatpush1.bf16.xpose.msra.mxu0 0
      %861 = vmatprep.subr.bf16.mxu0 0
      %862 = vmatpush1.bf16.xpose.msra.mxu0 0
      %863 = vmatprep.subr.bf16.mxu0 0
      %864 = vmatpush1.bf16.xpose.msra.mxu0 0
      %865 = vmatprep.subr.bf16.mxu0 0
      %866 = vmatpush1.bf16.xpose.msra.mxu0 0
      %867 = vmatprep.subr.bf16.mxu0 0
      %868 = vmatpush1.bf16.xpose.msra.mxu0 0
      %869 = vmatprep.subr.bf16.mxu0 0
      %870 = vmatpush1.bf16.xpose.msra.mxu0 0
      %871 = vmatprep.subr.bf16.mxu0 0
      %872 = vmatpush1.bf16.xpose.msra.mxu0 %v855
      %873 = vmatprep.subr.bf16.mxu0 0
      %874 = vmatpush2.bf16.xpose.msra.mxu0 0
      %875 = vmatprep.subr.bf16.mxu0 0
      %876 = vmatpush2.bf16.xpose.msra.mxu0 0
      %877 = vmatprep.subr.bf16.mxu0 0
      %878 = vmatpush2.bf16.xpose.msra.mxu0 0
      %879 = vmatprep.subr.bf16.mxu0 0
      %880 = vmatpush2.bf16.xpose.msra.mxu0 0
      %881 = vmatprep.subr.bf16.mxu0 0
      %882 = vmatpush2.bf16.xpose.msra.mxu0 0
      %883 = vmatprep.subr.bf16.mxu0 0
      %884 = vmatpush2.bf16.xpose.msra.mxu0 0
      %885 = vmatprep.subr.bf16.mxu0 0
      %886 = vmatpush2.bf16.xpose.msra.mxu0 0
      %887 = vmatprep.subr.bf16.mxu0 0
      %888 = vmatpush2.bf16.xpose.msra.mxu0 0
      %889 = vmatprep.mubr.bf16.mxu0 0
      %890 = vmatmul.mubr.bf16.gmra.mxu0 %v852
      %v891 = vpop.f32.mrf.mxu0
      %v892 = vadd.f32 0.0, %v891
      %v893 = vpop.f32.mrf.mxu0
      %v894 = vpop.f32.mrf.mxu0
      %v895 = vpop.f32.mrf.mxu0
      %896 = vdwg.mxu0
      %vm897 = vcmask 36864
      %v898 = vsel %vm897, %v892, -inf
      %899 = vmax.xlane.f32.xlu0 %v898
      %v900 = vpop.xlane.xlu0 %899
      %v901 = vsub.f32 %v892, %v900
      %v902 = vmul.f32 %v901, 1.442695
      %v903 = vpow.pop %v902
      %v904 = vsel %vm897, %v903, 0.0
      %905 = vadd.xlane.f32.xlu0 %v904
      %v906 = vpop.xlane.xlu0 %905
      %v907 = vrcp.pop %v906
      %v908 = vmul.f32 %v903, %v907
      %v909 = vpack.c.bf16 %v908, %v908
      %910 = vrot.lane.b32.xlu0 %v846, 64
      %v911 = vpop.permute.xlu0 %910
      %vm912 = vcmask 39936
      %v914 = vsel %vm912, %v909, 0
      %vm916 = vcmask 1041408
      %vm917 = vcmask 1042432
      %v918 = vsel %vm916, 4294967295, 65535
      %v919 = vsel %vm917, %v918, 0
      %v921 = vand.u32 %v911, %v919
      %923 = vmatprep.subr.bf16.mxu0 0
      %924 = vmatpush1.bf16.msra.mxu0 0
      %925 = vmatprep.subr.bf16.mxu0 0
      %926 = vmatpush1.bf16.msra.mxu0 0
      %927 = vmatprep.subr.bf16.mxu0 0
      %928 = vmatpush1.bf16.msra.mxu0 0
      %929 = vmatprep.subr.bf16.mxu0 0
      %930 = vmatpush1.bf16.msra.mxu0 0
      %931 = vmatprep.subr.bf16.mxu0 0
      %932 = vmatpush1.bf16.msra.mxu0 0
      %933 = vmatprep.subr.bf16.mxu0 0
      %934 = vmatpush1.bf16.msra.mxu0 0
      %935 = vmatprep.subr.bf16.mxu0 0
      %936 = vmatpush1.bf16.msra.mxu0 0
      %937 = vmatprep.subr.bf16.mxu0 0
      %938 = vmatpush1.bf16.msra.mxu0 %v921
      %939 = vmatprep.subr.bf16.mxu0 0
      %940 = vmatpush2.bf16.msra.mxu0 0
      %941 = vmatprep.subr.bf16.mxu0 0
      %942 = vmatpush2.bf16.msra.mxu0 0
      %943 = vmatprep.subr.bf16.mxu0 0
      %944 = vmatpush2.bf16.msra.mxu0 0
      %945 = vmatprep.subr.bf16.mxu0 0
      %946 = vmatpush2.bf16.msra.mxu0 0
      %947 = vmatprep.subr.bf16.mxu0 0
      %948 = vmatpush2.bf16.msra.mxu0 0
      %949 = vmatprep.subr.bf16.mxu0 0
      %950 = vmatpush2.bf16.msra.mxu0 0
      %951 = vmatprep.subr.bf16.mxu0 0
      %952 = vmatpush2.bf16.msra.mxu0 0
      %953 = vmatprep.subr.bf16.mxu0 0
      %954 = vmatpush2.bf16.msra.mxu0 0
      %955 = vmatprep.mubr.bf16.mxu0 0
      %956 = vmatmul.mubr.bf16.gmra.mxu0 %v914
      %v957 = vpop.f32.mrf.mxu0
      %v958 = vadd.f32 0.0, %v957
      %v959 = vpop.f32.mrf.mxu0
      %v960 = vpop.f32.mrf.mxu0
      %v961 = vpop.f32.mrf.mxu0
      %962 = vdwg.mxu0
      %vm963 = vcmask 61440
      %964 = vst.msk [vmem:[#allocation2] sm:$0x1f] %vm963, %v958
      %965 = vrot.lane.b32.xlu0 %v846, 120
      %v966 = vpop.permute.xlu0 %965
      %967 = vrot.lane.b32.xlu0 %v846, 88
      %v968 = vpop.permute.xlu0 %967
      %v970 = vsel %vm850, %v966, 0
      %v973 = vsel %vm850, %v968, 0
      %975 = vmatprep.subr.bf16.mxu0 0
      %976 = vmatpush1.bf16.xpose.msra.mxu0 0
      %977 = vmatprep.subr.bf16.mxu0 0
      %978 = vmatpush1.bf16.xpose.msra.mxu0 0
      %979 = vmatprep.subr.bf16.mxu0 0
      %980 = vmatpush1.bf16.xpose.msra.mxu0 0
      %981 = vmatprep.subr.bf16.mxu0 0
      %982 = vmatpush1.bf16.xpose.msra.mxu0 0
      %983 = vmatprep.subr.bf16.mxu0 0
      %984 = vmatpush1.bf16.xpose.msra.mxu0 0
      %985 = vmatprep.subr.bf16.mxu0 0
      %986 = vmatpush1.bf16.xpose.msra.mxu0 0
      %987 = vmatprep.subr.bf16.mxu0 0
      %988 = vmatpush1.bf16.xpose.msra.mxu0 0
      %989 = vmatprep.subr.bf16.mxu0 0
      %990 = vmatpush1.bf16.xpose.msra.mxu0 %v973
      %991 = vmatprep.subr.bf16.mxu0 0
      %992 = vmatpush2.bf16.xpose.msra.mxu0 0
      %993 = vmatprep.subr.bf16.mxu0 0
      %994 = vmatpush2.bf16.xpose.msra.mxu0 0
      %995 = vmatprep.subr.bf16.mxu0 0
      %996 = vmatpush2.bf16.xpose.msra.mxu0 0
      %997 = vmatprep.subr.bf16.mxu0 0
      %998 = vmatpush2.bf16.xpose.msra.mxu0 0
      %999 = vmatprep.subr.bf16.mxu0 0
      %1000 = vmatpush2.bf16.xpose.msra.mxu0 0
      %1001 = vmatprep.subr.bf16.mxu0 0
      %1002 = vmatpush2.bf16.xpose.msra.mxu0 0
      %1003 = vmatprep.subr.bf16.mxu0 0
      %1004 = vmatpush2.bf16.xpose.msra.mxu0 0
      %1005 = vmatprep.subr.bf16.mxu0 0
      %1006 = vmatpush2.bf16.xpose.msra.mxu0 0
      %1007 = vmatprep.mubr.bf16.mxu0 0
      %1008 = vmatmul.mubr.bf16.gmra.mxu0 %v970
      %v1009 = vpop.f32.mrf.mxu0
      %v1010 = vadd.f32 0.0, %v1009
      %v1011 = vpop.f32.mrf.mxu0
      %v1012 = vpop.f32.mrf.mxu0
      %v1013 = vpop.f32.mrf.mxu0
      %1014 = vdwg.mxu0
      %v1015 = vsel %vm897, %v1010, -inf
      %1016 = vmax.xlane.f32.xlu0 %v1015
      %v1017 = vpop.xlane.xlu0 %1016
      %v1018 = vsub.f32 %v1010, %v1017
      %v1019 = vmul.f32 %v1018, 1.442695
      %v1020 = vpow.pop %v1019
      %v1021 = vsel %vm897, %v1020, 0.0
      %1022 = vadd.xlane.f32.xlu0 %v1021
      %v1023 = vpop.xlane.xlu0 %1022
      %v1024 = vrcp.pop %v1023
      %v1025 = vmul.f32 %v1020, %v1024
      %v1026 = vpack.c.bf16 %v1025, %v1025
      %1027 = vrot.lane.b32.xlu0 %v846, 56
      %v1028 = vpop.permute.xlu0 %1027
      %v1030 = vsel %vm912, %v1026, 0
      %v1033 = vand.u32 %v1028, %v919
      %1035 = vmatprep.subr.bf16.mxu0 0
      %1036 = vmatpush1.bf16.msra.mxu0 0
      %1037 = vmatprep.subr.bf16.mxu0 0
      %1038 = vmatpush1.bf16.msra.mxu0 0
      %1039 = vmatprep.subr.bf16.mxu0 0
      %1040 = vmatpush1.bf16.msra.mxu0 0
      %1041 = vmatprep.subr.bf16.mxu0 0
      %1042 = vmatpush1.bf16.msra.mxu0 0
      %1043 = vmatprep.subr.bf16.mxu0 0
      %1044 = vmatpush1.bf16.msra.mxu0 0
      %1045 = vmatprep.subr.bf16.mxu0 0
      %1046 = vmatpush1.bf16.msra.mxu0 0
      %1047 = vmatprep.subr.bf16.mxu0 0
      %1048 = vmatpush1.bf16.msra.mxu0 0
      %1049 = vmatprep.subr.bf16.mxu0 0
      %1050 = vmatpush1.bf16.msra.mxu0 %v1033
      %1051 = vmatprep.subr.bf16.mxu0 0
      %1052 = vmatpush2.bf16.msra.mxu0 0
      %1053 = vmatprep.subr.bf16.mxu0 0
      %1054 = vmatpush2.bf16.msra.mxu0 0
      %1055 = vmatprep.subr.bf16.mxu0 0
      %1056 = vmatpush2.bf16.msra.mxu0 0
      %1057 = vmatprep.subr.bf16.mxu0 0
      %1058 = vmatpush2.bf16.msra.mxu0 0
      %1059 = vmatprep.subr.bf16.mxu0 0
      %1060 = vmatpush2.bf16.msra.mxu0 0
      %1061 = vmatprep.subr.bf16.mxu0 0
      %1062 = vmatpush2.bf16.msra.mxu0 0
      %1063 = vmatprep.subr.bf16.mxu0 0
      %1064 = vmatpush2.bf16.msra.mxu0 0
      %1065 = vmatprep.subr.bf16.mxu0 0
      %1066 = vmatpush2.bf16.msra.mxu0 0
      %1067 = vmatprep.mubr.bf16.mxu0 0
      %1068 = vmatmul.mubr.bf16.gmra.mxu0 %v1030
      %v1069 = vpop.f32.mrf.mxu0
      %v1070 = vadd.f32 0.0, %v1069
      %v1071 = vpop.f32.mrf.mxu0
      %v1072 = vpop.f32.mrf.mxu0
      %v1073 = vpop.f32.mrf.mxu0
      %1074 = vdwg.mxu0
      %1076 = vrot.lane.b32.xlu0 %v1070, 8
      %v1077 = vpop.permute.xlu0 %1076
      %vm1079 = vcmask 127040
      %1080 = vst.msk [vmem:[#allocation2] sm:$0x1f] %vm1079, %v1077
      %1081 = vrot.lane.b32.xlu0 %v846, 112
      %v1082 = vpop.permute.xlu0 %1081
      %1083 = vrot.lane.b32.xlu0 %v846, 80
      %v1084 = vpop.permute.xlu0 %1083
      %v1086 = vsel %vm850, %v1082, 0
      %v1089 = vsel %vm850, %v1084, 0
      %1091 = vmatprep.subr.bf16.mxu0 0
      %1092 = vmatpush1.bf16.xpose.msra.mxu0 0
      %1093 = vmatprep.subr.bf16.mxu0 0
      %1094 = vmatpush1.bf16.xpose.msra.mxu0 0
      %1095 = vmatprep.subr.bf16.mxu0 0
      %1096 = vmatpush1.bf16.xpose.msra.mxu0 0
      %1097 = vmatprep.subr.bf16.mxu0 0
      %1098 = vmatpush1.bf16.xpose.msra.mxu0 0
      %1099 = vmatprep.subr.bf16.mxu0 0
      %1100 = vmatpush1.bf16.xpose.msra.mxu0 0
      %1101 = vmatprep.subr.bf16.mxu0 0
      %1102 = vmatpush1.bf16.xpose.msra.mxu0 0
      %1103 = vmatprep.subr.bf16.mxu0 0
      %1104 = vmatpush1.bf16.xpose.msra.mxu0 0
      %1105 = vmatprep.subr.bf16.mxu0 0
      %1106 = vmatpush1.bf16.xpose.msra.mxu0 %v1089
      %1107 = vmatprep.subr.bf16.mxu0 0
      %1108 = vmatpush2.bf16.xpose.msra.mxu0 0
      %1109 = vmatprep.subr.bf16.mxu0 0
      %1110 = vmatpush2.bf16.xpose.msra.mxu0 0
      %1111 = vmatprep.subr.bf16.mxu0 0
      %1112 = vmatpush2.bf16.xpose.msra.mxu0 0
      %1113 = vmatprep.subr.bf16.mxu0 0
      %1114 = vmatpush2.bf16.xpose.msra.mxu0 0
      %1115 = vmatprep.subr.bf16.mxu0 0
      %1116 = vmatpush2.bf16.xpose.msra.mxu0 0
      %1117 = vmatprep.subr.bf16.mxu0 0
      %1118 = vmatpush2.bf16.xpose.msra.mxu0 0
      %1119 = vmatprep.subr.bf16.mxu0 0
      %1120 = vmatpush2.bf16.xpose.msra.mxu0 0
      %1121 = vmatprep.subr.bf16.mxu0 0
      %1122 = vmatpush2.bf16.xpose.msra.mxu0 0
      %1123 = vmatprep.mubr.bf16.mxu0 0
      %1124 = vmatmul.mubr.bf16.gmra.mxu0 %v1086
      %v1125 = vpop.f32.mrf.mxu0
      %v1126 = vadd.f32 0.0, %v1125
      %v1127 = vpop.f32.mrf.mxu0
      %v1128 = vpop.f32.mrf.mxu0
      %v1129 = vpop.f32.mrf.mxu0
      %1130 = vdwg.mxu0
      %v1131 = vsel %vm897, %v1126, -inf
      %1132 = vmax.xlane.f32.xlu0 %v1131
      %v1133 = vpop.xlane.xlu0 %1132
      %v1134 = vsub.f32 %v1126, %v1133
      %v1135 = vmul.f32 %v1134, 1.442695
      %v1136 = vpow.pop %v1135
      %v1137 = vsel %vm897, %v1136, 0.0
      %1138 = vadd.xlane.f32.xlu0 %v1137
      %v1139 = vpop.xlane.xlu0 %1138
      %v1140 = vrcp.pop %v1139
      %v1141 = vmul.f32 %v1136, %v1140
      %v1142 = vpack.c.bf16 %v1141, %v1141
      %1143 = vrot.lane.b32.xlu0 %v846, 48
      %v1144 = vpop.permute.xlu0 %1143
      %v1146 = vsel %vm912, %v1142, 0
      %v1149 = vand.u32 %v1144, %v919
      %1151 = vmatprep.subr.bf16.mxu0 0
      %1152 = vmatpush1.bf16.msra.mxu0 0
      %1153 = vmatprep.subr.bf16.mxu0 0
      %1154 = vmatpush1.bf16.msra.mxu0 0
      %1155 = vmatprep.subr.bf16.mxu0 0
      %1156 = vmatpush1.bf16.msra.mxu0 0
      %1157 = vmatprep.subr.bf16.mxu0 0
      %1158 = vmatpush1.bf16.msra.mxu0 0
      %1159 = vmatprep.subr.bf16.mxu0 0
      %1160 = vmatpush1.bf16.msra.mxu0 0
      %1161 = vmatprep.subr.bf16.mxu0 0
      %1162 = vmatpush1.bf16.msra.mxu0 0
      %1163 = vmatprep.subr.bf16.mxu0 0
      %1164 = vmatpush1.bf16.msra.mxu0 0
      %1165 = vmatprep.subr.bf16.mxu0 0
      %1166 = vmatpush1.bf16.msra.mxu0 %v1149
      %1167 = vmatprep.subr.bf16.mxu0 0
      %1168 = vmatpush2.bf16.msra.mxu0 0
      %1169 = vmatprep.subr.bf16.mxu0 0
      %1170 = vmatpush2.bf16.msra.mxu0 0
      %1171 = vmatprep.subr.bf16.mxu0 0
      %1172 = vmatpush2.bf16.msra.mxu0 0
      %1173 = vmatprep.subr.bf16.mxu0 0
      %1174 = vmatpush2.bf16.msra.mxu0 0
      %1175 = vmatprep.subr.bf16.mxu0 0
      %1176 = vmatpush2.bf16.msra.mxu0 0
      %1177 = vmatprep.subr.bf16.mxu0 0
      %1178 = vmatpush2.bf16.msra.mxu0 0
      %1179 = vmatprep.subr.bf16.mxu0 0
      %1180 = vmatpush2.bf16.msra.mxu0 0
      %1181 = vmatprep.subr.bf16.mxu0 0
      %1182 = vmatpush2.bf16.msra.mxu0 0
      %1183 = vmatprep.mubr.bf16.mxu0 0
      %1184 = vmatmul.mubr.bf16.gmra.mxu0 %v1146
      %v1185 = vpop.f32.mrf.mxu0
      %v1186 = vadd.f32 0.0, %v1185
      %v1187 = vpop.f32.mrf.mxu0
      %v1188 = vpop.f32.mrf.mxu0
      %v1189 = vpop.f32.mrf.mxu0
      %1190 = vdwg.mxu0
      %1192 = vrot.lane.b32.xlu0 %v1186, 16
      %v1193 = vpop.permute.xlu0 %1192
      %vm1195 = vcmask 192640
      %1196 = vst.msk [vmem:[#allocation2] sm:$0x1f] %vm1195, %v1193
      %1197 = vrot.lane.b32.xlu0 %v846, 104
      %v1198 = vpop.permute.xlu0 %1197
      %1199 = vrot.lane.b32.xlu0 %v846, 72
      %v1200 = vpop.permute.xlu0 %1199
      %v1202 = vsel %vm850, %v1198, 0
      %v1205 = vsel %vm850, %v1200, 0
      %1207 = vmatprep.subr.bf16.mxu0 0
      %1208 = vmatpush1.bf16.xpose.msra.mxu0 0
      %1209 = vmatprep.subr.bf16.mxu0 0
      %1210 = vmatpush1.bf16.xpose.msra.mxu0 0
      %1211 = vmatprep.subr.bf16.mxu0 0
      %1212 = vmatpush1.bf16.xpose.msra.mxu0 0
      %1213 = vmatprep.subr.bf16.mxu0 0
      %1214 = vmatpush1.bf16.xpose.msra.mxu0 0
      %1215 = vmatprep.subr.bf16.mxu0 0
      %1216 = vmatpush1.bf16.xpose.msra.mxu0 0
      %1217 = vmatprep.subr.bf16.mxu0 0
      %1218 = vmatpush1.bf16.xpose.msra.mxu0 0
      %1219 = vmatprep.subr.bf16.mxu0 0
      %1220 = vmatpush1.bf16.xpose.msra.mxu0 0
      %1221 = vmatprep.subr.bf16.mxu0 0
      %1222 = vmatpush1.bf16.xpose.msra.mxu0 %v1205
      %1223 = vmatprep.subr.bf16.mxu0 0
      %1224 = vmatpush2.bf16.xpose.msra.mxu0 0
      %1225 = vmatprep.subr.bf16.mxu0 0
      %1226 = vmatpush2.bf16.xpose.msra.mxu0 0
      %1227 = vmatprep.subr.bf16.mxu0 0
      %1228 = vmatpush2.bf16.xpose.msra.mxu0 0
      %1229 = vmatprep.subr.bf16.mxu0 0
      %1230 = vmatpush2.bf16.xpose.msra.mxu0 0
      %1231 = vmatprep.subr.bf16.mxu0 0
      %1232 = vmatpush2.bf16.xpose.msra.mxu0 0
      %1233 = vmatprep.subr.bf16.mxu0 0
      %1234 = vmatpush2.bf16.xpose.msra.mxu0 0
      %1235 = vmatprep.subr.bf16.mxu0 0
      %1236 = vmatpush2.bf16.xpose.msra.mxu0 0
      %1237 = vmatprep.subr.bf16.mxu0 0
      %1238 = vmatpush2.bf16.xpose.msra.mxu0 0
      %1239 = vmatprep.mubr.bf16.mxu0 0
      %1240 = vmatmul.mubr.bf16.gmra.mxu0 %v1202
      %v1241 = vpop.f32.mrf.mxu0
      %v1242 = vadd.f32 0.0, %v1241
      %v1243 = vpop.f32.mrf.mxu0
      %v1244 = vpop.f32.mrf.mxu0
      %v1245 = vpop.f32.mrf.mxu0
      %1246 = vdwg.mxu0
      %v1247 = vsel %vm897, %v1242, -inf
      %1248 = vmax.xlane.f32.xlu0 %v1247
      %v1249 = vpop.xlane.xlu0 %1248
      %v1250 = vsub.f32 %v1242, %v1249
      %v1251 = vmul.f32 %v1250, 1.442695
      %v1252 = vpow.pop %v1251
      %v1253 = vsel %vm897, %v1252, 0.0
      %1254 = vadd.xlane.f32.xlu0 %v1253
      %v1255 = vpop.xlane.xlu0 %1254
      %v1256 = vrcp.pop %v1255
      %v1257 = vmul.f32 %v1252, %v1256
      %v1258 = vpack.c.bf16 %v1257, %v1257
      %1259 = vrot.lane.b32.xlu0 %v846, 40
      %v1260 = vpop.permute.xlu0 %1259
      %v1262 = vsel %vm912, %v1258, 0
      %v1265 = vand.u32 %v1260, %v919
      %1267 = vmatprep.subr.bf16.mxu0 0
      %1268 = vmatpush1.bf16.msra.mxu0 0
      %1269 = vmatprep.subr.bf16.mxu0 0
      %1270 = vmatpush1.bf16.msra.mxu0 0
      %1271 = vmatprep.subr.bf16.mxu0 0
      %1272 = vmatpush1.bf16.msra.mxu0 0
      %1273 = vmatprep.subr.bf16.mxu0 0
      %1274 = vmatpush1.bf16.msra.mxu0 0
      %1275 = vmatprep.subr.bf16.mxu0 0
      %1276 = vmatpush1.bf16.msra.mxu0 0
      %1277 = vmatprep.subr.bf16.mxu0 0
      %1278 = vmatpush1.bf16.msra.mxu0 0
      %1279 = vmatprep.subr.bf16.mxu0 0
      %1280 = vmatpush1.bf16.msra.mxu0 0
      %1281 = vmatprep.subr.bf16.mxu0 0
      %1282 = vmatpush1.bf16.msra.mxu0 %v1265
      %1283 = vmatprep.subr.bf16.mxu0 0
      %1284 = vmatpush2.bf16.msra.mxu0 0
      %1285 = vmatprep.subr.bf16.mxu0 0
      %1286 = vmatpush2.bf16.msra.mxu0 0
      %1287 = vmatprep.subr.bf16.mxu0 0
      %1288 = vmatpush2.bf16.msra.mxu0 0
      %1289 = vmatprep.subr.bf16.mxu0 0
      %1290 = vmatpush2.bf16.msra.mxu0 0
      %1291 = vmatprep.subr.bf16.mxu0 0
      %1292 = vmatpush2.bf16.msra.mxu0 0
      %1293 = vmatprep.subr.bf16.mxu0 0
      %1294 = vmatpush2.bf16.msra.mxu0 0
      %1295 = vmatprep.subr.bf16.mxu0 0
      %1296 = vmatpush2.bf16.msra.mxu0 0
      %1297 = vmatprep.subr.bf16.mxu0 0
      %1298 = vmatpush2.bf16.msra.mxu0 0
      %1299 = vmatprep.mubr.bf16.mxu0 0
      %1300 = vmatmul.mubr.bf16.gmra.mxu0 %v1262
      %v1301 = vpop.f32.mrf.mxu0
      %v1302 = vadd.f32 0.0, %v1301
      %v1303 = vpop.f32.mrf.mxu0
      %v1304 = vpop.f32.mrf.mxu0
      %v1305 = vpop.f32.mrf.mxu0
      %1306 = vdwg.mxu0
      %1308 = vrot.lane.b32.xlu0 %v1302, 24
      %v1309 = vpop.permute.xlu0 %1308
      %vm1311 = vcmask 258240
      %1312 = vst.msk [vmem:[#allocation2] sm:$0x1f] %vm1311, %v1309
      %v1313 = vld [vmem:[#allocation2] sm:$0x1f]
      %v1314 = vpack.c.bf16 %v1313, %v1313
      %v1315 = vld [vmem:[%s664] sm:$0xf]
      %v1316 = vld [vmem:[%s664 + $0x4] sm:$0xf]
      %v1317 = vld [vmem:[%s664 + $0x8] sm:$0xf]
      %v1318 = vld [vmem:[%s664 + $0xc] sm:$0xf]
      %v1319 = vld [vmem:[%s667] sm:$0x1]
      %v1321 = vlaneseq
      %v1322 = vshrl.u32 %v1321, 7
      %v1323 = vsub.s32 0, %v1322
      %v1324 = vrot.slane %v1319, %v1323
      %v1330 = vunpack.c.l.b16 %v1315
      %v1331 = vunpack.c.l.b16 %v1316
      %v1332 = vunpack.c.l.b16 %v1317
      %v1333 = vunpack.c.l.b16 %v1318
      %v1334 = vpack.c.b16 %v1331, %v1330
      %v1335 = vpack.c.b16 %v1333, %v1332
      %v1339 = vsel %vm802, %v1314, 0
      %1341 = vmatprep.subr.bf16.mxu0 0
      %1342 = vmatpush1.bf16.msra.mxu0 0
      %1343 = vmatprep.subr.bf16.mxu0 0
      %1344 = vmatpush1.bf16.msra.mxu0 0
      %1345 = vmatprep.subr.bf16.mxu0 0
      %1346 = vmatpush1.bf16.msra.mxu0 0
      %1347 = vmatprep.subr.bf16.mxu0 0
      %1348 = vmatpush1.bf16.msra.mxu0 0
      %1349 = vmatprep.subr.bf16.mxu0 0
      %1350 = vmatpush1.bf16.msra.mxu0 0
      %1351 = vmatprep.subr.bf16.mxu0 0
      %1352 = vmatpush1.bf16.msra.mxu0 0
      %1353 = vmatprep.subr.bf16.mxu0 0
      %1354 = vmatpush1.bf16.msra.mxu0 %v1335
      %1355 = vmatprep.subr.bf16.mxu0 0
      %1356 = vmatpush1.bf16.msra.mxu0 %v1334
      %1357 = vmatprep.subr.bf16.mxu0 0
      %1358 = vmatpush2.bf16.msra.mxu0 0
      %1359 = vmatprep.subr.bf16.mxu0 0
      %1360 = vmatpush2.bf16.msra.mxu0 0
      %1361 = vmatprep.subr.bf16.mxu0 0
      %1362 = vmatpush2.bf16.msra.mxu0 0
      %1363 = vmatprep.subr.bf16.mxu0 0
      %1364 = vmatpush2.bf16.msra.mxu0 0
      %1365 = vmatprep.subr.bf16.mxu0 0
      %1366 = vmatpush2.bf16.msra.mxu0 0
      %1367 = vmatprep.subr.bf16.mxu0 0
      %1368 = vmatpush2.bf16.msra.mxu0 0
      %1369 = vmatprep.subr.bf16.mxu0 0
      %1370 = vmatpush2.bf16.msra.mxu0 0
      %1371 = vmatprep.subr.bf16.mxu0 0
      %1372 = vmatpush2.bf16.msra.mxu0 0
      %1373 = vmatprep.mubr.bf16.mxu0 0
      %1374 = vmatmul.mubr.bf16.gmra.mxu0 %v1339
      %v1375 = vpop.f32.mrf.mxu0
      %v1376 = vadd.f32 %v1324, %v1375
      %v1377 = vpop.f32.mrf.mxu0
      %v1378 = vpop.f32.mrf.mxu0
      %v1379 = vpop.f32.mrf.mxu0
      %1380 = vdwg.mxu0
      %v1381 = vadd.f32 %v739, %v1376
      %v1382 = vld [vmem:[%s670] sm:$0x1]
      %v1383 = vld [vmem:[%s673] sm:$0x1]
      %v1384 = vsel %vm742, %v1381, 0.0
      %1385 = vadd.xlane.f32.xlu0 %v1384
      %v1386 = vpop.xlane.xlu0 %1385
      %v1387 = vmul.f32 %v1386, %v746
      %v1388 = vsub.f32 %v1381, %v1387
      %v1389 = vmul.f32 %v1388, %v1388
      %v1390 = vsel %vm742, %v1389, 0.0
      %1391 = vadd.xlane.f32.xlu0 %v1390
      %v1392 = vpop.xlane.xlu0 %1391
      %v1393 = vmul.f32 %v1392, 0.032258064
      %v1394 = vrsqrt.pop %v1393
      %v1395 = vmul.f32 %v1393, %v1394
      %vm1396 = vcmp.eq.f32.partialorder %v1393, inf
      %v1397 = vsel %vm1396, %v1393, %v1395
      %vm1398 = vcmp.eq.f32.partialorder %v1393, 0.0
      %v1399 = vand.u32 %v1393, 2147483648
      %v1400 = vsel %vm1398, %v1399, %v1397
      %v1401 = vadd.f32 %v1400, 1e-06
      %v1402 = vrcp.pop %v1401
      %v1403 = vmul.f32 %v1388, %v1402
      %v1405 = vlaneseq
      %v1406 = vshrl.u32 %v1405, 7
      %v1407 = vsub.s32 0, %v1406
      %v1408 = vrot.slane %v1382, %v1407
      %v1410 = vmul.f32 %v1403, %v1408
      %v1412 = vlaneseq
      %v1413 = vshrl.u32 %v1412, 7
      %v1414 = vsub.s32 0, %v1413
      %v1415 = vrot.slane %v1383, %v1414
      %v1417 = vadd.f32 %v1410, %v1415
      %v1418 = vpack.c.bf16 %v1417, %v1417
      %v1419 = vld [vmem:[%s678] sm:$0xf]
      %v1420 = vld [vmem:[%s678 + $0x4] sm:$0xf]
      %v1421 = vld [vmem:[%s678 + $0x8] sm:$0xf]
      %v1422 = vld [vmem:[%s678 + $0xc] sm:$0xf]
      %v1423 = vld [vmem:[%s681] sm:$0x1]
      %v1425 = vlaneseq
      %v1426 = vshrl.u32 %v1425, 7
      %v1427 = vsub.s32 0, %v1426
      %v1428 = vrot.slane %v1423, %v1427
      %v1434 = vunpack.c.l.b16 %v1419
      %v1435 = vunpack.c.l.b16 %v1420
      %v1436 = vunpack.c.l.b16 %v1421
      %v1437 = vunpack.c.l.b16 %v1422
      %v1438 = vpack.c.b16 %v1435, %v1434
      %v1439 = vpack.c.b16 %v1437, %v1436
      %v1443 = vsel %vm802, %v1418, 0
      %1445 = vmatprep.subr.bf16.mxu0 0
      %1446 = vmatpush1.bf16.msra.mxu0 0
      %1447 = vmatprep.subr.bf16.mxu0 0
      %1448 = vmatpush1.bf16.msra.mxu0 0
      %1449 = vmatprep.subr.bf16.mxu0 0
      %1450 = vmatpush1.bf16.msra.mxu0 0
      %1451 = vmatprep.subr.bf16.mxu0 0
      %1452 = vmatpush1.bf16.msra.mxu0 0
      %1453 = vmatprep.subr.bf16.mxu0 0
      %1454 = vmatpush1.bf16.msra.mxu0 0
      %1455 = vmatprep.subr.bf16.mxu0 0
      %1456 = vmatpush1.bf16.msra.mxu0 0
      %1457 = vmatprep.subr.bf16.mxu0 0
      %1458 = vmatpush1.bf16.msra.mxu0 %v1439
      %1459 = vmatprep.subr.bf16.mxu0 0
      %1460 = vmatpush1.bf16.msra.mxu0 %v1438
      %1461 = vmatprep.subr.bf16.mxu0 0
      %1462 = vmatpush2.bf16.msra.mxu0 0
      %1463 = vmatprep.subr.bf16.mxu0 0
      %1464 = vmatpush2.bf16.msra.mxu0 0
      %1465 = vmatprep.subr.bf16.mxu0 0
      %1466 = vmatpush2.bf16.msra.mxu0 0
      %1467 = vmatprep.subr.bf16.mxu0 0
      %1468 = vmatpush2.bf16.msra.mxu0 0
      %1469 = vmatprep.subr.bf16.mxu0 0
      %1470 = vmatpush2.bf16.msra.mxu0 0
      %1471 = vmatprep.subr.bf16.mxu0 0
      %1472 = vmatpush2.bf16.msra.mxu0 0
      %1473 = vmatprep.subr.bf16.mxu0 0
      %1474 = vmatpush2.bf16.msra.mxu0 0
      %1475 = vmatprep.subr.bf16.mxu0 0
      %1476 = vmatpush2.bf16.msra.mxu0 0
      %1477 = vmatprep.mubr.bf16.mxu0 0
      %1478 = vmatmul.mubr.bf16.gmra.mxu0 %v1443
      %v1479 = vpop.f32.mrf.mxu0
      %v1480 = vadd.f32 %v1428, %v1479
      %v1481 = vpop.f32.mrf.mxu0
      %v1482 = vpop.f32.mrf.mxu0
      %v1483 = vpop.f32.mrf.mxu0
      %1484 = vdwg.mxu0
      %v1485 = vmax.f32 %v1480, 0.0
      %v1486 = vpack.c.bf16 %v1485, %v1485
      %v1487 = vld [vmem:[%s686] sm:$0xf]
      %v1488 = vld [vmem:[%s686 + $0x4] sm:$0xf]
      %v1489 = vld [vmem:[%s686 + $0x8] sm:$0xf]
      %v1490 = vld [vmem:[%s686 + $0xc] sm:$0xf]
      %v1491 = vld [vmem:[%s686 + $0x10] sm:$0xf]
      %v1492 = vld [vmem:[%s686 + $0x14] sm:$0xf]
      %v1493 = vld [vmem:[%s686 + $0x18] sm:$0xf]
      %v1494 = vld [vmem:[%s686 + $0x1c] sm:$0xf]
      %v1495 = vld [vmem:[%s689] sm:$0x1]
      %v1497 = vlaneseq
      %v1498 = vshrl.u32 %v1497, 7
      %v1499 = vsub.s32 0, %v1498
      %v1500 = vrot.slane %v1495, %v1499
      %v1510 = vunpack.c.l.b16 %v1487
      %v1511 = vunpack.c.l.b16 %v1488
      %v1512 = vunpack.c.l.b16 %v1489
      %v1513 = vunpack.c.l.b16 %v1490
      %v1514 = vunpack.c.l.b16 %v1491
      %v1515 = vunpack.c.l.b16 %v1492
      %v1516 = vunpack.c.l.b16 %v1493
      %v1517 = vunpack.c.l.b16 %v1494
      %v1518 = vpack.c.b16 %v1511, %v1510
      %v1519 = vpack.c.b16 %v1513, %v1512
      %v1520 = vpack.c.b16 %v1515, %v1514
      %v1521 = vpack.c.b16 %v1517, %v1516
      %vm1526 = vcmask 523264
      %v1528 = vsel %vm1526, %v1486, 0
      %1530 = vmatprep.subr.bf16.mxu0 0
      %1531 = vmatpush1.bf16.msra.mxu0 0
      %1532 = vmatprep.subr.bf16.mxu0 0
      %1533 = vmatpush1.bf16.msra.mxu0 0
      %1534 = vmatprep.subr.bf16.mxu0 0
      %1535 = vmatpush1.bf16.msra.mxu0 0
      %1536 = vmatprep.subr.bf16.mxu0 0
      %1537 = vmatpush1.bf16.msra.mxu0 0
      %1538 = vmatprep.subr.bf16.mxu0 0
      %1539 = vmatpush1.bf16.msra.mxu0 %v1521
      %1540 = vmatprep.subr.bf16.mxu0 0
      %1541 = vmatpush1.bf16.msra.mxu0 %v1520
      %1542 = vmatprep.subr.bf16.mxu0 0
      %1543 = vmatpush1.bf16.msra.mxu0 %v1519
      %1544 = vmatprep.subr.bf16.mxu0 0
      %1545 = vmatpush1.bf16.msra.mxu0 %v1518
      %1546 = vmatprep.subr.bf16.mxu0 0
      %1547 = vmatpush2.bf16.msra.mxu0 0
      %1548 = vmatprep.subr.bf16.mxu0 0
      %1549 = vmatpush2.bf16.msra.mxu0 0
      %1550 = vmatprep.subr.bf16.mxu0 0
      %1551 = vmatpush2.bf16.msra.mxu0 0
      %1552 = vmatprep.subr.bf16.mxu0 0
      %1553 = vmatpush2.bf16.msra.mxu0 0
      %1554 = vmatprep.subr.bf16.mxu0 0
      %1555 = vmatpush2.bf16.msra.mxu0 0
      %1556 = vmatprep.subr.bf16.mxu0 0
      %1557 = vmatpush2.bf16.msra.mxu0 0
      %1558 = vmatprep.subr.bf16.mxu0 0
      %1559 = vmatpush2.bf16.msra.mxu0 0
      %1560 = vmatprep.subr.bf16.mxu0 0
      %1561 = vmatpush2.bf16.msra.mxu0 0
      %1562 = vmatprep.mubr.bf16.mxu0 0
      %1563 = vmatmul.mubr.bf16.gmra.mxu0 %v1528
      %v1564 = vpop.f32.mrf.mxu0
      %v1565 = vadd.f32 %v1500, %v1564
      %v1566 = vpop.f32.mrf.mxu0
      %v1567 = vpop.f32.mrf.mxu0
      %v1568 = vpop.f32.mrf.mxu0
      %1569 = vdwg.mxu0
      %v1570 = vadd.f32 %v1381, %v1565
      %1571 = vst.msk [vmem:[%s693] sm:$0x1f] %vm742, %v1570
      %p1572 = scmp.lt.s32.totalorder %s30, 1
      %s1573 = scalar_select %p1572, %s30, 1
      %s1574 = smul.addr %s1573, 8
      %s1575 = scalar_lea.vmem %s15, %s1574
      // Predicated region
      $region85: #{model_forward_itm.8} parent=79 // pred_check
        %p1576 = pneg %p436
      $region86: #{model_forward_itm.8} parent=79 // pred_check_branch
        %1578 = sbr.rel (%p1576) target = $region88
      $region87: #{model_forward_itm.8} parent=79 // pred_region
        _
      $region88: #{model_forward_itm.8} parent=79 // pred_fallthru
        _
    $region80: #{model_forward_itm.8} parent=5 // pred_fallthru
      _
    %p1579 = scmp.le.s32.totalorder 2, %s21
    // Predicated region
    $region89: #{model_forward_itm.8} parent=5 // pred_check
      %p1580 = pneg %p1579
    $region90: #{model_forward_itm.8} parent=5 // pred_check_branch
      %1582 = sbr.rel (%p1580) target = $region92
    $region91: #{model_forward_itm.8} parent=5 // pred_region
      %s1583 = ssub.s32 %s21, 2
      // Predicated region
      $region93: #{model_forward_itm.8} parent=91 // pred_check
        %p1584 = pneg %p442
      $region94: #{model_forward_itm.8} parent=91 // pred_check_branch
        %1586 = sbr.rel (%p1584) target = $region96
      $region95: #{model_forward_itm.8} parent=91 // pred_region
        %p1587 = scmp.lt.s32.totalorder %s32, 1
        %s1588 = scalar_select %p1587, %s32, 1
        %s1589 = smul.addr %s1588, 8
        %s1590 = scalar_lea.vmem %s15, %s1589
      $region96: #{model_forward_itm.8} parent=91 // pred_fallthru
        _
    $region92: #{model_forward_itm.8} parent=5 // pred_fallthru
      _
  $region6: #{model_forward_itm.8} parent=0 // loop_footer
    %s25 = sadd.s32 1, %s21
  $region7: #{model_forward_itm.8} parent=0 // loop_footer_branch
    %20 = sbr.rel target = $region3
  $region8: #{model_forward_itm.8} parent=0 // loop_exit
    _

// kernel: model_forward_itm.9
$region0: #{model_forward_itm.9}
  #allocation0 [shape = 'u32[]', space=smem, size = 0x4, offset = 0x4, fixed_abs, tag = 'smem constant byte address 0x4 - core index']
  #allocation1 [shape = 'u32[144,128]{1,0:T(1,128)}', space=vmem, size = 0x12000, scoped, tag = 'internal scratch']
  #allocation2 [shape = 'f32[6,32]{1,0:T(8,128)}', space=vmem, size = 0x1000, scoped, tag = 'scratch operand']
  %s0 = inlined_call_operand.vmem [shape: f32[2,6,32], index: 0, kind: input, shape index: {}]
  %s1 = inlined_call_operand.vmem [shape: f32[1,32], index: 1, kind: input, shape index: {}]
  %s2 = inlined_call_operand.vmem [shape: f32[1,32], index: 2, kind: input, shape index: {}]
  %s3 = inlined_call_operand.vmem [shape: f32[1,1,32], index: 3, kind: input, shape index: {}]
  %s4 = inlined_call_operand.vmem [shape: f32[1,1,32], index: 4, kind: input, shape index: {}]
  %s5 = inlined_call_operand.vmem [shape: bf16[1,32,96], index: 5, kind: input, shape index: {}]
  %s6 = inlined_call_operand.vmem [shape: f32[1,1,96], index: 6, kind: input, shape index: {}]
  %s7 = inlined_call_operand.vmem [shape: bf16[1,32,32], index: 7, kind: input, shape index: {}]
  %s8 = inlined_call_operand.vmem [shape: f32[1,1,32], index: 8, kind: input, shape index: {}]
  %s9 = inlined_call_operand.vmem [shape: f32[1,1,32], index: 9, kind: input, shape index: {}]
  %s10 = inlined_call_operand.vmem [shape: f32[1,1,32], index: 10, kind: input, shape index: {}]
  %s11 = inlined_call_operand.vmem [shape: bf16[1,32,64], index: 11, kind: input, shape index: {}]
  %s12 = inlined_call_operand.vmem [shape: f32[1,1,64], index: 12, kind: input, shape index: {}]
  %s13 = inlined_call_operand.vmem [shape: bf16[1,64,32], index: 13, kind: input, shape index: {}]
  %s14 = inlined_call_operand.vmem [shape: f32[1,1,32], index: 14, kind: input, shape index: {}]
  %s15 = inlined_call_operand.vmem [shape: f32[2,6,32], index: 15, kind: output, shape index: {}]
  %s16 = sld [smem:[#allocation0]]
  $region97: #{model_forward_itm.9} parent=0
    _
  %s18 = ssub.s32 1, %s16
  %s19 = scalar_select 0, %s18, %s16
  loop: start=0, step=1, limit=4
  $region2: #{model_forward_itm.9} parent=0 // loop_pre_header
    _
  $region3: #{model_forward_itm.9} parent=0 // loop_header
    %s21 = sphi 0, %s25
    %p22 = scmp.ge.s32.totalorder %s21, 4
    %s28 = sphi 0, %s40
    %s29 = sphi 0, %s36
    %s30 = sphi 0, %s28
    %s31 = sphi 0, %s29
    %s32 = sphi 0, %s30
    %s33 = sphi 0, %s31
    %s43 = sphi 0, %s45
    %s46 = sphi 0, %s43
    %s47 = sphi 0, %s46
    %s63 = sphi 0, %s47
    %s67 = sphi 0, %s67
    %s69 = sphi 0, %s67
    %s70 = sphi 0, %s69
    %s84 = sphi 0, %s70
    %s88 = sphi 0, %s88
    %s90 = sphi 0, %s88
    %s91 = sphi 0, %s90
    %s105 = sphi 0, %s91
    %s111 = sphi 0, %s113
    %s114 = sphi 0, %s111
    %s115 = sphi 0, %s114
    %s131 = sphi 0, %s115
    %s137 = sphi 0, %s139
    %s140 = sphi 0, %s137
    %s141 = sphi 0, %s140
    %s157 = sphi 0, %s141
    %s163 = sphi 0, %s165
    %s166 = sphi 0, %s163
    %s167 = sphi 0, %s166
    %s183 = sphi 0, %s167
    %s189 = sphi 0, %s191
    %s192 = sphi 0, %s189
    %s193 = sphi 0, %s192
    %s209 = sphi 0, %s193
    %s215 = sphi 0, %s217
    %s218 = sphi 0, %s215
    %s219 = sphi 0, %s218
    %s235 = sphi 0, %s219
    %s241 = sphi 0, %s243
    %s244 = sphi 0, %s241
    %s245 = sphi 0, %s244
    %s261 = sphi 0, %s245
    %s267 = sphi 0, %s269
    %s270 = sphi 0, %s267
    %s271 = sphi 0, %s270
    %s287 = sphi 0, %s271
    %s293 = sphi 0, %s295
    %s296 = sphi 0, %s293
    %s297 = sphi 0, %s296
    %s313 = sphi 0, %s297
    %s319 = sphi 0, %s321
    %s322 = sphi 0, %s319
    %s323 = sphi 0, %s322
    %s339 = sphi 0, %s323
    %s345 = sphi 0, %s347
    %s348 = sphi 0, %s345
    %s349 = sphi 0, %s348
    %s365 = sphi 0, %s349
    %s371 = sphi 0, %s373
    %s374 = sphi 0, %s371
    %s375 = sphi 0, %s374
    %s391 = sphi 0, %s375
    %s397 = sphi 0, %s399
    %s400 = sphi 0, %s397
    %s401 = sphi 0, %s400
    %s417 = sphi 0, %s401
    %s423 = sphi 0, %s425
    %s426 = sphi 0, %s423
    %s427 = sphi 0, %s426
    %s443 = sphi 0, %s427
  $region4: #{model_forward_itm.9} parent=0 // loop_header_branch
    %24 = sbr.rel (%p22) target = $region8
  $region5: #{model_forward_itm.9} parent=0 // loop_body
    %s26 = ssub.s32 %s21, 1
    %s27 = ssub.s32 %s21, 2
    %s34 = sadd.s32 1, %s29
    %p35 = scmp.ge.s32.totalorder %s34, 1
    %s36 = scalar_select %p35, 0, %s34
    %s37 = sadd.s32 1, %s28
    %s38 = scalar_select %p35, %s37, %s28
    %p39 = scmp.ge.s32.totalorder %s38, 2
    %s40 = scalar_select %p39, 0, %s38
    %s41 = ssub.s32 %s28, %s40
    %p42 = scmp.eq.s32.totalorder %s41, 0
    %s44 = sadd.s32 %s43, 1
    %s45 = scalar_select %p42, %s43, %s44
    %p48 = pneg %p42
    %p49 = scmp.eq.s32.totalorder %s21, 1
    %p50 = por %p48, %p49
    %p51 = scmp.ne.s32.totalorder %s43, %s46
    %p52 = scmp.eq.s32.totalorder %s21, 0
    %p53 = por %p51, %p52
    %p54 = scmp.ne.s32.totalorder %s43, %s46
    %p55 = scmp.eq.s32.totalorder %s26, 1
    %p56 = por %p54, %p55
    %p57 = scmp.ne.s32.totalorder %s46, %s47
    %p58 = scmp.eq.s32.totalorder %s26, 0
    %p59 = por %p57, %p58
    %p60 = scmp.ne.s32.totalorder %s46, %s47
    %p61 = scmp.eq.s32.totalorder %s27, 1
    %p62 = por %p60, %p61
    %p64 = scmp.ne.s32.totalorder %s47, %s63
    %p65 = scmp.eq.s32.totalorder %s27, 0
    %p66 = por %p64, %p65
    %s68 = sadd.s32 %s67, 1
    %p71 = scmp.eq.s32.totalorder %s21, 1
    %p72 = scmp.ne.s32.totalorder %s67, %s69
    %p73 = scmp.eq.s32.totalorder %s21, 0
    %p74 = por %p72, %p73
    %p75 = scmp.ne.s32.totalorder %s67, %s69
    %p76 = scmp.eq.s32.totalorder %s26, 1
    %p77 = por %p75, %p76
    %p78 = scmp.ne.s32.totalorder %s69, %s70
    %p79 = scmp.eq.s32.totalorder %s26, 0
    %p80 = por %p78, %p79
    %p81 = scmp.ne.s32.totalorder %s69, %s70
    %p82 = scmp.eq.s32.totalorder %s27, 1
    %p83 = por %p81, %p82
    %p85 = scmp.ne.s32.totalorder %s70, %s84
    %p86 = scmp.eq.s32.totalorder %s27, 0
    %p87 = por %p85, %p86
    %s89 = sadd.s32 %s88, 1
    %p92 = scmp.eq.s32.totalorder %s21, 1
    %p93 = scmp.ne.s32.totalorder %s88, %s90
    %p94 = scmp.eq.s32.totalorder %s21, 0
    %p95 = por %p93, %p94
    %p96 = scmp.ne.s32.totalorder %s88, %s90
    %p97 = scmp.eq.s32.totalorder %s26, 1
    %p98 = por %p96, %p97
    %p99 = scmp.ne.s32.totalorder %s90, %s91
    %p100 = scmp.eq.s32.totalorder %s26, 0
    %p101 = por %p99, %p100
    %p102 = scmp.ne.s32.totalorder %s90, %s91
    %p103 = scmp.eq.s32.totalorder %s27, 1
    %p104 = por %p102, %p103
    %p106 = scmp.ne.s32.totalorder %s91, %s105
    %p107 = scmp.eq.s32.totalorder %s27, 0
    %p108 = por %p106, %p107
    %s109 = ssub.s32 %s29, %s36
    %p110 = scmp.eq.s32.totalorder %s109, 0
    %s112 = sadd.s32 %s111, 1
    %s113 = scalar_select %p110, %s111, %s112
    %p116 = pneg %p110
    %p117 = scmp.eq.s32.totalorder %s21, 1
    %p118 = por %p116, %p117
    %p119 = scmp.ne.s32.totalorder %s111, %s114
    %p120 = scmp.eq.s32.totalorder %s21, 0
    %p121 = por %p119, %p120
    %p122 = scmp.ne.s32.totalorder %s111, %s114
    %p123 = scmp.eq.s32.totalorder %s26, 1
    %p124 = por %p122, %p123
    %p125 = scmp.ne.s32.totalorder %s114, %s115
    %p126 = scmp.eq.s32.totalorder %s26, 0
    %p127 = por %p125, %p126
    %p128 = scmp.ne.s32.totalorder %s114, %s115
    %p129 = scmp.eq.s32.totalorder %s27, 1
    %p130 = por %p128, %p129
    %p132 = scmp.ne.s32.totalorder %s115, %s131
    %p133 = scmp.eq.s32.totalorder %s27, 0
    %p134 = por %p132, %p133
    %s135 = ssub.s32 %s29, %s36
    %p136 = scmp.eq.s32.totalorder %s135, 0
    %s138 = sadd.s32 %s137, 1
    %s139 = scalar_select %p136, %s137, %s138
    %p142 = pneg %p136
    %p143 = scmp.eq.s32.totalorder %s21, 1
    %p144 = por %p142, %p143
    %p145 = scmp.ne.s32.totalorder %s137, %s140
    %p146 = scmp.eq.s32.totalorder %s21, 0
    %p147 = por %p145, %p146
    %p148 = scmp.ne.s32.totalorder %s137, %s140
    %p149 = scmp.eq.s32.totalorder %s26, 1
    %p150 = por %p148, %p149
    %p151 = scmp.ne.s32.totalorder %s140, %s141
    %p152 = scmp.eq.s32.totalorder %s26, 0
    %p153 = por %p151, %p152
    %p154 = scmp.ne.s32.totalorder %s140, %s141
    %p155 = scmp.eq.s32.totalorder %s27, 1
    %p156 = por %p154, %p155
    %p158 = scmp.ne.s32.totalorder %s141, %s157
    %p159 = scmp.eq.s32.totalorder %s27, 0
    %p160 = por %p158, %p159
    %s161 = ssub.s32 %s29, %s36
    %p162 = scmp.eq.s32.totalorder %s161, 0
    %s164 = sadd.s32 %s163, 1
    %s165 = scalar_select %p162, %s163, %s164
    %p168 = pneg %p162
    %p169 = scmp.eq.s32.totalorder %s21, 1
    %p170 = por %p168, %p169
    %p171 = scmp.ne.s32.totalorder %s163, %s166
    %p172 = scmp.eq.s32.totalorder %s21, 0
    %p173 = por %p171, %p172
    %p174 = scmp.ne.s32.totalorder %s163, %s166
    %p175 = scmp.eq.s32.totalorder %s26, 1
    %p176 = por %p174, %p175
    %p177 = scmp.ne.s32.totalorder %s166, %s167
    %p178 = scmp.eq.s32.totalorder %s26, 0
    %p179 = por %p177, %p178
    %p180 = scmp.ne.s32.totalorder %s166, %s167
    %p181 = scmp.eq.s32.totalorder %s27, 1
    %p182 = por %p180, %p181
    %p184 = scmp.ne.s32.totalorder %s167, %s183
    %p185 = scmp.eq.s32.totalorder %s27, 0
    %p186 = por %p184, %p185
    %s187 = ssub.s32 %s29, %s36
    %p188 = scmp.eq.s32.totalorder %s187, 0
    %s190 = sadd.s32 %s189, 1
    %s191 = scalar_select %p188, %s189, %s190
    %p194 = pneg %p188
    %p195 = scmp.eq.s32.totalorder %s21, 1
    %p196 = por %p194, %p195
    %p197 = scmp.ne.s32.totalorder %s189, %s192
    %p198 = scmp.eq.s32.totalorder %s21, 0
    %p199 = por %p197, %p198
    %p200 = scmp.ne.s32.totalorder %s189, %s192
    %p201 = scmp.eq.s32.totalorder %s26, 1
    %p202 = por %p200, %p201
    %p203 = scmp.ne.s32.totalorder %s192, %s193
    %p204 = scmp.eq.s32.totalorder %s26, 0
    %p205 = por %p203, %p204
    %p206 = scmp.ne.s32.totalorder %s192, %s193
    %p207 = scmp.eq.s32.totalorder %s27, 1
    %p208 = por %p206, %p207
    %p210 = scmp.ne.s32.totalorder %s193, %s209
    %p211 = scmp.eq.s32.totalorder %s27, 0
    %p212 = por %p210, %p211
    %s213 = ssub.s32 %s29, %s36
    %p214 = scmp.eq.s32.totalorder %s213, 0
    %s216 = sadd.s32 %s215, 1
    %s217 = scalar_select %p214, %s215, %s216
    %p220 = pneg %p214
    %p221 = scmp.eq.s32.totalorder %s21, 1
    %p222 = por %p220, %p221
    %p223 = scmp.ne.s32.totalorder %s215, %s218
    %p224 = scmp.eq.s32.totalorder %s21, 0
    %p225 = por %p223, %p224
    %p226 = scmp.ne.s32.totalorder %s215, %s218
    %p227 = scmp.eq.s32.totalorder %s26, 1
    %p228 = por %p226, %p227
    %p229 = scmp.ne.s32.totalorder %s218, %s219
    %p230 = scmp.eq.s32.totalorder %s26, 0
    %p231 = por %p229, %p230
    %p232 = scmp.ne.s32.totalorder %s218, %s219
    %p233 = scmp.eq.s32.totalorder %s27, 1
    %p234 = por %p232, %p233
    %p236 = scmp.ne.s32.totalorder %s219, %s235
    %p237 = scmp.eq.s32.totalorder %s27, 0
    %p238 = por %p236, %p237
    %s239 = ssub.s32 %s29, %s36
    %p240 = scmp.eq.s32.totalorder %s239, 0
    %s242 = sadd.s32 %s241, 1
    %s243 = scalar_select %p240, %s241, %s242
    %p246 = pneg %p240
    %p247 = scmp.eq.s32.totalorder %s21, 1
    %p248 = por %p246, %p247
    %p249 = scmp.ne.s32.totalorder %s241, %s244
    %p250 = scmp.eq.s32.totalorder %s21, 0
    %p251 = por %p249, %p250
    %p252 = scmp.ne.s32.totalorder %s241, %s244
    %p253 = scmp.eq.s32.totalorder %s26, 1
    %p254 = por %p252, %p253
    %p255 = scmp.ne.s32.totalorder %s244, %s245
    %p256 = scmp.eq.s32.totalorder %s26, 0
    %p257 = por %p255, %p256
    %p258 = scmp.ne.s32.totalorder %s244, %s245
    %p259 = scmp.eq.s32.totalorder %s27, 1
    %p260 = por %p258, %p259
    %p262 = scmp.ne.s32.totalorder %s245, %s261
    %p263 = scmp.eq.s32.totalorder %s27, 0
    %p264 = por %p262, %p263
    %s265 = ssub.s32 %s29, %s36
    %p266 = scmp.eq.s32.totalorder %s265, 0
    %s268 = sadd.s32 %s267, 1
    %s269 = scalar_select %p266, %s267, %s268
    %p272 = pneg %p266
    %p273 = scmp.eq.s32.totalorder %s21, 1
    %p274 = por %p272, %p273
    %p275 = scmp.ne.s32.totalorder %s267, %s270
    %p276 = scmp.eq.s32.totalorder %s21, 0
    %p277 = por %p275, %p276
    %p278 = scmp.ne.s32.totalorder %s267, %s270
    %p279 = scmp.eq.s32.totalorder %s26, 1
    %p280 = por %p278, %p279
    %p281 = scmp.ne.s32.totalorder %s270, %s271
    %p282 = scmp.eq.s32.totalorder %s26, 0
    %p283 = por %p281, %p282
    %p284 = scmp.ne.s32.totalorder %s270, %s271
    %p285 = scmp.eq.s32.totalorder %s27, 1
    %p286 = por %p284, %p285
    %p288 = scmp.ne.s32.totalorder %s271, %s287
    %p289 = scmp.eq.s32.totalorder %s27, 0
    %p290 = por %p288, %p289
    %s291 = ssub.s32 %s29, %s36
    %p292 = scmp.eq.s32.totalorder %s291, 0
    %s294 = sadd.s32 %s293, 1
    %s295 = scalar_select %p292, %s293, %s294
    %p298 = pneg %p292
    %p299 = scmp.eq.s32.totalorder %s21, 1
    %p300 = por %p298, %p299
    %p301 = scmp.ne.s32.totalorder %s293, %s296
    %p302 = scmp.eq.s32.totalorder %s21, 0
    %p303 = por %p301, %p302
    %p304 = scmp.ne.s32.totalorder %s293, %s296
    %p305 = scmp.eq.s32.totalorder %s26, 1
    %p306 = por %p304, %p305
    %p307 = scmp.ne.s32.totalorder %s296, %s297
    %p308 = scmp.eq.s32.totalorder %s26, 0
    %p309 = por %p307, %p308
    %p310 = scmp.ne.s32.totalorder %s296, %s297
    %p311 = scmp.eq.s32.totalorder %s27, 1
    %p312 = por %p310, %p311
    %p314 = scmp.ne.s32.totalorder %s297, %s313
    %p315 = scmp.eq.s32.totalorder %s27, 0
    %p316 = por %p314, %p315
    %s317 = ssub.s32 %s29, %s36
    %p318 = scmp.eq.s32.totalorder %s317, 0
    %s320 = sadd.s32 %s319, 1
    %s321 = scalar_select %p318, %s319, %s320
    %p324 = pneg %p318
    %p325 = scmp.eq.s32.totalorder %s21, 1
    %p326 = por %p324, %p325
    %p327 = scmp.ne.s32.totalorder %s319, %s322
    %p328 = scmp.eq.s32.totalorder %s21, 0
    %p329 = por %p327, %p328
    %p330 = scmp.ne.s32.totalorder %s319, %s322
    %p331 = scmp.eq.s32.totalorder %s26, 1
    %p332 = por %p330, %p331
    %p333 = scmp.ne.s32.totalorder %s322, %s323
    %p334 = scmp.eq.s32.totalorder %s26, 0
    %p335 = por %p333, %p334
    %p336 = scmp.ne.s32.totalorder %s322, %s323
    %p337 = scmp.eq.s32.totalorder %s27, 1
    %p338 = por %p336, %p337
    %p340 = scmp.ne.s32.totalorder %s323, %s339
    %p341 = scmp.eq.s32.totalorder %s27, 0
    %p342 = por %p340, %p341
    %s343 = ssub.s32 %s29, %s36
    %p344 = scmp.eq.s32.totalorder %s343, 0
    %s346 = sadd.s32 %s345, 1
    %s347 = scalar_select %p344, %s345, %s346
    %p350 = pneg %p344
    %p351 = scmp.eq.s32.totalorder %s21, 1
    %p352 = por %p350, %p351
    %p353 = scmp.ne.s32.totalorder %s345, %s348
    %p354 = scmp.eq.s32.totalorder %s21, 0
    %p355 = por %p353, %p354
    %p356 = scmp.ne.s32.totalorder %s345, %s348
    %p357 = scmp.eq.s32.totalorder %s26, 1
    %p358 = por %p356, %p357
    %p359 = scmp.ne.s32.totalorder %s348, %s349
    %p360 = scmp.eq.s32.totalorder %s26, 0
    %p361 = por %p359, %p360
    %p362 = scmp.ne.s32.totalorder %s348, %s349
    %p363 = scmp.eq.s32.totalorder %s27, 1
    %p364 = por %p362, %p363
    %p366 = scmp.ne.s32.totalorder %s349, %s365
    %p367 = scmp.eq.s32.totalorder %s27, 0
    %p368 = por %p366, %p367
    %s369 = ssub.s32 %s29, %s36
    %p370 = scmp.eq.s32.totalorder %s369, 0
    %s372 = sadd.s32 %s371, 1
    %s373 = scalar_select %p370, %s371, %s372
    %p376 = pneg %p370
    %p377 = scmp.eq.s32.totalorder %s21, 1
    %p378 = por %p376, %p377
    %p379 = scmp.ne.s32.totalorder %s371, %s374
    %p380 = scmp.eq.s32.totalorder %s21, 0
    %p381 = por %p379, %p380
    %p382 = scmp.ne.s32.totalorder %s371, %s374
    %p383 = scmp.eq.s32.totalorder %s26, 1
    %p384 = por %p382, %p383
    %p385 = scmp.ne.s32.totalorder %s374, %s375
    %p386 = scmp.eq.s32.totalorder %s26, 0
    %p387 = por %p385, %p386
    %p388 = scmp.ne.s32.totalorder %s374, %s375
    %p389 = scmp.eq.s32.totalorder %s27, 1
    %p390 = por %p388, %p389
    %p392 = scmp.ne.s32.totalorder %s375, %s391
    %p393 = scmp.eq.s32.totalorder %s27, 0
    %p394 = por %p392, %p393
    %s395 = ssub.s32 %s29, %s36
    %p396 = scmp.eq.s32.totalorder %s395, 0
    %s398 = sadd.s32 %s397, 1
    %s399 = scalar_select %p396, %s397, %s398
    %p402 = pneg %p396
    %p403 = scmp.eq.s32.totalorder %s21, 1
    %p404 = por %p402, %p403
    %p405 = scmp.ne.s32.totalorder %s397, %s400
    %p406 = scmp.eq.s32.totalorder %s21, 0
    %p407 = por %p405, %p406
    %p408 = scmp.ne.s32.totalorder %s397, %s400
    %p409 = scmp.eq.s32.totalorder %s26, 1
    %p410 = por %p408, %p409
    %p411 = scmp.ne.s32.totalorder %s400, %s401
    %p412 = scmp.eq.s32.totalorder %s26, 0
    %p413 = por %p411, %p412
    %p414 = scmp.ne.s32.totalorder %s400, %s401
    %p415 = scmp.eq.s32.totalorder %s27, 1
    %p416 = por %p414, %p415
    %p418 = scmp.ne.s32.totalorder %s401, %s417
    %p419 = scmp.eq.s32.totalorder %s27, 0
    %p420 = por %p418, %p419
    %s421 = ssub.s32 %s28, %s40
    %p422 = scmp.eq.s32.totalorder %s421, 0
    %s424 = sadd.s32 %s423, 1
    %s425 = scalar_select %p422, %s423, %s424
    %p428 = pneg %p422
    %p429 = scmp.eq.s32.totalorder %s21, 1
    %p430 = por %p428, %p429
    %p431 = scmp.ne.s32.totalorder %s423, %s426
    %p432 = scmp.eq.s32.totalorder %s21, 0
    %p433 = por %p431, %p432
    %p434 = scmp.ne.s32.totalorder %s423, %s426
    %p435 = scmp.eq.s32.totalorder %s26, 1
    %p436 = por %p434, %p435
    %p437 = scmp.ne.s32.totalorder %s426, %s427
    %p438 = scmp.eq.s32.totalorder %s26, 0
    %p439 = por %p437, %p438
    %p440 = scmp.ne.s32.totalorder %s426, %s427
    %p441 = scmp.eq.s32.totalorder %s27, 1
    %p442 = por %p440, %p441
    %p444 = scmp.ne.s32.totalorder %s427, %s443
    %p445 = scmp.eq.s32.totalorder %s27, 0
    %p446 = por %p444, %p445
    %p447 = scmp.le.s32.totalorder 1, %s21
    %p448 = scmp.lt.s32.totalorder %s21, 3
    %p449 = pnand %p447, %p448
    %p450 = pneg %p449
    // Predicated region
    $region9: #{model_forward_itm.9} parent=5 // pred_check
      _
    $region10: #{model_forward_itm.9} parent=5 // pred_check_branch
      %452 = sbr.rel (%p449) target = $region12
    $region11: #{model_forward_itm.9} parent=5 // pred_region
      %s453 = ssub.s32 %s21, 1
      // Predicated region
      $region13: #{model_forward_itm.9} parent=11 // pred_check
        %p454 = pneg %p80
      $region14: #{model_forward_itm.9} parent=11 // pred_check_branch
        %456 = sbr.rel (%p454) target = $region16
      $region15: #{model_forward_itm.9} parent=11 // pred_region
        _
      $region16: #{model_forward_itm.9} parent=11 // pred_fallthru
        _
      // Predicated region
      $region17: #{model_forward_itm.9} parent=11 // pred_check
        %p457 = pneg %p101
      $region18: #{model_forward_itm.9} parent=11 // pred_check_branch
        %459 = sbr.rel (%p457) target = $region20
      $region19: #{model_forward_itm.9} parent=11 // pred_region
        _
      $region20: #{model_forward_itm.9} parent=11 // pred_fallthru
        _
      // Predicated region
      $region21: #{model_forward_itm.9} parent=11 // pred_check
        %p460 = pneg %p127
      $region22: #{model_forward_itm.9} parent=11 // pred_check_branch
        %462 = sbr.rel (%p460) target = $region24
      $region23: #{model_forward_itm.9} parent=11 // pred_region
        %p463 = scmp.lt.s32.totalorder %s31, 0
        %s464 = scalar_select %p463, %s31, 0
        %s465 = scalar_lea.vmem %s3, %s464
      $region24: #{model_forward_itm.9} parent=11 // pred_fallthru
        _
      // Predicated region
      $region25: #{model_forward_itm.9} parent=11 // pred_check
        %p466 = pneg %p153
      $region26: #{model_forward_itm.9} parent=11 // pred_check_branch
        %468 = sbr.rel (%p466) target = $region28
      $region27: #{model_forward_itm.9} parent=11 // pred_region
        %p469 = scmp.lt.s32.totalorder %s31, 0
        %s470 = scalar_select %p469, %s31, 0
        %s471 = scalar_lea.vmem %s4, %s470
      $region28: #{model_forward_itm.9} parent=11 // pred_fallthru
        _
      // Predicated region
      $region29: #{model_forward_itm.9} parent=11 // pred_check
        %p472 = pneg %p179
      $region30: #{model_forward_itm.9} parent=11 // pred_check_branch
        %474 = sbr.rel (%p472) target = $region32
      $region31: #{model_forward_itm.9} parent=11 // pred_region
        %p475 = scmp.lt.s32.totalorder %s31, 0
        %s476 = scalar_select %p475, %s31, 0
        %s477 = smul.addr %s476, 4
        %s478 = smul.addr %s477, 4
        %s479 = scalar_lea.vmem %s5, %s478
      $region32: #{model_forward_itm.9} parent=11 // pred_fallthru
        _
      // Predicated region
      $region33: #{model_forward_itm.9} parent=11 // pred_check
        %p480 = pneg %p205
      $region34: #{model_forward_itm.9} parent=11 // pred_check_branch
        %482 = sbr.rel (%p480) target = $region36
      $region35: #{model_forward_itm.9} parent=11 // pred_region
        %p483 = scmp.lt.s32.totalorder %s31, 0
        %s484 = scalar_select %p483, %s31, 0
        %s485 = scalar_lea.vmem %s6, %s484
      $region36: #{model_forward_itm.9} parent=11 // pred_fallthru
        _
      // Predicated region
      $region37: #{model_forward_itm.9} parent=11 // pred_check
        %p486 = pneg %p231
      $region38: #{model_forward_itm.9} parent=11 // pred_check_branch
        %488 = sbr.rel (%p486) target = $region40
      $region39: #{model_forward_itm.9} parent=11 // pred_region
        %p489 = scmp.lt.s32.totalorder %s31, 0
        %s490 = scalar_select %p489, %s31, 0
        %s491 = smul.addr %s490, 4
        %s492 = smul.addr %s491, 4
        %s493 = scalar_lea.vmem %s7, %s492
      $region40: #{model_forward_itm.9} parent=11 // pred_fallthru
        _
      // Predicated region
      $region41: #{model_forward_itm.9} parent=11 // pred_check
        %p494 = pneg %p257
      $region42: #{model_forward_itm.9} parent=11 // pred_check_branch
        %496 = sbr.rel (%p494) target = $region44
      $region43: #{model_forward_itm.9} parent=11 // pred_region
        %p497 = scmp.lt.s32.totalorder %s31, 0
        %s498 = scalar_select %p497, %s31, 0
        %s499 = scalar_lea.vmem %s8, %s498
      $region44: #{model_forward_itm.9} parent=11 // pred_fallthru
        _
      // Predicated region
      $region45: #{model_forward_itm.9} parent=11 // pred_check
        %p500 = pneg %p283
      $region46: #{model_forward_itm.9} parent=11 // pred_check_branch
        %502 = sbr.rel (%p500) target = $region48
      $region47: #{model_forward_itm.9} parent=11 // pred_region
        %p503 = scmp.lt.s32.totalorder %s31, 0
        %s504 = scalar_select %p503, %s31, 0
        %s505 = scalar_lea.vmem %s9, %s504
      $region48: #{model_forward_itm.9} parent=11 // pred_fallthru
        _
      // Predicated region
      $region49: #{model_forward_itm.9} parent=11 // pred_check
        %p506 = pneg %p309
      $region50: #{model_forward_itm.9} parent=11 // pred_check_branch
        %508 = sbr.rel (%p506) target = $region52
      $region51: #{model_forward_itm.9} parent=11 // pred_region
        %p509 = scmp.lt.s32.totalorder %s31, 0
        %s510 = scalar_select %p509, %s31, 0
        %s511 = scalar_lea.vmem %s10, %s510
      $region52: #{model_forward_itm.9} parent=11 // pred_fallthru
        _
      // Predicated region
      $region53: #{model_forward_itm.9} parent=11 // pred_check
        %p512 = pneg %p335
      $region54: #{model_forward_itm.9} parent=11 // pred_check_branch
        %514 = sbr.rel (%p512) target = $region56
      $region55: #{model_forward_itm.9} parent=11 // pred_region
        %p515 = scmp.lt.s32.totalorder %s31, 0
        %s516 = scalar_select %p515, %s31, 0
        %s517 = smul.addr %s516, 4
        %s518 = smul.addr %s517, 4
        %s519 = scalar_lea.vmem %s11, %s518
      $region56: #{model_forward_itm.9} parent=11 // pred_fallthru
        _
      // Predicated region
      $region57: #{model_forward_itm.9} parent=11 // pred_check
        %p520 = pneg %p361
      $region58: #{model_forward_itm.9} parent=11 // pred_check_branch
        %522 = sbr.rel (%p520) target = $region60
      $region59: #{model_forward_itm.9} parent=11 // pred_region
        %p523 = scmp.lt.s32.totalorder %s31, 0
        %s524 = scalar_select %p523, %s31, 0
        %s525 = scalar_lea.vmem %s12, %s524
      $region60: #{model_forward_itm.9} parent=11 // pred_fallthru
        _
      // Predicated region
      $region61: #{model_forward_itm.9} parent=11 // pred_check
        %p526 = pneg %p387
      $region62: #{model_forward_itm.9} parent=11 // pred_check_branch
        %528 = sbr.rel (%p526) target = $region64
      $region63: #{model_forward_itm.9} parent=11 // pred_region
        %p529 = scmp.lt.s32.totalorder %s31, 0
        %s530 = scalar_select %p529, %s31, 0
        %s531 = smul.addr %s530, 8
        %s532 = smul.addr %s531, 4
        %s533 = scalar_lea.vmem %s13, %s532
      $region64: #{model_forward_itm.9} parent=11 // pred_fallthru
        _
      // Predicated region
      $region65: #{model_forward_itm.9} parent=11 // pred_check
        %p534 = pneg %p413
      $region66: #{model_forward_itm.9} parent=11 // pred_check_branch
        %536 = sbr.rel (%p534) target = $region68
      $region67: #{model_forward_itm.9} parent=11 // pred_region
        %p537 = scmp.lt.s32.totalorder %s31, 0
        %s538 = scalar_select %p537, %s31, 0
        %s539 = scalar_lea.vmem %s14, %s538
      $region68: #{model_forward_itm.9} parent=11 // pred_fallthru
        _
    $region12: #{model_forward_itm.9} parent=5 // pred_fallthru
      _
    %p540 = scmp.lt.s32.totalorder %s21, 2
    // Predicated region
    $region69: #{model_forward_itm.9} parent=5 // pred_check
      %p541 = pneg %p540
    $region70: #{model_forward_itm.9} parent=5 // pred_check_branch
      %543 = sbr.rel (%p541) target = $region72
    $region71: #{model_forward_itm.9} parent=5 // pred_region
      // Predicated region
      $region73: #{model_forward_itm.9} parent=71 // pred_check
        %p544 = pneg %p53
      $region74: #{model_forward_itm.9} parent=71 // pred_check_branch
        %546 = sbr.rel (%p544) target = $region76
      $region75: #{model_forward_itm.9} parent=71 // pred_region
        %p547 = scmp.lt.s32.totalorder %s28, 1
        %s548 = scalar_select %p547, %s28, 1
        %s549 = smul.addr %s548, 8
        %s550 = scalar_lea.vmem %s0, %s549
      $region76: #{model_forward_itm.9} parent=71 // pred_fallthru
        _
    $region72: #{model_forward_itm.9} parent=5 // pred_fallthru
      _
    %p551 = scmp.le.s32.totalorder 1, %s21
    %p552 = scmp.lt.s32.totalorder %s21, 3
    %p553 = pnand %p551, %p552
    %p554 = pneg %p553
    // Predicated region
    $region77: #{model_forward_itm.9} parent=5 // pred_check
      _
    $region78: #{model_forward_itm.9} parent=5 // pred_check_branch
      %556 = sbr.rel (%p553) target = $region80
    $region79: #{model_forward_itm.9} parent=5 // pred_region
      %s557 = ssub.s32 %s21, 1
      %p558 = scmp.lt.s32.totalorder %s30, 1
      %s559 = scalar_select %p558, %s30, 1
      %s560 = smul.addr %s559, 8
      %s561 = scalar_lea.vmem %s0, %s560
      %p562 = pneg %p59
      %p563 = pneg %p56
      %p564 = pneg %p80
      %p565 = pneg %p77
      %p566 = pneg %p101
      %p567 = pneg %p98
      %p568 = scmp.lt.s32.totalorder %s31, 0
      %s569 = scalar_select %p568, %s31, 0
      %s570 = scalar_lea.vmem %s3, %s569
      %p571 = pneg %p127
      %p572 = pneg %p124
      %p573 = scmp.lt.s32.totalorder %s31, 0
      %s574 = scalar_select %p573, %s31, 0
      %s575 = scalar_lea.vmem %s4, %s574
      %p576 = pneg %p153
      %p577 = pneg %p150
      %p578 = scmp.lt.s32.totalorder %s31, 0
      %s579 = scalar_select %p578, %s31, 0
      %s580 = smul.addr %s579, 4
      %s581 = smul.addr %s580, 4
      %s582 = scalar_lea.vmem %s5, %s581
      %p583 = pneg %p179
      %p584 = pneg %p176
      %p585 = scmp.lt.s32.totalorder %s31, 0
      %s586 = scalar_select %p585, %s31, 0
      %s587 = scalar_lea.vmem %s6, %s586
      %p588 = pneg %p205
      %p589 = pneg %p202
      %p590 = scmp.lt.s32.totalorder %s31, 0
      %s591 = scalar_select %p590, %s31, 0
      %s592 = smul.addr %s591, 4
      %s593 = smul.addr %s592, 4
      %s594 = scalar_lea.vmem %s7, %s593
      %p595 = pneg %p231
      %p596 = pneg %p228
      %p597 = scmp.lt.s32.totalorder %s31, 0
      %s598 = scalar_select %p597, %s31, 0
      %s599 = scalar_lea.vmem %s8, %s598
      %p600 = pneg %p257
      %p601 = pneg %p254
      %p602 = scmp.lt.s32.totalorder %s31, 0
      %s603 = scalar_select %p602, %s31, 0
      %s604 = scalar_lea.vmem %s9, %s603
      %p605 = pneg %p283
      %p606 = pneg %p280
      %p607 = scmp.lt.s32.totalorder %s31, 0
      %s608 = scalar_select %p607, %s31, 0
      %s609 = scalar_lea.vmem %s10, %s608
      %p610 = pneg %p309
      %p611 = pneg %p306
      %p612 = scmp.lt.s32.totalorder %s31, 0
      %s613 = scalar_select %p612, %s31, 0
      %s614 = smul.addr %s613, 4
      %s615 = smul.addr %s614, 4
      %s616 = scalar_lea.vmem %s11, %s615
      %p617 = pneg %p335
      %p618 = pneg %p332
      %p619 = scmp.lt.s32.totalorder %s31, 0
      %s620 = scalar_select %p619, %s31, 0
      %s621 = scalar_lea.vmem %s12, %s620
      %p622 = pneg %p361
      %p623 = pneg %p358
      %p624 = scmp.lt.s32.totalorder %s31, 0
      %s625 = scalar_select %p624, %s31, 0
      %s626 = smul.addr %s625, 8
      %s627 = smul.addr %s626, 4
      %s628 = scalar_lea.vmem %s13, %s627
      %p629 = pneg %p387
      %p630 = pneg %p384
      %p631 = scmp.lt.s32.totalorder %s31, 0
      %s632 = scalar_select %p631, %s31, 0
      %s633 = scalar_lea.vmem %s14, %s632
      %p634 = pneg %p413
      %p635 = pneg %p410
      %p636 = pneg %p439
      %p637 = pneg %p436
      %p638 = scmp.lt.s32.totalorder %s30, 1
      %s639 = scalar_select %p638, %s30, 1
      %s640 = smul.addr %s639, 8
      %s641 = scalar_lea.vmem %s15, %s640
      %p642 = scmp.lt.s32.totalorder %s30, 1
      %s643 = scalar_select %p642, %s30, 1
      %s644 = smul.addr %s643, 8
      %s645 = scalar_lea.vmem %s0, %s644
      %p646 = scmp.lt.s32.totalorder %s31, 0
      %s647 = scalar_select %p646, %s31, 0
      %s648 = scalar_lea.vmem %s3, %s647
      %p649 = scmp.lt.s32.totalorder %s31, 0
      %s650 = scalar_select %p649, %s31, 0
      %s651 = scalar_lea.vmem %s4, %s650
      %p652 = scmp.lt.s32.totalorder %s31, 0
      %s653 = scalar_select %p652, %s31, 0
      %s654 = smul.addr %s653, 4
      %s655 = smul.addr %s654, 4
      %s656 = scalar_lea.vmem %s5, %s655
      %p657 = scmp.lt.s32.totalorder %s31, 0
      %s658 = scalar_select %p657, %s31, 0
      %s659 = scalar_lea.vmem %s6, %s658
      %p660 = scmp.lt.s32.totalorder %s31, 0
      %s661 = scalar_select %p660, %s31, 0
      %s662 = smul.addr %s661, 4
      %s663 = smul.addr %s662, 4
      %s664 = scalar_lea.vmem %s7, %s663
      %p665 = scmp.lt.s32.totalorder %s31, 0
      %s666 = scalar_select %p665, %s31, 0
      %s667 = scalar_lea.vmem %s8, %s666
      %p668 = scmp.lt.s32.totalorder %s31, 0
      %s669 = scalar_select %p668, %s31, 0
      %s670 = scalar_lea.vmem %s9, %s669
      %p671 = scmp.lt.s32.totalorder %s31, 0
      %s672 = scalar_select %p671, %s31, 0
      %s673 = scalar_lea.vmem %s10, %s672
      %p674 = scmp.lt.s32.totalorder %s31, 0
      %s675 = scalar_select %p674, %s31, 0
      %s676 = smul.addr %s675, 4
      %s677 = smul.addr %s676, 4
      %s678 = scalar_lea.vmem %s11, %s677
      %p679 = scmp.lt.s32.totalorder %s31, 0
      %s680 = scalar_select %p679, %s31, 0
      %s681 = scalar_lea.vmem %s12, %s680
      %p682 = scmp.lt.s32.totalorder %s31, 0
      %s683 = scalar_select %p682, %s31, 0
      %s684 = smul.addr %s683, 8
      %s685 = smul.addr %s684, 4
      %s686 = scalar_lea.vmem %s13, %s685
      %p687 = scmp.lt.s32.totalorder %s31, 0
      %s688 = scalar_select %p687, %s31, 0
      %s689 = scalar_lea.vmem %s14, %s688
      %p690 = scmp.lt.s32.totalorder %s30, 1
      %s691 = scalar_select %p690, %s30, 1
      %s692 = smul.addr %s691, 8
      %s693 = scalar_lea.vmem %s15, %s692
      %p695 = scmp.eq.s32.totalorder %s31, 0
      // Predicated region
      $region81: #{model_forward_itm.9} parent=79 // pred_check
        %p696 = pneg %p695
      $region82: #{model_forward_itm.9} parent=79 // pred_check_branch
        %698 = sbr.rel (%p696) target = $region84
      $region83: #{model_forward_itm.9} parent=79 // pred_region
        %v699 = vld [vmem:[%s645] sm:$0x3f]
        %v700 = vld [vmem:[%s1] sm:$0x1]
        %v701 = vld [vmem:[%s2] sm:$0x1]
        %vm702 = vcmask 259072
        %v703 = vsel %vm702, %v699, 0.0
        %704 = vadd.xlane.f32.xlu0 %v703
        %v705 = vpop.xlane.xlu0 %704
        %v706 = vrcp.pop 32.0
        %v707 = vmul.f32 %v705, %v706
        %v708 = vsub.f32 %v699, %v707
        %v709 = vmul.f32 %v708, %v708
        %v710 = vsel %vm702, %v709, 0.0
        %711 = vadd.xlane.f32.xlu0 %v710
        %v712 = vpop.xlane.xlu0 %711
        %v713 = vmul.f32 %v712, 0.032258064
        %v714 = vrsqrt.pop %v713
        %v715 = vmul.f32 %v713, %v714
        %vm716 = vcmp.eq.f32.partialorder %v713, inf
        %v717 = vsel %vm716, %v713, %v715
        %vm718 = vcmp.eq.f32.partialorder %v713, 0.0
        %v719 = vand.u32 %v713, 2147483648
        %v720 = vsel %vm718, %v719, %v717
        %v721 = vadd.f32 %v720, 1e-06
        %v722 = vrcp.pop %v721
        %v723 = vmul.f32 %v708, %v722
        %v725 = vlaneseq
        %v726 = vshrl.u32 %v725, 7
        %v727 = vsub.s32 0, %v726
        %v728 = vrot.slane %v700, %v727
        %v730 = vmul.f32 %v723, %v728
        %v732 = vlaneseq
        %v733 = vshrl.u32 %v732, 7
        %v734 = vsub.s32 0, %v733
        %v735 = vrot.slane %v701, %v734
        %v737 = vadd.f32 %v730, %v735
        %738 = vst.msk [vmem:[%s693] sm:$0x3f] %vm702, %v737
      $region84: #{model_forward_itm.9} parent=79 // pred_fallthru
        _
      %v739 = vld [vmem:[%s693] sm:$0x3f]
      %v740 = vld [vmem:[%s648] sm:$0x1]
      %v741 = vld [vmem:[%s651] sm:$0x1]
      %vm742 = vcmask 259072
      %v743 = vsel %vm742, %v739, 0.0
      %744 = vadd.xlane.f32.xlu0 %v743
      %v745 = vpop.xlane.xlu0 %744
      %v746 = vrcp.pop 32.0
      %v747 = vmul.f32 %v745, %v746
      %v748 = vsub.f32 %v739, %v747
      %v749 = vmul.f32 %v748, %v748
      %v750 = vsel %vm742, %v749, 0.0
      %751 = vadd.xlane.f32.xlu0 %v750
      %v752 = vpop.xlane.xlu0 %751
      %v753 = vmul.f32 %v752, 0.032258064
      %v754 = vrsqrt.pop %v753
      %v755 = vmul.f32 %v753, %v754
      %vm756 = vcmp.eq.f32.partialorder %v753, inf
      %v757 = vsel %vm756, %v753, %v755
      %vm758 = vcmp.eq.f32.partialorder %v753, 0.0
      %v759 = vand.u32 %v753, 2147483648
      %v760 = vsel %vm758, %v759, %v757
      %v761 = vadd.f32 %v760, 1e-06
      %v762 = vrcp.pop %v761
      %v763 = vmul.f32 %v748, %v762
      %v765 = vlaneseq
      %v766 = vshrl.u32 %v765, 7
      %v767 = vsub.s32 0, %v766
      %v768 = vrot.slane %v740, %v767
      %v770 = vmul.f32 %v763, %v768
      %v772 = vlaneseq
      %v773 = vshrl.u32 %v772, 7
      %v774 = vsub.s32 0, %v773
      %v775 = vrot.slane %v741, %v774
      %v777 = vadd.f32 %v770, %v775
      %v778 = vpack.c.bf16 %v777, %v777
      %v779 = vld [vmem:[%s656] sm:$0xf]
      %v780 = vld [vmem:[%s656 + $0x4] sm:$0xf]
      %v781 = vld [vmem:[%s656 + $0x8] sm:$0xf]
      %v782 = vld [vmem:[%s656 + $0xc] sm:$0xf]
      %v783 = vld [vmem:[%s659] sm:$0x1]
      %v785 = vlaneseq
      %v786 = vshrl.u32 %v785, 7
      %v787 = vsub.s32 0, %v786
      %v788 = vrot.slane %v783, %v787
      %v794 = vunpack.c.l.b16 %v779
      %v795 = vunpack.c.l.b16 %v780
      %v796 = vunpack.c.l.b16 %v781
      %v797 = vunpack.c.l.b16 %v782
      %v798 = vpack.c.b16 %v795, %v794
      %v799 = vpack.c.b16 %v797, %v796
      %vm802 = vcmask 261120
      %v804 = vsel %vm802, %v778, 0
      %806 = vmatprep.subr.bf16.mxu0 0
      %807 = vmatpush1.bf16.msra.mxu0 0
      %808 = vmatprep.subr.bf16.mxu0 0
      %809 = vmatpush1.bf16.msra.mxu0 0
      %810 = vmatprep.subr.bf16.mxu0 0
      %811 = vmatpush1.bf16.msra.mxu0 0
      %812 = vmatprep.subr.bf16.mxu0 0
      %813 = vmatpush1.bf16.msra.mxu0 0
      %814 = vmatprep.subr.bf16.mxu0 0
      %815 = vmatpush1.bf16.msra.mxu0 0
      %816 = vmatprep.subr.bf16.mxu0 0
      %817 = vmatpush1.bf16.msra.mxu0 0
      %818 = vmatprep.subr.bf16.mxu0 0
      %819 = vmatpush1.bf16.msra.mxu0 %v799
      %820 = vmatprep.subr.bf16.mxu0 0
      %821 = vmatpush1.bf16.msra.mxu0 %v798
      %822 = vmatprep.subr.bf16.mxu0 0
      %823 = vmatpush2.bf16.msra.mxu0 0
      %824 = vmatprep.subr.bf16.mxu0 0
      %825 = vmatpush2.bf16.msra.mxu0 0
      %826 = vmatprep.subr.bf16.mxu0 0
      %827 = vmatpush2.bf16.msra.mxu0 0
      %828 = vmatprep.subr.bf16.mxu0 0
      %829 = vmatpush2.bf16.msra.mxu0 0
      %830 = vmatprep.subr.bf16.mxu0 0
      %831 = vmatpush2.bf16.msra.mxu0 0
      %832 = vmatprep.subr.bf16.mxu0 0
      %833 = vmatpush2.bf16.msra.mxu0 0
      %834 = vmatprep.subr.bf16.mxu0 0
      %835 = vmatpush2.bf16.msra.mxu0 0
      %836 = vmatprep.subr.bf16.mxu0 0
      %837 = vmatpush2.bf16.msra.mxu0 0
      %838 = vmatprep.mubr.bf16.mxu0 0
      %839 = vmatmul.mubr.bf16.gmra.mxu0 %v804
      %v840 = vpop.f32.mrf.mxu0
      %v841 = vadd.f32 %v788, %v840
      %v842 = vpop.f32.mrf.mxu0
      %v843 = vpop.f32.mrf.mxu0
      %v844 = vpop.f32.mrf.mxu0
      %845 = vdwg.mxu0
      %v846 = vpack.c.bf16 %v841, %v841
      %848 = vrot.lane.b32.xlu0 %v846, 96
      %v849 = vpop.permute.xlu0 %848
      %vm850 = vcmask 64512
      %v852 = vsel %vm850, %v846, 0
      %v855 = vsel %vm850, %v849, 0
      %857 = vmatprep.subr.bf16.mxu0 0
      %858 = vmatpush1.bf16.xpose.msra.mxu0 0
      %859 = vmatprep.subr.bf16.mxu0 0
      %860 = vmatpush1.bf16.xpose.msra.mxu0 0
      %861 = vmatprep.subr.bf16.mxu0 0
      %862 = vmatpush1.bf16.xpose.msra.mxu0 0
      %863 = vmatprep.subr.bf16.mxu0 0
      %864 = vmatpush1.bf16.xpose.msra.mxu0 0
      %865 = vmatprep.subr.bf16.mxu0 0
      %866 = vmatpush1.bf16.xpose.msra.mxu0 0
      %867 = vmatprep.subr.bf16.mxu0 0
      %868 = vmatpush1.bf16.xpose.msra.mxu0 0
      %869 = vmatprep.subr.bf16.mxu0 0
      %870 = vmatpush1.bf16.xpose.msra.mxu0 0
      %871 = vmatprep.subr.bf16.mxu0 0
      %872 = vmatpush1.bf16.xpose.msra.mxu0 %v855
      %873 = vmatprep.subr.bf16.mxu0 0
      %874 = vmatpush2.bf16.xpose.msra.mxu0 0
      %875 = vmatprep.subr.bf16.mxu0 0
      %876 = vmatpush2.bf16.xpose.msra.mxu0 0
      %877 = vmatprep.subr.bf16.mxu0 0
      %878 = vmatpush2.bf16.xpose.msra.mxu0 0
      %879 = vmatprep.subr.bf16.mxu0 0
      %880 = vmatpush2.bf16.xpose.msra.mxu0 0
      %881 = vmatprep.subr.bf16.mxu0 0
      %882 = vmatpush2.bf16.xpose.msra.mxu0 0
      %883 = vmatprep.subr.bf16.mxu0 0
      %884 = vmatpush2.bf16.xpose.msra.mxu0 0
      %885 = vmatprep.subr.bf16.mxu0 0
      %886 = vmatpush2.bf16.xpose.msra.mxu0 0
      %887 = vmatprep.subr.bf16.mxu0 0
      %888 = vmatpush2.bf16.xpose.msra.mxu0 0
      %889 = vmatprep.mubr.bf16.mxu0 0
      %890 = vmatmul.mubr.bf16.gmra.mxu0 %v852
      %v891 = vpop.f32.mrf.mxu0
      %v892 = vadd.f32 0.0, %v891
      %v893 = vpop.f32.mrf.mxu0
      %v894 = vpop.f32.mrf.mxu0
      %v895 = vpop.f32.mrf.mxu0
      %896 = vdwg.mxu0
      %vm897 = vcmask 46080
      %v898 = vsel %vm897, %v892, -inf
      %899 = vmax.xlane.f32.xlu0 %v898
      %v900 = vpop.xlane.xlu0 %899
      %v901 = vsub.f32 %v892, %v900
      %v902 = vmul.f32 %v901, 1.442695
      %v903 = vpow.pop %v902
      %v904 = vsel %vm897, %v903, 0.0
      %905 = vadd.xlane.f32.xlu0 %v904
      %v906 = vpop.xlane.xlu0 %905
      %v907 = vrcp.pop %v906
      %v908 = vmul.f32 %v903, %v907
      %v909 = vpack.c.bf16 %v908, %v908
      %910 = vrot.lane.b32.xlu0 %v846, 64
      %v911 = vpop.permute.xlu0 %910
      %vm912 = vcmask 48128
      %v914 = vsel %vm912, %v909, 0
      %vm916 = vcmask 1042432
      %v918 = vsel %vm916, %v911, 0
      %920 = vmatprep.subr.bf16.mxu0 0
      %921 = vmatpush1.bf16.msra.mxu0 0
      %922 = vmatprep.subr.bf16.mxu0 0
      %923 = vmatpush1.bf16.msra.mxu0 0
      %924 = vmatprep.subr.bf16.mxu0 0
      %925 = vmatpush1.bf16.msra.mxu0 0
      %926 = vmatprep.subr.bf16.mxu0 0
      %927 = vmatpush1.bf16.msra.mxu0 0
      %928 = vmatprep.subr.bf16.mxu0 0
      %929 = vmatpush1.bf16.msra.mxu0 0
      %930 = vmatprep.subr.bf16.mxu0 0
      %931 = vmatpush1.bf16.msra.mxu0 0
      %932 = vmatprep.subr.bf16.mxu0 0
      %933 = vmatpush1.bf16.msra.mxu0 0
      %934 = vmatprep.subr.bf16.mxu0 0
      %935 = vmatpush1.bf16.msra.mxu0 %v918
      %936 = vmatprep.subr.bf16.mxu0 0
      %937 = vmatpush2.bf16.msra.mxu0 0
      %938 = vmatprep.subr.bf16.mxu0 0
      %939 = vmatpush2.bf16.msra.mxu0 0
      %940 = vmatprep.subr.bf16.mxu0 0
      %941 = vmatpush2.bf16.msra.mxu0 0
      %942 = vmatprep.subr.bf16.mxu0 0
      %943 = vmatpush2.bf16.msra.mxu0 0
      %944 = vmatprep.subr.bf16.mxu0 0
      %945 = vmatpush2.bf16.msra.mxu0 0
      %946 = vmatprep.subr.bf16.mxu0 0
      %947 = vmatpush2.bf16.msra.mxu0 0
      %948 = vmatprep.subr.bf16.mxu0 0
      %949 = vmatpush2.bf16.msra.mxu0 0
      %950 = vmatprep.subr.bf16.mxu0 0
      %951 = vmatpush2.bf16.msra.mxu0 0
      %952 = vmatprep.mubr.bf16.mxu0 0
      %953 = vmatmul.mubr.bf16.gmra.mxu0 %v914
      %v954 = vpop.f32.mrf.mxu0
      %v955 = vadd.f32 0.0, %v954
      %v956 = vpop.f32.mrf.mxu0
      %v957 = vpop.f32.mrf.mxu0
      %v958 = vpop.f32.mrf.mxu0
      %959 = vdwg.mxu0
      %vm960 = vcmask 62464
      %961 = vst.msk [vmem:[#allocation2] sm:$0x3f] %vm960, %v955
      %962 = vrot.lane.b32.xlu0 %v846, 120
      %v963 = vpop.permute.xlu0 %962
      %964 = vrot.lane.b32.xlu0 %v846, 88
      %v965 = vpop.permute.xlu0 %964
      %v967 = vsel %vm850, %v963, 0
      %v970 = vsel %vm850, %v965, 0
      %972 = vmatprep.subr.bf16.mxu0 0
      %973 = vmatpush1.bf16.xpose.msra.mxu0 0
      %974 = vmatprep.subr.bf16.mxu0 0
      %975 = vmatpush1.bf16.xpose.msra.mxu0 0
      %976 = vmatprep.subr.bf16.mxu0 0
      %977 = vmatpush1.bf16.xpose.msra.mxu0 0
      %978 = vmatprep.subr.bf16.mxu0 0
      %979 = vmatpush1.bf16.xpose.msra.mxu0 0
      %980 = vmatprep.subr.bf16.mxu0 0
      %981 = vmatpush1.bf16.xpose.msra.mxu0 0
      %982 = vmatprep.subr.bf16.mxu0 0
      %983 = vmatpush1.bf16.xpose.msra.mxu0 0
      %984 = vmatprep.subr.bf16.mxu0 0
      %985 = vmatpush1.bf16.xpose.msra.mxu0 0
      %986 = vmatprep.subr.bf16.mxu0 0
      %987 = vmatpush1.bf16.xpose.msra.mxu0 %v970
      %988 = vmatprep.subr.bf16.mxu0 0
      %989 = vmatpush2.bf16.xpose.msra.mxu0 0
      %990 = vmatprep.subr.bf16.mxu0 0
      %991 = vmatpush2.bf16.xpose.msra.mxu0 0
      %992 = vmatprep.subr.bf16.mxu0 0
      %993 = vmatpush2.bf16.xpose.msra.mxu0 0
      %994 = vmatprep.subr.bf16.mxu0 0
      %995 = vmatpush2.bf16.xpose.msra.mxu0 0
      %996 = vmatprep.subr.bf16.mxu0 0
      %997 = vmatpush2.bf16.xpose.msra.mxu0 0
      %998 = vmatprep.subr.bf16.mxu0 0
      %999 = vmatpush2.bf16.xpose.msra.mxu0 0
      %1000 = vmatprep.subr.bf16.mxu0 0
      %1001 = vmatpush2.bf16.xpose.msra.mxu0 0
      %1002 = vmatprep.subr.bf16.mxu0 0
      %1003 = vmatpush2.bf16.xpose.msra.mxu0 0
      %1004 = vmatprep.mubr.bf16.mxu0 0
      %1005 = vmatmul.mubr.bf16.gmra.mxu0 %v967
      %v1006 = vpop.f32.mrf.mxu0
      %v1007 = vadd.f32 0.0, %v1006
      %v1008 = vpop.f32.mrf.mxu0
      %v1009 = vpop.f32.mrf.mxu0
      %v1010 = vpop.f32.mrf.mxu0
      %1011 = vdwg.mxu0
      %v1012 = vsel %vm897, %v1007, -inf
      %1013 = vmax.xlane.f32.xlu0 %v1012
      %v1014 = vpop.xlane.xlu0 %1013
      %v1015 = vsub.f32 %v1007, %v1014
      %v1016 = vmul.f32 %v1015, 1.442695
      %v1017 = vpow.pop %v1016
      %v1018 = vsel %vm897, %v1017, 0.0
      %1019 = vadd.xlane.f32.xlu0 %v1018
      %v1020 = vpop.xlane.xlu0 %1019
      %v1021 = vrcp.pop %v1020
      %v1022 = vmul.f32 %v1017, %v1021
      %v1023 = vpack.c.bf16 %v1022, %v1022
      %1024 = vrot.lane.b32.xlu0 %v846, 56
      %v1025 = vpop.permute.xlu0 %1024
      %v1027 = vsel %vm912, %v1023, 0
      %v1030 = vsel %vm916, %v1025, 0
      %1032 = vmatprep.subr.bf16.mxu0 0
      %1033 = vmatpush1.bf16.msra.mxu0 0
      %1034 = vmatprep.subr.bf16.mxu0 0
      %1035 = vmatpush1.bf16.msra.mxu0 0
      %1036 = vmatprep.subr.bf16.mxu0 0
      %1037 = vmatpush1.bf16.msra.mxu0 0
      %1038 = vmatprep.subr.bf16.mxu0 0
      %1039 = vmatpush1.bf16.msra.mxu0 0
      %1040 = vmatprep.subr.bf16.mxu0 0
      %1041 = vmatpush1.bf16.msra.mxu0 0
      %1042 = vmatprep.subr.bf16.mxu0 0
      %1043 = vmatpush1.bf16.msra.mxu0 0
      %1044 = vmatprep.subr.bf16.mxu0 0
      %1045 = vmatpush1.bf16.msra.mxu0 0
      %1046 = vmatprep.subr.bf16.mxu0 0
      %1047 = vmatpush1.bf16.msra.mxu0 %v1030
      %1048 = vmatprep.subr.bf16.mxu0 0
      %1049 = vmatpush2.bf16.msra.mxu0 0
      %1050 = vmatprep.subr.bf16.mxu0 0
      %1051 = vmatpush2.bf16.msra.mxu0 0
      %1052 = vmatprep.subr.bf16.mxu0 0
      %1053 = vmatpush2.bf16.msra.mxu0 0
      %1054 = vmatprep.subr.bf16.mxu0 0
      %1055 = vmatpush2.bf16.msra.mxu0 0
      %1056 = vmatprep.subr.bf16.mxu0 0
      %1057 = vmatpush2.bf16.msra.mxu0 0
      %1058 = vmatprep.subr.bf16.mxu0 0
      %1059 = vmatpush2.bf16.msra.mxu0 0
      %1060 = vmatprep.subr.bf16.mxu0 0
      %1061 = vmatpush2.bf16.msra.mxu0 0
      %1062 = vmatprep.subr.bf16.mxu0 0
      %1063 = vmatpush2.bf16.msra.mxu0 0
      %1064 = vmatprep.mubr.bf16.mxu0 0
      %1065 = vmatmul.mubr.bf16.gmra.mxu0 %v1027
      %v1066 = vpop.f32.mrf.mxu0
      %v1067 = vadd.f32 0.0, %v1066
      %v1068 = vpop.f32.mrf.mxu0
      %v1069 = vpop.f32.mrf.mxu0
      %v1070 = vpop.f32.mrf.mxu0
      %1071 = vdwg.mxu0
      %1073 = vrot.lane.b32.xlu0 %v1067, 8
      %v1074 = vpop.permute.xlu0 %1073
      %vm1076 = vcmask 128064
      %1077 = vst.msk [vmem:[#allocation2] sm:$0x3f] %vm1076, %v1074
      %1078 = vrot.lane.b32.xlu0 %v846, 112
      %v1079 = vpop.permute.xlu0 %1078
      %1080 = vrot.lane.b32.xlu0 %v846, 80
      %v1081 = vpop.permute.xlu0 %1080
      %v1083 = vsel %vm850, %v1079, 0
      %v1086 = vsel %vm850, %v1081, 0
      %1088 = vmatprep.subr.bf16.mxu0 0
      %1089 = vmatpush1.bf16.xpose.msra.mxu0 0
      %1090 = vmatprep.subr.bf16.mxu0 0
      %1091 = vmatpush1.bf16.xpose.msra.mxu0 0
      %1092 = vmatprep.subr.bf16.mxu0 0
      %1093 = vmatpush1.bf16.xpose.msra.mxu0 0
      %1094 = vmatprep.subr.bf16.mxu0 0
      %1095 = vmatpush1.bf16.xpose.msra.mxu0 0
      %1096 = vmatprep.subr.bf16.mxu0 0
      %1097 = vmatpush1.bf16.xpose.msra.mxu0 0
      %1098 = vmatprep.subr.bf16.mxu0 0
      %1099 = vmatpush1.bf16.xpose.msra.mxu0 0
      %1100 = vmatprep.subr.bf16.mxu0 0
      %1101 = vmatpush1.bf16.xpose.msra.mxu0 0
      %1102 = vmatprep.subr.bf16.mxu0 0
      %1103 = vmatpush1.bf16.xpose.msra.mxu0 %v1086
      %1104 = vmatprep.subr.bf16.mxu0 0
      %1105 = vmatpush2.bf16.xpose.msra.mxu0 0
      %1106 = vmatprep.subr.bf16.mxu0 0
      %1107 = vmatpush2.bf16.xpose.msra.mxu0 0
      %1108 = vmatprep.subr.bf16.mxu0 0
      %1109 = vmatpush2.bf16.xpose.msra.mxu0 0
      %1110 = vmatprep.subr.bf16.mxu0 0
      %1111 = vmatpush2.bf16.xpose.msra.mxu0 0
      %1112 = vmatprep.subr.bf16.mxu0 0
      %1113 = vmatpush2.bf16.xpose.msra.mxu0 0
      %1114 = vmatprep.subr.bf16.mxu0 0
      %1115 = vmatpush2.bf16.xpose.msra.mxu0 0
      %1116 = vmatprep.subr.bf16.mxu0 0
      %1117 = vmatpush2.bf16.xpose.msra.mxu0 0
      %1118 = vmatprep.subr.bf16.mxu0 0
      %1119 = vmatpush2.bf16.xpose.msra.mxu0 0
      %1120 = vmatprep.mubr.bf16.mxu0 0
      %1121 = vmatmul.mubr.bf16.gmra.mxu0 %v1083
      %v1122 = vpop.f32.mrf.mxu0
      %v1123 = vadd.f32 0.0, %v1122
      %v1124 = vpop.f32.mrf.mxu0
      %v1125 = vpop.f32.mrf.mxu0
      %v1126 = vpop.f32.mrf.mxu0
      %1127 = vdwg.mxu0
      %v1128 = vsel %vm897, %v1123, -inf
      %1129 = vmax.xlane.f32.xlu0 %v1128
      %v1130 = vpop.xlane.xlu0 %1129
      %v1131 = vsub.f32 %v1123, %v1130
      %v1132 = vmul.f32 %v1131, 1.442695
      %v1133 = vpow.pop %v1132
      %v1134 = vsel %vm897, %v1133, 0.0
      %1135 = vadd.xlane.f32.xlu0 %v1134
      %v1136 = vpop.xlane.xlu0 %1135
      %v1137 = vrcp.pop %v1136
      %v1138 = vmul.f32 %v1133, %v1137
      %v1139 = vpack.c.bf16 %v1138, %v1138
      %1140 = vrot.lane.b32.xlu0 %v846, 48
      %v1141 = vpop.permute.xlu0 %1140
      %v1143 = vsel %vm912, %v1139, 0
      %v1146 = vsel %vm916, %v1141, 0
      %1148 = vmatprep.subr.bf16.mxu0 0
      %1149 = vmatpush1.bf16.msra.mxu0 0
      %1150 = vmatprep.subr.bf16.mxu0 0
      %1151 = vmatpush1.bf16.msra.mxu0 0
      %1152 = vmatprep.subr.bf16.mxu0 0
      %1153 = vmatpush1.bf16.msra.mxu0 0
      %1154 = vmatprep.subr.bf16.mxu0 0
      %1155 = vmatpush1.bf16.msra.mxu0 0
      %1156 = vmatprep.subr.bf16.mxu0 0
      %1157 = vmatpush1.bf16.msra.mxu0 0
      %1158 = vmatprep.subr.bf16.mxu0 0
      %1159 = vmatpush1.bf16.msra.mxu0 0
      %1160 = vmatprep.subr.bf16.mxu0 0
      %1161 = vmatpush1.bf16.msra.mxu0 0
      %1162 = vmatprep.subr.bf16.mxu0 0
      %1163 = vmatpush1.bf16.msra.mxu0 %v1146
      %1164 = vmatprep.subr.bf16.mxu0 0
      %1165 = vmatpush2.bf16.msra.mxu0 0
      %1166 = vmatprep.subr.bf16.mxu0 0
      %1167 = vmatpush2.bf16.msra.mxu0 0
      %1168 = vmatprep.subr.bf16.mxu0 0
      %1169 = vmatpush2.bf16.msra.mxu0 0
      %1170 = vmatprep.subr.bf16.mxu0 0
      %1171 = vmatpush2.bf16.msra.mxu0 0
      %1172 = vmatprep.subr.bf16.mxu0 0
      %1173 = vmatpush2.bf16.msra.mxu0 0
      %1174 = vmatprep.subr.bf16.mxu0 0
      %1175 = vmatpush2.bf16.msra.mxu0 0
      %1176 = vmatprep.subr.bf16.mxu0 0
      %1177 = vmatpush2.bf16.msra.mxu0 0
      %1178 = vmatprep.subr.bf16.mxu0 0
      %1179 = vmatpush2.bf16.msra.mxu0 0
      %1180 = vmatprep.mubr.bf16.mxu0 0
      %1181 = vmatmul.mubr.bf16.gmra.mxu0 %v1143
      %v1182 = vpop.f32.mrf.mxu0
      %v1183 = vadd.f32 0.0, %v1182
      %v1184 = vpop.f32.mrf.mxu0
      %v1185 = vpop.f32.mrf.mxu0
      %v1186 = vpop.f32.mrf.mxu0
      %1187 = vdwg.mxu0
      %1189 = vrot.lane.b32.xlu0 %v1183, 16
      %v1190 = vpop.permute.xlu0 %1189
      %vm1192 = vcmask 193664
      %1193 = vst.msk [vmem:[#allocation2] sm:$0x3f] %vm1192, %v1190
      %1194 = vrot.lane.b32.xlu0 %v846, 104
      %v1195 = vpop.permute.xlu0 %1194
      %1196 = vrot.lane.b32.xlu0 %v846, 72
      %v1197 = vpop.permute.xlu0 %1196
      %v1199 = vsel %vm850, %v1195, 0
      %v1202 = vsel %vm850, %v1197, 0
      %1204 = vmatprep.subr.bf16.mxu0 0
      %1205 = vmatpush1.bf16.xpose.msra.mxu0 0
      %1206 = vmatprep.subr.bf16.mxu0 0
      %1207 = vmatpush1.bf16.xpose.msra.mxu0 0
      %1208 = vmatprep.subr.bf16.mxu0 0
      %1209 = vmatpush1.bf16.xpose.msra.mxu0 0
      %1210 = vmatprep.subr.bf16.mxu0 0
      %1211 = vmatpush1.bf16.xpose.msra.mxu0 0
      %1212 = vmatprep.subr.bf16.mxu0 0
      %1213 = vmatpush1.bf16.xpose.msra.mxu0 0
      %1214 = vmatprep.subr.bf16.mxu0 0
      %1215 = vmatpush1.bf16.xpose.msra.mxu0 0
      %1216 = vmatprep.subr.bf16.mxu0 0
      %1217 = vmatpush1.bf16.xpose.msra.mxu0 0
      %1218 = vmatprep.subr.bf16.mxu0 0
      %1219 = vmatpush1.bf16.xpose.msra.mxu0 %v1202
      %1220 = vmatprep.subr.bf16.mxu0 0
      %1221 = vmatpush2.bf16.xpose.msra.mxu0 0
      %1222 = vmatprep.subr.bf16.mxu0 0
      %1223 = vmatpush2.bf16.xpose.msra.mxu0 0
      %1224 = vmatprep.subr.bf16.mxu0 0
      %1225 = vmatpush2.bf16.xpose.msra.mxu0 0
      %1226 = vmatprep.subr.bf16.mxu0 0
      %1227 = vmatpush2.bf16.xpose.msra.mxu0 0
      %1228 = vmatprep.subr.bf16.mxu0 0
      %1229 = vmatpush2.bf16.xpose.msra.mxu0 0
      %1230 = vmatprep.subr.bf16.mxu0 0
      %1231 = vmatpush2.bf16.xpose.msra.mxu0 0
      %1232 = vmatprep.subr.bf16.mxu0 0
      %1233 = vmatpush2.bf16.xpose.msra.mxu0 0
      %1234 = vmatprep.subr.bf16.mxu0 0
      %1235 = vmatpush2.bf16.xpose.msra.mxu0 0
      %1236 = vmatprep.mubr.bf16.mxu0 0
      %1237 = vmatmul.mubr.bf16.gmra.mxu0 %v1199
      %v1238 = vpop.f32.mrf.mxu0
      %v1239 = vadd.f32 0.0, %v1238
      %v1240 = vpop.f32.mrf.mxu0
      %v1241 = vpop.f32.mrf.mxu0
      %v1242 = vpop.f32.mrf.mxu0
      %1243 = vdwg.mxu0
      %v1244 = vsel %vm897, %v1239, -inf
      %1245 = vmax.xlane.f32.xlu0 %v1244
      %v1246 = vpop.xlane.xlu0 %1245
      %v1247 = vsub.f32 %v1239, %v1246
      %v1248 = vmul.f32 %v1247, 1.442695
      %v1249 = vpow.pop %v1248
      %v1250 = vsel %vm897, %v1249, 0.0
      %1251 = vadd.xlane.f32.xlu0 %v1250
      %v1252 = vpop.xlane.xlu0 %1251
      %v1253 = vrcp.pop %v1252
      %v1254 = vmul.f32 %v1249, %v1253
      %v1255 = vpack.c.bf16 %v1254, %v1254
      %1256 = vrot.lane.b32.xlu0 %v846, 40
      %v1257 = vpop.permute.xlu0 %1256
      %v1259 = vsel %vm912, %v1255, 0
      %v1262 = vsel %vm916, %v1257, 0
      %1264 = vmatprep.subr.bf16.mxu0 0
      %1265 = vmatpush1.bf16.msra.mxu0 0
      %1266 = vmatprep.subr.bf16.mxu0 0
      %1267 = vmatpush1.bf16.msra.mxu0 0
      %1268 = vmatprep.subr.bf16.mxu0 0
      %1269 = vmatpush1.bf16.msra.mxu0 0
      %1270 = vmatprep.subr.bf16.mxu0 0
      %1271 = vmatpush1.bf16.msra.mxu0 0
      %1272 = vmatprep.subr.bf16.mxu0 0
      %1273 = vmatpush1.bf16.msra.mxu0 0
      %1274 = vmatprep.subr.bf16.mxu0 0
      %1275 = vmatpush1.bf16.msra.mxu0 0
      %1276 = vmatprep.subr.bf16.mxu0 0
      %1277 = vmatpush1.bf16.msra.mxu0 0
      %1278 = vmatprep.subr.bf16.mxu0 0
      %1279 = vmatpush1.bf16.msra.mxu0 %v1262
      %1280 = vmatprep.subr.bf16.mxu0 0
      %1281 = vmatpush2.bf16.msra.mxu0 0
      %1282 = vmatprep.subr.bf16.mxu0 0
      %1283 = vmatpush2.bf16.msra.mxu0 0
      %1284 = vmatprep.subr.bf16.mxu0 0
      %1285 = vmatpush2.bf16.msra.mxu0 0
      %1286 = vmatprep.subr.bf16.mxu0 0
      %1287 = vmatpush2.bf16.msra.mxu0 0
      %1288 = vmatprep.subr.bf16.mxu0 0
      %1289 = vmatpush2.bf16.msra.mxu0 0
      %1290 = vmatprep.subr.bf16.mxu0 0
      %1291 = vmatpush2.bf16.msra.mxu0 0
      %1292 = vmatprep.subr.bf16.mxu0 0
      %1293 = vmatpush2.bf16.msra.mxu0 0
      %1294 = vmatprep.subr.bf16.mxu0 0
      %1295 = vmatpush2.bf16.msra.mxu0 0
      %1296 = vmatprep.mubr.bf16.mxu0 0
      %1297 = vmatmul.mubr.bf16.gmra.mxu0 %v1259
      %v1298 = vpop.f32.mrf.mxu0
      %v1299 = vadd.f32 0.0, %v1298
      %v1300 = vpop.f32.mrf.mxu0
      %v1301 = vpop.f32.mrf.mxu0
      %v1302 = vpop.f32.mrf.mxu0
      %1303 = vdwg.mxu0
      %1305 = vrot.lane.b32.xlu0 %v1299, 24
      %v1306 = vpop.permute.xlu0 %1305
      %vm1308 = vcmask 259264
      %1309 = vst.msk [vmem:[#allocation2] sm:$0x3f] %vm1308, %v1306
      %v1310 = vld [vmem:[#allocation2] sm:$0x3f]
      %v1311 = vpack.c.bf16 %v1310, %v1310
      %v1312 = vld [vmem:[%s664] sm:$0xf]
      %v1313 = vld [vmem:[%s664 + $0x4] sm:$0xf]
      %v1314 = vld [vmem:[%s664 + $0x8] sm:$0xf]
      %v1315 = vld [vmem:[%s664 + $0xc] sm:$0xf]
      %v1316 = vld [vmem:[%s667] sm:$0x1]
      %v1318 = vlaneseq
      %v1319 = vshrl.u32 %v1318, 7
      %v1320 = vsub.s32 0, %v1319
      %v1321 = vrot.slane %v1316, %v1320
      %v1327 = vunpack.c.l.b16 %v1312
      %v1328 = vunpack.c.l.b16 %v1313
      %v1329 = vunpack.c.l.b16 %v1314
      %v1330 = vunpack.c.l.b16 %v1315
      %v1331 = vpack.c.b16 %v1328, %v1327
      %v1332 = vpack.c.b16 %v1330, %v1329
      %v1336 = vsel %vm802, %v1311, 0
      %1338 = vmatprep.subr.bf16.mxu0 0
      %1339 = vmatpush1.bf16.msra.mxu0 0
      %1340 = vmatprep.subr.bf16.mxu0 0
      %1341 = vmatpush1.bf16.msra.mxu0 0
      %1342 = vmatprep.subr.bf16.mxu0 0
      %1343 = vmatpush1.bf16.msra.mxu0 0
      %1344 = vmatprep.subr.bf16.mxu0 0
      %1345 = vmatpush1.bf16.msra.mxu0 0
      %1346 = vmatprep.subr.bf16.mxu0 0
      %1347 = vmatpush1.bf16.msra.mxu0 0
      %1348 = vmatprep.subr.bf16.mxu0 0
      %1349 = vmatpush1.bf16.msra.mxu0 0
      %1350 = vmatprep.subr.bf16.mxu0 0
      %1351 = vmatpush1.bf16.msra.mxu0 %v1332
      %1352 = vmatprep.subr.bf16.mxu0 0
      %1353 = vmatpush1.bf16.msra.mxu0 %v1331
      %1354 = vmatprep.subr.bf16.mxu0 0
      %1355 = vmatpush2.bf16.msra.mxu0 0
      %1356 = vmatprep.subr.bf16.mxu0 0
      %1357 = vmatpush2.bf16.msra.mxu0 0
      %1358 = vmatprep.subr.bf16.mxu0 0
      %1359 = vmatpush2.bf16.msra.mxu0 0
      %1360 = vmatprep.subr.bf16.mxu0 0
      %1361 = vmatpush2.bf16.msra.mxu0 0
      %1362 = vmatprep.subr.bf16.mxu0 0
      %1363 = vmatpush2.bf16.msra.mxu0 0
      %1364 = vmatprep.subr.bf16.mxu0 0
      %1365 = vmatpush2.bf16.msra.mxu0 0
      %1366 = vmatprep.subr.bf16.mxu0 0
      %1367 = vmatpush2.bf16.msra.mxu0 0
      %1368 = vmatprep.subr.bf16.mxu0 0
      %1369 = vmatpush2.bf16.msra.mxu0 0
      %1370 = vmatprep.mubr.bf16.mxu0 0
      %1371 = vmatmul.mubr.bf16.gmra.mxu0 %v1336
      %v1372 = vpop.f32.mrf.mxu0
      %v1373 = vadd.f32 %v1321, %v1372
      %v1374 = vpop.f32.mrf.mxu0
      %v1375 = vpop.f32.mrf.mxu0
      %v1376 = vpop.f32.mrf.mxu0
      %1377 = vdwg.mxu0
      %v1378 = vadd.f32 %v739, %v1373
      %v1379 = vld [vmem:[%s670] sm:$0x1]
      %v1380 = vld [vmem:[%s673] sm:$0x1]
      %v1381 = vsel %vm742, %v1378, 0.0
      %1382 = vadd.xlane.f32.xlu0 %v1381
      %v1383 = vpop.xlane.xlu0 %1382
      %v1384 = vmul.f32 %v1383, %v746
      %v1385 = vsub.f32 %v1378, %v1384
      %v1386 = vmul.f32 %v1385, %v1385
      %v1387 = vsel %vm742, %v1386, 0.0
      %1388 = vadd.xlane.f32.xlu0 %v1387
      %v1389 = vpop.xlane.xlu0 %1388
      %v1390 = vmul.f32 %v1389, 0.032258064
      %v1391 = vrsqrt.pop %v1390
      %v1392 = vmul.f32 %v1390, %v1391
      %vm1393 = vcmp.eq.f32.partialorder %v1390, inf
      %v1394 = vsel %vm1393, %v1390, %v1392
      %vm1395 = vcmp.eq.f32.partialorder %v1390, 0.0
      %v1396 = vand.u32 %v1390, 2147483648
      %v1397 = vsel %vm1395, %v1396, %v1394
      %v1398 = vadd.f32 %v1397, 1e-06
      %v1399 = vrcp.pop %v1398
      %v1400 = vmul.f32 %v1385, %v1399
      %v1402 = vlaneseq
      %v1403 = vshrl.u32 %v1402, 7
      %v1404 = vsub.s32 0, %v1403
      %v1405 = vrot.slane %v1379, %v1404
      %v1407 = vmul.f32 %v1400, %v1405
      %v1409 = vlaneseq
      %v1410 = vshrl.u32 %v1409, 7
      %v1411 = vsub.s32 0, %v1410
      %v1412 = vrot.slane %v1380, %v1411
      %v1414 = vadd.f32 %v1407, %v1412
      %v1415 = vpack.c.bf16 %v1414, %v1414
      %v1416 = vld [vmem:[%s678] sm:$0xf]
      %v1417 = vld [vmem:[%s678 + $0x4] sm:$0xf]
      %v1418 = vld [vmem:[%s678 + $0x8] sm:$0xf]
      %v1419 = vld [vmem:[%s678 + $0xc] sm:$0xf]
      %v1420 = vld [vmem:[%s681] sm:$0x1]
      %v1422 = vlaneseq
      %v1423 = vshrl.u32 %v1422, 7
      %v1424 = vsub.s32 0, %v1423
      %v1425 = vrot.slane %v1420, %v1424
      %v1431 = vunpack.c.l.b16 %v1416
      %v1432 = vunpack.c.l.b16 %v1417
      %v1433 = vunpack.c.l.b16 %v1418
      %v1434 = vunpack.c.l.b16 %v1419
      %v1435 = vpack.c.b16 %v1432, %v1431
      %v1436 = vpack.c.b16 %v1434, %v1433
      %v1440 = vsel %vm802, %v1415, 0
      %1442 = vmatprep.subr.bf16.mxu0 0
      %1443 = vmatpush1.bf16.msra.mxu0 0
      %1444 = vmatprep.subr.bf16.mxu0 0
      %1445 = vmatpush1.bf16.msra.mxu0 0
      %1446 = vmatprep.subr.bf16.mxu0 0
      %1447 = vmatpush1.bf16.msra.mxu0 0
      %1448 = vmatprep.subr.bf16.mxu0 0
      %1449 = vmatpush1.bf16.msra.mxu0 0
      %1450 = vmatprep.subr.bf16.mxu0 0
      %1451 = vmatpush1.bf16.msra.mxu0 0
      %1452 = vmatprep.subr.bf16.mxu0 0
      %1453 = vmatpush1.bf16.msra.mxu0 0
      %1454 = vmatprep.subr.bf16.mxu0 0
      %1455 = vmatpush1.bf16.msra.mxu0 %v1436
      %1456 = vmatprep.subr.bf16.mxu0 0
      %1457 = vmatpush1.bf16.msra.mxu0 %v1435
      %1458 = vmatprep.subr.bf16.mxu0 0
      %1459 = vmatpush2.bf16.msra.mxu0 0
      %1460 = vmatprep.subr.bf16.mxu0 0
      %1461 = vmatpush2.bf16.msra.mxu0 0
      %1462 = vmatprep.subr.bf16.mxu0 0
      %1463 = vmatpush2.bf16.msra.mxu0 0
      %1464 = vmatprep.subr.bf16.mxu0 0
      %1465 = vmatpush2.bf16.msra.mxu0 0
      %1466 = vmatprep.subr.bf16.mxu0 0
      %1467 = vmatpush2.bf16.msra.mxu0 0
      %1468 = vmatprep.subr.bf16.mxu0 0
      %1469 = vmatpush2.bf16.msra.mxu0 0
      %1470 = vmatprep.subr.bf16.mxu0 0
      %1471 = vmatpush2.bf16.msra.mxu0 0
      %1472 = vmatprep.subr.bf16.mxu0 0
      %1473 = vmatpush2.bf16.msra.mxu0 0
      %1474 = vmatprep.mubr.bf16.mxu0 0
      %1475 = vmatmul.mubr.bf16.gmra.mxu0 %v1440
      %v1476 = vpop.f32.mrf.mxu0
      %v1477 = vadd.f32 %v1425, %v1476
      %v1478 = vpop.f32.mrf.mxu0
      %v1479 = vpop.f32.mrf.mxu0
      %v1480 = vpop.f32.mrf.mxu0
      %1481 = vdwg.mxu0
      %v1482 = vmax.f32 %v1477, 0.0
      %v1483 = vpack.c.bf16 %v1482, %v1482
      %v1484 = vld [vmem:[%s686] sm:$0xf]
      %v1485 = vld [vmem:[%s686 + $0x4] sm:$0xf]
      %v1486 = vld [vmem:[%s686 + $0x8] sm:$0xf]
      %v1487 = vld [vmem:[%s686 + $0xc] sm:$0xf]
      %v1488 = vld [vmem:[%s686 + $0x10] sm:$0xf]
      %v1489 = vld [vmem:[%s686 + $0x14] sm:$0xf]
      %v1490 = vld [vmem:[%s686 + $0x18] sm:$0xf]
      %v1491 = vld [vmem:[%s686 + $0x1c] sm:$0xf]
      %v1492 = vld [vmem:[%s689] sm:$0x1]
      %v1494 = vlaneseq
      %v1495 = vshrl.u32 %v1494, 7
      %v1496 = vsub.s32 0, %v1495
      %v1497 = vrot.slane %v1492, %v1496
      %v1507 = vunpack.c.l.b16 %v1484
      %v1508 = vunpack.c.l.b16 %v1485
      %v1509 = vunpack.c.l.b16 %v1486
      %v1510 = vunpack.c.l.b16 %v1487
      %v1511 = vunpack.c.l.b16 %v1488
      %v1512 = vunpack.c.l.b16 %v1489
      %v1513 = vunpack.c.l.b16 %v1490
      %v1514 = vunpack.c.l.b16 %v1491
      %v1515 = vpack.c.b16 %v1508, %v1507
      %v1516 = vpack.c.b16 %v1510, %v1509
      %v1517 = vpack.c.b16 %v1512, %v1511
      %v1518 = vpack.c.b16 %v1514, %v1513
      %vm1523 = vcmask 523264
      %v1525 = vsel %vm1523, %v1483, 0
      %1527 = vmatprep.subr.bf16.mxu0 0
      %1528 = vmatpush1.bf16.msra.mxu0 0
      %1529 = vmatprep.subr.bf16.mxu0 0
      %1530 = vmatpush1.bf16.msra.mxu0 0
      %1531 = vmatprep.subr.bf16.mxu0 0
      %1532 = vmatpush1.bf16.msra.mxu0 0
      %1533 = vmatprep.subr.bf16.mxu0 0
      %1534 = vmatpush1.bf16.msra.mxu0 0
      %1535 = vmatprep.subr.bf16.mxu0 0
      %1536 = vmatpush1.bf16.msra.mxu0 %v1518
      %1537 = vmatprep.subr.bf16.mxu0 0
      %1538 = vmatpush1.bf16.msra.mxu0 %v1517
      %1539 = vmatprep.subr.bf16.mxu0 0
      %1540 = vmatpush1.bf16.msra.mxu0 %v1516
      %1541 = vmatprep.subr.bf16.mxu0 0
      %1542 = vmatpush1.bf16.msra.mxu0 %v1515
      %1543 = vmatprep.subr.bf16.mxu0 0
      %1544 = vmatpush2.bf16.msra.mxu0 0
      %1545 = vmatprep.subr.bf16.mxu0 0
      %1546 = vmatpush2.bf16.msra.mxu0 0
      %1547 = vmatprep.subr.bf16.mxu0 0
      %1548 = vmatpush2.bf16.msra.mxu0 0
      %1549 = vmatprep.subr.bf16.mxu0 0
      %1550 = vmatpush2.bf16.msra.mxu0 0
      %1551 = vmatprep.subr.bf16.mxu0 0
      %1552 = vmatpush2.bf16.msra.mxu0 0
      %1553 = vmatprep.subr.bf16.mxu0 0
      %1554 = vmatpush2.bf16.msra.mxu0 0
      %1555 = vmatprep.subr.bf16.mxu0 0
      %1556 = vmatpush2.bf16.msra.mxu0 0
      %1557 = vmatprep.subr.bf16.mxu0 0
      %1558 = vmatpush2.bf16.msra.mxu0 0
      %1559 = vmatprep.mubr.bf16.mxu0 0
      %1560 = vmatmul.mubr.bf16.gmra.mxu0 %v1525
      %v1561 = vpop.f32.mrf.mxu0
      %v1562 = vadd.f32 %v1497, %v1561
      %v1563 = vpop.f32.mrf.mxu0
      %v1564 = vpop.f32.mrf.mxu0
      %v1565 = vpop.f32.mrf.mxu0
      %1566 = vdwg.mxu0
      %v1567 = vadd.f32 %v1378, %v1562
      %1568 = vst.msk [vmem:[%s693] sm:$0x3f] %vm742, %v1567
      %p1569 = scmp.lt.s32.totalorder %s30, 1
      %s1570 = scalar_select %p1569, %s30, 1
      %s1571 = smul.addr %s1570, 8
      %s1572 = scalar_lea.vmem %s15, %s1571
      // Predicated region
      $region85: #{model_forward_itm.9} parent=79 // pred_check
        %p1573 = pneg %p436
      $region86: #{model_forward_itm.9} parent=79 // pred_check_branch
        %1575 = sbr.rel (%p1573) target = $region88
      $region87: #{model_forward_itm.9} parent=79 // pred_region
        _
      $region88: #{model_forward_itm.9} parent=79 // pred_fallthru
        _
    $region80: #{model_forward_itm.9} parent=5 // pred_fallthru
      _
    %p1576 = scmp.le.s32.totalorder 2, %s21
    // Predicated region
    $region89: #{model_forward_itm.9} parent=5 // pred_check
      %p1577 = pneg %p1576
    $region90: #{model_forward_itm.9} parent=5 // pred_check_branch
      %1579 = sbr.rel (%p1577) target = $region92
    $region91: #{model_forward_itm.9} parent=5 // pred_region
      %s1580 = ssub.s32 %s21, 2
      // Predicated region
      $region93: #{model_forward_itm.9} parent=91 // pred_check
        %p1581 = pneg %p442
      $region94: #{model_forward_itm.9} parent=91 // pred_check_branch
        %1583 = sbr.rel (%p1581) target = $region96
      $region95: #{model_forward_itm.9} parent=91 // pred_region
        %p1584 = scmp.lt.s32.totalorder %s32, 1
        %s1585 = scalar_select %p1584, %s32, 1
        %s1586 = smul.addr %s1585, 8
        %s1587 = scalar_lea.vmem %s15, %s1586
      $region96: #{model_forward_itm.9} parent=91 // pred_fallthru
        _
    $region92: #{model_forward_itm.9} parent=5 // pred_fallthru
      _
  $region6: #{model_forward_itm.9} parent=0 // loop_footer
    %s25 = sadd.s32 1, %s21
  $region7: #{model_forward_itm.9} parent=0 // loop_footer_branch
    %20 = sbr.rel target = $region3
  $region8: #{model_forward_itm.9} parent=0 // loop_exit
    _

// kernel: model_forward_itm.10
$region0: #{model_forward_itm.10}
  #allocation0 [shape = 'u32[]', space=smem, size = 0x4, offset = 0x4, fixed_abs, tag = 'smem constant byte address 0x4 - core index']
  #allocation1 [shape = 'u32[144,128]{1,0:T(1,128)}', space=vmem, size = 0x12000, scoped, tag = 'internal scratch']
  %s0 = inlined_call_operand.vmem [shape: f32[2,6,32], index: 0, kind: input, shape index: {}]
  %s1 = inlined_call_operand.vmem [shape: f32[6,32], index: 1, kind: input, shape index: {}]
  %s2 = inlined_call_operand.vmem [shape: f32[1,32], index: 2, kind: input, shape index: {}]
  %s3 = inlined_call_operand.vmem [shape: f32[1,32], index: 3, kind: input, shape index: {}]
  %s4 = inlined_call_operand.vmem [shape: f32[2,6,32], index: 4, kind: output, shape index: {}]
  %s5 = sld [smem:[#allocation0]]
  $region26: #{model_forward_itm.10} parent=0
    _
  %s7 = ssub.s32 1, %s5
  %s8 = scalar_select 0, %s7, %s5
  // Predicated region
  $region2: #{model_forward_itm.10} parent=0 // pred_check
    _
  $region3: #{model_forward_itm.10} parent=0 // pred_check_branch
    %10 = sbr.rel (0) target = $region5
  $region4: #{model_forward_itm.10} parent=0 // pred_region
    _
  $region5: #{model_forward_itm.10} parent=0 // pred_fallthru
    _
  // Predicated region
  $region6: #{model_forward_itm.10} parent=0 // pred_check
    _
  $region7: #{model_forward_itm.10} parent=0 // pred_check_branch
    %12 = sbr.rel (0) target = $region9
  $region8: #{model_forward_itm.10} parent=0 // pred_region
    _
  $region9: #{model_forward_itm.10} parent=0 // pred_fallthru
    _
  // Predicated region
  $region10: #{model_forward_itm.10} parent=0 // pred_check
    _
  $region11: #{model_forward_itm.10} parent=0 // pred_check_branch
    %14 = sbr.rel (0) target = $region13
  $region12: #{model_forward_itm.10} parent=0 // pred_region
    _
  $region13: #{model_forward_itm.10} parent=0 // pred_fallthru
    _
  // Predicated region
  $region14: #{model_forward_itm.10} parent=0 // pred_check
    _
  $region15: #{model_forward_itm.10} parent=0 // pred_check_branch
    %16 = sbr.rel (0) target = $region17
  $region16: #{model_forward_itm.10} parent=0 // pred_region
    _
  $region17: #{model_forward_itm.10} parent=0 // pred_fallthru
    _
  %v17 = vld [vmem:[%s0] sm:$0x3f]
  %v18 = vld [vmem:[%s0 + $0x8] sm:$0x3f]
  %v19 = vmul.f32 %v17, 5.656854
  %v20 = vmul.f32 %v18, 5.656854
  %v21 = vld [vmem:[%s1] sm:$0x3f]
  %v22 = vadd.f32 %v19, %v21
  %v23 = vadd.f32 %v20, %v21
  %v24 = vld [vmem:[%s2] sm:$0x1]
  %v25 = vld [vmem:[%s3] sm:$0x1]
  %vm26 = vcmask 259072
  %v27 = vsel %vm26, %v22, 0.0
  %28 = vadd.xlane.f32.xlu0 %v27
  %v29 = vpop.xlane.xlu0 %28
  %v30 = vsel %vm26, %v23, 0.0
  %31 = vadd.xlane.f32.xlu0 %v30
  %v32 = vpop.xlane.xlu0 %31
  %v33 = vrcp.pop 32.0
  %v34 = vmul.f32 %v29, %v33
  %v35 = vmul.f32 %v32, %v33
  %v36 = vsub.f32 %v22, %v34
  %v37 = vsub.f32 %v23, %v35
  %v38 = vmul.f32 %v36, %v36
  %v39 = vmul.f32 %v37, %v37
  %v40 = vsel %vm26, %v38, 0.0
  %41 = vadd.xlane.f32.xlu0 %v40
  %v42 = vpop.xlane.xlu0 %41
  %v43 = vsel %vm26, %v39, 0.0
  %44 = vadd.xlane.f32.xlu0 %v43
  %v45 = vpop.xlane.xlu0 %44
  %v46 = vmul.f32 %v42, 0.032258064
  %v47 = vmul.f32 %v45, 0.032258064
  %v48 = vrsqrt.pop %v46
  %v49 = vmul.f32 %v46, %v48
  %vm50 = vcmp.eq.f32.partialorder %v46, inf
  %v51 = vsel %vm50, %v46, %v49
  %vm52 = vcmp.eq.f32.partialorder %v46, 0.0
  %v53 = vand.u32 %v46, 2147483648
  %v54 = vsel %vm52, %v53, %v51
  %v55 = vrsqrt.pop %v47
  %v56 = vmul.f32 %v47, %v55
  %vm57 = vcmp.eq.f32.partialorder %v47, inf
  %v58 = vsel %vm57, %v47, %v56
  %vm59 = vcmp.eq.f32.partialorder %v47, 0.0
  %v60 = vand.u32 %v47, 2147483648
  %v61 = vsel %vm59, %v60, %v58
  %v62 = vadd.f32 %v54, 1e-12
  %v63 = vadd.f32 %v61, 1e-12
  %v64 = vrcp.pop %v62
  %v65 = vrcp.pop %v63
  %v66 = vmul.f32 %v36, %v64
  %v67 = vmul.f32 %v37, %v65
  %v69 = vlaneseq
  %v70 = vshrl.u32 %v69, 7
  %v71 = vsub.s32 0, %v70
  %v72 = vrot.slane %v24, %v71
  %v74 = vmul.f32 %v66, %v72
  %v75 = vmul.f32 %v67, %v72
  %v77 = vlaneseq
  %v78 = vshrl.u32 %v77, 7
  %v79 = vsub.s32 0, %v78
  %v80 = vrot.slane %v25, %v79
  %v82 = vadd.f32 %v74, %v80
  %v83 = vadd.f32 %v75, %v80
  %84 = vst.msk [vmem:[%s4] sm:$0x3f] %vm26, %v82
  %85 = vst.msk [vmem:[%s4 + $0x8] sm:$0x3f] %vm26, %v83
  // Predicated region
  $region18: #{model_forward_itm.10} parent=0 // pred_check
    _
  $region19: #{model_forward_itm.10} parent=0 // pred_check_branch
    %87 = sbr.rel (0) target = $region21
  $region20: #{model_forward_itm.10} parent=0 // pred_region
    _
  $region21: #{model_forward_itm.10} parent=0 // pred_fallthru
    _
  // Predicated region
  $region22: #{model_forward_itm.10} parent=0 // pred_check
    _
  $region23: #{model_forward_itm.10} parent=0 // pred_check_branch
    %89 = sbr.rel (0) target = $region25
  $region24: #{model_forward_itm.10} parent=0 // pred_region
    _
  $region25: #{model_forward_itm.10} parent=0 // pred_fallthru
    _

// kernel: model_forward_itm.11
$region0: #{model_forward_itm.11}
  #allocation0 [shape = 'u32[]', space=smem, size = 0x4, offset = 0x4, fixed_abs, tag = 'smem constant byte address 0x4 - core index']
  #allocation1 [shape = 'u32[144,128]{1,0:T(1,128)}', space=vmem, size = 0x12000, scoped, tag = 'internal scratch']
  #allocation2 [shape = 'f32[13,32]{1,0:T(8,128)}', space=vmem, size = 0x2000, scoped, tag = 'scratch operand']
  %s0 = inlined_call_operand.vmem [shape: f32[2,13,32], index: 0, kind: input, shape index: {}]
  %s1 = inlined_call_operand.vmem [shape: f32[1,32], index: 1, kind: input, shape index: {}]
  %s2 = inlined_call_operand.vmem [shape: f32[1,32], index: 2, kind: input, shape index: {}]
  %s3 = inlined_call_operand.vmem [shape: f32[2,1,32], index: 3, kind: input, shape index: {}]
  %s4 = inlined_call_operand.vmem [shape: f32[2,1,32], index: 4, kind: input, shape index: {}]
  %s5 = inlined_call_operand.vmem [shape: bf16[2,32,96], index: 5, kind: input, shape index: {}]
  %s6 = inlined_call_operand.vmem [shape: f32[2,1,96], index: 6, kind: input, shape index: {}]
  %s7 = inlined_call_operand.vmem [shape: bf16[2,32,32], index: 7, kind: input, shape index: {}]
  %s8 = inlined_call_operand.vmem [shape: f32[2,1,32], index: 8, kind: input, shape index: {}]
  %s9 = inlined_call_operand.vmem [shape: f32[2,1,32], index: 9, kind: input, shape index: {}]
  %s10 = inlined_call_operand.vmem [shape: f32[2,1,32], index: 10, kind: input, shape index: {}]
  %s11 = inlined_call_operand.vmem [shape: bf16[2,32,64], index: 11, kind: input, shape index: {}]
  %s12 = inlined_call_operand.vmem [shape: f32[2,1,64], index: 12, kind: input, shape index: {}]
  %s13 = inlined_call_operand.vmem [shape: bf16[2,64,32], index: 13, kind: input, shape index: {}]
  %s14 = inlined_call_operand.vmem [shape: f32[2,1,32], index: 14, kind: input, shape index: {}]
  %s15 = inlined_call_operand.vmem [shape: f32[2,13,32], index: 15, kind: output, shape index: {}]
  %s16 = sld [smem:[#allocation0]]
  $region97: #{model_forward_itm.11} parent=0
    _
  %s18 = ssub.s32 1, %s16
  %s19 = scalar_select 0, %s18, %s16
  loop: start=0, step=1, limit=6
  $region2: #{model_forward_itm.11} parent=0 // loop_pre_header
    _
  $region3: #{model_forward_itm.11} parent=0 // loop_header
    %s21 = sphi 0, %s25
    %p22 = scmp.ge.s32.totalorder %s21, 6
    %s28 = sphi 0, %s40
    %s29 = sphi 0, %s36
    %s30 = sphi 0, %s28
    %s31 = sphi 0, %s29
    %s32 = sphi 0, %s30
    %s33 = sphi 0, %s31
    %s43 = sphi 0, %s45
    %s46 = sphi 0, %s43
    %s47 = sphi 0, %s46
    %s63 = sphi 0, %s47
    %s67 = sphi 0, %s67
    %s69 = sphi 0, %s67
    %s70 = sphi 0, %s69
    %s84 = sphi 0, %s70
    %s88 = sphi 0, %s88
    %s90 = sphi 0, %s88
    %s91 = sphi 0, %s90
    %s105 = sphi 0, %s91
    %s111 = sphi 0, %s113
    %s114 = sphi 0, %s111
    %s115 = sphi 0, %s114
    %s131 = sphi 0, %s115
    %s137 = sphi 0, %s139
    %s140 = sphi 0, %s137
    %s141 = sphi 0, %s140
    %s157 = sphi 0, %s141
    %s163 = sphi 0, %s165
    %s166 = sphi 0, %s163
    %s167 = sphi 0, %s166
    %s183 = sphi 0, %s167
    %s189 = sphi 0, %s191
    %s192 = sphi 0, %s189
    %s193 = sphi 0, %s192
    %s209 = sphi 0, %s193
    %s215 = sphi 0, %s217
    %s218 = sphi 0, %s215
    %s219 = sphi 0, %s218
    %s235 = sphi 0, %s219
    %s241 = sphi 0, %s243
    %s244 = sphi 0, %s241
    %s245 = sphi 0, %s244
    %s261 = sphi 0, %s245
    %s267 = sphi 0, %s269
    %s270 = sphi 0, %s267
    %s271 = sphi 0, %s270
    %s287 = sphi 0, %s271
    %s293 = sphi 0, %s295
    %s296 = sphi 0, %s293
    %s297 = sphi 0, %s296
    %s313 = sphi 0, %s297
    %s319 = sphi 0, %s321
    %s322 = sphi 0, %s319
    %s323 = sphi 0, %s322
    %s339 = sphi 0, %s323
    %s345 = sphi 0, %s347
    %s348 = sphi 0, %s345
    %s349 = sphi 0, %s348
    %s365 = sphi 0, %s349
    %s371 = sphi 0, %s373
    %s374 = sphi 0, %s371
    %s375 = sphi 0, %s374
    %s391 = sphi 0, %s375
    %s397 = sphi 0, %s399
    %s400 = sphi 0, %s397
    %s401 = sphi 0, %s400
    %s417 = sphi 0, %s401
    %s423 = sphi 0, %s425
    %s426 = sphi 0, %s423
    %s427 = sphi 0, %s426
    %s443 = sphi 0, %s427
  $region4: #{model_forward_itm.11} parent=0 // loop_header_branch
    %24 = sbr.rel (%p22) target = $region8
  $region5: #{model_forward_itm.11} parent=0 // loop_body
    %s26 = ssub.s32 %s21, 1
    %s27 = ssub.s32 %s21, 2
    %s34 = sadd.s32 1, %s29
    %p35 = scmp.ge.s32.totalorder %s34, 2
    %s36 = scalar_select %p35, 0, %s34
    %s37 = sadd.s32 1, %s28
    %s38 = scalar_select %p35, %s37, %s28
    %p39 = scmp.ge.s32.totalorder %s38, 2
    %s40 = scalar_select %p39, 0, %s38
    %s41 = ssub.s32 %s28, %s40
    %p42 = scmp.eq.s32.totalorder %s41, 0
    %s44 = sadd.s32 %s43, 1
    %s45 = scalar_select %p42, %s43, %s44
    %p48 = pneg %p42
    %p49 = scmp.eq.s32.totalorder %s21, 3
    %p50 = por %p48, %p49
    %p51 = scmp.ne.s32.totalorder %s43, %s46
    %p52 = scmp.eq.s32.totalorder %s21, 0
    %p53 = por %p51, %p52
    %p54 = scmp.ne.s32.totalorder %s43, %s46
    %p55 = scmp.eq.s32.totalorder %s26, 3
    %p56 = por %p54, %p55
    %p57 = scmp.ne.s32.totalorder %s46, %s47
    %p58 = scmp.eq.s32.totalorder %s26, 0
    %p59 = por %p57, %p58
    %p60 = scmp.ne.s32.totalorder %s46, %s47
    %p61 = scmp.eq.s32.totalorder %s27, 3
    %p62 = por %p60, %p61
    %p64 = scmp.ne.s32.totalorder %s47, %s63
    %p65 = scmp.eq.s32.totalorder %s27, 0
    %p66 = por %p64, %p65
    %s68 = sadd.s32 %s67, 1
    %p71 = scmp.eq.s32.totalorder %s21, 3
    %p72 = scmp.ne.s32.totalorder %s67, %s69
    %p73 = scmp.eq.s32.totalorder %s21, 0
    %p74 = por %p72, %p73
    %p75 = scmp.ne.s32.totalorder %s67, %s69
    %p76 = scmp.eq.s32.totalorder %s26, 3
    %p77 = por %p75, %p76
    %p78 = scmp.ne.s32.totalorder %s69, %s70
    %p79 = scmp.eq.s32.totalorder %s26, 0
    %p80 = por %p78, %p79
    %p81 = scmp.ne.s32.totalorder %s69, %s70
    %p82 = scmp.eq.s32.totalorder %s27, 3
    %p83 = por %p81, %p82
    %p85 = scmp.ne.s32.totalorder %s70, %s84
    %p86 = scmp.eq.s32.totalorder %s27, 0
    %p87 = por %p85, %p86
    %s89 = sadd.s32 %s88, 1
    %p92 = scmp.eq.s32.totalorder %s21, 3
    %p93 = scmp.ne.s32.totalorder %s88, %s90
    %p94 = scmp.eq.s32.totalorder %s21, 0
    %p95 = por %p93, %p94
    %p96 = scmp.ne.s32.totalorder %s88, %s90
    %p97 = scmp.eq.s32.totalorder %s26, 3
    %p98 = por %p96, %p97
    %p99 = scmp.ne.s32.totalorder %s90, %s91
    %p100 = scmp.eq.s32.totalorder %s26, 0
    %p101 = por %p99, %p100
    %p102 = scmp.ne.s32.totalorder %s90, %s91
    %p103 = scmp.eq.s32.totalorder %s27, 3
    %p104 = por %p102, %p103
    %p106 = scmp.ne.s32.totalorder %s91, %s105
    %p107 = scmp.eq.s32.totalorder %s27, 0
    %p108 = por %p106, %p107
    %s109 = ssub.s32 %s29, %s36
    %p110 = scmp.eq.s32.totalorder %s109, 0
    %s112 = sadd.s32 %s111, 1
    %s113 = scalar_select %p110, %s111, %s112
    %p116 = pneg %p110
    %p117 = scmp.eq.s32.totalorder %s21, 3
    %p118 = por %p116, %p117
    %p119 = scmp.ne.s32.totalorder %s111, %s114
    %p120 = scmp.eq.s32.totalorder %s21, 0
    %p121 = por %p119, %p120
    %p122 = scmp.ne.s32.totalorder %s111, %s114
    %p123 = scmp.eq.s32.totalorder %s26, 3
    %p124 = por %p122, %p123
    %p125 = scmp.ne.s32.totalorder %s114, %s115
    %p126 = scmp.eq.s32.totalorder %s26, 0
    %p127 = por %p125, %p126
    %p128 = scmp.ne.s32.totalorder %s114, %s115
    %p129 = scmp.eq.s32.totalorder %s27, 3
    %p130 = por %p128, %p129
    %p132 = scmp.ne.s32.totalorder %s115, %s131
    %p133 = scmp.eq.s32.totalorder %s27, 0
    %p134 = por %p132, %p133
    %s135 = ssub.s32 %s29, %s36
    %p136 = scmp.eq.s32.totalorder %s135, 0
    %s138 = sadd.s32 %s137, 1
    %s139 = scalar_select %p136, %s137, %s138
    %p142 = pneg %p136
    %p143 = scmp.eq.s32.totalorder %s21, 3
    %p144 = por %p142, %p143
    %p145 = scmp.ne.s32.totalorder %s137, %s140
    %p146 = scmp.eq.s32.totalorder %s21, 0
    %p147 = por %p145, %p146
    %p148 = scmp.ne.s32.totalorder %s137, %s140
    %p149 = scmp.eq.s32.totalorder %s26, 3
    %p150 = por %p148, %p149
    %p151 = scmp.ne.s32.totalorder %s140, %s141
    %p152 = scmp.eq.s32.totalorder %s26, 0
    %p153 = por %p151, %p152
    %p154 = scmp.ne.s32.totalorder %s140, %s141
    %p155 = scmp.eq.s32.totalorder %s27, 3
    %p156 = por %p154, %p155
    %p158 = scmp.ne.s32.totalorder %s141, %s157
    %p159 = scmp.eq.s32.totalorder %s27, 0
    %p160 = por %p158, %p159
    %s161 = ssub.s32 %s29, %s36
    %p162 = scmp.eq.s32.totalorder %s161, 0
    %s164 = sadd.s32 %s163, 1
    %s165 = scalar_select %p162, %s163, %s164
    %p168 = pneg %p162
    %p169 = scmp.eq.s32.totalorder %s21, 3
    %p170 = por %p168, %p169
    %p171 = scmp.ne.s32.totalorder %s163, %s166
    %p172 = scmp.eq.s32.totalorder %s21, 0
    %p173 = por %p171, %p172
    %p174 = scmp.ne.s32.totalorder %s163, %s166
    %p175 = scmp.eq.s32.totalorder %s26, 3
    %p176 = por %p174, %p175
    %p177 = scmp.ne.s32.totalorder %s166, %s167
    %p178 = scmp.eq.s32.totalorder %s26, 0
    %p179 = por %p177, %p178
    %p180 = scmp.ne.s32.totalorder %s166, %s167
    %p181 = scmp.eq.s32.totalorder %s27, 3
    %p182 = por %p180, %p181
    %p184 = scmp.ne.s32.totalorder %s167, %s183
    %p185 = scmp.eq.s32.totalorder %s27, 0
    %p186 = por %p184, %p185
    %s187 = ssub.s32 %s29, %s36
    %p188 = scmp.eq.s32.totalorder %s187, 0
    %s190 = sadd.s32 %s189, 1
    %s191 = scalar_select %p188, %s189, %s190
    %p194 = pneg %p188
    %p195 = scmp.eq.s32.totalorder %s21, 3
    %p196 = por %p194, %p195
    %p197 = scmp.ne.s32.totalorder %s189, %s192
    %p198 = scmp.eq.s32.totalorder %s21, 0
    %p199 = por %p197, %p198
    %p200 = scmp.ne.s32.totalorder %s189, %s192
    %p201 = scmp.eq.s32.totalorder %s26, 3
    %p202 = por %p200, %p201
    %p203 = scmp.ne.s32.totalorder %s192, %s193
    %p204 = scmp.eq.s32.totalorder %s26, 0
    %p205 = por %p203, %p204
    %p206 = scmp.ne.s32.totalorder %s192, %s193
    %p207 = scmp.eq.s32.totalorder %s27, 3
    %p208 = por %p206, %p207
    %p210 = scmp.ne.s32.totalorder %s193, %s209
    %p211 = scmp.eq.s32.totalorder %s27, 0
    %p212 = por %p210, %p211
    %s213 = ssub.s32 %s29, %s36
    %p214 = scmp.eq.s32.totalorder %s213, 0
    %s216 = sadd.s32 %s215, 1
    %s217 = scalar_select %p214, %s215, %s216
    %p220 = pneg %p214
    %p221 = scmp.eq.s32.totalorder %s21, 3
    %p222 = por %p220, %p221
    %p223 = scmp.ne.s32.totalorder %s215, %s218
    %p224 = scmp.eq.s32.totalorder %s21, 0
    %p225 = por %p223, %p224
    %p226 = scmp.ne.s32.totalorder %s215, %s218
    %p227 = scmp.eq.s32.totalorder %s26, 3
    %p228 = por %p226, %p227
    %p229 = scmp.ne.s32.totalorder %s218, %s219
    %p230 = scmp.eq.s32.totalorder %s26, 0
    %p231 = por %p229, %p230
    %p232 = scmp.ne.s32.totalorder %s218, %s219
    %p233 = scmp.eq.s32.totalorder %s27, 3
    %p234 = por %p232, %p233
    %p236 = scmp.ne.s32.totalorder %s219, %s235
    %p237 = scmp.eq.s32.totalorder %s27, 0
    %p238 = por %p236, %p237
    %s239 = ssub.s32 %s29, %s36
    %p240 = scmp.eq.s32.totalorder %s239, 0
    %s242 = sadd.s32 %s241, 1
    %s243 = scalar_select %p240, %s241, %s242
    %p246 = pneg %p240
    %p247 = scmp.eq.s32.totalorder %s21, 3
    %p248 = por %p246, %p247
    %p249 = scmp.ne.s32.totalorder %s241, %s244
    %p250 = scmp.eq.s32.totalorder %s21, 0
    %p251 = por %p249, %p250
    %p252 = scmp.ne.s32.totalorder %s241, %s244
    %p253 = scmp.eq.s32.totalorder %s26, 3
    %p254 = por %p252, %p253
    %p255 = scmp.ne.s32.totalorder %s244, %s245
    %p256 = scmp.eq.s32.totalorder %s26, 0
    %p257 = por %p255, %p256
    %p258 = scmp.ne.s32.totalorder %s244, %s245
    %p259 = scmp.eq.s32.totalorder %s27, 3
    %p260 = por %p258, %p259
    %p262 = scmp.ne.s32.totalorder %s245, %s261
    %p263 = scmp.eq.s32.totalorder %s27, 0
    %p264 = por %p262, %p263
    %s265 = ssub.s32 %s29, %s36
    %p266 = scmp.eq.s32.totalorder %s265, 0
    %s268 = sadd.s32 %s267, 1
    %s269 = scalar_select %p266, %s267, %s268
    %p272 = pneg %p266
    %p273 = scmp.eq.s32.totalorder %s21, 3
    %p274 = por %p272, %p273
    %p275 = scmp.ne.s32.totalorder %s267, %s270
    %p276 = scmp.eq.s32.totalorder %s21, 0
    %p277 = por %p275, %p276
    %p278 = scmp.ne.s32.totalorder %s267, %s270
    %p279 = scmp.eq.s32.totalorder %s26, 3
    %p280 = por %p278, %p279
    %p281 = scmp.ne.s32.totalorder %s270, %s271
    %p282 = scmp.eq.s32.totalorder %s26, 0
    %p283 = por %p281, %p282
    %p284 = scmp.ne.s32.totalorder %s270, %s271
    %p285 = scmp.eq.s32.totalorder %s27, 3
    %p286 = por %p284, %p285
    %p288 = scmp.ne.s32.totalorder %s271, %s287
    %p289 = scmp.eq.s32.totalorder %s27, 0
    %p290 = por %p288, %p289
    %s291 = ssub.s32 %s29, %s36
    %p292 = scmp.eq.s32.totalorder %s291, 0
    %s294 = sadd.s32 %s293, 1
    %s295 = scalar_select %p292, %s293, %s294
    %p298 = pneg %p292
    %p299 = scmp.eq.s32.totalorder %s21, 3
    %p300 = por %p298, %p299
    %p301 = scmp.ne.s32.totalorder %s293, %s296
    %p302 = scmp.eq.s32.totalorder %s21, 0
    %p303 = por %p301, %p302
    %p304 = scmp.ne.s32.totalorder %s293, %s296
    %p305 = scmp.eq.s32.totalorder %s26, 3
    %p306 = por %p304, %p305
    %p307 = scmp.ne.s32.totalorder %s296, %s297
    %p308 = scmp.eq.s32.totalorder %s26, 0
    %p309 = por %p307, %p308
    %p310 = scmp.ne.s32.totalorder %s296, %s297
    %p311 = scmp.eq.s32.totalorder %s27, 3
    %p312 = por %p310, %p311
    %p314 = scmp.ne.s32.totalorder %s297, %s313
    %p315 = scmp.eq.s32.totalorder %s27, 0
    %p316 = por %p314, %p315
    %s317 = ssub.s32 %s29, %s36
    %p318 = scmp.eq.s32.totalorder %s317, 0
    %s320 = sadd.s32 %s319, 1
    %s321 = scalar_select %p318, %s319, %s320
    %p324 = pneg %p318
    %p325 = scmp.eq.s32.totalorder %s21, 3
    %p326 = por %p324, %p325
    %p327 = scmp.ne.s32.totalorder %s319, %s322
    %p328 = scmp.eq.s32.totalorder %s21, 0
    %p329 = por %p327, %p328
    %p330 = scmp.ne.s32.totalorder %s319, %s322
    %p331 = scmp.eq.s32.totalorder %s26, 3
    %p332 = por %p330, %p331
    %p333 = scmp.ne.s32.totalorder %s322, %s323
    %p334 = scmp.eq.s32.totalorder %s26, 0
    %p335 = por %p333, %p334
    %p336 = scmp.ne.s32.totalorder %s322, %s323
    %p337 = scmp.eq.s32.totalorder %s27, 3
    %p338 = por %p336, %p337
    %p340 = scmp.ne.s32.totalorder %s323, %s339
    %p341 = scmp.eq.s32.totalorder %s27, 0
    %p342 = por %p340, %p341
    %s343 = ssub.s32 %s29, %s36
    %p344 = scmp.eq.s32.totalorder %s343, 0
    %s346 = sadd.s32 %s345, 1
    %s347 = scalar_select %p344, %s345, %s346
    %p350 = pneg %p344
    %p351 = scmp.eq.s32.totalorder %s21, 3
    %p352 = por %p350, %p351
    %p353 = scmp.ne.s32.totalorder %s345, %s348
    %p354 = scmp.eq.s32.totalorder %s21, 0
    %p355 = por %p353, %p354
    %p356 = scmp.ne.s32.totalorder %s345, %s348
    %p357 = scmp.eq.s32.totalorder %s26, 3
    %p358 = por %p356, %p357
    %p359 = scmp.ne.s32.totalorder %s348, %s349
    %p360 = scmp.eq.s32.totalorder %s26, 0
    %p361 = por %p359, %p360
    %p362 = scmp.ne.s32.totalorder %s348, %s349
    %p363 = scmp.eq.s32.totalorder %s27, 3
    %p364 = por %p362, %p363
    %p366 = scmp.ne.s32.totalorder %s349, %s365
    %p367 = scmp.eq.s32.totalorder %s27, 0
    %p368 = por %p366, %p367
    %s369 = ssub.s32 %s29, %s36
    %p370 = scmp.eq.s32.totalorder %s369, 0
    %s372 = sadd.s32 %s371, 1
    %s373 = scalar_select %p370, %s371, %s372
    %p376 = pneg %p370
    %p377 = scmp.eq.s32.totalorder %s21, 3
    %p378 = por %p376, %p377
    %p379 = scmp.ne.s32.totalorder %s371, %s374
    %p380 = scmp.eq.s32.totalorder %s21, 0
    %p381 = por %p379, %p380
    %p382 = scmp.ne.s32.totalorder %s371, %s374
    %p383 = scmp.eq.s32.totalorder %s26, 3
    %p384 = por %p382, %p383
    %p385 = scmp.ne.s32.totalorder %s374, %s375
    %p386 = scmp.eq.s32.totalorder %s26, 0
    %p387 = por %p385, %p386
    %p388 = scmp.ne.s32.totalorder %s374, %s375
    %p389 = scmp.eq.s32.totalorder %s27, 3
    %p390 = por %p388, %p389
    %p392 = scmp.ne.s32.totalorder %s375, %s391
    %p393 = scmp.eq.s32.totalorder %s27, 0
    %p394 = por %p392, %p393
    %s395 = ssub.s32 %s29, %s36
    %p396 = scmp.eq.s32.totalorder %s395, 0
    %s398 = sadd.s32 %s397, 1
    %s399 = scalar_select %p396, %s397, %s398
    %p402 = pneg %p396
    %p403 = scmp.eq.s32.totalorder %s21, 3
    %p404 = por %p402, %p403
    %p405 = scmp.ne.s32.totalorder %s397, %s400
    %p406 = scmp.eq.s32.totalorder %s21, 0
    %p407 = por %p405, %p406
    %p408 = scmp.ne.s32.totalorder %s397, %s400
    %p409 = scmp.eq.s32.totalorder %s26, 3
    %p410 = por %p408, %p409
    %p411 = scmp.ne.s32.totalorder %s400, %s401
    %p412 = scmp.eq.s32.totalorder %s26, 0
    %p413 = por %p411, %p412
    %p414 = scmp.ne.s32.totalorder %s400, %s401
    %p415 = scmp.eq.s32.totalorder %s27, 3
    %p416 = por %p414, %p415
    %p418 = scmp.ne.s32.totalorder %s401, %s417
    %p419 = scmp.eq.s32.totalorder %s27, 0
    %p420 = por %p418, %p419
    %s421 = ssub.s32 %s28, %s40
    %p422 = scmp.eq.s32.totalorder %s421, 0
    %s424 = sadd.s32 %s423, 1
    %s425 = scalar_select %p422, %s423, %s424
    %p428 = pneg %p422
    %p429 = scmp.eq.s32.totalorder %s21, 3
    %p430 = por %p428, %p429
    %p431 = scmp.ne.s32.totalorder %s423, %s426
    %p432 = scmp.eq.s32.totalorder %s21, 0
    %p433 = por %p431, %p432
    %p434 = scmp.ne.s32.totalorder %s423, %s426
    %p435 = scmp.eq.s32.totalorder %s26, 3
    %p436 = por %p434, %p435
    %p437 = scmp.ne.s32.totalorder %s426, %s427
    %p438 = scmp.eq.s32.totalorder %s26, 0
    %p439 = por %p437, %p438
    %p440 = scmp.ne.s32.totalorder %s426, %s427
    %p441 = scmp.eq.s32.totalorder %s27, 3
    %p442 = por %p440, %p441
    %p444 = scmp.ne.s32.totalorder %s427, %s443
    %p445 = scmp.eq.s32.totalorder %s27, 0
    %p446 = por %p444, %p445
    %p447 = scmp.le.s32.totalorder 1, %s21
    %p448 = scmp.lt.s32.totalorder %s21, 5
    %p449 = pnand %p447, %p448
    %p450 = pneg %p449
    // Predicated region
    $region9: #{model_forward_itm.11} parent=5 // pred_check
      _
    $region10: #{model_forward_itm.11} parent=5 // pred_check_branch
      %452 = sbr.rel (%p449) target = $region12
    $region11: #{model_forward_itm.11} parent=5 // pred_region
      %s453 = ssub.s32 %s21, 1
      // Predicated region
      $region13: #{model_forward_itm.11} parent=11 // pred_check
        %p454 = pneg %p80
      $region14: #{model_forward_itm.11} parent=11 // pred_check_branch
        %456 = sbr.rel (%p454) target = $region16
      $region15: #{model_forward_itm.11} parent=11 // pred_region
        _
      $region16: #{model_forward_itm.11} parent=11 // pred_fallthru
        _
      // Predicated region
      $region17: #{model_forward_itm.11} parent=11 // pred_check
        %p457 = pneg %p101
      $region18: #{model_forward_itm.11} parent=11 // pred_check_branch
        %459 = sbr.rel (%p457) target = $region20
      $region19: #{model_forward_itm.11} parent=11 // pred_region
        _
      $region20: #{model_forward_itm.11} parent=11 // pred_fallthru
        _
    $region12: #{model_forward_itm.11} parent=5 // pred_fallthru
      _
    %p460 = scmp.lt.s32.totalorder %s21, 4
    // Predicated region
    $region21: #{model_forward_itm.11} parent=5 // pred_check
      %p461 = pneg %p460
    $region22: #{model_forward_itm.11} parent=5 // pred_check_branch
      %463 = sbr.rel (%p461) target = $region24
    $region23: #{model_forward_itm.11} parent=5 // pred_region
      // Predicated region
      $region25: #{model_forward_itm.11} parent=23 // pred_check
        %p464 = pneg %p53
      $region26: #{model_forward_itm.11} parent=23 // pred_check_branch
        %466 = sbr.rel (%p464) target = $region28
      $region27: #{model_forward_itm.11} parent=23 // pred_region
        %p467 = scmp.lt.s32.totalorder %s28, 1
        %s468 = scalar_select %p467, %s28, 1
        %s469 = smul.addr %s468, 2
        %s470 = smul.addr %s469, 8
        %s471 = scalar_lea.vmem %s0, %s470
      $region28: #{model_forward_itm.11} parent=23 // pred_fallthru
        _
      // Predicated region
      $region29: #{model_forward_itm.11} parent=23 // pred_check
        %p472 = pneg %p121
      $region30: #{model_forward_itm.11} parent=23 // pred_check_branch
        %474 = sbr.rel (%p472) target = $region32
      $region31: #{model_forward_itm.11} parent=23 // pred_region
        %p475 = scmp.lt.s32.totalorder %s29, 1
        %s476 = scalar_select %p475, %s29, 1
        %s477 = scalar_lea.vmem %s3, %s476
      $region32: #{model_forward_itm.11} parent=23 // pred_fallthru
        _
      // Predicated region
      $region33: #{model_forward_itm.11} parent=23 // pred_check
        %p478 = pneg %p147
      $region34: #{model_forward_itm.11} parent=23 // pred_check_branch
        %480 = sbr.rel (%p478) target = $region36
      $region35: #{model_forward_itm.11} parent=23 // pred_region
        %p481 = scmp.lt.s32.totalorder %s29, 1
        %s482 = scalar_select %p481, %s29, 1
        %s483 = scalar_lea.vmem %s4, %s482
      $region36: #{model_forward_itm.11} parent=23 // pred_fallthru
        _
      // Predicated region
      $region37: #{model_forward_itm.11} parent=23 // pred_check
        %p484 = pneg %p173
      $region38: #{model_forward_itm.11} parent=23 // pred_check_branch
        %486 = sbr.rel (%p484) target = $region40
      $region39: #{model_forward_itm.11} parent=23 // pred_region
        %p487 = scmp.lt.s32.totalorder %s29, 1
        %s488 = scalar_select %p487, %s29, 1
        %s489 = smul.addr %s488, 4
        %s490 = smul.addr %s489, 4
        %s491 = scalar_lea.vmem %s5, %s490
      $region40: #{model_forward_itm.11} parent=23 // pred_fallthru
        _
      // Predicated region
      $region41: #{model_forward_itm.11} parent=23 // pred_check
        %p492 = pneg %p199
      $region42: #{model_forward_itm.11} parent=23 // pred_check_branch
        %494 = sbr.rel (%p492) target = $region44
      $region43: #{model_forward_itm.11} parent=23 // pred_region
        %p495 = scmp.lt.s32.totalorder %s29, 1
        %s496 = scalar_select %p495, %s29, 1
        %s497 = scalar_lea.vmem %s6, %s496
      $region44: #{model_forward_itm.11} parent=23 // pred_fallthru
        _
      // Predicated region
      $region45: #{model_forward_itm.11} parent=23 // pred_check
        %p498 = pneg %p225
      $region46: #{model_forward_itm.11} parent=23 // pred_check_branch
        %500 = sbr.rel (%p498) target = $region48
      $region47: #{model_forward_itm.11} parent=23 // pred_region
        %p501 = scmp.lt.s32.totalorder %s29, 1
        %s502 = scalar_select %p501, %s29, 1
        %s503 = smul.addr %s502, 4
        %s504 = smul.addr %s503, 4
        %s505 = scalar_lea.vmem %s7, %s504
      $region48: #{model_forward_itm.11} parent=23 // pred_fallthru
        _
      // Predicated region
      $region49: #{model_forward_itm.11} parent=23 // pred_check
        %p506 = pneg %p251
      $region50: #{model_forward_itm.11} parent=23 // pred_check_branch
        %508 = sbr.rel (%p506) target = $region52
      $region51: #{model_forward_itm.11} parent=23 // pred_region
        %p509 = scmp.lt.s32.totalorder %s29, 1
        %s510 = scalar_select %p509, %s29, 1
        %s511 = scalar_lea.vmem %s8, %s510
      $region52: #{model_forward_itm.11} parent=23 // pred_fallthru
        _
      // Predicated region
      $region53: #{model_forward_itm.11} parent=23 // pred_check
        %p512 = pneg %p277
      $region54: #{model_forward_itm.11} parent=23 // pred_check_branch
        %514 = sbr.rel (%p512) target = $region56
      $region55: #{model_forward_itm.11} parent=23 // pred_region
        %p515 = scmp.lt.s32.totalorder %s29, 1
        %s516 = scalar_select %p515, %s29, 1
        %s517 = scalar_lea.vmem %s9, %s516
      $region56: #{model_forward_itm.11} parent=23 // pred_fallthru
        _
      // Predicated region
      $region57: #{model_forward_itm.11} parent=23 // pred_check
        %p518 = pneg %p303
      $region58: #{model_forward_itm.11} parent=23 // pred_check_branch
        %520 = sbr.rel (%p518) target = $region60
      $region59: #{model_forward_itm.11} parent=23 // pred_region
        %p521 = scmp.lt.s32.totalorder %s29, 1
        %s522 = scalar_select %p521, %s29, 1
        %s523 = scalar_lea.vmem %s10, %s522
      $region60: #{model_forward_itm.11} parent=23 // pred_fallthru
        _
      // Predicated region
      $region61: #{model_forward_itm.11} parent=23 // pred_check
        %p524 = pneg %p329
      $region62: #{model_forward_itm.11} parent=23 // pred_check_branch
        %526 = sbr.rel (%p524) target = $region64
      $region63: #{model_forward_itm.11} parent=23 // pred_region
        %p527 = scmp.lt.s32.totalorder %s29, 1
        %s528 = scalar_select %p527, %s29, 1
        %s529 = smul.addr %s528, 4
        %s530 = smul.addr %s529, 4
        %s531 = scalar_lea.vmem %s11, %s530
      $region64: #{model_forward_itm.11} parent=23 // pred_fallthru
        _
      // Predicated region
      $region65: #{model_forward_itm.11} parent=23 // pred_check
        %p532 = pneg %p355
      $region66: #{model_forward_itm.11} parent=23 // pred_check_branch
        %534 = sbr.rel (%p532) target = $region68
      $region67: #{model_forward_itm.11} parent=23 // pred_region
        %p535 = scmp.lt.s32.totalorder %s29, 1
        %s536 = scalar_select %p535, %s29, 1
        %s537 = scalar_lea.vmem %s12, %s536
      $region68: #{model_forward_itm.11} parent=23 // pred_fallthru
        _
      // Predicated region
      $region69: #{model_forward_itm.11} parent=23 // pred_check
        %p538 = pneg %p381
      $region70: #{model_forward_itm.11} parent=23 // pred_check_branch
        %540 = sbr.rel (%p538) target = $region72
      $region71: #{model_forward_itm.11} parent=23 // pred_region
        %p541 = scmp.lt.s32.totalorder %s29, 1
        %s542 = scalar_select %p541, %s29, 1
        %s543 = smul.addr %s542, 8
        %s544 = smul.addr %s543, 4
        %s545 = scalar_lea.vmem %s13, %s544
      $region72: #{model_forward_itm.11} parent=23 // pred_fallthru
        _
      // Predicated region
      $region73: #{model_forward_itm.11} parent=23 // pred_check
        %p546 = pneg %p407
      $region74: #{model_forward_itm.11} parent=23 // pred_check_branch
        %548 = sbr.rel (%p546) target = $region76
      $region75: #{model_forward_itm.11} parent=23 // pred_region
        %p549 = scmp.lt.s32.totalorder %s29, 1
        %s550 = scalar_select %p549, %s29, 1
        %s551 = scalar_lea.vmem %s14, %s550
      $region76: #{model_forward_itm.11} parent=23 // pred_fallthru
        _
    $region24: #{model_forward_itm.11} parent=5 // pred_fallthru
      _
    %p552 = scmp.le.s32.totalorder 1, %s21
    %p553 = scmp.lt.s32.totalorder %s21, 5
    %p554 = pnand %p552, %p553
    %p555 = pneg %p554
    // Predicated region
    $region77: #{model_forward_itm.11} parent=5 // pred_check
      _
    $region78: #{model_forward_itm.11} parent=5 // pred_check_branch
      %557 = sbr.rel (%p554) target = $region80
    $region79: #{model_forward_itm.11} parent=5 // pred_region
      %s558 = ssub.s32 %s21, 1
      %p559 = scmp.lt.s32.totalorder %s30, 1
      %s560 = scalar_select %p559, %s30, 1
      %s561 = smul.addr %s560, 2
      %s562 = smul.addr %s561, 8
      %s563 = scalar_lea.vmem %s0, %s562
      %p564 = pneg %p59
      %p565 = pneg %p56
      %p566 = pneg %p80
      %p567 = pneg %p77
      %p568 = pneg %p101
      %p569 = pneg %p98
      %p570 = scmp.lt.s32.totalorder %s31, 1
      %s571 = scalar_select %p570, %s31, 1
      %s572 = scalar_lea.vmem %s3, %s571
      %p573 = pneg %p127
      %p574 = pneg %p124
      %p575 = scmp.lt.s32.totalorder %s31, 1
      %s576 = scalar_select %p575, %s31, 1
      %s577 = scalar_lea.vmem %s4, %s576
      %p578 = pneg %p153
      %p579 = pneg %p150
      %p580 = scmp.lt.s32.totalorder %s31, 1
      %s581 = scalar_select %p580, %s31, 1
      %s582 = smul.addr %s581, 4
      %s583 = smul.addr %s582, 4
      %s584 = scalar_lea.vmem %s5, %s583
      %p585 = pneg %p179
      %p586 = pneg %p176
      %p587 = scmp.lt.s32.totalorder %s31, 1
      %s588 = scalar_select %p587, %s31, 1
      %s589 = scalar_lea.vmem %s6, %s588
      %p590 = pneg %p205
      %p591 = pneg %p202
      %p592 = scmp.lt.s32.totalorder %s31, 1
      %s593 = scalar_select %p592, %s31, 1
      %s594 = smul.addr %s593, 4
      %s595 = smul.addr %s594, 4
      %s596 = scalar_lea.vmem %s7, %s595
      %p597 = pneg %p231
      %p598 = pneg %p228
      %p599 = scmp.lt.s32.totalorder %s31, 1
      %s600 = scalar_select %p599, %s31, 1
      %s601 = scalar_lea.vmem %s8, %s600
      %p602 = pneg %p257
      %p603 = pneg %p254
      %p604 = scmp.lt.s32.totalorder %s31, 1
      %s605 = scalar_select %p604, %s31, 1
      %s606 = scalar_lea.vmem %s9, %s605
      %p607 = pneg %p283
      %p608 = pneg %p280
      %p609 = scmp.lt.s32.totalorder %s31, 1
      %s610 = scalar_select %p609, %s31, 1
      %s611 = scalar_lea.vmem %s10, %s610
      %p612 = pneg %p309
      %p613 = pneg %p306
      %p614 = scmp.lt.s32.totalorder %s31, 1
      %s615 = scalar_select %p614, %s31, 1
      %s616 = smul.addr %s615, 4
      %s617 = smul.addr %s616, 4
      %s618 = scalar_lea.vmem %s11, %s617
      %p619 = pneg %p335
      %p620 = pneg %p332
      %p621 = scmp.lt.s32.totalorder %s31, 1
      %s622 = scalar_select %p621, %s31, 1
      %s623 = scalar_lea.vmem %s12, %s622
      %p624 = pneg %p361
      %p625 = pneg %p358
      %p626 = scmp.lt.s32.totalorder %s31, 1
      %s627 = scalar_select %p626, %s31, 1
      %s628 = smul.addr %s627, 8
      %s629 = smul.addr %s628, 4
      %s630 = scalar_lea.vmem %s13, %s629
      %p631 = pneg %p387
      %p632 = pneg %p384
      %p633 = scmp.lt.s32.totalorder %s31, 1
      %s634 = scalar_select %p633, %s31, 1
      %s635 = scalar_lea.vmem %s14, %s634
      %p636 = pneg %p413
      %p637 = pneg %p410
      %p638 = pneg %p439
      %p639 = pneg %p436
      %p640 = scmp.lt.s32.totalorder %s30, 1
      %s641 = scalar_select %p640, %s30, 1
      %s642 = smul.addr %s641, 2
      %s643 = smul.addr %s642, 8
      %s644 = scalar_lea.vmem %s15, %s643
      %p645 = scmp.lt.s32.totalorder %s30, 1
      %s646 = scalar_select %p645, %s30, 1
      %s647 = smul.addr %s646, 2
      %s648 = smul.addr %s647, 8
      %s649 = scalar_lea.vmem %s0, %s648
      %p650 = scmp.lt.s32.totalorder %s31, 1
      %s651 = scalar_select %p650, %s31, 1
      %s652 = scalar_lea.vmem %s3, %s651
      %p653 = scmp.lt.s32.totalorder %s31, 1
      %s654 = scalar_select %p653, %s31, 1
      %s655 = scalar_lea.vmem %s4, %s654
      %p656 = scmp.lt.s32.totalorder %s31, 1
      %s657 = scalar_select %p656, %s31, 1
      %s658 = smul.addr %s657, 4
      %s659 = smul.addr %s658, 4
      %s660 = scalar_lea.vmem %s5, %s659
      %p661 = scmp.lt.s32.totalorder %s31, 1
      %s662 = scalar_select %p661, %s31, 1
      %s663 = scalar_lea.vmem %s6, %s662
      %p664 = scmp.lt.s32.totalorder %s31, 1
      %s665 = scalar_select %p664, %s31, 1
      %s666 = smul.addr %s665, 4
      %s667 = smul.addr %s666, 4
      %s668 = scalar_lea.vmem %s7, %s667
      %p669 = scmp.lt.s32.totalorder %s31, 1
      %s670 = scalar_select %p669, %s31, 1
      %s671 = scalar_lea.vmem %s8, %s670
      %p672 = scmp.lt.s32.totalorder %s31, 1
      %s673 = scalar_select %p672, %s31, 1
      %s674 = scalar_lea.vmem %s9, %s673
      %p675 = scmp.lt.s32.totalorder %s31, 1
      %s676 = scalar_select %p675, %s31, 1
      %s677 = scalar_lea.vmem %s10, %s676
      %p678 = scmp.lt.s32.totalorder %s31, 1
      %s679 = scalar_select %p678, %s31, 1
      %s680 = smul.addr %s679, 4
      %s681 = smul.addr %s680, 4
      %s682 = scalar_lea.vmem %s11, %s681
      %p683 = scmp.lt.s32.totalorder %s31, 1
      %s684 = scalar_select %p683, %s31, 1
      %s685 = scalar_lea.vmem %s12, %s684
      %p686 = scmp.lt.s32.totalorder %s31, 1
      %s687 = scalar_select %p686, %s31, 1
      %s688 = smul.addr %s687, 8
      %s689 = smul.addr %s688, 4
      %s690 = scalar_lea.vmem %s13, %s689
      %p691 = scmp.lt.s32.totalorder %s31, 1
      %s692 = scalar_select %p691, %s31, 1
      %s693 = scalar_lea.vmem %s14, %s692
      %p694 = scmp.lt.s32.totalorder %s30, 1
      %s695 = scalar_select %p694, %s30, 1
      %s696 = smul.addr %s695, 2
      %s697 = smul.addr %s696, 8
      %s698 = scalar_lea.vmem %s15, %s697
      %p700 = scmp.eq.s32.totalorder %s31, 0
      // Predicated region
      $region81: #{model_forward_itm.11} parent=79 // pred_check
        %p701 = pneg %p700
      $region82: #{model_forward_itm.11} parent=79 // pred_check_branch
        %703 = sbr.rel (%p701) target = $region84
      $region83: #{model_forward_itm.11} parent=79 // pred_region
        %v704 = vld [vmem:[%s649] sm:$0xff]
        %v705 = vld [vmem:[%s649 + $0x8] sm:$0x1f]
        %v706 = vld [vmem:[%s1] sm:$0x1]
        %v707 = vld [vmem:[%s2] sm:$0x1]
        %vm708 = vcmask 261120
        %v709 = vsel %vm708, %v704, 0.0
        %710 = vadd.xlane.f32.xlu0 %v709
        %v711 = vpop.xlane.xlu0 %710
        %vm712 = vcmask 258048
        %v713 = vsel %vm712, %v705, 0.0
        %714 = vadd.xlane.f32.xlu0 %v713
        %v715 = vpop.xlane.xlu0 %714
        %v716 = vrcp.pop 32.0
        %v717 = vmul.f32 %v711, %v716
        %v718 = vmul.f32 %v715, %v716
        %v719 = vsub.f32 %v704, %v717
        %v720 = vsub.f32 %v705, %v718
        %v721 = vmul.f32 %v719, %v719
        %v722 = vmul.f32 %v720, %v720
        %v723 = vsel %vm708, %v721, 0.0
        %724 = vadd.xlane.f32.xlu0 %v723
        %v725 = vpop.xlane.xlu0 %724
        %v726 = vsel %vm712, %v722, 0.0
        %727 = vadd.xlane.f32.xlu0 %v726
        %v728 = vpop.xlane.xlu0 %727
        %v729 = vmul.f32 %v725, 0.032258064
        %v730 = vmul.f32 %v728, 0.032258064
        %v731 = vrsqrt.pop %v729
        %v732 = vmul.f32 %v729, %v731
        %vm733 = vcmp.eq.f32.partialorder %v729, inf
        %v734 = vsel %vm733, %v729, %v732
        %vm735 = vcmp.eq.f32.partialorder %v729, 0.0
        %v736 = vand.u32 %v729, 2147483648
        %v737 = vsel %vm735, %v736, %v734
        %v738 = vrsqrt.pop %v730
        %v739 = vmul.f32 %v730, %v738
        %vm740 = vcmp.eq.f32.partialorder %v730, inf
        %v741 = vsel %vm740, %v730, %v739
        %vm742 = vcmp.eq.f32.partialorder %v730, 0.0
        %v743 = vand.u32 %v730, 2147483648
        %v744 = vsel %vm742, %v743, %v741
        %v745 = vadd.f32 %v737, 1e-06
        %v746 = vadd.f32 %v744, 1e-06
        %v747 = vrcp.pop %v745
        %v748 = vrcp.pop %v746
        %v749 = vmul.f32 %v719, %v747
        %v750 = vmul.f32 %v720, %v748
        %v752 = vlaneseq
        %v753 = vshrl.u32 %v752, 7
        %v754 = vsub.s32 0, %v753
        %v755 = vrot.slane %v706, %v754
        %v757 = vmul.f32 %v749, %v755
        %v758 = vmul.f32 %v750, %v755
        %v760 = vlaneseq
        %v761 = vshrl.u32 %v760, 7
        %v762 = vsub.s32 0, %v761
        %v763 = vrot.slane %v707, %v762
        %v765 = vadd.f32 %v757, %v763
        %v766 = vadd.f32 %v758, %v763
        %767 = vst.msk [vmem:[%s698] sm:$0xff] %vm708, %v765
        %768 = vst.msk [vmem:[%s698 + $0x8] sm:$0x1f] %vm712, %v766
      $region84: #{model_forward_itm.11} parent=79 // pred_fallthru
        _
      %v769 = vld [vmem:[%s698] sm:$0xff]
      %v770 = vld [vmem:[%s698 + $0x8] sm:$0x1f]
      %v771 = vld [vmem:[%s652] sm:$0x1]
      %v772 = vld [vmem:[%s655] sm:$0x1]
      %vm773 = vcmask 261120
      %v774 = vsel %vm773, %v769, 0.0
      %775 = vadd.xlane.f32.xlu0 %v774
      %v776 = vpop.xlane.xlu0 %775
      %vm777 = vcmask 258048
      %v778 = vsel %vm777, %v770, 0.0
      %779 = vadd.xlane.f32.xlu0 %v778
      %v780 = vpop.xlane.xlu0 %779
      %v781 = vrcp.pop 32.0
      %v782 = vmul.f32 %v776, %v781
      %v783 = vmul.f32 %v780, %v781
      %v784 = vsub.f32 %v769, %v782
      %v785 = vsub.f32 %v770, %v783
      %v786 = vmul.f32 %v784, %v784
      %v787 = vmul.f32 %v785, %v785
      %v788 = vsel %vm773, %v786, 0.0
      %789 = vadd.xlane.f32.xlu0 %v788
      %v790 = vpop.xlane.xlu0 %789
      %v791 = vsel %vm777, %v787, 0.0
      %792 = vadd.xlane.f32.xlu0 %v791
      %v793 = vpop.xlane.xlu0 %792
      %v794 = vmul.f32 %v790, 0.032258064
      %v795 = vmul.f32 %v793, 0.032258064
      %v796 = vrsqrt.pop %v794
      %v797 = vmul.f32 %v794, %v796
      %vm798 = vcmp.eq.f32.partialorder %v794, inf
      %v799 = vsel %vm798, %v794, %v797
      %vm800 = vcmp.eq.f32.partialorder %v794, 0.0
      %v801 = vand.u32 %v794, 2147483648
      %v802 = vsel %vm800, %v801, %v799
      %v803 = vrsqrt.pop %v795
      %v804 = vmul.f32 %v795, %v803
      %vm805 = vcmp.eq.f32.partialorder %v795, inf
      %v806 = vsel %vm805, %v795, %v804
      %vm807 = vcmp.eq.f32.partialorder %v795, 0.0
      %v808 = vand.u32 %v795, 2147483648
      %v809 = vsel %vm807, %v808, %v806
      %v810 = vadd.f32 %v802, 1e-06
      %v811 = vadd.f32 %v809, 1e-06
      %v812 = vrcp.pop %v810
      %v813 = vrcp.pop %v811
      %v814 = vmul.f32 %v784, %v812
      %v815 = vmul.f32 %v785, %v813
      %v817 = vlaneseq
      %v818 = vshrl.u32 %v817, 7
      %v819 = vsub.s32 0, %v818
      %v820 = vrot.slane %v771, %v819
      %v822 = vmul.f32 %v814, %v820
      %v823 = vmul.f32 %v815, %v820
      %v825 = vlaneseq
      %v826 = vshrl.u32 %v825, 7
      %v827 = vsub.s32 0, %v826
      %v828 = vrot.slane %v772, %v827
      %v830 = vadd.f32 %v822, %v828
      %v831 = vadd.f32 %v823, %v828
      %v832 = vpack.c.bf16 %v831, %v830
      %v833 = vld [vmem:[%s660] sm:$0xf]
      %v834 = vld [vmem:[%s660 + $0x4] sm:$0xf]
      %v835 = vld [vmem:[%s660 + $0x8] sm:$0xf]
      %v836 = vld [vmem:[%s660 + $0xc] sm:$0xf]
      %v837 = vld [vmem:[%s663] sm:$0x1]
      %v839 = vlaneseq
      %v840 = vshrl.u32 %v839, 7
      %v841 = vsub.s32 0, %v840
      %v842 = vrot.slane %v837, %v841
      %v848 = vunpack.c.l.b16 %v833
      %v849 = vunpack.c.l.b16 %v834
      %v850 = vunpack.c.l.b16 %v835
      %v851 = vunpack.c.l.b16 %v836
      %v852 = vpack.c.b16 %v849, %v848
      %v853 = vpack.c.b16 %v851, %v850
      %v857 = vsel %vm773, %v832, 0
      %859 = vmatprep.subr.bf16.mxu0 0
      %860 = vmatpush1.bf16.msra.mxu0 0
      %861 = vmatprep.subr.bf16.mxu0 0
      %862 = vmatpush1.bf16.msra.mxu0 0
      %863 = vmatprep.subr.bf16.mxu0 0
      %864 = vmatpush1.bf16.msra.mxu0 0
      %865 = vmatprep.subr.bf16.mxu0 0
      %866 = vmatpush1.bf16.msra.mxu0 0
      %867 = vmatprep.subr.bf16.mxu0 0
      %868 = vmatpush1.bf16.msra.mxu0 0
      %869 = vmatprep.subr.bf16.mxu0 0
      %870 = vmatpush1.bf16.msra.mxu0 0
      %871 = vmatprep.subr.bf16.mxu0 0
      %872 = vmatpush1.bf16.msra.mxu0 %v853
      %873 = vmatprep.subr.bf16.mxu0 0
      %874 = vmatpush1.bf16.msra.mxu0 %v852
      %875 = vmatprep.subr.bf16.mxu0 0
      %876 = vmatpush2.bf16.msra.mxu0 0
      %877 = vmatprep.subr.bf16.mxu0 0
      %878 = vmatpush2.bf16.msra.mxu0 0
      %879 = vmatprep.subr.bf16.mxu0 0
      %880 = vmatpush2.bf16.msra.mxu0 0
      %881 = vmatprep.subr.bf16.mxu0 0
      %882 = vmatpush2.bf16.msra.mxu0 0
      %883 = vmatprep.subr.bf16.mxu0 0
      %884 = vmatpush2.bf16.msra.mxu0 0
      %885 = vmatprep.subr.bf16.mxu0 0
      %886 = vmatpush2.bf16.msra.mxu0 0
      %887 = vmatprep.subr.bf16.mxu0 0
      %888 = vmatpush2.bf16.msra.mxu0 0
      %889 = vmatprep.subr.bf16.mxu0 0
      %890 = vmatpush2.bf16.msra.mxu0 0
      %891 = vmatprep.mubr.bf16.mxu0 0
      %892 = vmatmul.mubr.bf16.gmra.mxu0 %v857
      %v893 = vpop.f32.mrf.mxu0
      %v894 = vadd.f32 %v842, %v893
      %v895 = vpop.f32.mrf.mxu0
      %v896 = vpop.f32.mrf.mxu0
      %v897 = vadd.f32 %v842, %v896
      %v898 = vpop.f32.mrf.mxu0
      %899 = vdwg.mxu0
      %v900 = vpack.c.bf16 %v897, %v894
      %902 = vrot.lane.b32.xlu0 %v900, 96
      %v903 = vpop.permute.xlu0 %902
      %vm904 = vcmask 64512
      %v906 = vsel %vm904, %v900, 0
      %v909 = vsel %vm904, %v903, 0
      %911 = vmatprep.subr.bf16.mxu0 0
      %912 = vmatpush1.bf16.xpose.msra.mxu0 0
      %913 = vmatprep.subr.bf16.mxu0 0
      %914 = vmatpush1.bf16.xpose.msra.mxu0 0
      %915 = vmatprep.subr.bf16.mxu0 0
      %916 = vmatpush1.bf16.xpose.msra.mxu0 0
      %917 = vmatprep.subr.bf16.mxu0 0
      %918 = vmatpush1.bf16.xpose.msra.mxu0 0
      %919 = vmatprep.subr.bf16.mxu0 0
      %920 = vmatpush1.bf16.xpose.msra.mxu0 0
      %921 = vmatprep.subr.bf16.mxu0 0
      %922 = vmatpush1.bf16.xpose.msra.mxu0 0
      %923 = vmatprep.subr.bf16.mxu0 0
      %924 = vmatpush1.bf16.xpose.msra.mxu0 0
      %925 = vmatprep.subr.bf16.mxu0 0
      %926 = vmatpush1.bf16.xpose.msra.mxu0 %v909
      %927 = vmatprep.subr.bf16.mxu0 0
      %928 = vmatpush2.bf16.xpose.msra.mxu0 0
      %929 = vmatprep.subr.bf16.mxu0 0
      %930 = vmatpush2.bf16.xpose.msra.mxu0 0
      %931 = vmatprep.subr.bf16.mxu0 0
      %932 = vmatpush2.bf16.xpose.msra.mxu0 0
      %933 = vmatprep.subr.bf16.mxu0 0
      %934 = vmatpush2.bf16.xpose.msra.mxu0 0
      %935 = vmatprep.subr.bf16.mxu0 0
      %936 = vmatpush2.bf16.xpose.msra.mxu0 0
      %937 = vmatprep.subr.bf16.mxu0 0
      %938 = vmatpush2.bf16.xpose.msra.mxu0 0
      %939 = vmatprep.subr.bf16.mxu0 0
      %940 = vmatpush2.bf16.xpose.msra.mxu0 0
      %941 = vmatprep.subr.bf16.mxu0 0
      %942 = vmatpush2.bf16.xpose.msra.mxu0 0
      %943 = vmatprep.mubr.bf16.mxu0 0
      %944 = vmatmul.mubr.bf16.gmra.mxu0 %v906
      %v945 = vpop.f32.mrf.mxu0
      %v946 = vadd.f32 0.0, %v945
      %v947 = vpop.f32.mrf.mxu0
      %v948 = vpop.f32.mrf.mxu0
      %v949 = vadd.f32 0.0, %v948
      %v950 = vpop.f32.mrf.mxu0
      %951 = vdwg.mxu0
      %vm952 = vcmask 105472
      %v953 = vsel %vm952, %v946, -inf
      %954 = vmax.xlane.f32.xlu0 %v953
      %v955 = vpop.xlane.xlu0 %954
      %vm956 = vcmask 102400
      %v957 = vsel %vm956, %v949, -inf
      %958 = vmax.xlane.f32.xlu0 %v957
      %v959 = vpop.xlane.xlu0 %958
      %v960 = vsub.f32 %v946, %v955
      %v961 = vsub.f32 %v949, %v959
      %v962 = vmul.f32 %v960, 1.442695
      %v963 = vpow.pop %v962
      %v964 = vmul.f32 %v961, 1.442695
      %v965 = vpow.pop %v964
      %v966 = vsel %vm952, %v963, 0.0
      %967 = vadd.xlane.f32.xlu0 %v966
      %v968 = vpop.xlane.xlu0 %967
      %v969 = vsel %vm956, %v965, 0.0
      %970 = vadd.xlane.f32.xlu0 %v969
      %v971 = vpop.xlane.xlu0 %970
      %v972 = vrcp.pop %v968
      %v973 = vrcp.pop %v971
      %v974 = vmul.f32 %v963, %v972
      %v975 = vmul.f32 %v965, %v973
      %v976 = vpack.c.bf16 %v975, %v974
      %977 = vrot.lane.b32.xlu0 %v900, 64
      %v978 = vpop.permute.xlu0 %977
      %v980 = vsel %vm952, %v976, 0
      %vm982 = vcmask 1045504
      %vm983 = vcmask 1046528
      %v984 = vsel %vm982, 4294967295, 65535
      %v985 = vsel %vm983, %v984, 0
      %v987 = vand.u32 %v978, %v985
      %989 = vmatprep.subr.bf16.mxu0 0
      %990 = vmatpush1.bf16.msra.mxu0 0
      %991 = vmatprep.subr.bf16.mxu0 0
      %992 = vmatpush1.bf16.msra.mxu0 0
      %993 = vmatprep.subr.bf16.mxu0 0
      %994 = vmatpush1.bf16.msra.mxu0 0
      %995 = vmatprep.subr.bf16.mxu0 0
      %996 = vmatpush1.bf16.msra.mxu0 0
      %997 = vmatprep.subr.bf16.mxu0 0
      %998 = vmatpush1.bf16.msra.mxu0 0
      %999 = vmatprep.subr.bf16.mxu0 0
      %1000 = vmatpush1.bf16.msra.mxu0 0
      %1001 = vmatprep.subr.bf16.mxu0 0
      %1002 = vmatpush1.bf16.msra.mxu0 0
      %1003 = vmatprep.subr.bf16.mxu0 0
      %1004 = vmatpush1.bf16.msra.mxu0 %v987
      %1005 = vmatprep.subr.bf16.mxu0 0
      %1006 = vmatpush2.bf16.msra.mxu0 0
      %1007 = vmatprep.subr.bf16.mxu0 0
      %1008 = vmatpush2.bf16.msra.mxu0 0
      %1009 = vmatprep.subr.bf16.mxu0 0
      %1010 = vmatpush2.bf16.msra.mxu0 0
      %1011 = vmatprep.subr.bf16.mxu0 0
      %1012 = vmatpush2.bf16.msra.mxu0 0
      %1013 = vmatprep.subr.bf16.mxu0 0
      %1014 = vmatpush2.bf16.msra.mxu0 0
      %1015 = vmatprep.subr.bf16.mxu0 0
      %1016 = vmatpush2.bf16.msra.mxu0 0
      %1017 = vmatprep.subr.bf16.mxu0 0
      %1018 = vmatpush2.bf16.msra.mxu0 0
      %1019 = vmatprep.subr.bf16.mxu0 0
      %1020 = vmatpush2.bf16.msra.mxu0 0
      %1021 = vmatprep.mubr.bf16.mxu0 0
      %1022 = vmatmul.mubr.bf16.gmra.mxu0 %v980
      %v1023 = vpop.f32.mrf.mxu0
      %v1024 = vadd.f32 0.0, %v1023
      %v1025 = vpop.f32.mrf.mxu0
      %v1026 = vpop.f32.mrf.mxu0
      %v1027 = vadd.f32 0.0, %v1026
      %v1028 = vpop.f32.mrf.mxu0
      %1029 = vdwg.mxu0
      %1030 = vst.msk [vmem:[#allocation2] sm:$0xff] %vm904, %v1024
      %vm1031 = vcmask 61440
      %1032 = vst.msk [vmem:[#allocation2 + $0x8] sm:$0x1f] %vm1031, %v1027
      %1033 = vrot.lane.b32.xlu0 %v900, 120
      %v1034 = vpop.permute.xlu0 %1033
      %1035 = vrot.lane.b32.xlu0 %v900, 88
      %v1036 = vpop.permute.xlu0 %1035
      %v1038 = vsel %vm904, %v1034, 0
      %v1041 = vsel %vm904, %v1036, 0
      %1043 = vmatprep.subr.bf16.mxu0 0
      %1044 = vmatpush1.bf16.xpose.msra.mxu0 0
      %1045 = vmatprep.subr.bf16.mxu0 0
      %1046 = vmatpush1.bf16.xpose.msra.mxu0 0
      %1047 = vmatprep.subr.bf16.mxu0 0
      %1048 = vmatpush1.bf16.xpose.msra.mxu0 0
      %1049 = vmatprep.subr.bf16.mxu0 0
      %1050 = vmatpush1.bf16.xpose.msra.mxu0 0
      %1051 = vmatprep.subr.bf16.mxu0 0
      %1052 = vmatpush1.bf16.xpose.msra.mxu0 0
      %1053 = vmatprep.subr.bf16.mxu0 0
      %1054 = vmatpush1.bf16.xpose.msra.mxu0 0
      %1055 = vmatprep.subr.bf16.mxu0 0
      %1056 = vmatpush1.bf16.xpose.msra.mxu0 0
      %1057 = vmatprep.subr.bf16.mxu0 0
      %1058 = vmatpush1.bf16.xpose.msra.mxu0 %v1041
      %1059 = vmatprep.subr.bf16.mxu0 0
      %1060 = vmatpush2.bf16.xpose.msra.mxu0 0
      %1061 = vmatprep.subr.bf16.mxu0 0
      %1062 = vmatpush2.bf16.xpose.msra.mxu0 0
      %1063 = vmatprep.subr.bf16.mxu0 0
      %1064 = vmatpush2.bf16.xpose.msra.mxu0 0
      %1065 = vmatprep.subr.bf16.mxu0 0
      %1066 = vmatpush2.bf16.xpose.msra.mxu0 0
      %1067 = vmatprep.subr.bf16.mxu0 0
      %1068 = vmatpush2.bf16.xpose.msra.mxu0 0
      %1069 = vmatprep.subr.bf16.mxu0 0
      %1070 = vmatpush2.bf16.xpose.msra.mxu0 0
      %1071 = vmatprep.subr.bf16.mxu0 0
      %1072 = vmatpush2.bf16.xpose.msra.mxu0 0
      %1073 = vmatprep.subr.bf16.mxu0 0
      %1074 = vmatpush2.bf16.xpose.msra.mxu0 0
      %1075 = vmatprep.mubr.bf16.mxu0 0
      %1076 = vmatmul.mubr.bf16.gmra.mxu0 %v1038
      %v1077 = vpop.f32.mrf.mxu0
      %v1078 = vadd.f32 0.0, %v1077
      %v1079 = vpop.f32.mrf.mxu0
      %v1080 = vpop.f32.mrf.mxu0
      %v1081 = vadd.f32 0.0, %v1080
      %v1082 = vpop.f32.mrf.mxu0
      %1083 = vdwg.mxu0
      %v1084 = vsel %vm952, %v1078, -inf
      %1085 = vmax.xlane.f32.xlu0 %v1084
      %v1086 = vpop.xlane.xlu0 %1085
      %v1087 = vsel %vm956, %v1081, -inf
      %1088 = vmax.xlane.f32.xlu0 %v1087
      %v1089 = vpop.xlane.xlu0 %1088
      %v1090 = vsub.f32 %v1078, %v1086
      %v1091 = vsub.f32 %v1081, %v1089
      %v1092 = vmul.f32 %v1090, 1.442695
      %v1093 = vpow.pop %v1092
      %v1094 = vmul.f32 %v1091, 1.442695
      %v1095 = vpow.pop %v1094
      %v1096 = vsel %vm952, %v1093, 0.0
      %1097 = vadd.xlane.f32.xlu0 %v1096
      %v1098 = vpop.xlane.xlu0 %1097
      %v1099 = vsel %vm956, %v1095, 0.0
      %1100 = vadd.xlane.f32.xlu0 %v1099
      %v1101 = vpop.xlane.xlu0 %1100
      %v1102 = vrcp.pop %v1098
      %v1103 = vrcp.pop %v1101
      %v1104 = vmul.f32 %v1093, %v1102
      %v1105 = vmul.f32 %v1095, %v1103
      %v1106 = vpack.c.bf16 %v1105, %v1104
      %1107 = vrot.lane.b32.xlu0 %v900, 56
      %v1108 = vpop.permute.xlu0 %1107
      %v1110 = vsel %vm952, %v1106, 0
      %v1113 = vand.u32 %v1108, %v985
      %1115 = vmatprep.subr.bf16.mxu0 0
      %1116 = vmatpush1.bf16.msra.mxu0 0
      %1117 = vmatprep.subr.bf16.mxu0 0
      %1118 = vmatpush1.bf16.msra.mxu0 0
      %1119 = vmatprep.subr.bf16.mxu0 0
      %1120 = vmatpush1.bf16.msra.mxu0 0
      %1121 = vmatprep.subr.bf16.mxu0 0
      %1122 = vmatpush1.bf16.msra.mxu0 0
      %1123 = vmatprep.subr.bf16.mxu0 0
      %1124 = vmatpush1.bf16.msra.mxu0 0
      %1125 = vmatprep.subr.bf16.mxu0 0
      %1126 = vmatpush1.bf16.msra.mxu0 0
      %1127 = vmatprep.subr.bf16.mxu0 0
      %1128 = vmatpush1.bf16.msra.mxu0 0
      %1129 = vmatprep.subr.bf16.mxu0 0
      %1130 = vmatpush1.bf16.msra.mxu0 %v1113
      %1131 = vmatprep.subr.bf16.mxu0 0
      %1132 = vmatpush2.bf16.msra.mxu0 0
      %1133 = vmatprep.subr.bf16.mxu0 0
      %1134 = vmatpush2.bf16.msra.mxu0 0
      %1135 = vmatprep.subr.bf16.mxu0 0
      %1136 = vmatpush2.bf16.msra.mxu0 0
      %1137 = vmatprep.subr.bf16.mxu0 0
      %1138 = vmatpush2.bf16.msra.mxu0 0
      %1139 = vmatprep.subr.bf16.mxu0 0
      %1140 = vmatpush2.bf16.msra.mxu0 0
      %1141 = vmatprep.subr.bf16.mxu0 0
      %1142 = vmatpush2.bf16.msra.mxu0 0
      %1143 = vmatprep.subr.bf16.mxu0 0
      %1144 = vmatpush2.bf16.msra.mxu0 0
      %1145 = vmatprep.subr.bf16.mxu0 0
      %1146 = vmatpush2.bf16.msra.mxu0 0
      %1147 = vmatprep.mubr.bf16.mxu0 0
      %1148 = vmatmul.mubr.bf16.gmra.mxu0 %v1110
      %v1149 = vpop.f32.mrf.mxu0
      %v1150 = vadd.f32 0.0, %v1149
      %v1151 = vpop.f32.mrf.mxu0
      %v1152 = vpop.f32.mrf.mxu0
      %v1153 = vadd.f32 0.0, %v1152
      %v1154 = vpop.f32.mrf.mxu0
      %1155 = vdwg.mxu0
      %1158 = vrot.lane.b32.xlu0 %v1150, 8
      %v1159 = vpop.permute.xlu0 %1158
      %1160 = vrot.lane.b32.xlu0 %v1153, 8
      %v1161 = vpop.permute.xlu0 %1160
      %vm1164 = vcmask 130112
      %1165 = vst.msk [vmem:[#allocation2] sm:$0xff] %vm1164, %v1159
      %vm1166 = vcmask 127040
      %1167 = vst.msk [vmem:[#allocation2 + $0x8] sm:$0x1f] %vm1166, %v1161
      %1168 = vrot.lane.b32.xlu0 %v900, 112
      %v1169 = vpop.permute.xlu0 %1168
      %1170 = vrot.lane.b32.xlu0 %v900, 80
      %v1171 = vpop.permute.xlu0 %1170
      %v1173 = vsel %vm904, %v1169, 0
      %v1176 = vsel %vm904, %v1171, 0
      %1178 = vmatprep.subr.bf16.mxu0 0
      %1179 = vmatpush1.bf16.xpose.msra.mxu0 0
      %1180 = vmatprep.subr.bf16.mxu0 0
      %1181 = vmatpush1.bf16.xpose.msra.mxu0 0
      %1182 = vmatprep.subr.bf16.mxu0 0
      %1183 = vmatpush1.bf16.xpose.msra.mxu0 0
      %1184 = vmatprep.subr.bf16.mxu0 0
      %1185 = vmatpush1.bf16.xpose.msra.mxu0 0
      %1186 = vmatprep.subr.bf16.mxu0 0
      %1187 = vmatpush1.bf16.xpose.msra.mxu0 0
      %1188 = vmatprep.subr.bf16.mxu0 0
      %1189 = vmatpush1.bf16.xpose.msra.mxu0 0
      %1190 = vmatprep.subr.bf16.mxu0 0
      %1191 = vmatpush1.bf16.xpose.msra.mxu0 0
      %1192 = vmatprep.subr.bf16.mxu0 0
      %1193 = vmatpush1.bf16.xpose.msra.mxu0 %v1176
      %1194 = vmatprep.subr.bf16.mxu0 0
      %1195 = vmatpush2.bf16.xpose.msra.mxu0 0
      %1196 = vmatprep.subr.bf16.mxu0 0
      %1197 = vmatpush2.bf16.xpose.msra.mxu0 0
      %1198 = vmatprep.subr.bf16.mxu0 0
      %1199 = vmatpush2.bf16.xpose.msra.mxu0 0
      %1200 = vmatprep.subr.bf16.mxu0 0
      %1201 = vmatpush2.bf16.xpose.msra.mxu0 0
      %1202 = vmatprep.subr.bf16.mxu0 0
      %1203 = vmatpush2.bf16.xpose.msra.mxu0 0
      %1204 = vmatprep.subr.bf16.mxu0 0
      %1205 = vmatpush2.bf16.xpose.msra.mxu0 0
      %1206 = vmatprep.subr.bf16.mxu0 0
      %1207 = vmatpush2.bf16.xpose.msra.mxu0 0
      %1208 = vmatprep.subr.bf16.mxu0 0
      %1209 = vmatpush2.bf16.xpose.msra.mxu0 0
      %1210 = vmatprep.mubr.bf16.mxu0 0
      %1211 = vmatmul.mubr.bf16.gmra.mxu0 %v1173
      %v1212 = vpop.f32.mrf.mxu0
      %v1213 = vadd.f32 0.0, %v1212
      %v1214 = vpop.f32.mrf.mxu0
      %v1215 = vpop.f32.mrf.mxu0
      %v1216 = vadd.f32 0.0, %v1215
      %v1217 = vpop.f32.mrf.mxu0
      %1218 = vdwg.mxu0
      %v1219 = vsel %vm952, %v1213, -inf
      %1220 = vmax.xlane.f32.xlu0 %v1219
      %v1221 = vpop.xlane.xlu0 %1220
      %v1222 = vsel %vm956, %v1216, -inf
      %1223 = vmax.xlane.f32.xlu0 %v1222
      %v1224 = vpop.xlane.xlu0 %1223
      %v1225 = vsub.f32 %v1213, %v1221
      %v1226 = vsub.f32 %v1216, %v1224
      %v1227 = vmul.f32 %v1225, 1.442695
      %v1228 = vpow.pop %v1227
      %v1229 = vmul.f32 %v1226, 1.442695
      %v1230 = vpow.pop %v1229
      %v1231 = vsel %vm952, %v1228, 0.0
      %1232 = vadd.xlane.f32.xlu0 %v1231
      %v1233 = vpop.xlane.xlu0 %1232
      %v1234 = vsel %vm956, %v1230, 0.0
      %1235 = vadd.xlane.f32.xlu0 %v1234
      %v1236 = vpop.xlane.xlu0 %1235
      %v1237 = vrcp.pop %v1233
      %v1238 = vrcp.pop %v1236
      %v1239 = vmul.f32 %v1228, %v1237
      %v1240 = vmul.f32 %v1230, %v1238
      %v1241 = vpack.c.bf16 %v1240, %v1239
      %1242 = vrot.lane.b32.xlu0 %v900, 48
      %v1243 = vpop.permute.xlu0 %1242
      %v1245 = vsel %vm952, %v1241, 0
      %v1248 = vand.u32 %v1243, %v985
      %1250 = vmatprep.subr.bf16.mxu0 0
      %1251 = vmatpush1.bf16.msra.mxu0 0
      %1252 = vmatprep.subr.bf16.mxu0 0
      %1253 = vmatpush1.bf16.msra.mxu0 0
      %1254 = vmatprep.subr.bf16.mxu0 0
      %1255 = vmatpush1.bf16.msra.mxu0 0
      %1256 = vmatprep.subr.bf16.mxu0 0
      %1257 = vmatpush1.bf16.msra.mxu0 0
      %1258 = vmatprep.subr.bf16.mxu0 0
      %1259 = vmatpush1.bf16.msra.mxu0 0
      %1260 = vmatprep.subr.bf16.mxu0 0
      %1261 = vmatpush1.bf16.msra.mxu0 0
      %1262 = vmatprep.subr.bf16.mxu0 0
      %1263 = vmatpush1.bf16.msra.mxu0 0
      %1264 = vmatprep.subr.bf16.mxu0 0
      %1265 = vmatpush1.bf16.msra.mxu0 %v1248
      %1266 = vmatprep.subr.bf16.mxu0 0
      %1267 = vmatpush2.bf16.msra.mxu0 0
      %1268 = vmatprep.subr.bf16.mxu0 0
      %1269 = vmatpush2.bf16.msra.mxu0 0
      %1270 = vmatprep.subr.bf16.mxu0 0
      %1271 = vmatpush2.bf16.msra.mxu0 0
      %1272 = vmatprep.subr.bf16.mxu0 0
      %1273 = vmatpush2.bf16.msra.mxu0 0
      %1274 = vmatprep.subr.bf16.mxu0 0
      %1275 = vmatpush2.bf16.msra.mxu0 0
      %1276 = vmatprep.subr.bf16.mxu0 0
      %1277 = vmatpush2.bf16.msra.mxu0 0
      %1278 = vmatprep.subr.bf16.mxu0 0
      %1279 = vmatpush2.bf16.msra.mxu0 0
      %1280 = vmatprep.subr.bf16.mxu0 0
      %1281 = vmatpush2.bf16.msra.mxu0 0
      %1282 = vmatprep.mubr.bf16.mxu0 0
      %1283 = vmatmul.mubr.bf16.gmra.mxu0 %v1245
      %v1284 = vpop.f32.mrf.mxu0
      %v1285 = vadd.f32 0.0, %v1284
      %v1286 = vpop.f32.mrf.mxu0
      %v1287 = vpop.f32.mrf.mxu0
      %v1288 = vadd.f32 0.0, %v1287
      %v1289 = vpop.f32.mrf.mxu0
      %1290 = vdwg.mxu0
      %1293 = vrot.lane.b32.xlu0 %v1285, 16
      %v1294 = vpop.permute.xlu0 %1293
      %1295 = vrot.lane.b32.xlu0 %v1288, 16
      %v1296 = vpop.permute.xlu0 %1295
      %vm1299 = vcmask 195712
      %1300 = vst.msk [vmem:[#allocation2] sm:$0xff] %vm1299, %v1294
      %vm1301 = vcmask 192640
      %1302 = vst.msk [vmem:[#allocation2 + $0x8] sm:$0x1f] %vm1301, %v1296
      %1303 = vrot.lane.b32.xlu0 %v900, 104
      %v1304 = vpop.permute.xlu0 %1303
      %1305 = vrot.lane.b32.xlu0 %v900, 72
      %v1306 = vpop.permute.xlu0 %1305
      %v1308 = vsel %vm904, %v1304, 0
      %v1311 = vsel %vm904, %v1306, 0
      %1313 = vmatprep.subr.bf16.mxu0 0
      %1314 = vmatpush1.bf16.xpose.msra.mxu0 0
      %1315 = vmatprep.subr.bf16.mxu0 0
      %1316 = vmatpush1.bf16.xpose.msra.mxu0 0
      %1317 = vmatprep.subr.bf16.mxu0 0
      %1318 = vmatpush1.bf16.xpose.msra.mxu0 0
      %1319 = vmatprep.subr.bf16.mxu0 0
      %1320 = vmatpush1.bf16.xpose.msra.mxu0 0
      %1321 = vmatprep.subr.bf16.mxu0 0
      %1322 = vmatpush1.bf16.xpose.msra.mxu0 0
      %1323 = vmatprep.subr.bf16.mxu0 0
      %1324 = vmatpush1.bf16.xpose.msra.mxu0 0
      %1325 = vmatprep.subr.bf16.mxu0 0
      %1326 = vmatpush1.bf16.xpose.msra.mxu0 0
      %1327 = vmatprep.subr.bf16.mxu0 0
      %1328 = vmatpush1.bf16.xpose.msra.mxu0 %v1311
      %1329 = vmatprep.subr.bf16.mxu0 0
      %1330 = vmatpush2.bf16.xpose.msra.mxu0 0
      %1331 = vmatprep.subr.bf16.mxu0 0
      %1332 = vmatpush2.bf16.xpose.msra.mxu0 0
      %1333 = vmatprep.subr.bf16.mxu0 0
      %1334 = vmatpush2.bf16.xpose.msra.mxu0 0
      %1335 = vmatprep.subr.bf16.mxu0 0
      %1336 = vmatpush2.bf16.xpose.msra.mxu0 0
      %1337 = vmatprep.subr.bf16.mxu0 0
      %1338 = vmatpush2.bf16.xpose.msra.mxu0 0
      %1339 = vmatprep.subr.bf16.mxu0 0
      %1340 = vmatpush2.bf16.xpose.msra.mxu0 0
      %1341 = vmatprep.subr.bf16.mxu0 0
      %1342 = vmatpush2.bf16.xpose.msra.mxu0 0
      %1343 = vmatprep.subr.bf16.mxu0 0
      %1344 = vmatpush2.bf16.xpose.msra.mxu0 0
      %1345 = vmatprep.mubr.bf16.mxu0 0
      %1346 = vmatmul.mubr.bf16.gmra.mxu0 %v1308
      %v1347 = vpop.f32.mrf.mxu0
      %v1348 = vadd.f32 0.0, %v1347
      %v1349 = vpop.f32.mrf.mxu0
      %v1350 = vpop.f32.mrf.mxu0
      %v1351 = vadd.f32 0.0, %v1350
      %v1352 = vpop.f32.mrf.mxu0
      %1353 = vdwg.mxu0
      %v1354 = vsel %vm952, %v1348, -inf
      %1355 = vmax.xlane.f32.xlu0 %v1354
      %v1356 = vpop.xlane.xlu0 %1355
      %v1357 = vsel %vm956, %v1351, -inf
      %1358 = vmax.xlane.f32.xlu0 %v1357
      %v1359 = vpop.xlane.xlu0 %1358
      %v1360 = vsub.f32 %v1348, %v1356
      %v1361 = vsub.f32 %v1351, %v1359
      %v1362 = vmul.f32 %v1360, 1.442695
      %v1363 = vpow.pop %v1362
      %v1364 = vmul.f32 %v1361, 1.442695
      %v1365 = vpow.pop %v1364
      %v1366 = vsel %vm952, %v1363, 0.0
      %1367 = vadd.xlane.f32.xlu0 %v1366
      %v1368 = vpop.xlane.xlu0 %1367
      %v1369 = vsel %vm956, %v1365, 0.0
      %1370 = vadd.xlane.f32.xlu0 %v1369
      %v1371 = vpop.xlane.xlu0 %1370
      %v1372 = vrcp.pop %v1368
      %v1373 = vrcp.pop %v1371
      %v1374 = vmul.f32 %v1363, %v1372
      %v1375 = vmul.f32 %v1365, %v1373
      %v1376 = vpack.c.bf16 %v1375, %v1374
      %1377 = vrot.lane.b32.xlu0 %v900, 40
      %v1378 = vpop.permute.xlu0 %1377
      %v1380 = vsel %vm952, %v1376, 0
      %v1383 = vand.u32 %v1378, %v985
      %1385 = vmatprep.subr.bf16.mxu0 0
      %1386 = vmatpush1.bf16.msra.mxu0 0
      %1387 = vmatprep.subr.bf16.mxu0 0
      %1388 = vmatpush1.bf16.msra.mxu0 0
      %1389 = vmatprep.subr.bf16.mxu0 0
      %1390 = vmatpush1.bf16.msra.mxu0 0
      %1391 = vmatprep.subr.bf16.mxu0 0
      %1392 = vmatpush1.bf16.msra.mxu0 0
      %1393 = vmatprep.subr.bf16.mxu0 0
      %1394 = vmatpush1.bf16.msra.mxu0 0
      %1395 = vmatprep.subr.bf16.mxu0 0
      %1396 = vmatpush1.bf16.msra.mxu0 0
      %1397 = vmatprep.subr.bf16.mxu0 0
      %1398 = vmatpush1.bf16.msra.mxu0 0
      %1399 = vmatprep.subr.bf16.mxu0 0
      %1400 = vmatpush1.bf16.msra.mxu0 %v1383
      %1401 = vmatprep.subr.bf16.mxu0 0
      %1402 = vmatpush2.bf16.msra.mxu0 0
      %1403 = vmatprep.subr.bf16.mxu0 0
      %1404 = vmatpush2.bf16.msra.mxu0 0
      %1405 = vmatprep.subr.bf16.mxu0 0
      %1406 = vmatpush2.bf16.msra.mxu0 0
      %1407 = vmatprep.subr.bf16.mxu0 0
      %1408 = vmatpush2.bf16.msra.mxu0 0
      %1409 = vmatprep.subr.bf16.mxu0 0
      %1410 = vmatpush2.bf16.msra.mxu0 0
      %1411 = vmatprep.subr.bf16.mxu0 0
      %1412 = vmatpush2.bf16.msra.mxu0 0
      %1413 = vmatprep.subr.bf16.mxu0 0
      %1414 = vmatpush2.bf16.msra.mxu0 0
      %1415 = vmatprep.subr.bf16.mxu0 0
      %1416 = vmatpush2.bf16.msra.mxu0 0
      %1417 = vmatprep.mubr.bf16.mxu0 0
      %1418 = vmatmul.mubr.bf16.gmra.mxu0 %v1380
      %v1419 = vpop.f32.mrf.mxu0
      %v1420 = vadd.f32 0.0, %v1419
      %v1421 = vpop.f32.mrf.mxu0
      %v1422 = vpop.f32.mrf.mxu0
      %v1423 = vadd.f32 0.0, %v1422
      %v1424 = vpop.f32.mrf.mxu0
      %1425 = vdwg.mxu0
      %1428 = vrot.lane.b32.xlu0 %v1420, 24
      %v1429 = vpop.permute.xlu0 %1428
      %1430 = vrot.lane.b32.xlu0 %v1423, 24
      %v1431 = vpop.permute.xlu0 %1430
      %vm1434 = vcmask 261312
      %1435 = vst.msk [vmem:[#allocation2] sm:$0xff] %vm1434, %v1429
      %vm1436 = vcmask 258240
      %1437 = vst.msk [vmem:[#allocation2 + $0x8] sm:$0x1f] %vm1436, %v1431
      %v1438 = vld [vmem:[#allocation2] sm:$0xff]
      %v1439 = vld [vmem:[#allocation2 + $0x8] sm:$0x1f]
      %v1440 = vpack.c.bf16 %v1439, %v1438
      %v1441 = vld [vmem:[%s668] sm:$0xf]
      %v1442 = vld [vmem:[%s668 + $0x4] sm:$0xf]
      %v1443 = vld [vmem:[%s668 + $0x8] sm:$0xf]
      %v1444 = vld [vmem:[%s668 + $0xc] sm:$0xf]
      %v1445 = vld [vmem:[%s671] sm:$0x1]
      %v1447 = vlaneseq
      %v1448 = vshrl.u32 %v1447, 7
      %v1449 = vsub.s32 0, %v1448
      %v1450 = vrot.slane %v1445, %v1449
      %v1456 = vunpack.c.l.b16 %v1441
      %v1457 = vunpack.c.l.b16 %v1442
      %v1458 = vunpack.c.l.b16 %v1443
      %v1459 = vunpack.c.l.b16 %v1444
      %v1460 = vpack.c.b16 %v1457, %v1456
      %v1461 = vpack.c.b16 %v1459, %v1458
      %v1465 = vsel %vm773, %v1440, 0
      %1467 = vmatprep.subr.bf16.mxu0 0
      %1468 = vmatpush1.bf16.msra.mxu0 0
      %1469 = vmatprep.subr.bf16.mxu0 0
      %1470 = vmatpush1.bf16.msra.mxu0 0
      %1471 = vmatprep.subr.bf16.mxu0 0
      %1472 = vmatpush1.bf16.msra.mxu0 0
      %1473 = vmatprep.subr.bf16.mxu0 0
      %1474 = vmatpush1.bf16.msra.mxu0 0
      %1475 = vmatprep.subr.bf16.mxu0 0
      %1476 = vmatpush1.bf16.msra.mxu0 0
      %1477 = vmatprep.subr.bf16.mxu0 0
      %1478 = vmatpush1.bf16.msra.mxu0 0
      %1479 = vmatprep.subr.bf16.mxu0 0
      %1480 = vmatpush1.bf16.msra.mxu0 %v1461
      %1481 = vmatprep.subr.bf16.mxu0 0
      %1482 = vmatpush1.bf16.msra.mxu0 %v1460
      %1483 = vmatprep.subr.bf16.mxu0 0
      %1484 = vmatpush2.bf16.msra.mxu0 0
      %1485 = vmatprep.subr.bf16.mxu0 0
      %1486 = vmatpush2.bf16.msra.mxu0 0
      %1487 = vmatprep.subr.bf16.mxu0 0
      %1488 = vmatpush2.bf16.msra.mxu0 0
      %1489 = vmatprep.subr.bf16.mxu0 0
      %1490 = vmatpush2.bf16.msra.mxu0 0
      %1491 = vmatprep.subr.bf16.mxu0 0
      %1492 = vmatpush2.bf16.msra.mxu0 0
      %1493 = vmatprep.subr.bf16.mxu0 0
      %1494 = vmatpush2.bf16.msra.mxu0 0
      %1495 = vmatprep.subr.bf16.mxu0 0
      %1496 = vmatpush2.bf16.msra.mxu0 0
      %1497 = vmatprep.subr.bf16.mxu0 0
      %1498 = vmatpush2.bf16.msra.mxu0 0
      %1499 = vmatprep.mubr.bf16.mxu0 0
      %1500 = vmatmul.mubr.bf16.gmra.mxu0 %v1465
      %v1501 = vpop.f32.mrf.mxu0
      %v1502 = vadd.f32 %v1450, %v1501
      %v1503 = vpop.f32.mrf.mxu0
      %v1504 = vpop.f32.mrf.mxu0
      %v1505 = vadd.f32 %v1450, %v1504
      %v1506 = vpop.f32.mrf.mxu0
      %1507 = vdwg.mxu0
      %v1508 = vadd.f32 %v769, %v1502
      %v1509 = vadd.f32 %v770, %v1505
      %v1510 = vld [vmem:[%s674] sm:$0x1]
      %v1511 = vld [vmem:[%s677] sm:$0x1]
      %v1512 = vsel %vm773, %v1508, 0.0
      %1513 = vadd.xlane.f32.xlu0 %v1512
      %v1514 = vpop.xlane.xlu0 %1513
      %v1515 = vsel %vm777, %v1509, 0.0
      %1516 = vadd.xlane.f32.xlu0 %v1515
      %v1517 = vpop.xlane.xlu0 %1516
      %v1518 = vmul.f32 %v1514, %v781
      %v1519 = vmul.f32 %v1517, %v781
      %v1520 = vsub.f32 %v1508, %v1518
      %v1521 = vsub.f32 %v1509, %v1519
      %v1522 = vmul.f32 %v1520, %v1520
      %v1523 = vmul.f32 %v1521, %v1521
      %v1524 = vsel %vm773, %v1522, 0.0
      %1525 = vadd.xlane.f32.xlu0 %v1524
      %v1526 = vpop.xlane.xlu0 %1525
      %v1527 = vsel %vm777, %v1523, 0.0
      %1528 = vadd.xlane.f32.xlu0 %v1527
      %v1529 = vpop.xlane.xlu0 %1528
      %v1530 = vmul.f32 %v1526, 0.032258064
      %v1531 = vmul.f32 %v1529, 0.032258064
      %v1532 = vrsqrt.pop %v1530
      %v1533 = vmul.f32 %v1530, %v1532
      %vm1534 = vcmp.eq.f32.partialorder %v1530, inf
      %v1535 = vsel %vm1534, %v1530, %v1533
      %vm1536 = vcmp.eq.f32.partialorder %v1530, 0.0
      %v1537 = vand.u32 %v1530, 2147483648
      %v1538 = vsel %vm1536, %v1537, %v1535
      %v1539 = vrsqrt.pop %v1531
      %v1540 = vmul.f32 %v1531, %v1539
      %vm1541 = vcmp.eq.f32.partialorder %v1531, inf
      %v1542 = vsel %vm1541, %v1531, %v1540
      %vm1543 = vcmp.eq.f32.partialorder %v1531, 0.0
      %v1544 = vand.u32 %v1531, 2147483648
      %v1545 = vsel %vm1543, %v1544, %v1542
      %v1546 = vadd.f32 %v1538, 1e-06
      %v1547 = vadd.f32 %v1545, 1e-06
      %v1548 = vrcp.pop %v1546
      %v1549 = vrcp.pop %v1547
      %v1550 = vmul.f32 %v1520, %v1548
      %v1551 = vmul.f32 %v1521, %v1549
      %v1553 = vlaneseq
      %v1554 = vshrl.u32 %v1553, 7
      %v1555 = vsub.s32 0, %v1554
      %v1556 = vrot.slane %v1510, %v1555
      %v1558 = vmul.f32 %v1550, %v1556
      %v1559 = vmul.f32 %v1551, %v1556
      %v1561 = vlaneseq
      %v1562 = vshrl.u32 %v1561, 7
      %v1563 = vsub.s32 0, %v1562
      %v1564 = vrot.slane %v1511, %v1563
      %v1566 = vadd.f32 %v1558, %v1564
      %v1567 = vadd.f32 %v1559, %v1564
      %v1568 = vpack.c.bf16 %v1567, %v1566
      %v1569 = vld [vmem:[%s682] sm:$0xf]
      %v1570 = vld [vmem:[%s682 + $0x4] sm:$0xf]
      %v1571 = vld [vmem:[%s682 + $0x8] sm:$0xf]
      %v1572 = vld [vmem:[%s682 + $0xc] sm:$0xf]
      %v1573 = vld [vmem:[%s685] sm:$0x1]
      %v1575 = vlaneseq
      %v1576 = vshrl.u32 %v1575, 7
      %v1577 = vsub.s32 0, %v1576
      %v1578 = vrot.slane %v1573, %v1577
      %v1584 = vunpack.c.l.b16 %v1569
      %v1585 = vunpack.c.l.b16 %v1570
      %v1586 = vunpack.c.l.b16 %v1571
      %v1587 = vunpack.c.l.b16 %v1572
      %v1588 = vpack.c.b16 %v1585, %v1584
      %v1589 = vpack.c.b16 %v1587, %v1586
      %v1593 = vsel %vm773, %v1568, 0
      %1595 = vmatprep.subr.bf16.mxu0 0
      %1596 = vmatpush1.bf16.msra.mxu0 0
      %1597 = vmatprep.subr.bf16.mxu0 0
      %1598 = vmatpush1.bf16.msra.mxu0 0
      %1599 = vmatprep.subr.bf16.mxu0 0
      %1600 = vmatpush1.bf16.msra.mxu0 0
      %1601 = vmatprep.subr.bf16.mxu0 0
      %1602 = vmatpush1.bf16.msra.mxu0 0
      %1603 = vmatprep.subr.bf16.mxu0 0
      %1604 = vmatpush1.bf16.msra.mxu0 0
      %1605 = vmatprep.subr.bf16.mxu0 0
      %1606 = vmatpush1.bf16.msra.mxu0 0
      %1607 = vmatprep.subr.bf16.mxu0 0
      %1608 = vmatpush1.bf16.msra.mxu0 %v1589
      %1609 = vmatprep.subr.bf16.mxu0 0
      %1610 = vmatpush1.bf16.msra.mxu0 %v1588
      %1611 = vmatprep.subr.bf16.mxu0 0
      %1612 = vmatpush2.bf16.msra.mxu0 0
      %1613 = vmatprep.subr.bf16.mxu0 0
      %1614 = vmatpush2.bf16.msra.mxu0 0
      %1615 = vmatprep.subr.bf16.mxu0 0
      %1616 = vmatpush2.bf16.msra.mxu0 0
      %1617 = vmatprep.subr.bf16.mxu0 0
      %1618 = vmatpush2.bf16.msra.mxu0 0
      %1619 = vmatprep.subr.bf16.mxu0 0
      %1620 = vmatpush2.bf16.msra.mxu0 0
      %1621 = vmatprep.subr.bf16.mxu0 0
      %1622 = vmatpush2.bf16.msra.mxu0 0
      %1623 = vmatprep.subr.bf16.mxu0 0
      %1624 = vmatpush2.bf16.msra.mxu0 0
      %1625 = vmatprep.subr.bf16.mxu0 0
      %1626 = vmatpush2.bf16.msra.mxu0 0
      %1627 = vmatprep.mubr.bf16.mxu0 0
      %1628 = vmatmul.mubr.bf16.gmra.mxu0 %v1593
      %v1629 = vpop.f32.mrf.mxu0
      %v1630 = vadd.f32 %v1578, %v1629
      %v1631 = vpop.f32.mrf.mxu0
      %v1632 = vpop.f32.mrf.mxu0
      %v1633 = vadd.f32 %v1578, %v1632
      %v1634 = vpop.f32.mrf.mxu0
      %1635 = vdwg.mxu0
      %v1636 = vmax.f32 %v1630, 0.0
      %v1637 = vmax.f32 %v1633, 0.0
      %v1638 = vpack.c.bf16 %v1637, %v1636
      %v1639 = vld [vmem:[%s690] sm:$0xf]
      %v1640 = vld [vmem:[%s690 + $0x4] sm:$0xf]
      %v1641 = vld [vmem:[%s690 + $0x8] sm:$0xf]
      %v1642 = vld [vmem:[%s690 + $0xc] sm:$0xf]
      %v1643 = vld [vmem:[%s690 + $0x10] sm:$0xf]
      %v1644 = vld [vmem:[%s690 + $0x14] sm:$0xf]
      %v1645 = vld [vmem:[%s690 + $0x18] sm:$0xf]
      %v1646 = vld [vmem:[%s690 + $0x1c] sm:$0xf]
      %v1647 = vld [vmem:[%s693] sm:$0x1]
      %v1649 = vlaneseq
      %v1650 = vshrl.u32 %v1649, 7
      %v1651 = vsub.s32 0, %v1650
      %v1652 = vrot.slane %v1647, %v1651
      %v1662 = vunpack.c.l.b16 %v1639
      %v1663 = vunpack.c.l.b16 %v1640
      %v1664 = vunpack.c.l.b16 %v1641
      %v1665 = vunpack.c.l.b16 %v1642
      %v1666 = vunpack.c.l.b16 %v1643
      %v1667 = vunpack.c.l.b16 %v1644
      %v1668 = vunpack.c.l.b16 %v1645
      %v1669 = vunpack.c.l.b16 %v1646
      %v1670 = vpack.c.b16 %v1663, %v1662
      %v1671 = vpack.c.b16 %v1665, %v1664
      %v1672 = vpack.c.b16 %v1667, %v1666
      %v1673 = vpack.c.b16 %v1669, %v1668
      %vm1678 = vcmask 523264
      %v1680 = vsel %vm1678, %v1638, 0
      %1682 = vmatprep.subr.bf16.mxu0 0
      %1683 = vmatpush1.bf16.msra.mxu0 0
      %1684 = vmatprep.subr.bf16.mxu0 0
      %1685 = vmatpush1.bf16.msra.mxu0 0
      %1686 = vmatprep.subr.bf16.mxu0 0
      %1687 = vmatpush1.bf16.msra.mxu0 0
      %1688 = vmatprep.subr.bf16.mxu0 0
      %1689 = vmatpush1.bf16.msra.mxu0 0
      %1690 = vmatprep.subr.bf16.mxu0 0
      %1691 = vmatpush1.bf16.msra.mxu0 %v1673
      %1692 = vmatprep.subr.bf16.mxu0 0
      %1693 = vmatpush1.bf16.msra.mxu0 %v1672
      %1694 = vmatprep.subr.bf16.mxu0 0
      %1695 = vmatpush1.bf16.msra.mxu0 %v1671
      %1696 = vmatprep.subr.bf16.mxu0 0
      %1697 = vmatpush1.bf16.msra.mxu0 %v1670
      %1698 = vmatprep.subr.bf16.mxu0 0
      %1699 = vmatpush2.bf16.msra.mxu0 0
      %1700 = vmatprep.subr.bf16.mxu0 0
      %1701 = vmatpush2.bf16.msra.mxu0 0
      %1702 = vmatprep.subr.bf16.mxu0 0
      %1703 = vmatpush2.bf16.msra.mxu0 0
      %1704 = vmatprep.subr.bf16.mxu0 0
      %1705 = vmatpush2.bf16.msra.mxu0 0
      %1706 = vmatprep.subr.bf16.mxu0 0
      %1707 = vmatpush2.bf16.msra.mxu0 0
      %1708 = vmatprep.subr.bf16.mxu0 0
      %1709 = vmatpush2.bf16.msra.mxu0 0
      %1710 = vmatprep.subr.bf16.mxu0 0
      %1711 = vmatpush2.bf16.msra.mxu0 0
      %1712 = vmatprep.subr.bf16.mxu0 0
      %1713 = vmatpush2.bf16.msra.mxu0 0
      %1714 = vmatprep.mubr.bf16.mxu0 0
      %1715 = vmatmul.mubr.bf16.gmra.mxu0 %v1680
      %v1716 = vpop.f32.mrf.mxu0
      %v1717 = vadd.f32 %v1652, %v1716
      %v1718 = vpop.f32.mrf.mxu0
      %v1719 = vpop.f32.mrf.mxu0
      %v1720 = vadd.f32 %v1652, %v1719
      %v1721 = vpop.f32.mrf.mxu0
      %1722 = vdwg.mxu0
      %v1723 = vadd.f32 %v1508, %v1717
      %v1724 = vadd.f32 %v1509, %v1720
      %1725 = vst.msk [vmem:[%s698] sm:$0xff] %vm773, %v1723
      %1726 = vst.msk [vmem:[%s698 + $0x8] sm:$0x1f] %vm777, %v1724
      %p1727 = scmp.lt.s32.totalorder %s30, 1
      %s1728 = scalar_select %p1727, %s30, 1
      %s1729 = smul.addr %s1728, 2
      %s1730 = smul.addr %s1729, 8
      %s1731 = scalar_lea.vmem %s15, %s1730
      // Predicated region
      $region85: #{model_forward_itm.11} parent=79 // pred_check
        %p1732 = pneg %p436
      $region86: #{model_forward_itm.11} parent=79 // pred_check_branch
        %1734 = sbr.rel (%p1732) target = $region88
      $region87: #{model_forward_itm.11} parent=79 // pred_region
        _
      $region88: #{model_forward_itm.11} parent=79 // pred_fallthru
        _
    $region80: #{model_forward_itm.11} parent=5 // pred_fallthru
      _
    %p1735 = scmp.le.s32.totalorder 2, %s21
    // Predicated region
    $region89: #{model_forward_itm.11} parent=5 // pred_check
      %p1736 = pneg %p1735
    $region90: #{model_forward_itm.11} parent=5 // pred_check_branch
      %1738 = sbr.rel (%p1736) target = $region92
    $region91: #{model_forward_itm.11} parent=5 // pred_region
      %s1739 = ssub.s32 %s21, 2
      // Predicated region
      $region93: #{model_forward_itm.11} parent=91 // pred_check
        %p1740 = pneg %p442
      $region94: #{model_forward_itm.11} parent=91 // pred_check_branch
        %1742 = sbr.rel (%p1740) target = $region96
      $region95: #{model_forward_itm.11} parent=91 // pred_region
        %p1743 = scmp.lt.s32.totalorder %s32, 1
        %s1744 = scalar_select %p1743, %s32, 1
        %s1745 = smul.addr %s1744, 2
        %s1746 = smul.addr %s1745, 8
        %s1747 = scalar_lea.vmem %s15, %s1746
      $region96: #{model_forward_itm.11} parent=91 // pred_fallthru
        _
    $region92: #{model_forward_itm.11} parent=5 // pred_fallthru
      _
  $region6: #{model_forward_itm.11} parent=0 // loop_footer
    %s25 = sadd.s32 1, %s21
  $region7: #{model_forward_itm.11} parent=0 // loop_footer_branch
    %20 = sbr.rel target = $region3
  $region8: #{model_forward_itm.11} parent=0 // loop_exit
    _

</llo_original>
